<compile_context>
chip_gen: v6e
topology: v6e:2x2x1
jax: 0.10.0
libtpu: 0.0.40
codegen_flags: <defaults>
</compile_context>

<pallas_src>
import functools
import math

import jax
import jax.numpy as jnp
from jax.experimental import pallas as pl
from jax.experimental.pallas import tpu as pltpu


# ---------------------------------------------------------------------------
# Pallas kernel: full TPIEncoder forward (all layers), input/output in (S,B,E)
# ---------------------------------------------------------------------------
def tpi_encoder_kernel(
    x_ref,        # (S, BB, E)  f32
    wqkv_t_ref,   # (L, E, 3E)  bf16   in_proj_weight.T per layer
    bqkv_ref,     # (L, 1, 3E)  f32
    wo_t_ref,     # (L, E, E)   bf16   out_proj.weight.T
    bo_ref,       # (L, 1, E)   f32
    g1_ref,       # (L, 1, E)   f32    norm1.weight
    be1_ref,      # (L, 1, E)   f32    norm1.bias
    w1_t_ref,     # (L, E, F)   bf16   linear1.weight.T
    b1_ref,       # (L, 1, F)   f32
    w2_t_ref,     # (L, F, E)   bf16   linear2.weight.T (pre-transposed once)
    b2_ref,       # (L, 1, E)   f32
    g2_ref,       # (L, 1, E)   f32    norm2.weight
    be2_ref,      # (L, 1, E)   f32    norm2.bias
    o_ref,        # (S, BB, E)  f32
    *,
    num_layers: int,
    num_heads: int,
    head_dim: int,
    approx_softmax: bool,
):
    S, BB, E = x_ref.shape
    R = S * BB                       # tokens folded as rows, ordered (s, b)
    H, hd = num_heads, head_dim
    inv_scale = 1.0 / math.sqrt(hd)

    # same-batch mask for the fused (R, R) attention score matrix:
    # row r <-> token (s = r // BB, b = r % BB)
    rows = jax.lax.broadcasted_iota(jnp.int32, (R, R), 0)
    cols = jax.lax.broadcasted_iota(jnp.int32, (R, R), 1)
    same_batch = (rows % BB) == (cols % BB)

    x = x_ref[...].astype(jnp.float32).reshape(R, E)   # free leading-dim fold

    for l in range(num_layers):          # static unrolled layer loop
        # ---- in-projection: one bf16 matmul over all rows ------------------
        qkv = jnp.dot(x.astype(jnp.bfloat16), wqkv_t_ref[l],
                      preferred_element_type=jnp.float32) + bqkv_ref[l]  # (R,3E)
        q = qkv[:, :E]
        k = qkv[:, E:2 * E]
        v = qkv[:, 2 * E:]

        # ---- per-head euclidean-distance attention, batch folded into rows -
        head_outs = []
        for h in range(H):
            sl = slice(h * hd, (h + 1) * hd)
            qh, kh, vh = q[:, sl], k[:, sl], v[:, sl]          # (R, hd) f32

            # contract the minor axis of both operands (no transposes)
            dot = jax.lax.dot_general(
                qh, kh, dimension_numbers=(((1,), (1,)), ((), ())),
                preferred_element_type=jnp.float32)            # (R, R)
            qsq = jnp.sum(qh * qh, axis=-1, keepdims=True)      # (R, 1)
            ksq = jnp.sum(kh * kh, axis=-1, keepdims=True)      # (R, 1)
            d2 = qsq + jnp.swapaxes(ksq, 0, 1) - 2.0 * dot
            # clamp guards tiny FP-negative values under the radical
            scores = -jnp.sqrt(jnp.maximum(d2, 0.0)) * inv_scale
            # mask cross-batch pairs -> masked softmax == per-batch softmax
            scores = jnp.where(same_batch, scores, -jnp.inf)

            m = jnp.max(scores, axis=-1, keepdims=True)
            p = jnp.exp(scores - m)
            denom = jnp.sum(p, axis=-1, keepdims=True)
            p = p * pl.reciprocal(denom, approx=approx_softmax)

            head_outs.append(jnp.dot(p, vh,
                                     preferred_element_type=jnp.float32))  # (R, hd)

        attn = (jnp.concatenate(head_outs, axis=-1)
                if H > 1 else head_outs[0])                     # (R, E)
        # single out-projection matmul (bf16 operands, f32 accumulate)
        attn = jnp.dot(attn.astype(jnp.bfloat16), wo_t_ref[l],
                       preferred_element_type=jnp.float32) + bo_ref[l]

        # ---- residual + LayerNorm 1 (eps=1e-5, biased variance, f32) -------
        y = x + attn
        mu = jnp.mean(y, axis=-1, keepdims=True)
        var = jnp.mean((y - mu) * (y - mu), axis=-1, keepdims=True)
        y = (y - mu) * jax.lax.rsqrt(var + 1e-5) * g1_ref[l] + be1_ref[l]

        # ---- feed-forward (relu) + residual + LayerNorm 2 -------------------
        h1 = jnp.dot(y.astype(jnp.bfloat16), w1_t_ref[l],
                     preferred_element_type=jnp.float32) + b1_ref[l]     # (R, F)
        h1 = jnp.maximum(h1, 0.0)
        f = jnp.dot(h1.astype(jnp.bfloat16), w2_t_ref[l],
                    preferred_element_type=jnp.float32) + b2_ref[l]      # (R, E)

        z = y + f
        mu = jnp.mean(z, axis=-1, keepdims=True)
        var = jnp.mean((z - mu) * (z - mu), axis=-1, keepdims=True)
        x = (z - mu) * jax.lax.rsqrt(var + 1e-5) * g2_ref[l] + be2_ref[l]

    o_ref[...] = x.reshape(S, BB, E).astype(o_ref.dtype)   # free leading split


# ---------------------------------------------------------------------------
# One-time parameter preprocessing (transposes + bf16 cast hoisted out of fwd)
# ---------------------------------------------------------------------------
def pack_params(layer_params, weight_dtype=jnp.bfloat16):
    st = lambda xs: jnp.stack(xs, axis=0)
    wd = weight_dtype
    return {
        "wqkv_t": st([p["wqkv"].T.astype(wd) for p in layer_params]),  # (L,E,3E)
        "bqkv":   st([p["bqkv"].reshape(1, -1) for p in layer_params]),
        "wo_t":   st([p["wo"].T.astype(wd) for p in layer_params]),    # (L,E,E)
        "bo":     st([p["bo"].reshape(1, -1) for p in layer_params]),
        "g1":     st([p["g1"].reshape(1, -1) for p in layer_params]),
        "be1":    st([p["be1"].reshape(1, -1) for p in layer_params]),
        "w1_t":   st([p["w1"].T.astype(wd) for p in layer_params]),    # (L,E,F)
        "b1":     st([p["b1"].reshape(1, -1) for p in layer_params]),
        "w2_t":   st([p["w2"].T.astype(wd) for p in layer_params]),    # (L,F,E)
        "b2":     st([p["b2"].reshape(1, -1) for p in layer_params]),
        "g2":     st([p["g2"].reshape(1, -1) for p in layer_params]),
        "be2":    st([p["be2"].reshape(1, -1) for p in layer_params]),
    }


# ---------------------------------------------------------------------------
# Forward wrapper: single fused pallas_call, no wrapper transposes
# ---------------------------------------------------------------------------
@functools.partial(jax.jit,
                   static_argnames=("num_heads", "grid_blocks", "approx_softmax"))
def tpi_encoder_pallas(x_sbe, packed, num_heads, grid_blocks=1,
                       approx_softmax=False):
    S, B, E = x_sbe.shape
    L = packed["wqkv_t"].shape[0]
    head_dim = E // num_heads

    # Default: single grid step (v5e/v6e are single-TC; splitting a tiny batch
    # only adds serial overhead).  For v7x, only set grid_blocks=2 after
    # verifying real dual-core sharding (pltpu.CORE_PARALLEL) in the dump.
    G = grid_blocks
    assert B % G == 0, f"batch {B} not divisible by grid_blocks {G}"
    BB = B // G

    weight_names = ("wqkv_t", "bqkv", "wo_t", "bo", "g1", "be1",
                    "w1_t", "b1", "w2_t", "b2", "g2", "be2")
    weight_args = [packed[n] for n in weight_names]

    in_specs = [pl.BlockSpec((S, BB, E), lambda g: (0, g, 0))]
    # constant-index weight blocks: resident in VMEM, not re-fetched per step
    in_specs += [pl.BlockSpec(a.shape, lambda g: (0, 0, 0)) for a in weight_args]

    kernel = functools.partial(
        tpi_encoder_kernel,
        num_layers=L, num_heads=num_heads, head_dim=head_dim,
        approx_softmax=approx_softmax)

    return pl.pallas_call(
        kernel,
        grid=(G,),
        in_specs=in_specs,
        out_specs=pl.BlockSpec((S, BB, E), lambda g: (0, g, 0)),
        out_shape=jax.ShapeDtypeStruct((S, B, E), jnp.float32),
        compiler_params=pltpu.CompilerParams(
            dimension_semantics=("arbitrary",) if G == 1 else ("parallel",)),
    )(x_sbe, *weight_args)


# ---------------------------------------------------------------------------
# Pure-JAX references (for correctness checks)
# ---------------------------------------------------------------------------
def _layernorm(x, g, b):
    mu = jnp.mean(x, axis=-1, keepdims=True)
    var = jnp.mean((x - mu) ** 2, axis=-1, keepdims=True)
    return (x - mu) * jax.lax.rsqrt(var + 1e-5) * g + b


def ref_layer(x, p, H, match_kernel_precision=False):
    B, S, E = x.shape
    hd = E // H

    def mm(a, w):   # a @ w.T with the kernel's matmul precision policy
        wt = w.T
        if match_kernel_precision:
            a, wt = a.astype(jnp.bfloat16), wt.astype(jnp.bfloat16)
        return jnp.einsum("bse,ef->bsf", a, wt,
                          preferred_element_type=jnp.float32)

    qkv = mm(x, p["wqkv"]) + p["bqkv"]
    q, k, v = qkv[..., :E], qkv[..., E:2 * E], qkv[..., 2 * E:]

    def split(t):
        return t.reshape(B, S, H, hd).transpose(0, 2, 1, 3)

    q, k, v = split(q), split(k), split(v)
    dot = jnp.einsum("bhqd,bhkd->bhqk", q, k)
    qsq = jnp.sum(q * q, -1, keepdims=True)
    ksq = jnp.sum(k * k, -1, keepdims=True)
    d2 = qsq + jnp.swapaxes(ksq, -1, -2) - 2.0 * dot
    scores = -jnp.sqrt(jnp.maximum(d2, 0.0)) / math.sqrt(hd)
    pw = jax.nn.softmax(scores, axis=-1)
    attn = jnp.einsum("bhqk,bhkd->bhqd", pw, v)
    attn = attn.transpose(0, 2, 1, 3).reshape(B, S, E)
    attn = mm(attn, p["wo"]) + p["bo"]
    y = _layernorm(x + attn, p["g1"], p["be1"])
    h1 = jnp.maximum(mm(y, p["w1"]) + p["b1"], 0.0)
    f = mm(h1, p["w2"]) + p["b2"]
    return _layernorm(y + f, p["g2"], p["be2"])


def ref_encoder(x_sbe, layer_params, H, match_kernel_precision=False):
    x = jnp.transpose(x_sbe, (1, 0, 2))
    for p in layer_params:
        x = ref_layer(x, p, H, match_kernel_precision)
    return jnp.transpose(x, (1, 0, 2))


# ---------------------------------------------------------------------------
# Deterministic parameter construction (synthetic; no checkpoint loading)
# ---------------------------------------------------------------------------
def make_layer_params(key, E, F):
    ks = jax.random.split(key, 8)
    s = 0.05
    return {
        "wqkv": jax.random.normal(ks[0], (3 * E, E), jnp.float32) * s,
        "bqkv": jax.random.normal(ks[1], (3 * E,), jnp.float32) * s,
        "wo":   jax.random.normal(ks[2], (E, E), jnp.float32) * s,
        "bo":   jax.random.normal(ks[3], (E,), jnp.float32) * s,
        "w1":   jax.random.normal(ks[4], (F, E), jnp.float32) * s,
        "b1":   jax.random.normal(ks[5], (F,), jnp.float32) * s,
        "w2":   jax.random.normal(ks[6], (E, F), jnp.float32) * s,
        "b2":   jax.random.normal(ks[7], (E,), jnp.float32) * s,
        "g1":   jnp.ones((E,), jnp.float32),
        "be1":  jnp.zeros((E,), jnp.float32),
        "g2":   jnp.ones((E,), jnp.float32),
        "be2":  jnp.zeros((E,), jnp.float32),
    }


if __name__ == "__main__":
    # small shapes consistent with the module: x is (seq, batch, embed)
    S, B, E = 8, 2, 32
    NUM_HEADS = 4
    NUM_LAYERS = 2
    DIM_FFN = 2048    # nn.TransformerEncoderLayer default used by TPIEncoderLayer

    key = jax.random.PRNGKey(0)
    kx, kp = jax.random.split(key)
    x = jax.random.normal(kx, (S, B, E), jnp.float32)
    layer_keys = jax.random.split(kp, NUM_LAYERS)
    params = [make_layer_params(k, E, DIM_FFN) for k in layer_keys]

    packed = pack_params(params)   # one-time weight layout + bf16 preprocessing

    out = tpi_encoder_pallas(x, packed, num_heads=NUM_HEADS)
    out = jax.block_until_ready(out)
    assert out.shape == (S, B, E)

    # Tight check vs a reference that uses the SAME precision policy
    # (bf16 matmul operands, f32 accumulate / LayerNorm / softmax).
    ref_matched = ref_encoder(x, params, NUM_HEADS, match_kernel_precision=True)
    assert jnp.allclose(out, ref_matched, rtol=2e-3, atol=2e-3), \
        "mismatch vs precision-matched reference"

    # Loose sanity check vs the full-f32 PyTorch-equivalent reference; the
    # difference is purely the bf16 weight/operand quantization.
    ref_f32 = ref_encoder(x, params, NUM_HEADS, match_kernel_precision=False)
    assert jnp.allclose(out, ref_f32, rtol=3e-2, atol=3e-2), \
        "mismatch vs f32 reference"

    # NOTE: dropout layers are identity (eval-mode semantics).
    print("KERNEL_OK")
</pallas_src>

<mosaic_0001>
module attributes {stable_mosaic.version = 11 : i64} {
  func.func @tpi_encoder_kernel(%arg0: i32, %arg1: memref<8x2x32xf32, #tpu.memory_space<vmem>>, %arg2: memref<2x32x96xbf16, #tpu.memory_space<vmem>>, %arg3: memref<2x1x96xf32, #tpu.memory_space<vmem>>, %arg4: memref<2x32x32xbf16, #tpu.memory_space<vmem>>, %arg5: memref<2x1x32xf32, #tpu.memory_space<vmem>>, %arg6: memref<2x1x32xf32, #tpu.memory_space<vmem>>, %arg7: memref<2x1x32xf32, #tpu.memory_space<vmem>>, %arg8: memref<2x32x2048xbf16, #tpu.memory_space<vmem>>, %arg9: memref<2x1x2048xf32, #tpu.memory_space<vmem>>, %arg10: memref<2x2048x32xbf16, #tpu.memory_space<vmem>>, %arg11: memref<2x1x32xf32, #tpu.memory_space<vmem>>, %arg12: memref<2x1x32xf32, #tpu.memory_space<vmem>>, %arg13: memref<2x1x32xf32, #tpu.memory_space<vmem>>, %arg14: memref<8x2x32xf32, #tpu.memory_space<vmem>>) attributes {dimension_semantics = [#tpu.dimension_semantics<arbitrary>], iteration_bounds = array<i64: 1>, scalar_prefetch = 0 : i64, scratch_operands = 0 : i64, tpu.core_type = #tpu.core_type<tc>, window_params = [{transform_indices = @transform_0, window_bounds = array<i64: 8, 2, 32>}, {pipeline_mode = #tpu.pipeline_mode<synchronous>, transform_indices = @transform_1, window_bounds = array<i64: 2, 32, 96>}, {pipeline_mode = #tpu.pipeline_mode<synchronous>, transform_indices = @transform_2, window_bounds = array<i64: 2, 1, 96>}, {pipeline_mode = #tpu.pipeline_mode<synchronous>, transform_indices = @transform_3, window_bounds = array<i64: 2, 32, 32>}, {pipeline_mode = #tpu.pipeline_mode<synchronous>, transform_indices = @transform_4, window_bounds = array<i64: 2, 1, 32>}, {pipeline_mode = #tpu.pipeline_mode<synchronous>, transform_indices = @transform_5, window_bounds = array<i64: 2, 1, 32>}, {pipeline_mode = #tpu.pipeline_mode<synchronous>, transform_indices = @transform_6, window_bounds = array<i64: 2, 1, 32>}, {pipeline_mode = #tpu.pipeline_mode<synchronous>, transform_indices = @transform_7, window_bounds = array<i64: 2, 32, 2048>}, {pipeline_mode = #tpu.pipeline_mode<synchronous>, transform_indices = @transform_8, window_bounds = array<i64: 2, 1, 2048>}, {pipeline_mode = #tpu.pipeline_mode<synchronous>, transform_indices = @transform_9, window_bounds = array<i64: 2, 2048, 32>}, {pipeline_mode = #tpu.pipeline_mode<synchronous>, transform_indices = @transform_10, window_bounds = array<i64: 2, 1, 32>}, {pipeline_mode = #tpu.pipeline_mode<synchronous>, transform_indices = @transform_11, window_bounds = array<i64: 2, 1, 32>}, {pipeline_mode = #tpu.pipeline_mode<synchronous>, transform_indices = @transform_12, window_bounds = array<i64: 2, 1, 32>}, {transform_indices = @transform_13, window_bounds = array<i64: 8, 2, 32>}]} {
    %0 = tpu.iota {dimensions = array<i32: 0>} : vector<16x16xi32>
    %1 = tpu.iota {dimensions = array<i32: 1>} : vector<16x16xi32>
    %c2_i32 = arith.constant 2 : i32
    %c0_i32 = arith.constant 0 : i32
    %2 = arith.cmpi eq, %c2_i32, %c0_i32 : i32
    %c1_i32 = arith.constant 1 : i32
    %3 = arith.select %2, %c1_i32, %c2_i32 : i32
    %4 = vector.broadcast %3 : i32 to vector<16x16xi32>
    %5 = arith.remsi %0, %4 : vector<16x16xi32>
    %c0_i32_0 = arith.constant 0 : i32
    %6 = vector.broadcast %c0_i32_0 : i32 to vector<16x16xi32>
    %7 = arith.cmpi ne, %5, %6 : vector<16x16xi32>
    %c0_i32_1 = arith.constant 0 : i32
    %8 = vector.broadcast %c0_i32_1 : i32 to vector<16x16xi32>
    %9 = arith.cmpi slt, %5, %8 : vector<16x16xi32>
    %c0_i32_2 = arith.constant 0 : i32
    %10 = arith.cmpi slt, %3, %c0_i32_2 : i32
    %11 = vector.broadcast %10 : i1 to vector<16x16xi1>
    %12 = vector.broadcast %11 : vector<16x16xi1> to vector<16x16xi1>
    %13 = arith.xori %9, %12 : vector<16x16xi1>
    %14 = arith.andi %13, %7 : vector<16x16xi1>
    %15 = vector.broadcast %3 : i32 to vector<16x16xi32>
    %16 = arith.addi %5, %15 : vector<16x16xi32>
    %17 = arith.select %14, %16, %5 : vector<16x16xi1>, vector<16x16xi32>
    %c2_i32_3 = arith.constant 2 : i32
    %c0_i32_4 = arith.constant 0 : i32
    %18 = arith.cmpi eq, %c2_i32_3, %c0_i32_4 : i32
    %c1_i32_5 = arith.constant 1 : i32
    %19 = arith.select %18, %c1_i32_5, %c2_i32_3 : i32
    %20 = vector.broadcast %19 : i32 to vector<16x16xi32>
    %21 = arith.remsi %1, %20 : vector<16x16xi32>
    %c0_i32_6 = arith.constant 0 : i32
    %22 = vector.broadcast %c0_i32_6 : i32 to vector<16x16xi32>
    %23 = arith.cmpi ne, %21, %22 : vector<16x16xi32>
    %c0_i32_7 = arith.constant 0 : i32
    %24 = vector.broadcast %c0_i32_7 : i32 to vector<16x16xi32>
    %25 = arith.cmpi slt, %21, %24 : vector<16x16xi32>
    %c0_i32_8 = arith.constant 0 : i32
    %26 = arith.cmpi slt, %19, %c0_i32_8 : i32
    %27 = vector.broadcast %26 : i1 to vector<16x16xi1>
    %28 = vector.broadcast %27 : vector<16x16xi1> to vector<16x16xi1>
    %29 = arith.xori %25, %28 : vector<16x16xi1>
    %30 = arith.andi %29, %23 : vector<16x16xi1>
    %31 = vector.broadcast %19 : i32 to vector<16x16xi32>
    %32 = arith.addi %21, %31 : vector<16x16xi32>
    %33 = arith.select %30, %32, %21 : vector<16x16xi1>, vector<16x16xi32>
    %34 = arith.cmpi eq, %17, %33 : vector<16x16xi32>
    %c0 = arith.constant 0 : index
    %c0_9 = arith.constant 0 : index
    %c0_10 = arith.constant 0 : index
    %35 = vector.load %arg1[%c0, %c0_9, %c0_10] : memref<8x2x32xf32, #tpu.memory_space<vmem>>, vector<8x2x32xf32>
    %36 = vector.shape_cast %35 : vector<8x2x32xf32> to vector<16x32xf32>
    %37 = arith.truncf %36 : vector<16x32xf32> to vector<16x32xbf16>
    %c0_11 = arith.constant 0 : index
    %c0_12 = arith.constant 0 : index
    %c0_13 = arith.constant 0 : index
    %38 = vector.load %arg2[%c0_11, %c0_12, %c0_13] : memref<2x32x96xbf16, #tpu.memory_space<vmem>>, vector<1x32x96xbf16>
    %39 = vector.shape_cast %38 : vector<1x32x96xbf16> to vector<32x96xbf16>
    %cst = arith.constant dense<0.000000e+00> : vector<16x96xf32>
    %40 = tpu.matmul %37, %39, %cst {dimension_numbers = #tpu.dot_dimension_numbers<[1], [0], [0], [1], [0, 0, 1, 1], [], []>} : vector<16x32xbf16>, vector<32x96xbf16>, vector<16x96xf32> -> vector<16x96xf32>
    %c0_14 = arith.constant 0 : index
    %c0_15 = arith.constant 0 : index
    %c0_16 = arith.constant 0 : index
    %41 = vector.load %arg3[%c0_14, %c0_15, %c0_16] : memref<2x1x96xf32, #tpu.memory_space<vmem>>, vector<1x1x96xf32>
    %42 = vector.shape_cast %41 : vector<1x1x96xf32> to vector<1x96xf32>
    %43 = vector.broadcast %42 : vector<1x96xf32> to vector<16x96xf32>
    %44 = arith.addf %40, %43 : vector<16x96xf32>
    %45 = vector.extract_strided_slice %44 {offsets = [0, 0], sizes = [16, 32], strides = [1, 1]} : vector<16x96xf32> to vector<16x32xf32>
    %46 = vector.extract_strided_slice %44 {offsets = [0, 32], sizes = [16, 32], strides = [1, 1]} : vector<16x96xf32> to vector<16x32xf32>
    %47 = vector.extract_strided_slice %44 {offsets = [0, 64], sizes = [16, 32], strides = [1, 1]} : vector<16x96xf32> to vector<16x32xf32>
    %48 = vector.extract_strided_slice %45 {offsets = [0, 0], sizes = [16, 8], strides = [1, 1]} : vector<16x32xf32> to vector<16x8xf32>
    %49 = vector.extract_strided_slice %46 {offsets = [0, 0], sizes = [16, 8], strides = [1, 1]} : vector<16x32xf32> to vector<16x8xf32>
    %50 = vector.extract_strided_slice %47 {offsets = [0, 0], sizes = [16, 8], strides = [1, 1]} : vector<16x32xf32> to vector<16x8xf32>
    %cst_17 = arith.constant dense<0.000000e+00> : vector<16x16xf32>
    %51 = tpu.matmul %48, %49, %cst_17 {dimension_numbers = #tpu.dot_dimension_numbers<[1], [1], [0], [0], [0, 0, 1, 0], [], []>} : vector<16x8xf32>, vector<16x8xf32>, vector<16x16xf32> -> vector<16x16xf32>
    %52 = arith.mulf %48, %48 : vector<16x8xf32>
    %cst_18 = arith.constant dense<0.000000e+00> : vector<16xf32>
    %53 = vector.multi_reduction <add>, %52, %cst_18 [1] : vector<16x8xf32> to vector<16xf32>
    %54 = vector.shape_cast %53 : vector<16xf32> to vector<16x1xf32>
    %55 = arith.mulf %49, %49 : vector<16x8xf32>
    %cst_19 = arith.constant dense<0.000000e+00> : vector<16xf32>
    %56 = vector.multi_reduction <add>, %55, %cst_19 [1] : vector<16x8xf32> to vector<16xf32>
    %57 = vector.shape_cast %56 : vector<16xf32> to vector<16x1xf32>
    %58 = tpu.transpose %57, [1, 0] : vector<16x1xf32> -> vector<1x16xf32>
    %59 = vector.broadcast %54 : vector<16x1xf32> to vector<16x16xf32>
    %60 = vector.broadcast %58 : vector<1x16xf32> to vector<16x16xf32>
    %61 = arith.addf %59, %60 : vector<16x16xf32>
    %cst_20 = arith.constant 2.000000e+00 : f32
    %62 = vector.broadcast %cst_20 : f32 to vector<16x16xf32>
    %63 = arith.mulf %62, %51 : vector<16x16xf32>
    %64 = arith.subf %61, %63 : vector<16x16xf32>
    %cst_21 = arith.constant 0.000000e+00 : f32
    %65 = vector.broadcast %cst_21 : f32 to vector<16x16xf32>
    %66 = arith.maximumf %64, %65 : vector<16x16xf32>
    %67 = math.sqrt %66 : vector<16x16xf32>
    %cst_22 = arith.constant 0.000000e+00 : f32
    %68 = vector.broadcast %cst_22 : f32 to vector<16x16xf32>
    %69 = arith.subf %68, %67 : vector<16x16xf32>
    %cst_23 = arith.constant 0.353553385 : f32
    %70 = vector.broadcast %cst_23 : f32 to vector<16x16xf32>
    %71 = arith.mulf %69, %70 : vector<16x16xf32>
    %cst_24 = arith.constant 0xFF800000 : f32
    %72 = vector.broadcast %cst_24 : f32 to vector<16x16xf32>
    %73 = arith.select %34, %71, %72 : vector<16x16xi1>, vector<16x16xf32>
    %cst_25 = arith.constant dense<0xFF800000> : vector<16xf32>
    %74 = vector.multi_reduction <maximumf>, %73, %cst_25 [1] : vector<16x16xf32> to vector<16xf32>
    %75 = vector.shape_cast %74 : vector<16xf32> to vector<16x1xf32>
    %76 = vector.broadcast %75 : vector<16x1xf32> to vector<16x16xf32>
    %77 = arith.subf %73, %76 : vector<16x16xf32>
    %78 = math.exp %77 : vector<16x16xf32>
    %cst_26 = arith.constant dense<0.000000e+00> : vector<16xf32>
    %79 = vector.multi_reduction <add>, %78, %cst_26 [1] : vector<16x16xf32> to vector<16xf32>
    %80 = vector.shape_cast %79 : vector<16xf32> to vector<16x1xf32>
    %81 = tpu.reciprocal %80 : vector<16x1xf32> -> vector<16x1xf32>
    %82 = vector.broadcast %81 : vector<16x1xf32> to vector<16x16xf32>
    %83 = arith.mulf %78, %82 : vector<16x16xf32>
    %cst_27 = arith.constant dense<0.000000e+00> : vector<16x8xf32>
    %84 = tpu.matmul %83, %50, %cst_27 {dimension_numbers = #tpu.dot_dimension_numbers<[1], [0], [0], [1], [0, 0, 1, 1], [], []>} : vector<16x16xf32>, vector<16x8xf32>, vector<16x8xf32> -> vector<16x8xf32>
    %85 = vector.extract_strided_slice %45 {offsets = [0, 8], sizes = [16, 8], strides = [1, 1]} : vector<16x32xf32> to vector<16x8xf32>
    %86 = vector.extract_strided_slice %46 {offsets = [0, 8], sizes = [16, 8], strides = [1, 1]} : vector<16x32xf32> to vector<16x8xf32>
    %87 = vector.extract_strided_slice %47 {offsets = [0, 8], sizes = [16, 8], strides = [1, 1]} : vector<16x32xf32> to vector<16x8xf32>
    %cst_28 = arith.constant dense<0.000000e+00> : vector<16x16xf32>
    %88 = tpu.matmul %85, %86, %cst_28 {dimension_numbers = #tpu.dot_dimension_numbers<[1], [1], [0], [0], [0, 0, 1, 0], [], []>} : vector<16x8xf32>, vector<16x8xf32>, vector<16x16xf32> -> vector<16x16xf32>
    %89 = arith.mulf %85, %85 : vector<16x8xf32>
    %cst_29 = arith.constant dense<0.000000e+00> : vector<16xf32>
    %90 = vector.multi_reduction <add>, %89, %cst_29 [1] : vector<16x8xf32> to vector<16xf32>
    %91 = vector.shape_cast %90 : vector<16xf32> to vector<16x1xf32>
    %92 = arith.mulf %86, %86 : vector<16x8xf32>
    %cst_30 = arith.constant dense<0.000000e+00> : vector<16xf32>
    %93 = vector.multi_reduction <add>, %92, %cst_30 [1] : vector<16x8xf32> to vector<16xf32>
    %94 = vector.shape_cast %93 : vector<16xf32> to vector<16x1xf32>
    %95 = tpu.transpose %94, [1, 0] : vector<16x1xf32> -> vector<1x16xf32>
    %96 = vector.broadcast %91 : vector<16x1xf32> to vector<16x16xf32>
    %97 = vector.broadcast %95 : vector<1x16xf32> to vector<16x16xf32>
    %98 = arith.addf %96, %97 : vector<16x16xf32>
    %cst_31 = arith.constant 2.000000e+00 : f32
    %99 = vector.broadcast %cst_31 : f32 to vector<16x16xf32>
    %100 = arith.mulf %99, %88 : vector<16x16xf32>
    %101 = arith.subf %98, %100 : vector<16x16xf32>
    %cst_32 = arith.constant 0.000000e+00 : f32
    %102 = vector.broadcast %cst_32 : f32 to vector<16x16xf32>
    %103 = arith.maximumf %101, %102 : vector<16x16xf32>
    %104 = math.sqrt %103 : vector<16x16xf32>
    %cst_33 = arith.constant 0.000000e+00 : f32
    %105 = vector.broadcast %cst_33 : f32 to vector<16x16xf32>
    %106 = arith.subf %105, %104 : vector<16x16xf32>
    %cst_34 = arith.constant 0.353553385 : f32
    %107 = vector.broadcast %cst_34 : f32 to vector<16x16xf32>
    %108 = arith.mulf %106, %107 : vector<16x16xf32>
    %cst_35 = arith.constant 0xFF800000 : f32
    %109 = vector.broadcast %cst_35 : f32 to vector<16x16xf32>
    %110 = arith.select %34, %108, %109 : vector<16x16xi1>, vector<16x16xf32>
    %cst_36 = arith.constant dense<0xFF800000> : vector<16xf32>
    %111 = vector.multi_reduction <maximumf>, %110, %cst_36 [1] : vector<16x16xf32> to vector<16xf32>
    %112 = vector.shape_cast %111 : vector<16xf32> to vector<16x1xf32>
    %113 = vector.broadcast %112 : vector<16x1xf32> to vector<16x16xf32>
    %114 = arith.subf %110, %113 : vector<16x16xf32>
    %115 = math.exp %114 : vector<16x16xf32>
    %cst_37 = arith.constant dense<0.000000e+00> : vector<16xf32>
    %116 = vector.multi_reduction <add>, %115, %cst_37 [1] : vector<16x16xf32> to vector<16xf32>
    %117 = vector.shape_cast %116 : vector<16xf32> to vector<16x1xf32>
    %118 = tpu.reciprocal %117 : vector<16x1xf32> -> vector<16x1xf32>
    %119 = vector.broadcast %118 : vector<16x1xf32> to vector<16x16xf32>
    %120 = arith.mulf %115, %119 : vector<16x16xf32>
    %cst_38 = arith.constant dense<0.000000e+00> : vector<16x8xf32>
    %121 = tpu.matmul %120, %87, %cst_38 {dimension_numbers = #tpu.dot_dimension_numbers<[1], [0], [0], [1], [0, 0, 1, 1], [], []>} : vector<16x16xf32>, vector<16x8xf32>, vector<16x8xf32> -> vector<16x8xf32>
    %122 = vector.extract_strided_slice %45 {offsets = [0, 16], sizes = [16, 8], strides = [1, 1]} : vector<16x32xf32> to vector<16x8xf32>
    %123 = vector.extract_strided_slice %46 {offsets = [0, 16], sizes = [16, 8], strides = [1, 1]} : vector<16x32xf32> to vector<16x8xf32>
    %124 = vector.extract_strided_slice %47 {offsets = [0, 16], sizes = [16, 8], strides = [1, 1]} : vector<16x32xf32> to vector<16x8xf32>
    %cst_39 = arith.constant dense<0.000000e+00> : vector<16x16xf32>
    %125 = tpu.matmul %122, %123, %cst_39 {dimension_numbers = #tpu.dot_dimension_numbers<[1], [1], [0], [0], [0, 0, 1, 0], [], []>} : vector<16x8xf32>, vector<16x8xf32>, vector<16x16xf32> -> vector<16x16xf32>
    %126 = arith.mulf %122, %122 : vector<16x8xf32>
    %cst_40 = arith.constant dense<0.000000e+00> : vector<16xf32>
    %127 = vector.multi_reduction <add>, %126, %cst_40 [1] : vector<16x8xf32> to vector<16xf32>
    %128 = vector.shape_cast %127 : vector<16xf32> to vector<16x1xf32>
    %129 = arith.mulf %123, %123 : vector<16x8xf32>
    %cst_41 = arith.constant dense<0.000000e+00> : vector<16xf32>
    %130 = vector.multi_reduction <add>, %129, %cst_41 [1] : vector<16x8xf32> to vector<16xf32>
    %131 = vector.shape_cast %130 : vector<16xf32> to vector<16x1xf32>
    %132 = tpu.transpose %131, [1, 0] : vector<16x1xf32> -> vector<1x16xf32>
    %133 = vector.broadcast %128 : vector<16x1xf32> to vector<16x16xf32>
    %134 = vector.broadcast %132 : vector<1x16xf32> to vector<16x16xf32>
    %135 = arith.addf %133, %134 : vector<16x16xf32>
    %cst_42 = arith.constant 2.000000e+00 : f32
    %136 = vector.broadcast %cst_42 : f32 to vector<16x16xf32>
    %137 = arith.mulf %136, %125 : vector<16x16xf32>
    %138 = arith.subf %135, %137 : vector<16x16xf32>
    %cst_43 = arith.constant 0.000000e+00 : f32
    %139 = vector.broadcast %cst_43 : f32 to vector<16x16xf32>
    %140 = arith.maximumf %138, %139 : vector<16x16xf32>
    %141 = math.sqrt %140 : vector<16x16xf32>
    %cst_44 = arith.constant 0.000000e+00 : f32
    %142 = vector.broadcast %cst_44 : f32 to vector<16x16xf32>
    %143 = arith.subf %142, %141 : vector<16x16xf32>
    %cst_45 = arith.constant 0.353553385 : f32
    %144 = vector.broadcast %cst_45 : f32 to vector<16x16xf32>
    %145 = arith.mulf %143, %144 : vector<16x16xf32>
    %cst_46 = arith.constant 0xFF800000 : f32
    %146 = vector.broadcast %cst_46 : f32 to vector<16x16xf32>
    %147 = arith.select %34, %145, %146 : vector<16x16xi1>, vector<16x16xf32>
    %cst_47 = arith.constant dense<0xFF800000> : vector<16xf32>
    %148 = vector.multi_reduction <maximumf>, %147, %cst_47 [1] : vector<16x16xf32> to vector<16xf32>
    %149 = vector.shape_cast %148 : vector<16xf32> to vector<16x1xf32>
    %150 = vector.broadcast %149 : vector<16x1xf32> to vector<16x16xf32>
    %151 = arith.subf %147, %150 : vector<16x16xf32>
    %152 = math.exp %151 : vector<16x16xf32>
    %cst_48 = arith.constant dense<0.000000e+00> : vector<16xf32>
    %153 = vector.multi_reduction <add>, %152, %cst_48 [1] : vector<16x16xf32> to vector<16xf32>
    %154 = vector.shape_cast %153 : vector<16xf32> to vector<16x1xf32>
    %155 = tpu.reciprocal %154 : vector<16x1xf32> -> vector<16x1xf32>
    %156 = vector.broadcast %155 : vector<16x1xf32> to vector<16x16xf32>
    %157 = arith.mulf %152, %156 : vector<16x16xf32>
    %cst_49 = arith.constant dense<0.000000e+00> : vector<16x8xf32>
    %158 = tpu.matmul %157, %124, %cst_49 {dimension_numbers = #tpu.dot_dimension_numbers<[1], [0], [0], [1], [0, 0, 1, 1], [], []>} : vector<16x16xf32>, vector<16x8xf32>, vector<16x8xf32> -> vector<16x8xf32>
    %159 = vector.extract_strided_slice %45 {offsets = [0, 24], sizes = [16, 8], strides = [1, 1]} : vector<16x32xf32> to vector<16x8xf32>
    %160 = vector.extract_strided_slice %46 {offsets = [0, 24], sizes = [16, 8], strides = [1, 1]} : vector<16x32xf32> to vector<16x8xf32>
    %161 = vector.extract_strided_slice %47 {offsets = [0, 24], sizes = [16, 8], strides = [1, 1]} : vector<16x32xf32> to vector<16x8xf32>
    %cst_50 = arith.constant dense<0.000000e+00> : vector<16x16xf32>
    %162 = tpu.matmul %159, %160, %cst_50 {dimension_numbers = #tpu.dot_dimension_numbers<[1], [1], [0], [0], [0, 0, 1, 0], [], []>} : vector<16x8xf32>, vector<16x8xf32>, vector<16x16xf32> -> vector<16x16xf32>
    %163 = arith.mulf %159, %159 : vector<16x8xf32>
    %cst_51 = arith.constant dense<0.000000e+00> : vector<16xf32>
    %164 = vector.multi_reduction <add>, %163, %cst_51 [1] : vector<16x8xf32> to vector<16xf32>
    %165 = vector.shape_cast %164 : vector<16xf32> to vector<16x1xf32>
    %166 = arith.mulf %160, %160 : vector<16x8xf32>
    %cst_52 = arith.constant dense<0.000000e+00> : vector<16xf32>
    %167 = vector.multi_reduction <add>, %166, %cst_52 [1] : vector<16x8xf32> to vector<16xf32>
    %168 = vector.shape_cast %167 : vector<16xf32> to vector<16x1xf32>
    %169 = tpu.transpose %168, [1, 0] : vector<16x1xf32> -> vector<1x16xf32>
    %170 = vector.broadcast %165 : vector<16x1xf32> to vector<16x16xf32>
    %171 = vector.broadcast %169 : vector<1x16xf32> to vector<16x16xf32>
    %172 = arith.addf %170, %171 : vector<16x16xf32>
    %cst_53 = arith.constant 2.000000e+00 : f32
    %173 = vector.broadcast %cst_53 : f32 to vector<16x16xf32>
    %174 = arith.mulf %173, %162 : vector<16x16xf32>
    %175 = arith.subf %172, %174 : vector<16x16xf32>
    %cst_54 = arith.constant 0.000000e+00 : f32
    %176 = vector.broadcast %cst_54 : f32 to vector<16x16xf32>
    %177 = arith.maximumf %175, %176 : vector<16x16xf32>
    %178 = math.sqrt %177 : vector<16x16xf32>
    %cst_55 = arith.constant 0.000000e+00 : f32
    %179 = vector.broadcast %cst_55 : f32 to vector<16x16xf32>
    %180 = arith.subf %179, %178 : vector<16x16xf32>
    %cst_56 = arith.constant 0.353553385 : f32
    %181 = vector.broadcast %cst_56 : f32 to vector<16x16xf32>
    %182 = arith.mulf %180, %181 : vector<16x16xf32>
    %cst_57 = arith.constant 0xFF800000 : f32
    %183 = vector.broadcast %cst_57 : f32 to vector<16x16xf32>
    %184 = arith.select %34, %182, %183 : vector<16x16xi1>, vector<16x16xf32>
    %cst_58 = arith.constant dense<0xFF800000> : vector<16xf32>
    %185 = vector.multi_reduction <maximumf>, %184, %cst_58 [1] : vector<16x16xf32> to vector<16xf32>
    %186 = vector.shape_cast %185 : vector<16xf32> to vector<16x1xf32>
    %187 = vector.broadcast %186 : vector<16x1xf32> to vector<16x16xf32>
    %188 = arith.subf %184, %187 : vector<16x16xf32>
    %189 = math.exp %188 : vector<16x16xf32>
    %cst_59 = arith.constant dense<0.000000e+00> : vector<16xf32>
    %190 = vector.multi_reduction <add>, %189, %cst_59 [1] : vector<16x16xf32> to vector<16xf32>
    %191 = vector.shape_cast %190 : vector<16xf32> to vector<16x1xf32>
    %192 = tpu.reciprocal %191 : vector<16x1xf32> -> vector<16x1xf32>
    %193 = vector.broadcast %192 : vector<16x1xf32> to vector<16x16xf32>
    %194 = arith.mulf %189, %193 : vector<16x16xf32>
    %cst_60 = arith.constant dense<0.000000e+00> : vector<16x8xf32>
    %195 = tpu.matmul %194, %161, %cst_60 {dimension_numbers = #tpu.dot_dimension_numbers<[1], [0], [0], [1], [0, 0, 1, 1], [], []>} : vector<16x16xf32>, vector<16x8xf32>, vector<16x8xf32> -> vector<16x8xf32>
    %196 = tpu.concatenate %84, %121, %158, %195 in 1 : vector<16x8xf32>, vector<16x8xf32>, vector<16x8xf32>, vector<16x8xf32> -> vector<16x32xf32>
    %197 = arith.truncf %196 : vector<16x32xf32> to vector<16x32xbf16>
    %c0_61 = arith.constant 0 : index
    %c0_62 = arith.constant 0 : index
    %c0_63 = arith.constant 0 : index
    %198 = vector.load %arg4[%c0_61, %c0_62, %c0_63] : memref<2x32x32xbf16, #tpu.memory_space<vmem>>, vector<1x32x32xbf16>
    %199 = vector.shape_cast %198 : vector<1x32x32xbf16> to vector<32x32xbf16>
    %cst_64 = arith.constant dense<0.000000e+00> : vector<16x32xf32>
    %200 = tpu.matmul %197, %199, %cst_64 {dimension_numbers = #tpu.dot_dimension_numbers<[1], [0], [0], [1], [0, 0, 1, 1], [], []>} : vector<16x32xbf16>, vector<32x32xbf16>, vector<16x32xf32> -> vector<16x32xf32>
    %c0_65 = arith.constant 0 : index
    %c0_66 = arith.constant 0 : index
    %c0_67 = arith.constant 0 : index
    %201 = vector.load %arg5[%c0_65, %c0_66, %c0_67] : memref<2x1x32xf32, #tpu.memory_space<vmem>>, vector<1x1x32xf32>
    %202 = vector.shape_cast %201 : vector<1x1x32xf32> to vector<1x32xf32>
    %203 = vector.broadcast %202 : vector<1x32xf32> to vector<16x32xf32>
    %204 = arith.addf %200, %203 : vector<16x32xf32>
    %205 = arith.addf %36, %204 : vector<16x32xf32>
    %cst_68 = arith.constant dense<0.000000e+00> : vector<16xf32>
    %206 = vector.multi_reduction <add>, %205, %cst_68 [1] : vector<16x32xf32> to vector<16xf32>
    %207 = vector.shape_cast %206 : vector<16xf32> to vector<16x1xf32>
    %cst_69 = arith.constant 3.200000e+01 : f32
    %208 = vector.broadcast %cst_69 : f32 to vector<16x1xf32>
    %209 = arith.divf %207, %208 : vector<16x1xf32>
    %210 = vector.broadcast %209 : vector<16x1xf32> to vector<16x32xf32>
    %211 = arith.subf %205, %210 : vector<16x32xf32>
    %212 = vector.broadcast %209 : vector<16x1xf32> to vector<16x32xf32>
    %213 = arith.subf %205, %212 : vector<16x32xf32>
    %214 = arith.mulf %211, %213 : vector<16x32xf32>
    %cst_70 = arith.constant dense<0.000000e+00> : vector<16xf32>
    %215 = vector.multi_reduction <add>, %214, %cst_70 [1] : vector<16x32xf32> to vector<16xf32>
    %216 = vector.shape_cast %215 : vector<16xf32> to vector<16x1xf32>
    %cst_71 = arith.constant 3.200000e+01 : f32
    %217 = vector.broadcast %cst_71 : f32 to vector<16x1xf32>
    %218 = arith.divf %216, %217 : vector<16x1xf32>
    %219 = vector.broadcast %209 : vector<16x1xf32> to vector<16x32xf32>
    %220 = arith.subf %205, %219 : vector<16x32xf32>
    %cst_72 = arith.constant 9.99999974E-6 : f32
    %221 = vector.broadcast %cst_72 : f32 to vector<16x1xf32>
    %222 = arith.addf %218, %221 : vector<16x1xf32>
    %223 = math.rsqrt %222 : vector<16x1xf32>
    %224 = vector.broadcast %223 : vector<16x1xf32> to vector<16x32xf32>
    %225 = arith.mulf %220, %224 : vector<16x32xf32>
    %c0_73 = arith.constant 0 : index
    %c0_74 = arith.constant 0 : index
    %c0_75 = arith.constant 0 : index
    %226 = vector.load %arg6[%c0_73, %c0_74, %c0_75] : memref<2x1x32xf32, #tpu.memory_space<vmem>>, vector<1x1x32xf32>
    %227 = vector.shape_cast %226 : vector<1x1x32xf32> to vector<1x32xf32>
    %228 = vector.broadcast %227 : vector<1x32xf32> to vector<16x32xf32>
    %229 = arith.mulf %225, %228 : vector<16x32xf32>
    %c0_76 = arith.constant 0 : index
    %c0_77 = arith.constant 0 : index
    %c0_78 = arith.constant 0 : index
    %230 = vector.load %arg7[%c0_76, %c0_77, %c0_78] : memref<2x1x32xf32, #tpu.memory_space<vmem>>, vector<1x1x32xf32>
    %231 = vector.shape_cast %230 : vector<1x1x32xf32> to vector<1x32xf32>
    %232 = vector.broadcast %231 : vector<1x32xf32> to vector<16x32xf32>
    %233 = arith.addf %229, %232 : vector<16x32xf32>
    %234 = arith.truncf %233 : vector<16x32xf32> to vector<16x32xbf16>
    %c0_79 = arith.constant 0 : index
    %c0_80 = arith.constant 0 : index
    %c0_81 = arith.constant 0 : index
    %235 = vector.load %arg8[%c0_79, %c0_80, %c0_81] : memref<2x32x2048xbf16, #tpu.memory_space<vmem>>, vector<1x32x2048xbf16>
    %236 = vector.shape_cast %235 : vector<1x32x2048xbf16> to vector<32x2048xbf16>
    %cst_82 = arith.constant dense<0.000000e+00> : vector<16x2048xf32>
    %237 = tpu.matmul %234, %236, %cst_82 {dimension_numbers = #tpu.dot_dimension_numbers<[1], [0], [0], [1], [0, 0, 1, 1], [], []>} : vector<16x32xbf16>, vector<32x2048xbf16>, vector<16x2048xf32> -> vector<16x2048xf32>
    %c0_83 = arith.constant 0 : index
    %c0_84 = arith.constant 0 : index
    %c0_85 = arith.constant 0 : index
    %238 = vector.load %arg9[%c0_83, %c0_84, %c0_85] : memref<2x1x2048xf32, #tpu.memory_space<vmem>>, vector<1x1x2048xf32>
    %239 = vector.shape_cast %238 : vector<1x1x2048xf32> to vector<1x2048xf32>
    %240 = vector.broadcast %239 : vector<1x2048xf32> to vector<16x2048xf32>
    %241 = arith.addf %237, %240 : vector<16x2048xf32>
    %cst_86 = arith.constant 0.000000e+00 : f32
    %242 = vector.broadcast %cst_86 : f32 to vector<16x2048xf32>
    %243 = arith.maximumf %241, %242 : vector<16x2048xf32>
    %244 = arith.truncf %243 : vector<16x2048xf32> to vector<16x2048xbf16>
    %c0_87 = arith.constant 0 : index
    %c0_88 = arith.constant 0 : index
    %c0_89 = arith.constant 0 : index
    %245 = vector.load %arg10[%c0_87, %c0_88, %c0_89] : memref<2x2048x32xbf16, #tpu.memory_space<vmem>>, vector<1x2048x32xbf16>
    %246 = vector.shape_cast %245 : vector<1x2048x32xbf16> to vector<2048x32xbf16>
    %cst_90 = arith.constant dense<0.000000e+00> : vector<16x32xf32>
    %247 = tpu.matmul %244, %246, %cst_90 {dimension_numbers = #tpu.dot_dimension_numbers<[1], [0], [0], [1], [0, 0, 1, 1], [], []>} : vector<16x2048xbf16>, vector<2048x32xbf16>, vector<16x32xf32> -> vector<16x32xf32>
    %c0_91 = arith.constant 0 : index
    %c0_92 = arith.constant 0 : index
    %c0_93 = arith.constant 0 : index
    %248 = vector.load %arg11[%c0_91, %c0_92, %c0_93] : memref<2x1x32xf32, #tpu.memory_space<vmem>>, vector<1x1x32xf32>
    %249 = vector.shape_cast %248 : vector<1x1x32xf32> to vector<1x32xf32>
    %250 = vector.broadcast %249 : vector<1x32xf32> to vector<16x32xf32>
    %251 = arith.addf %247, %250 : vector<16x32xf32>
    %252 = arith.addf %233, %251 : vector<16x32xf32>
    %cst_94 = arith.constant dense<0.000000e+00> : vector<16xf32>
    %253 = vector.multi_reduction <add>, %252, %cst_94 [1] : vector<16x32xf32> to vector<16xf32>
    %254 = vector.shape_cast %253 : vector<16xf32> to vector<16x1xf32>
    %cst_95 = arith.constant 3.200000e+01 : f32
    %255 = vector.broadcast %cst_95 : f32 to vector<16x1xf32>
    %256 = arith.divf %254, %255 : vector<16x1xf32>
    %257 = vector.broadcast %256 : vector<16x1xf32> to vector<16x32xf32>
    %258 = arith.subf %252, %257 : vector<16x32xf32>
    %259 = vector.broadcast %256 : vector<16x1xf32> to vector<16x32xf32>
    %260 = arith.subf %252, %259 : vector<16x32xf32>
    %261 = arith.mulf %258, %260 : vector<16x32xf32>
    %cst_96 = arith.constant dense<0.000000e+00> : vector<16xf32>
    %262 = vector.multi_reduction <add>, %261, %cst_96 [1] : vector<16x32xf32> to vector<16xf32>
    %263 = vector.shape_cast %262 : vector<16xf32> to vector<16x1xf32>
    %cst_97 = arith.constant 3.200000e+01 : f32
    %264 = vector.broadcast %cst_97 : f32 to vector<16x1xf32>
    %265 = arith.divf %263, %264 : vector<16x1xf32>
    %266 = vector.broadcast %256 : vector<16x1xf32> to vector<16x32xf32>
    %267 = arith.subf %252, %266 : vector<16x32xf32>
    %cst_98 = arith.constant 9.99999974E-6 : f32
    %268 = vector.broadcast %cst_98 : f32 to vector<16x1xf32>
    %269 = arith.addf %265, %268 : vector<16x1xf32>
    %270 = math.rsqrt %269 : vector<16x1xf32>
    %271 = vector.broadcast %270 : vector<16x1xf32> to vector<16x32xf32>
    %272 = arith.mulf %267, %271 : vector<16x32xf32>
    %c0_99 = arith.constant 0 : index
    %c0_100 = arith.constant 0 : index
    %c0_101 = arith.constant 0 : index
    %273 = vector.load %arg12[%c0_99, %c0_100, %c0_101] : memref<2x1x32xf32, #tpu.memory_space<vmem>>, vector<1x1x32xf32>
    %274 = vector.shape_cast %273 : vector<1x1x32xf32> to vector<1x32xf32>
    %275 = vector.broadcast %274 : vector<1x32xf32> to vector<16x32xf32>
    %276 = arith.mulf %272, %275 : vector<16x32xf32>
    %c0_102 = arith.constant 0 : index
    %c0_103 = arith.constant 0 : index
    %c0_104 = arith.constant 0 : index
    %277 = vector.load %arg13[%c0_102, %c0_103, %c0_104] : memref<2x1x32xf32, #tpu.memory_space<vmem>>, vector<1x1x32xf32>
    %278 = vector.shape_cast %277 : vector<1x1x32xf32> to vector<1x32xf32>
    %279 = vector.broadcast %278 : vector<1x32xf32> to vector<16x32xf32>
    %280 = arith.addf %276, %279 : vector<16x32xf32>
    %281 = arith.truncf %280 : vector<16x32xf32> to vector<16x32xbf16>
    %c1 = arith.constant 1 : index
    %c0_105 = arith.constant 0 : index
    %c0_106 = arith.constant 0 : index
    %282 = vector.load %arg2[%c1, %c0_105, %c0_106] : memref<2x32x96xbf16, #tpu.memory_space<vmem>>, vector<1x32x96xbf16>
    %283 = vector.shape_cast %282 : vector<1x32x96xbf16> to vector<32x96xbf16>
    %cst_107 = arith.constant dense<0.000000e+00> : vector<16x96xf32>
    %284 = tpu.matmul %281, %283, %cst_107 {dimension_numbers = #tpu.dot_dimension_numbers<[1], [0], [0], [1], [0, 0, 1, 1], [], []>} : vector<16x32xbf16>, vector<32x96xbf16>, vector<16x96xf32> -> vector<16x96xf32>
    %c1_108 = arith.constant 1 : index
    %c0_109 = arith.constant 0 : index
    %c0_110 = arith.constant 0 : index
    %285 = vector.load %arg3[%c1_108, %c0_109, %c0_110] : memref<2x1x96xf32, #tpu.memory_space<vmem>>, vector<1x1x96xf32>
    %286 = vector.shape_cast %285 : vector<1x1x96xf32> to vector<1x96xf32>
    %287 = vector.broadcast %286 : vector<1x96xf32> to vector<16x96xf32>
    %288 = arith.addf %284, %287 : vector<16x96xf32>
    %289 = vector.extract_strided_slice %288 {offsets = [0, 0], sizes = [16, 32], strides = [1, 1]} : vector<16x96xf32> to vector<16x32xf32>
    %290 = vector.extract_strided_slice %288 {offsets = [0, 32], sizes = [16, 32], strides = [1, 1]} : vector<16x96xf32> to vector<16x32xf32>
    %291 = vector.extract_strided_slice %288 {offsets = [0, 64], sizes = [16, 32], strides = [1, 1]} : vector<16x96xf32> to vector<16x32xf32>
    %292 = vector.extract_strided_slice %289 {offsets = [0, 0], sizes = [16, 8], strides = [1, 1]} : vector<16x32xf32> to vector<16x8xf32>
    %293 = vector.extract_strided_slice %290 {offsets = [0, 0], sizes = [16, 8], strides = [1, 1]} : vector<16x32xf32> to vector<16x8xf32>
    %294 = vector.extract_strided_slice %291 {offsets = [0, 0], sizes = [16, 8], strides = [1, 1]} : vector<16x32xf32> to vector<16x8xf32>
    %cst_111 = arith.constant dense<0.000000e+00> : vector<16x16xf32>
    %295 = tpu.matmul %292, %293, %cst_111 {dimension_numbers = #tpu.dot_dimension_numbers<[1], [1], [0], [0], [0, 0, 1, 0], [], []>} : vector<16x8xf32>, vector<16x8xf32>, vector<16x16xf32> -> vector<16x16xf32>
    %296 = arith.mulf %292, %292 : vector<16x8xf32>
    %cst_112 = arith.constant dense<0.000000e+00> : vector<16xf32>
    %297 = vector.multi_reduction <add>, %296, %cst_112 [1] : vector<16x8xf32> to vector<16xf32>
    %298 = vector.shape_cast %297 : vector<16xf32> to vector<16x1xf32>
    %299 = arith.mulf %293, %293 : vector<16x8xf32>
    %cst_113 = arith.constant dense<0.000000e+00> : vector<16xf32>
    %300 = vector.multi_reduction <add>, %299, %cst_113 [1] : vector<16x8xf32> to vector<16xf32>
    %301 = vector.shape_cast %300 : vector<16xf32> to vector<16x1xf32>
    %302 = tpu.transpose %301, [1, 0] : vector<16x1xf32> -> vector<1x16xf32>
    %303 = vector.broadcast %298 : vector<16x1xf32> to vector<16x16xf32>
    %304 = vector.broadcast %302 : vector<1x16xf32> to vector<16x16xf32>
    %305 = arith.addf %303, %304 : vector<16x16xf32>
    %cst_114 = arith.constant 2.000000e+00 : f32
    %306 = vector.broadcast %cst_114 : f32 to vector<16x16xf32>
    %307 = arith.mulf %306, %295 : vector<16x16xf32>
    %308 = arith.subf %305, %307 : vector<16x16xf32>
    %cst_115 = arith.constant 0.000000e+00 : f32
    %309 = vector.broadcast %cst_115 : f32 to vector<16x16xf32>
    %310 = arith.maximumf %308, %309 : vector<16x16xf32>
    %311 = math.sqrt %310 : vector<16x16xf32>
    %cst_116 = arith.constant 0.000000e+00 : f32
    %312 = vector.broadcast %cst_116 : f32 to vector<16x16xf32>
    %313 = arith.subf %312, %311 : vector<16x16xf32>
    %cst_117 = arith.constant 0.353553385 : f32
    %314 = vector.broadcast %cst_117 : f32 to vector<16x16xf32>
    %315 = arith.mulf %313, %314 : vector<16x16xf32>
    %cst_118 = arith.constant 0xFF800000 : f32
    %316 = vector.broadcast %cst_118 : f32 to vector<16x16xf32>
    %317 = arith.select %34, %315, %316 : vector<16x16xi1>, vector<16x16xf32>
    %cst_119 = arith.constant dense<0xFF800000> : vector<16xf32>
    %318 = vector.multi_reduction <maximumf>, %317, %cst_119 [1] : vector<16x16xf32> to vector<16xf32>
    %319 = vector.shape_cast %318 : vector<16xf32> to vector<16x1xf32>
    %320 = vector.broadcast %319 : vector<16x1xf32> to vector<16x16xf32>
    %321 = arith.subf %317, %320 : vector<16x16xf32>
    %322 = math.exp %321 : vector<16x16xf32>
    %cst_120 = arith.constant dense<0.000000e+00> : vector<16xf32>
    %323 = vector.multi_reduction <add>, %322, %cst_120 [1] : vector<16x16xf32> to vector<16xf32>
    %324 = vector.shape_cast %323 : vector<16xf32> to vector<16x1xf32>
    %325 = tpu.reciprocal %324 : vector<16x1xf32> -> vector<16x1xf32>
    %326 = vector.broadcast %325 : vector<16x1xf32> to vector<16x16xf32>
    %327 = arith.mulf %322, %326 : vector<16x16xf32>
    %cst_121 = arith.constant dense<0.000000e+00> : vector<16x8xf32>
    %328 = tpu.matmul %327, %294, %cst_121 {dimension_numbers = #tpu.dot_dimension_numbers<[1], [0], [0], [1], [0, 0, 1, 1], [], []>} : vector<16x16xf32>, vector<16x8xf32>, vector<16x8xf32> -> vector<16x8xf32>
    %329 = vector.extract_strided_slice %289 {offsets = [0, 8], sizes = [16, 8], strides = [1, 1]} : vector<16x32xf32> to vector<16x8xf32>
    %330 = vector.extract_strided_slice %290 {offsets = [0, 8], sizes = [16, 8], strides = [1, 1]} : vector<16x32xf32> to vector<16x8xf32>
    %331 = vector.extract_strided_slice %291 {offsets = [0, 8], sizes = [16, 8], strides = [1, 1]} : vector<16x32xf32> to vector<16x8xf32>
    %cst_122 = arith.constant dense<0.000000e+00> : vector<16x16xf32>
    %332 = tpu.matmul %329, %330, %cst_122 {dimension_numbers = #tpu.dot_dimension_numbers<[1], [1], [0], [0], [0, 0, 1, 0], [], []>} : vector<16x8xf32>, vector<16x8xf32>, vector<16x16xf32> -> vector<16x16xf32>
    %333 = arith.mulf %329, %329 : vector<16x8xf32>
    %cst_123 = arith.constant dense<0.000000e+00> : vector<16xf32>
    %334 = vector.multi_reduction <add>, %333, %cst_123 [1] : vector<16x8xf32> to vector<16xf32>
    %335 = vector.shape_cast %334 : vector<16xf32> to vector<16x1xf32>
    %336 = arith.mulf %330, %330 : vector<16x8xf32>
    %cst_124 = arith.constant dense<0.000000e+00> : vector<16xf32>
    %337 = vector.multi_reduction <add>, %336, %cst_124 [1] : vector<16x8xf32> to vector<16xf32>
    %338 = vector.shape_cast %337 : vector<16xf32> to vector<16x1xf32>
    %339 = tpu.transpose %338, [1, 0] : vector<16x1xf32> -> vector<1x16xf32>
    %340 = vector.broadcast %335 : vector<16x1xf32> to vector<16x16xf32>
    %341 = vector.broadcast %339 : vector<1x16xf32> to vector<16x16xf32>
    %342 = arith.addf %340, %341 : vector<16x16xf32>
    %cst_125 = arith.constant 2.000000e+00 : f32
    %343 = vector.broadcast %cst_125 : f32 to vector<16x16xf32>
    %344 = arith.mulf %343, %332 : vector<16x16xf32>
    %345 = arith.subf %342, %344 : vector<16x16xf32>
    %cst_126 = arith.constant 0.000000e+00 : f32
    %346 = vector.broadcast %cst_126 : f32 to vector<16x16xf32>
    %347 = arith.maximumf %345, %346 : vector<16x16xf32>
    %348 = math.sqrt %347 : vector<16x16xf32>
    %cst_127 = arith.constant 0.000000e+00 : f32
    %349 = vector.broadcast %cst_127 : f32 to vector<16x16xf32>
    %350 = arith.subf %349, %348 : vector<16x16xf32>
    %cst_128 = arith.constant 0.353553385 : f32
    %351 = vector.broadcast %cst_128 : f32 to vector<16x16xf32>
    %352 = arith.mulf %350, %351 : vector<16x16xf32>
    %cst_129 = arith.constant 0xFF800000 : f32
    %353 = vector.broadcast %cst_129 : f32 to vector<16x16xf32>
    %354 = arith.select %34, %352, %353 : vector<16x16xi1>, vector<16x16xf32>
    %cst_130 = arith.constant dense<0xFF800000> : vector<16xf32>
    %355 = vector.multi_reduction <maximumf>, %354, %cst_130 [1] : vector<16x16xf32> to vector<16xf32>
    %356 = vector.shape_cast %355 : vector<16xf32> to vector<16x1xf32>
    %357 = vector.broadcast %356 : vector<16x1xf32> to vector<16x16xf32>
    %358 = arith.subf %354, %357 : vector<16x16xf32>
    %359 = math.exp %358 : vector<16x16xf32>
    %cst_131 = arith.constant dense<0.000000e+00> : vector<16xf32>
    %360 = vector.multi_reduction <add>, %359, %cst_131 [1] : vector<16x16xf32> to vector<16xf32>
    %361 = vector.shape_cast %360 : vector<16xf32> to vector<16x1xf32>
    %362 = tpu.reciprocal %361 : vector<16x1xf32> -> vector<16x1xf32>
    %363 = vector.broadcast %362 : vector<16x1xf32> to vector<16x16xf32>
    %364 = arith.mulf %359, %363 : vector<16x16xf32>
    %cst_132 = arith.constant dense<0.000000e+00> : vector<16x8xf32>
    %365 = tpu.matmul %364, %331, %cst_132 {dimension_numbers = #tpu.dot_dimension_numbers<[1], [0], [0], [1], [0, 0, 1, 1], [], []>} : vector<16x16xf32>, vector<16x8xf32>, vector<16x8xf32> -> vector<16x8xf32>
    %366 = vector.extract_strided_slice %289 {offsets = [0, 16], sizes = [16, 8], strides = [1, 1]} : vector<16x32xf32> to vector<16x8xf32>
    %367 = vector.extract_strided_slice %290 {offsets = [0, 16], sizes = [16, 8], strides = [1, 1]} : vector<16x32xf32> to vector<16x8xf32>
    %368 = vector.extract_strided_slice %291 {offsets = [0, 16], sizes = [16, 8], strides = [1, 1]} : vector<16x32xf32> to vector<16x8xf32>
    %cst_133 = arith.constant dense<0.000000e+00> : vector<16x16xf32>
    %369 = tpu.matmul %366, %367, %cst_133 {dimension_numbers = #tpu.dot_dimension_numbers<[1], [1], [0], [0], [0, 0, 1, 0], [], []>} : vector<16x8xf32>, vector<16x8xf32>, vector<16x16xf32> -> vector<16x16xf32>
    %370 = arith.mulf %366, %366 : vector<16x8xf32>
    %cst_134 = arith.constant dense<0.000000e+00> : vector<16xf32>
    %371 = vector.multi_reduction <add>, %370, %cst_134 [1] : vector<16x8xf32> to vector<16xf32>
    %372 = vector.shape_cast %371 : vector<16xf32> to vector<16x1xf32>
    %373 = arith.mulf %367, %367 : vector<16x8xf32>
    %cst_135 = arith.constant dense<0.000000e+00> : vector<16xf32>
    %374 = vector.multi_reduction <add>, %373, %cst_135 [1] : vector<16x8xf32> to vector<16xf32>
    %375 = vector.shape_cast %374 : vector<16xf32> to vector<16x1xf32>
    %376 = tpu.transpose %375, [1, 0] : vector<16x1xf32> -> vector<1x16xf32>
    %377 = vector.broadcast %372 : vector<16x1xf32> to vector<16x16xf32>
    %378 = vector.broadcast %376 : vector<1x16xf32> to vector<16x16xf32>
    %379 = arith.addf %377, %378 : vector<16x16xf32>
    %cst_136 = arith.constant 2.000000e+00 : f32
    %380 = vector.broadcast %cst_136 : f32 to vector<16x16xf32>
    %381 = arith.mulf %380, %369 : vector<16x16xf32>
    %382 = arith.subf %379, %381 : vector<16x16xf32>
    %cst_137 = arith.constant 0.000000e+00 : f32
    %383 = vector.broadcast %cst_137 : f32 to vector<16x16xf32>
    %384 = arith.maximumf %382, %383 : vector<16x16xf32>
    %385 = math.sqrt %384 : vector<16x16xf32>
    %cst_138 = arith.constant 0.000000e+00 : f32
    %386 = vector.broadcast %cst_138 : f32 to vector<16x16xf32>
    %387 = arith.subf %386, %385 : vector<16x16xf32>
    %cst_139 = arith.constant 0.353553385 : f32
    %388 = vector.broadcast %cst_139 : f32 to vector<16x16xf32>
    %389 = arith.mulf %387, %388 : vector<16x16xf32>
    %cst_140 = arith.constant 0xFF800000 : f32
    %390 = vector.broadcast %cst_140 : f32 to vector<16x16xf32>
    %391 = arith.select %34, %389, %390 : vector<16x16xi1>, vector<16x16xf32>
    %cst_141 = arith.constant dense<0xFF800000> : vector<16xf32>
    %392 = vector.multi_reduction <maximumf>, %391, %cst_141 [1] : vector<16x16xf32> to vector<16xf32>
    %393 = vector.shape_cast %392 : vector<16xf32> to vector<16x1xf32>
    %394 = vector.broadcast %393 : vector<16x1xf32> to vector<16x16xf32>
    %395 = arith.subf %391, %394 : vector<16x16xf32>
    %396 = math.exp %395 : vector<16x16xf32>
    %cst_142 = arith.constant dense<0.000000e+00> : vector<16xf32>
    %397 = vector.multi_reduction <add>, %396, %cst_142 [1] : vector<16x16xf32> to vector<16xf32>
    %398 = vector.shape_cast %397 : vector<16xf32> to vector<16x1xf32>
    %399 = tpu.reciprocal %398 : vector<16x1xf32> -> vector<16x1xf32>
    %400 = vector.broadcast %399 : vector<16x1xf32> to vector<16x16xf32>
    %401 = arith.mulf %396, %400 : vector<16x16xf32>
    %cst_143 = arith.constant dense<0.000000e+00> : vector<16x8xf32>
    %402 = tpu.matmul %401, %368, %cst_143 {dimension_numbers = #tpu.dot_dimension_numbers<[1], [0], [0], [1], [0, 0, 1, 1], [], []>} : vector<16x16xf32>, vector<16x8xf32>, vector<16x8xf32> -> vector<16x8xf32>
    %403 = vector.extract_strided_slice %289 {offsets = [0, 24], sizes = [16, 8], strides = [1, 1]} : vector<16x32xf32> to vector<16x8xf32>
    %404 = vector.extract_strided_slice %290 {offsets = [0, 24], sizes = [16, 8], strides = [1, 1]} : vector<16x32xf32> to vector<16x8xf32>
    %405 = vector.extract_strided_slice %291 {offsets = [0, 24], sizes = [16, 8], strides = [1, 1]} : vector<16x32xf32> to vector<16x8xf32>
    %cst_144 = arith.constant dense<0.000000e+00> : vector<16x16xf32>
    %406 = tpu.matmul %403, %404, %cst_144 {dimension_numbers = #tpu.dot_dimension_numbers<[1], [1], [0], [0], [0, 0, 1, 0], [], []>} : vector<16x8xf32>, vector<16x8xf32>, vector<16x16xf32> -> vector<16x16xf32>
    %407 = arith.mulf %403, %403 : vector<16x8xf32>
    %cst_145 = arith.constant dense<0.000000e+00> : vector<16xf32>
    %408 = vector.multi_reduction <add>, %407, %cst_145 [1] : vector<16x8xf32> to vector<16xf32>
    %409 = vector.shape_cast %408 : vector<16xf32> to vector<16x1xf32>
    %410 = arith.mulf %404, %404 : vector<16x8xf32>
    %cst_146 = arith.constant dense<0.000000e+00> : vector<16xf32>
    %411 = vector.multi_reduction <add>, %410, %cst_146 [1] : vector<16x8xf32> to vector<16xf32>
    %412 = vector.shape_cast %411 : vector<16xf32> to vector<16x1xf32>
    %413 = tpu.transpose %412, [1, 0] : vector<16x1xf32> -> vector<1x16xf32>
    %414 = vector.broadcast %409 : vector<16x1xf32> to vector<16x16xf32>
    %415 = vector.broadcast %413 : vector<1x16xf32> to vector<16x16xf32>
    %416 = arith.addf %414, %415 : vector<16x16xf32>
    %cst_147 = arith.constant 2.000000e+00 : f32
    %417 = vector.broadcast %cst_147 : f32 to vector<16x16xf32>
    %418 = arith.mulf %417, %406 : vector<16x16xf32>
    %419 = arith.subf %416, %418 : vector<16x16xf32>
    %cst_148 = arith.constant 0.000000e+00 : f32
    %420 = vector.broadcast %cst_148 : f32 to vector<16x16xf32>
    %421 = arith.maximumf %419, %420 : vector<16x16xf32>
    %422 = math.sqrt %421 : vector<16x16xf32>
    %cst_149 = arith.constant 0.000000e+00 : f32
    %423 = vector.broadcast %cst_149 : f32 to vector<16x16xf32>
    %424 = arith.subf %423, %422 : vector<16x16xf32>
    %cst_150 = arith.constant 0.353553385 : f32
    %425 = vector.broadcast %cst_150 : f32 to vector<16x16xf32>
    %426 = arith.mulf %424, %425 : vector<16x16xf32>
    %cst_151 = arith.constant 0xFF800000 : f32
    %427 = vector.broadcast %cst_151 : f32 to vector<16x16xf32>
    %428 = arith.select %34, %426, %427 : vector<16x16xi1>, vector<16x16xf32>
    %cst_152 = arith.constant dense<0xFF800000> : vector<16xf32>
    %429 = vector.multi_reduction <maximumf>, %428, %cst_152 [1] : vector<16x16xf32> to vector<16xf32>
    %430 = vector.shape_cast %429 : vector<16xf32> to vector<16x1xf32>
    %431 = vector.broadcast %430 : vector<16x1xf32> to vector<16x16xf32>
    %432 = arith.subf %428, %431 : vector<16x16xf32>
    %433 = math.exp %432 : vector<16x16xf32>
    %cst_153 = arith.constant dense<0.000000e+00> : vector<16xf32>
    %434 = vector.multi_reduction <add>, %433, %cst_153 [1] : vector<16x16xf32> to vector<16xf32>
    %435 = vector.shape_cast %434 : vector<16xf32> to vector<16x1xf32>
    %436 = tpu.reciprocal %435 : vector<16x1xf32> -> vector<16x1xf32>
    %437 = vector.broadcast %436 : vector<16x1xf32> to vector<16x16xf32>
    %438 = arith.mulf %433, %437 : vector<16x16xf32>
    %cst_154 = arith.constant dense<0.000000e+00> : vector<16x8xf32>
    %439 = tpu.matmul %438, %405, %cst_154 {dimension_numbers = #tpu.dot_dimension_numbers<[1], [0], [0], [1], [0, 0, 1, 1], [], []>} : vector<16x16xf32>, vector<16x8xf32>, vector<16x8xf32> -> vector<16x8xf32>
    %440 = tpu.concatenate %328, %365, %402, %439 in 1 : vector<16x8xf32>, vector<16x8xf32>, vector<16x8xf32>, vector<16x8xf32> -> vector<16x32xf32>
    %441 = arith.truncf %440 : vector<16x32xf32> to vector<16x32xbf16>
    %c1_155 = arith.constant 1 : index
    %c0_156 = arith.constant 0 : index
    %c0_157 = arith.constant 0 : index
    %442 = vector.load %arg4[%c1_155, %c0_156, %c0_157] : memref<2x32x32xbf16, #tpu.memory_space<vmem>>, vector<1x32x32xbf16>
    %443 = vector.shape_cast %442 : vector<1x32x32xbf16> to vector<32x32xbf16>
    %cst_158 = arith.constant dense<0.000000e+00> : vector<16x32xf32>
    %444 = tpu.matmul %441, %443, %cst_158 {dimension_numbers = #tpu.dot_dimension_numbers<[1], [0], [0], [1], [0, 0, 1, 1], [], []>} : vector<16x32xbf16>, vector<32x32xbf16>, vector<16x32xf32> -> vector<16x32xf32>
    %c1_159 = arith.constant 1 : index
    %c0_160 = arith.constant 0 : index
    %c0_161 = arith.constant 0 : index
    %445 = vector.load %arg5[%c1_159, %c0_160, %c0_161] : memref<2x1x32xf32, #tpu.memory_space<vmem>>, vector<1x1x32xf32>
    %446 = vector.shape_cast %445 : vector<1x1x32xf32> to vector<1x32xf32>
    %447 = vector.broadcast %446 : vector<1x32xf32> to vector<16x32xf32>
    %448 = arith.addf %444, %447 : vector<16x32xf32>
    %449 = arith.addf %280, %448 : vector<16x32xf32>
    %cst_162 = arith.constant dense<0.000000e+00> : vector<16xf32>
    %450 = vector.multi_reduction <add>, %449, %cst_162 [1] : vector<16x32xf32> to vector<16xf32>
    %451 = vector.shape_cast %450 : vector<16xf32> to vector<16x1xf32>
    %cst_163 = arith.constant 3.200000e+01 : f32
    %452 = vector.broadcast %cst_163 : f32 to vector<16x1xf32>
    %453 = arith.divf %451, %452 : vector<16x1xf32>
    %454 = vector.broadcast %453 : vector<16x1xf32> to vector<16x32xf32>
    %455 = arith.subf %449, %454 : vector<16x32xf32>
    %456 = vector.broadcast %453 : vector<16x1xf32> to vector<16x32xf32>
    %457 = arith.subf %449, %456 : vector<16x32xf32>
    %458 = arith.mulf %455, %457 : vector<16x32xf32>
    %cst_164 = arith.constant dense<0.000000e+00> : vector<16xf32>
    %459 = vector.multi_reduction <add>, %458, %cst_164 [1] : vector<16x32xf32> to vector<16xf32>
    %460 = vector.shape_cast %459 : vector<16xf32> to vector<16x1xf32>
    %cst_165 = arith.constant 3.200000e+01 : f32
    %461 = vector.broadcast %cst_165 : f32 to vector<16x1xf32>
    %462 = arith.divf %460, %461 : vector<16x1xf32>
    %463 = vector.broadcast %453 : vector<16x1xf32> to vector<16x32xf32>
    %464 = arith.subf %449, %463 : vector<16x32xf32>
    %cst_166 = arith.constant 9.99999974E-6 : f32
    %465 = vector.broadcast %cst_166 : f32 to vector<16x1xf32>
    %466 = arith.addf %462, %465 : vector<16x1xf32>
    %467 = math.rsqrt %466 : vector<16x1xf32>
    %468 = vector.broadcast %467 : vector<16x1xf32> to vector<16x32xf32>
    %469 = arith.mulf %464, %468 : vector<16x32xf32>
    %c1_167 = arith.constant 1 : index
    %c0_168 = arith.constant 0 : index
    %c0_169 = arith.constant 0 : index
    %470 = vector.load %arg6[%c1_167, %c0_168, %c0_169] : memref<2x1x32xf32, #tpu.memory_space<vmem>>, vector<1x1x32xf32>
    %471 = vector.shape_cast %470 : vector<1x1x32xf32> to vector<1x32xf32>
    %472 = vector.broadcast %471 : vector<1x32xf32> to vector<16x32xf32>
    %473 = arith.mulf %469, %472 : vector<16x32xf32>
    %c1_170 = arith.constant 1 : index
    %c0_171 = arith.constant 0 : index
    %c0_172 = arith.constant 0 : index
    %474 = vector.load %arg7[%c1_170, %c0_171, %c0_172] : memref<2x1x32xf32, #tpu.memory_space<vmem>>, vector<1x1x32xf32>
    %475 = vector.shape_cast %474 : vector<1x1x32xf32> to vector<1x32xf32>
    %476 = vector.broadcast %475 : vector<1x32xf32> to vector<16x32xf32>
    %477 = arith.addf %473, %476 : vector<16x32xf32>
    %478 = arith.truncf %477 : vector<16x32xf32> to vector<16x32xbf16>
    %c1_173 = arith.constant 1 : index
    %c0_174 = arith.constant 0 : index
    %c0_175 = arith.constant 0 : index
    %479 = vector.load %arg8[%c1_173, %c0_174, %c0_175] : memref<2x32x2048xbf16, #tpu.memory_space<vmem>>, vector<1x32x2048xbf16>
    %480 = vector.shape_cast %479 : vector<1x32x2048xbf16> to vector<32x2048xbf16>
    %cst_176 = arith.constant dense<0.000000e+00> : vector<16x2048xf32>
    %481 = tpu.matmul %478, %480, %cst_176 {dimension_numbers = #tpu.dot_dimension_numbers<[1], [0], [0], [1], [0, 0, 1, 1], [], []>} : vector<16x32xbf16>, vector<32x2048xbf16>, vector<16x2048xf32> -> vector<16x2048xf32>
    %c1_177 = arith.constant 1 : index
    %c0_178 = arith.constant 0 : index
    %c0_179 = arith.constant 0 : index
    %482 = vector.load %arg9[%c1_177, %c0_178, %c0_179] : memref<2x1x2048xf32, #tpu.memory_space<vmem>>, vector<1x1x2048xf32>
    %483 = vector.shape_cast %482 : vector<1x1x2048xf32> to vector<1x2048xf32>
    %484 = vector.broadcast %483 : vector<1x2048xf32> to vector<16x2048xf32>
    %485 = arith.addf %481, %484 : vector<16x2048xf32>
    %cst_180 = arith.constant 0.000000e+00 : f32
    %486 = vector.broadcast %cst_180 : f32 to vector<16x2048xf32>
    %487 = arith.maximumf %485, %486 : vector<16x2048xf32>
    %488 = arith.truncf %487 : vector<16x2048xf32> to vector<16x2048xbf16>
    %c1_181 = arith.constant 1 : index
    %c0_182 = arith.constant 0 : index
    %c0_183 = arith.constant 0 : index
    %489 = vector.load %arg10[%c1_181, %c0_182, %c0_183] : memref<2x2048x32xbf16, #tpu.memory_space<vmem>>, vector<1x2048x32xbf16>
    %490 = vector.shape_cast %489 : vector<1x2048x32xbf16> to vector<2048x32xbf16>
    %cst_184 = arith.constant dense<0.000000e+00> : vector<16x32xf32>
    %491 = tpu.matmul %488, %490, %cst_184 {dimension_numbers = #tpu.dot_dimension_numbers<[1], [0], [0], [1], [0, 0, 1, 1], [], []>} : vector<16x2048xbf16>, vector<2048x32xbf16>, vector<16x32xf32> -> vector<16x32xf32>
    %c1_185 = arith.constant 1 : index
    %c0_186 = arith.constant 0 : index
    %c0_187 = arith.constant 0 : index
    %492 = vector.load %arg11[%c1_185, %c0_186, %c0_187] : memref<2x1x32xf32, #tpu.memory_space<vmem>>, vector<1x1x32xf32>
    %493 = vector.shape_cast %492 : vector<1x1x32xf32> to vector<1x32xf32>
    %494 = vector.broadcast %493 : vector<1x32xf32> to vector<16x32xf32>
    %495 = arith.addf %491, %494 : vector<16x32xf32>
    %496 = arith.addf %477, %495 : vector<16x32xf32>
    %cst_188 = arith.constant dense<0.000000e+00> : vector<16xf32>
    %497 = vector.multi_reduction <add>, %496, %cst_188 [1] : vector<16x32xf32> to vector<16xf32>
    %498 = vector.shape_cast %497 : vector<16xf32> to vector<16x1xf32>
    %cst_189 = arith.constant 3.200000e+01 : f32
    %499 = vector.broadcast %cst_189 : f32 to vector<16x1xf32>
    %500 = arith.divf %498, %499 : vector<16x1xf32>
    %501 = vector.broadcast %500 : vector<16x1xf32> to vector<16x32xf32>
    %502 = arith.subf %496, %501 : vector<16x32xf32>
    %503 = vector.broadcast %500 : vector<16x1xf32> to vector<16x32xf32>
    %504 = arith.subf %496, %503 : vector<16x32xf32>
    %505 = arith.mulf %502, %504 : vector<16x32xf32>
    %cst_190 = arith.constant dense<0.000000e+00> : vector<16xf32>
    %506 = vector.multi_reduction <add>, %505, %cst_190 [1] : vector<16x32xf32> to vector<16xf32>
    %507 = vector.shape_cast %506 : vector<16xf32> to vector<16x1xf32>
    %cst_191 = arith.constant 3.200000e+01 : f32
    %508 = vector.broadcast %cst_191 : f32 to vector<16x1xf32>
    %509 = arith.divf %507, %508 : vector<16x1xf32>
    %510 = vector.broadcast %500 : vector<16x1xf32> to vector<16x32xf32>
    %511 = arith.subf %496, %510 : vector<16x32xf32>
    %cst_192 = arith.constant 9.99999974E-6 : f32
    %512 = vector.broadcast %cst_192 : f32 to vector<16x1xf32>
    %513 = arith.addf %509, %512 : vector<16x1xf32>
    %514 = math.rsqrt %513 : vector<16x1xf32>
    %515 = vector.broadcast %514 : vector<16x1xf32> to vector<16x32xf32>
    %516 = arith.mulf %511, %515 : vector<16x32xf32>
    %c1_193 = arith.constant 1 : index
    %c0_194 = arith.constant 0 : index
    %c0_195 = arith.constant 0 : index
    %517 = vector.load %arg12[%c1_193, %c0_194, %c0_195] : memref<2x1x32xf32, #tpu.memory_space<vmem>>, vector<1x1x32xf32>
    %518 = vector.shape_cast %517 : vector<1x1x32xf32> to vector<1x32xf32>
    %519 = vector.broadcast %518 : vector<1x32xf32> to vector<16x32xf32>
    %520 = arith.mulf %516, %519 : vector<16x32xf32>
    %c1_196 = arith.constant 1 : index
    %c0_197 = arith.constant 0 : index
    %c0_198 = arith.constant 0 : index
    %521 = vector.load %arg13[%c1_196, %c0_197, %c0_198] : memref<2x1x32xf32, #tpu.memory_space<vmem>>, vector<1x1x32xf32>
    %522 = vector.shape_cast %521 : vector<1x1x32xf32> to vector<1x32xf32>
    %523 = vector.broadcast %522 : vector<1x32xf32> to vector<16x32xf32>
    %524 = arith.addf %520, %523 : vector<16x32xf32>
    %525 = vector.shape_cast %524 : vector<16x32xf32> to vector<8x2x32xf32>
    %c0_199 = arith.constant 0 : index
    %c0_200 = arith.constant 0 : index
    %c0_201 = arith.constant 0 : index
    %526 = vector.load %arg14[%c0_199, %c0_200, %c0_201] : memref<8x2x32xf32, #tpu.memory_space<vmem>>, vector<8x2x32xf32>
    tpu.vector_store %arg14[%c0_199, %c0_200, %c0_201], %525 {strides = array<i32>} : memref<8x2x32xf32, #tpu.memory_space<vmem>>, vector<8x2x32xf32>,
    return
  }
  func.func @transform_0(%arg0: i32) -> (i32, i32, i32) {
    %c0_i32 = arith.constant 0 : i32
    %c0_i32_0 = arith.constant 0 : i32
    %c0_i32_1 = arith.constant 0 : i32
    return %c0_i32, %arg0, %c0_i32_0 : i32, i32, i32
  }
  func.func @transform_1(%arg0: i32) -> (i32, i32, i32) {
    %c0_i32 = arith.constant 0 : i32
    %c0_i32_0 = arith.constant 0 : i32
    %c0_i32_1 = arith.constant 0 : i32
    %c0_i32_2 = arith.constant 0 : i32
    return %c0_i32, %c0_i32_0, %c0_i32_1 : i32, i32, i32
  }
  func.func @transform_2(%arg0: i32) -> (i32, i32, i32) {
    %c0_i32 = arith.constant 0 : i32
    %c0_i32_0 = arith.constant 0 : i32
    %c0_i32_1 = arith.constant 0 : i32
    %c0_i32_2 = arith.constant 0 : i32
    return %c0_i32, %c0_i32_0, %c0_i32_1 : i32, i32, i32
  }
  func.func @transform_3(%arg0: i32) -> (i32, i32, i32) {
    %c0_i32 = arith.constant 0 : i32
    %c0_i32_0 = arith.constant 0 : i32
    %c0_i32_1 = arith.constant 0 : i32
    %c0_i32_2 = arith.constant 0 : i32
    return %c0_i32, %c0_i32_0, %c0_i32_1 : i32, i32, i32
  }
  func.func @transform_4(%arg0: i32) -> (i32, i32, i32) {
    %c0_i32 = arith.constant 0 : i32
    %c0_i32_0 = arith.constant 0 : i32
    %c0_i32_1 = arith.constant 0 : i32
    %c0_i32_2 = arith.constant 0 : i32
    return %c0_i32, %c0_i32_0, %c0_i32_1 : i32, i32, i32
  }
  func.func @transform_5(%arg0: i32) -> (i32, i32, i32) {
    %c0_i32 = arith.constant 0 : i32
    %c0_i32_0 = arith.constant 0 : i32
    %c0_i32_1 = arith.constant 0 : i32
    %c0_i32_2 = arith.constant 0 : i32
    return %c0_i32, %c0_i32_0, %c0_i32_1 : i32, i32, i32
  }
  func.func @transform_6(%arg0: i32) -> (i32, i32, i32) {
    %c0_i32 = arith.constant 0 : i32
    %c0_i32_0 = arith.constant 0 : i32
    %c0_i32_1 = arith.constant 0 : i32
    %c0_i32_2 = arith.constant 0 : i32
    return %c0_i32, %c0_i32_0, %c0_i32_1 : i32, i32, i32
  }
  func.func @transform_7(%arg0: i32) -> (i32, i32, i32) {
    %c0_i32 = arith.constant 0 : i32
    %c0_i32_0 = arith.constant 0 : i32
    %c0_i32_1 = arith.constant 0 : i32
    %c0_i32_2 = arith.constant 0 : i32
    return %c0_i32, %c0_i32_0, %c0_i32_1 : i32, i32, i32
  }
  func.func @transform_8(%arg0: i32) -> (i32, i32, i32) {
    %c0_i32 = arith.constant 0 : i32
    %c0_i32_0 = arith.constant 0 : i32
    %c0_i32_1 = arith.constant 0 : i32
    %c0_i32_2 = arith.constant 0 : i32
    return %c0_i32, %c0_i32_0, %c0_i32_1 : i32, i32, i32
  }
  func.func @transform_9(%arg0: i32) -> (i32, i32, i32) {
    %c0_i32 = arith.constant 0 : i32
    %c0_i32_0 = arith.constant 0 : i32
    %c0_i32_1 = arith.constant 0 : i32
    %c0_i32_2 = arith.constant 0 : i32
    return %c0_i32, %c0_i32_0, %c0_i32_1 : i32, i32, i32
  }
  func.func @transform_10(%arg0: i32) -> (i32, i32, i32) {
    %c0_i32 = arith.constant 0 : i32
    %c0_i32_0 = arith.constant 0 : i32
    %c0_i32_1 = arith.constant 0 : i32
    %c0_i32_2 = arith.constant 0 : i32
    return %c0_i32, %c0_i32_0, %c0_i32_1 : i32, i32, i32
  }
  func.func @transform_11(%arg0: i32) -> (i32, i32, i32) {
    %c0_i32 = arith.constant 0 : i32
    %c0_i32_0 = arith.constant 0 : i32
    %c0_i32_1 = arith.constant 0 : i32
    %c0_i32_2 = arith.constant 0 : i32
    return %c0_i32, %c0_i32_0, %c0_i32_1 : i32, i32, i32
  }
  func.func @transform_12(%arg0: i32) -> (i32, i32, i32) {
    %c0_i32 = arith.constant 0 : i32
    %c0_i32_0 = arith.constant 0 : i32
    %c0_i32_1 = arith.constant 0 : i32
    %c0_i32_2 = arith.constant 0 : i32
    return %c0_i32, %c0_i32_0, %c0_i32_1 : i32, i32, i32
  }
  func.func @transform_13(%arg0: i32) -> (i32, i32, i32) {
    %c0_i32 = arith.constant 0 : i32
    %c0_i32_0 = arith.constant 0 : i32
    %c0_i32_1 = arith.constant 0 : i32
    return %c0_i32, %arg0, %c0_i32_0 : i32, i32, i32
  }
}

</mosaic_0001>

<llo_original>
// kernel: tpi_encoder_pallas.1
$region0: #{tpi_encoder_pallas.1}
  #allocation0 [shape = 'u32[]', space=smem, size = 0x4, offset = 0x4, fixed_abs, tag = 'smem constant byte address 0x4 - core index']
  #allocation1 [shape = 'u32[144,128]{1,0:T(1,128)}', space=vmem, size = 0x12000, scoped, tag = 'internal scratch']
  %s0 = inlined_call_operand.vmem [shape: f32[8,2,32], index: 0, kind: input, shape index: {}]
  %s1 = inlined_call_operand.vmem [shape: bf16[2,32,96], index: 1, kind: input, shape index: {}]
  %s2 = inlined_call_operand.vmem [shape: f32[2,1,96], index: 2, kind: input, shape index: {}]
  %s3 = inlined_call_operand.vmem [shape: bf16[2,32,32], index: 3, kind: input, shape index: {}]
  %s4 = inlined_call_operand.vmem [shape: f32[2,1,32], index: 4, kind: input, shape index: {}]
  %s5 = inlined_call_operand.vmem [shape: f32[2,1,32], index: 5, kind: input, shape index: {}]
  %s6 = inlined_call_operand.vmem [shape: f32[2,1,32], index: 6, kind: input, shape index: {}]
  %s7 = inlined_call_operand.vmem [shape: bf16[2,32,2048], index: 7, kind: input, shape index: {}]
  %s8 = inlined_call_operand.vmem [shape: f32[2,1,2048], index: 8, kind: input, shape index: {}]
  %s9 = inlined_call_operand.vmem [shape: bf16[2,2048,32], index: 9, kind: input, shape index: {}]
  %s10 = inlined_call_operand.vmem [shape: f32[2,1,32], index: 10, kind: input, shape index: {}]
  %s11 = inlined_call_operand.vmem [shape: f32[2,1,32], index: 11, kind: input, shape index: {}]
  %s12 = inlined_call_operand.vmem [shape: f32[2,1,32], index: 12, kind: input, shape index: {}]
  %s13 = inlined_call_operand.hbm [shape: f32[8,2,32], index: 13, kind: output, shape index: {}]
  %s14 = sld [smem:[#allocation0]]
  $region62: #{tpi_encoder_pallas.1} parent=0
    _
  %s16 = ssub.s32 1, %s14
  %s17 = scalar_select 0, %s16, %s14
  $region1: #{tpi_encoder_pallas.1} parent=0
    #allocation2 [shape = 'u8[8192]{0}', space=vmem, size = 0x2000, scoped, tag = 'output window, operand 0, single buffered']
    #allocation3 [shape = 's32[1]{0}', space=sflag, size = 0x4, scoped, tag = 'scoped memory for tpi_encoder_pallas.1']
    %18 = vsyncpa [#allocation3], 0
    // Predicated region
    $region2: #{tpi_encoder_pallas.1} parent=1 // pred_check
      _
    $region3: #{tpi_encoder_pallas.1} parent=1 // pred_check_branch
      %20 = sbr.rel (0) target = $region5
    $region4: #{tpi_encoder_pallas.1} parent=1 // pred_region
      _
    $region5: #{tpi_encoder_pallas.1} parent=1 // pred_fallthru
      _
    // Predicated region
    $region6: #{tpi_encoder_pallas.1} parent=1 // pred_check
      _
    $region7: #{tpi_encoder_pallas.1} parent=1 // pred_check_branch
      %22 = sbr.rel (0) target = $region9
    $region8: #{tpi_encoder_pallas.1} parent=1 // pred_region
      _
    $region9: #{tpi_encoder_pallas.1} parent=1 // pred_fallthru
      _
    // Predicated region
    $region10: #{tpi_encoder_pallas.1} parent=1 // pred_check
      _
    $region11: #{tpi_encoder_pallas.1} parent=1 // pred_check_branch
      %24 = sbr.rel (0) target = $region13
    $region12: #{tpi_encoder_pallas.1} parent=1 // pred_region
      _
    $region13: #{tpi_encoder_pallas.1} parent=1 // pred_fallthru
      _
    // Predicated region
    $region14: #{tpi_encoder_pallas.1} parent=1 // pred_check
      _
    $region15: #{tpi_encoder_pallas.1} parent=1 // pred_check_branch
      %26 = sbr.rel (0) target = $region17
    $region16: #{tpi_encoder_pallas.1} parent=1 // pred_region
      _
    $region17: #{tpi_encoder_pallas.1} parent=1 // pred_fallthru
      _
    // Predicated region
    $region18: #{tpi_encoder_pallas.1} parent=1 // pred_check
      _
    $region19: #{tpi_encoder_pallas.1} parent=1 // pred_check_branch
      %28 = sbr.rel (0) target = $region21
    $region20: #{tpi_encoder_pallas.1} parent=1 // pred_region
      _
    $region21: #{tpi_encoder_pallas.1} parent=1 // pred_fallthru
      _
    // Predicated region
    $region22: #{tpi_encoder_pallas.1} parent=1 // pred_check
      _
    $region23: #{tpi_encoder_pallas.1} parent=1 // pred_check_branch
      %30 = sbr.rel (0) target = $region25
    $region24: #{tpi_encoder_pallas.1} parent=1 // pred_region
      _
    $region25: #{tpi_encoder_pallas.1} parent=1 // pred_fallthru
      _
    // Predicated region
    $region26: #{tpi_encoder_pallas.1} parent=1 // pred_check
      _
    $region27: #{tpi_encoder_pallas.1} parent=1 // pred_check_branch
      %32 = sbr.rel (0) target = $region29
    $region28: #{tpi_encoder_pallas.1} parent=1 // pred_region
      _
    $region29: #{tpi_encoder_pallas.1} parent=1 // pred_fallthru
      _
    // Predicated region
    $region30: #{tpi_encoder_pallas.1} parent=1 // pred_check
      _
    $region31: #{tpi_encoder_pallas.1} parent=1 // pred_check_branch
      %34 = sbr.rel (0) target = $region33
    $region32: #{tpi_encoder_pallas.1} parent=1 // pred_region
      _
    $region33: #{tpi_encoder_pallas.1} parent=1 // pred_fallthru
      _
    // Predicated region
    $region34: #{tpi_encoder_pallas.1} parent=1 // pred_check
      _
    $region35: #{tpi_encoder_pallas.1} parent=1 // pred_check_branch
      %36 = sbr.rel (0) target = $region37
    $region36: #{tpi_encoder_pallas.1} parent=1 // pred_region
      _
    $region37: #{tpi_encoder_pallas.1} parent=1 // pred_fallthru
      _
    // Predicated region
    $region38: #{tpi_encoder_pallas.1} parent=1 // pred_check
      _
    $region39: #{tpi_encoder_pallas.1} parent=1 // pred_check_branch
      %38 = sbr.rel (0) target = $region41
    $region40: #{tpi_encoder_pallas.1} parent=1 // pred_region
      _
    $region41: #{tpi_encoder_pallas.1} parent=1 // pred_fallthru
      _
    // Predicated region
    $region42: #{tpi_encoder_pallas.1} parent=1 // pred_check
      _
    $region43: #{tpi_encoder_pallas.1} parent=1 // pred_check_branch
      %40 = sbr.rel (0) target = $region45
    $region44: #{tpi_encoder_pallas.1} parent=1 // pred_region
      _
    $region45: #{tpi_encoder_pallas.1} parent=1 // pred_fallthru
      _
    // Predicated region
    $region46: #{tpi_encoder_pallas.1} parent=1 // pred_check
      _
    $region47: #{tpi_encoder_pallas.1} parent=1 // pred_check_branch
      %42 = sbr.rel (0) target = $region49
    $region48: #{tpi_encoder_pallas.1} parent=1 // pred_region
      _
    $region49: #{tpi_encoder_pallas.1} parent=1 // pred_fallthru
      _
    // Predicated region
    $region50: #{tpi_encoder_pallas.1} parent=1 // pred_check
      _
    $region51: #{tpi_encoder_pallas.1} parent=1 // pred_check_branch
      %44 = sbr.rel (0) target = $region53
    $region52: #{tpi_encoder_pallas.1} parent=1 // pred_region
      _
    $region53: #{tpi_encoder_pallas.1} parent=1 // pred_fallthru
      _
    %v46 = vlaneseq
    %v47 = vshrl.u32 %v46, 7
    %v48 = vadd.s32 %v47, 8
    %v49 = vlaneseq
    %v50 = vand.u32 %v49, 127
    %vm51 = vcmp.lt.s32.totalorder %v47, 0
    %v52 = vsub.s32 0, %v47
    %v53 = vsel %vm51, %v52, %v47
    %v54 = vshrl.u32 %v53, 1
    %v55 = vand.u32 %v53, 1
    %v56 = vsub.s32 0, %v55
    %v57 = vsel %vm51, %v56, %v55
    %vm58 = vcmp.lt.s32.totalorder %v48, 0
    %v59 = vsub.s32 0, %v48
    %v60 = vsel %vm58, %v59, %v48
    %v61 = vshrl.u32 %v60, 1
    %v62 = vand.u32 %v60, 1
    %v63 = vsub.s32 0, %v62
    %v64 = vsel %vm58, %v63, %v62
    %vm65 = vcmp.ne.s32.totalorder %v57, 0
    %vm66 = vcmp.ne.s32.totalorder %v64, 0
    %vm67 = vcmp.lt.s32.totalorder %v57, 0
    %vm68 = vcmp.lt.s32.totalorder %v64, 0
    %vm69 = vmand %vm67, %vm65
    %vm70 = vmand %vm68, %vm66
    %v71 = vadd.s32 %v57, 2
    %v72 = vadd.s32 %v64, 2
    %v73 = vsel %vm69, %v71, %v57
    %v74 = vsel %vm70, %v72, %v64
    %vm75 = vcmp.lt.s32.totalorder %v50, 0
    %v76 = vsub.s32 0, %v50
    %v77 = vsel %vm75, %v76, %v50
    %v78 = vshrl.u32 %v77, 1
    %v79 = vand.u32 %v77, 1
    %v80 = vsub.s32 0, %v79
    %v81 = vsel %vm75, %v80, %v79
    %vm82 = vcmp.ne.s32.totalorder %v81, 0
    %vm83 = vcmp.lt.s32.totalorder %v81, 0
    %vm84 = vmand %vm83, %vm82
    %v85 = vadd.s32 %v81, 2
    %v86 = vsel %vm84, %v85, %v81
    %vm87 = vcmp.eq.s32.totalorder %v73, %v86
    %vm88 = vcmp.eq.s32.totalorder %v74, %v86
    %v89 = vld [vmem:[%s0] sm:$0x3]
    %v90 = vld [vmem:[%s0 + $0x2] sm:$0x3]
    %v91 = vld [vmem:[%s0 + $0x4] sm:$0x3]
    %v92 = vld [vmem:[%s0 + $0x6] sm:$0x3]
    %v93 = vld [vmem:[%s0 + $0x8] sm:$0x3]
    %v94 = vld [vmem:[%s0 + $0xa] sm:$0x3]
    %v95 = vld [vmem:[%s0 + $0xc] sm:$0x3]
    %v96 = vld [vmem:[%s0 + $0xe] sm:$0x3]
    %v105 = vcombine.low %v89, %v90
    %v106 = vcombine.low %v91, %v92
    %v108 = vunpack.c.l.s4 1983009808
    %v109 = vunpack.c.0.s8 %v108
    %v110 = vlaneseq
    %v111 = vshrl.u32 %v110, 7
    %v112 = vsub.s32 %v109, %v111
    %v113 = vrot.slane %v105, %v112
    %v115 = vunpack.c.l.s4 1983009808
    %v116 = vunpack.c.0.s8 %v115
    %v117 = vlaneseq
    %v118 = vshrl.u32 %v117, 7
    %v119 = vsub.s32 %v116, %v118
    %v120 = vrot.slane %v106, %v119
    %v121 = vcombine.low %v113, %v120
    %v122 = vcombine.low %v93, %v94
    %v123 = vcombine.low %v95, %v96
    %v125 = vunpack.c.l.s4 1983009808
    %v126 = vunpack.c.0.s8 %v125
    %v127 = vlaneseq
    %v128 = vshrl.u32 %v127, 7
    %v129 = vsub.s32 %v126, %v128
    %v130 = vrot.slane %v122, %v129
    %v132 = vunpack.c.l.s4 1983009808
    %v133 = vunpack.c.0.s8 %v132
    %v134 = vlaneseq
    %v135 = vshrl.u32 %v134, 7
    %v136 = vsub.s32 %v133, %v135
    %v137 = vrot.slane %v123, %v136
    %v138 = vcombine.low %v130, %v137
    %v141 = vpack.c.bf16 %v138, %v121
    %v142 = vld [vmem:[%s1] sm:$0xf]
    %v143 = vld [vmem:[%s1 + $0x4] sm:$0xf]
    %v144 = vld [vmem:[%s1 + $0x8] sm:$0xf]
    %v145 = vld [vmem:[%s1 + $0xc] sm:$0xf]
    %v146 = vld [vmem:[%s2] sm:$0x1]
    %v148 = vlaneseq
    %v149 = vshrl.u32 %v148, 7
    %v150 = vsub.s32 0, %v149
    %v151 = vrot.slane %v146, %v150
    %v157 = vunpack.c.l.b16 %v142
    %v158 = vunpack.c.l.b16 %v143
    %v159 = vunpack.c.l.b16 %v144
    %v160 = vunpack.c.l.b16 %v145
    %v161 = vpack.c.b16 %v158, %v157
    %v162 = vpack.c.b16 %v160, %v159
    %vm165 = vcmask 261120
    %v167 = vsel %vm165, %v141, 0
    %169 = vmatprep.subr.bf16.mxu0 0
    %170 = vmatpush1.bf16.msra.mxu0 0
    %171 = vmatprep.subr.bf16.mxu0 0
    %172 = vmatpush1.bf16.msra.mxu0 0
    %173 = vmatprep.subr.bf16.mxu0 0
    %174 = vmatpush1.bf16.msra.mxu0 0
    %175 = vmatprep.subr.bf16.mxu0 0
    %176 = vmatpush1.bf16.msra.mxu0 0
    %177 = vmatprep.subr.bf16.mxu0 0
    %178 = vmatpush1.bf16.msra.mxu0 0
    %179 = vmatprep.subr.bf16.mxu0 0
    %180 = vmatpush1.bf16.msra.mxu0 0
    %181 = vmatprep.subr.bf16.mxu0 0
    %182 = vmatpush1.bf16.msra.mxu0 %v162
    %183 = vmatprep.subr.bf16.mxu0 0
    %184 = vmatpush1.bf16.msra.mxu0 %v161
    %185 = vmatprep.subr.bf16.mxu0 0
    %186 = vmatpush2.bf16.msra.mxu0 0
    %187 = vmatprep.subr.bf16.mxu0 0
    %188 = vmatpush2.bf16.msra.mxu0 0
    %189 = vmatprep.subr.bf16.mxu0 0
    %190 = vmatpush2.bf16.msra.mxu0 0
    %191 = vmatprep.subr.bf16.mxu0 0
    %192 = vmatpush2.bf16.msra.mxu0 0
    %193 = vmatprep.subr.bf16.mxu0 0
    %194 = vmatpush2.bf16.msra.mxu0 0
    %195 = vmatprep.subr.bf16.mxu0 0
    %196 = vmatpush2.bf16.msra.mxu0 0
    %197 = vmatprep.subr.bf16.mxu0 0
    %198 = vmatpush2.bf16.msra.mxu0 0
    %199 = vmatprep.subr.bf16.mxu0 0
    %200 = vmatpush2.bf16.msra.mxu0 0
    %201 = vmatprep.mubr.bf16.mxu0 0
    %202 = vmatmul.mubr.bf16.gmra.mxu0 %v167
    %v203 = vpop.f32.mrf.mxu0
    %v204 = vadd.f32 %v151, %v203
    %v205 = vpop.f32.mrf.mxu0
    %v206 = vpop.f32.mrf.mxu0
    %v207 = vadd.f32 %v151, %v206
    %v208 = vpop.f32.mrf.mxu0
    %209 = vdwg.mxu0
    %212 = vrot.lane.b32.xlu0 %v204, 96
    %v213 = vpop.permute.xlu0 %212
    %214 = vrot.lane.b32.xlu0 %v207, 96
    %v215 = vpop.permute.xlu0 %214
    %vm216 = vcmask 64512
    %v217 = vsel %vm216, %v204, 0
    %v219 = vsel %vm216, %v207, 0
    %v221 = vsel %vm216, %v213, 0
    %v223 = vsel %vm216, %v215, 0
    %225 = vmatprep.subr.mxu0 0.0
    %226 = vmatpush1.xpose.msra.mxu0 0.0
    %227 = vmatprep.subr.mxu0 0.0
    %228 = vmatpush1.xpose.msra.mxu0 0.0
    %229 = vmatprep.subr.mxu0 0.0
    %230 = vmatpush1.xpose.msra.mxu0 0.0
    %231 = vmatprep.subr.mxu0 0.0
    %232 = vmatpush1.xpose.msra.mxu0 0.0
    %233 = vmatprep.subr.mxu0 0.0
    %234 = vmatpush1.xpose.msra.mxu0 0.0
    %235 = vmatprep.subr.mxu0 0.0
    %236 = vmatpush1.xpose.msra.mxu0 0.0
    %237 = vmatprep.subr.mxu0 0.0
    %238 = vmatpush1.xpose.msra.mxu0 0.0
    %239 = vmatprep.subr.mxu0 0.0
    %240 = vmatpush1.xpose.msra.mxu0 0.0
    %241 = vmatprep.subr.mxu0 0.0
    %242 = vmatpush1.xpose.msra.mxu0 0.0
    %243 = vmatprep.subr.mxu0 0.0
    %244 = vmatpush1.xpose.msra.mxu0 0.0
    %245 = vmatprep.subr.mxu0 0.0
    %246 = vmatpush1.xpose.msra.mxu0 0.0
    %247 = vmatprep.subr.mxu0 0.0
    %248 = vmatpush1.xpose.msra.mxu0 0.0
    %249 = vmatprep.subr.mxu0 0.0
    %250 = vmatpush1.xpose.msra.mxu0 0.0
    %251 = vmatprep.subr.mxu0 0.0
    %252 = vmatpush1.xpose.msra.mxu0 0.0
    %253 = vmatprep.subr.mxu0 0.0
    %254 = vmatpush1.xpose.msra.mxu0 %v223
    %255 = vmatprep.subr.mxu0 0.0
    %256 = vmatpush1.xpose.msra.mxu0 %v221
    %257 = vmatprep.subr.mxu0 0.0
    %258 = vmatpush2.xpose.msra.mxu0 0.0
    %259 = vmatprep.subr.mxu0 0.0
    %260 = vmatpush2.xpose.msra.mxu0 0.0
    %261 = vmatprep.subr.mxu0 0.0
    %262 = vmatpush2.xpose.msra.mxu0 0.0
    %263 = vmatprep.subr.mxu0 0.0
    %264 = vmatpush2.xpose.msra.mxu0 0.0
    %265 = vmatprep.subr.mxu0 0.0
    %266 = vmatpush2.xpose.msra.mxu0 0.0
    %267 = vmatprep.subr.mxu0 0.0
    %268 = vmatpush2.xpose.msra.mxu0 0.0
    %269 = vmatprep.subr.mxu0 0.0
    %270 = vmatpush2.xpose.msra.mxu0 0.0
    %271 = vmatprep.subr.mxu0 0.0
    %272 = vmatpush2.xpose.msra.mxu0 0.0
    %273 = vmatprep.subr.mxu0 0.0
    %274 = vmatpush2.xpose.msra.mxu0 0.0
    %275 = vmatprep.subr.mxu0 0.0
    %276 = vmatpush2.xpose.msra.mxu0 0.0
    %277 = vmatprep.subr.mxu0 0.0
    %278 = vmatpush2.xpose.msra.mxu0 0.0
    %279 = vmatprep.subr.mxu0 0.0
    %280 = vmatpush2.xpose.msra.mxu0 0.0
    %281 = vmatprep.subr.mxu0 0.0
    %282 = vmatpush2.xpose.msra.mxu0 0.0
    %283 = vmatprep.subr.mxu0 0.0
    %284 = vmatpush2.xpose.msra.mxu0 0.0
    %285 = vmatprep.subr.mxu0 0.0
    %286 = vmatpush2.xpose.msra.mxu0 0.0
    %287 = vmatprep.subr.mxu0 0.0
    %288 = vmatpush2.xpose.msra.mxu0 0.0
    %289 = vmatprep.mubr.f32.mxu0 0.0
    %290 = vmatmul.mubr.f32.gmra.mxu0 %v217
    %v291 = vpop.f32.mrf.mxu0
    %v292 = vadd.f32 0.0, %v291
    %v293 = vpop.f32.mrf.mxu0
    %294 = vmatprep.mubr.f32.mxu0 0.0
    %295 = vmatmul.mubr.f32.gmra.mxu0 %v219
    %v296 = vpop.f32.mrf.mxu0
    %v297 = vadd.f32 0.0, %v296
    %v298 = vpop.f32.mrf.mxu0
    %299 = vdwg.mxu0
    %v300 = vmul.f32 %v204, %v204
    %v301 = vmul.f32 %v207, %v207
    %v302 = vsel %vm216, %v300, 0.0
    %303 = vadd.xlane.f32.xlu0 %v302
    %v304 = vpop.xlane.xlu0 %303
    %v305 = vsel %vm216, %v301, 0.0
    %306 = vadd.xlane.f32.xlu0 %v305
    %v307 = vpop.xlane.xlu0 %306
    %310 = vrot.lane.b32.xlu0 %v300, 96
    %v311 = vpop.permute.xlu0 %310
    %312 = vrot.lane.b32.xlu0 %v301, 96
    %v313 = vpop.permute.xlu0 %312
    %v316 = vsel %vm216, %v311, 0.0
    %317 = vadd.xlane.f32.xlu0 %v316
    %v318 = vpop.xlane.xlu0 %317
    %v319 = vsel %vm216, %v313, 0.0
    %320 = vadd.xlane.f32.xlu0 %v319
    %v321 = vpop.xlane.xlu0 %320
    %322 = vxpose.xlu0.b32.start [1/16] %v318, 128
    %323 = vxpose.xlu0.b32.cont [2/16] %v321, 128
    %324 = vxpose.xlu0.b32.cont [3/16] 0.0, 128
    %325 = vxpose.xlu0.b32.cont [4/16] 0.0, 128
    %326 = vxpose.xlu0.b32.cont [5/16] 0.0, 128
    %327 = vxpose.xlu0.b32.cont [6/16] 0.0, 128
    %328 = vxpose.xlu0.b32.cont [7/16] 0.0, 128
    %329 = vxpose.xlu0.b32.cont [8/16] 0.0, 128
    %330 = vxpose.xlu0.b32.cont [9/16] 0.0, 128
    %331 = vxpose.xlu0.b32.cont [10/16] 0.0, 128
    %332 = vxpose.xlu0.b32.cont [11/16] 0.0, 128
    %333 = vxpose.xlu0.b32.cont [12/16] 0.0, 128
    %334 = vxpose.xlu0.b32.cont [13/16] 0.0, 128
    %335 = vxpose.xlu0.b32.cont [14/16] 0.0, 128
    %336 = vxpose.xlu0.b32.cont [15/16] 0.0, 128
    %337 = vxpose.xlu0.b32.end [16/16] 0.0, 128
    %v338 = vpop.trf.xlu0
    %v339 = vpop.trf.xlu0
    %v340 = vpop.trf.xlu0
    %v341 = vpop.trf.xlu0
    %v342 = vpop.trf.xlu0
    %v343 = vpop.trf.xlu0
    %v344 = vpop.trf.xlu0
    %v345 = vpop.trf.xlu0
    %v346 = vpop.trf.xlu0
    %v347 = vpop.trf.xlu0
    %v348 = vpop.trf.xlu0
    %v349 = vpop.trf.xlu0
    %v350 = vpop.trf.xlu0
    %v351 = vpop.trf.xlu0
    %v352 = vpop.trf.xlu0
    %v353 = vpop.trf.xlu0
    %v354 = vlaneseq
    %v355 = vshrl.u32 %v354, 7
    %v356 = vsub.s32 0, %v355
    %v357 = vrot.slane %v338, %v356
    %v358 = vadd.f32 %v304, %v357
    %v359 = vadd.f32 %v307, %v357
    %v360 = vmul.f32 %v292, 2.0
    %v361 = vmul.f32 %v297, 2.0
    %v362 = vsub.f32 %v358, %v360
    %v363 = vsub.f32 %v359, %v361
    %v364 = vmax.f32 %v362, 0.0
    %v365 = vmax.f32 %v363, 0.0
    %v366 = vrsqrt.pop %v364
    %v367 = vmul.f32 %v364, %v366
    %vm368 = vcmp.eq.f32.partialorder %v364, inf
    %v369 = vsel %vm368, %v364, %v367
    %vm370 = vcmp.eq.f32.partialorder %v364, 0.0
    %v371 = vand.u32 %v364, 2147483648
    %v372 = vsel %vm370, %v371, %v369
    %v373 = vrsqrt.pop %v365
    %v374 = vmul.f32 %v365, %v373
    %vm375 = vcmp.eq.f32.partialorder %v365, inf
    %v376 = vsel %vm375, %v365, %v374
    %vm377 = vcmp.eq.f32.partialorder %v365, 0.0
    %v378 = vand.u32 %v365, 2147483648
    %v379 = vsel %vm377, %v378, %v376
    %v380 = vsub.f32 0.0, %v372
    %v381 = vsub.f32 0.0, %v379
    %v382 = vmul.f32 %v380, 0.35355338
    %v383 = vmul.f32 %v381, 0.35355338
    %v384 = vsel %vm87, %v382, -inf
    %v385 = vsel %vm88, %v383, -inf
    %vm386 = vcmask 130048
    %v387 = vsel %vm386, %v384, -inf
    %388 = vmax.xlane.f32.xlu0 %v387
    %v389 = vpop.xlane.xlu0 %388
    %v390 = vsel %vm386, %v385, -inf
    %391 = vmax.xlane.f32.xlu0 %v390
    %v392 = vpop.xlane.xlu0 %391
    %v393 = vsub.f32 %v384, %v389
    %v394 = vsub.f32 %v385, %v392
    %v395 = vmul.f32 %v393, 1.442695
    %v396 = vpow.pop %v395
    %v397 = vmul.f32 %v394, 1.442695
    %v398 = vpow.pop %v397
    %v399 = vsel %vm386, %v396, 0.0
    %400 = vadd.xlane.f32.xlu0 %v399
    %v401 = vpop.xlane.xlu0 %400
    %v402 = vsel %vm386, %v398, 0.0
    %403 = vadd.xlane.f32.xlu0 %v402
    %v404 = vpop.xlane.xlu0 %403
    %v405 = vrcp.pop %v401
    %v406 = vrcp.pop %v404
    %v407 = vmul.f32 %v396, %v405
    %v408 = vmul.f32 %v398, %v406
    %409 = vrot.lane.b32.xlu0 %v204, 64
    %v410 = vpop.permute.xlu0 %409
    %411 = vrot.lane.b32.xlu0 %v207, 64
    %v412 = vpop.permute.xlu0 %411
    %v416 = vsel %vm386, %v407, 0
    %v419 = vsel %vm386, %v408, 0
    %421 = vmatprep.subr.mxu0 0.0
    %422 = vmatpush1.msra.mxu0 0.0
    %423 = vmatprep.subr.mxu0 0.0
    %424 = vmatpush1.msra.mxu0 0.0
    %425 = vmatprep.subr.mxu0 0.0
    %426 = vmatpush1.msra.mxu0 0.0
    %427 = vmatprep.subr.mxu0 0.0
    %428 = vmatpush1.msra.mxu0 0.0
    %429 = vmatprep.subr.mxu0 0.0
    %430 = vmatpush1.msra.mxu0 0.0
    %431 = vmatprep.subr.mxu0 0.0
    %432 = vmatpush1.msra.mxu0 0.0
    %433 = vmatprep.subr.mxu0 0.0
    %434 = vmatpush1.msra.mxu0 0.0
    %435 = vmatprep.subr.mxu0 0.0
    %436 = vmatpush1.msra.mxu0 0.0
    %437 = vmatprep.subr.mxu0 0.0
    %438 = vmatpush1.msra.mxu0 0.0
    %439 = vmatprep.subr.mxu0 0.0
    %440 = vmatpush1.msra.mxu0 0.0
    %441 = vmatprep.subr.mxu0 0.0
    %442 = vmatpush1.msra.mxu0 0.0
    %443 = vmatprep.subr.mxu0 0.0
    %444 = vmatpush1.msra.mxu0 0.0
    %445 = vmatprep.subr.mxu0 0.0
    %446 = vmatpush1.msra.mxu0 0.0
    %447 = vmatprep.subr.mxu0 0.0
    %448 = vmatpush1.msra.mxu0 0.0
    %449 = vmatprep.subr.mxu0 0.0
    %450 = vmatpush1.msra.mxu0 %v412
    %451 = vmatprep.subr.mxu0 0.0
    %452 = vmatpush1.msra.mxu0 %v410
    %453 = vmatprep.subr.mxu0 0.0
    %454 = vmatpush2.msra.mxu0 0.0
    %455 = vmatprep.subr.mxu0 0.0
    %456 = vmatpush2.msra.mxu0 0.0
    %457 = vmatprep.subr.mxu0 0.0
    %458 = vmatpush2.msra.mxu0 0.0
    %459 = vmatprep.subr.mxu0 0.0
    %460 = vmatpush2.msra.mxu0 0.0
    %461 = vmatprep.subr.mxu0 0.0
    %462 = vmatpush2.msra.mxu0 0.0
    %463 = vmatprep.subr.mxu0 0.0
    %464 = vmatpush2.msra.mxu0 0.0
    %465 = vmatprep.subr.mxu0 0.0
    %466 = vmatpush2.msra.mxu0 0.0
    %467 = vmatprep.subr.mxu0 0.0
    %468 = vmatpush2.msra.mxu0 0.0
    %469 = vmatprep.subr.mxu0 0.0
    %470 = vmatpush2.msra.mxu0 0.0
    %471 = vmatprep.subr.mxu0 0.0
    %472 = vmatpush2.msra.mxu0 0.0
    %473 = vmatprep.subr.mxu0 0.0
    %474 = vmatpush2.msra.mxu0 0.0
    %475 = vmatprep.subr.mxu0 0.0
    %476 = vmatpush2.msra.mxu0 0.0
    %477 = vmatprep.subr.mxu0 0.0
    %478 = vmatpush2.msra.mxu0 0.0
    %479 = vmatprep.subr.mxu0 0.0
    %480 = vmatpush2.msra.mxu0 0.0
    %481 = vmatprep.subr.mxu0 0.0
    %482 = vmatpush2.msra.mxu0 0.0
    %483 = vmatprep.subr.mxu0 0.0
    %484 = vmatpush2.msra.mxu0 0.0
    %485 = vmatprep.mubr.f32.mxu0 0.0
    %486 = vmatmul.mubr.f32.gmra.mxu0 %v416
    %v487 = vpop.f32.mrf.mxu0
    %v488 = vadd.f32 0.0, %v487
    %v489 = vpop.f32.mrf.mxu0
    %490 = vmatprep.mubr.f32.mxu0 0.0
    %491 = vmatmul.mubr.f32.gmra.mxu0 %v419
    %v492 = vpop.f32.mrf.mxu0
    %v493 = vadd.f32 0.0, %v492
    %v494 = vpop.f32.mrf.mxu0
    %495 = vdwg.mxu0
    %496 = vrot.lane.b32.xlu0 %v204, 120
    %v497 = vpop.permute.xlu0 %496
    %498 = vrot.lane.b32.xlu0 %v207, 120
    %v499 = vpop.permute.xlu0 %498
    %500 = vrot.lane.b32.xlu0 %v204, 88
    %v501 = vpop.permute.xlu0 %500
    %502 = vrot.lane.b32.xlu0 %v207, 88
    %v503 = vpop.permute.xlu0 %502
    %v504 = vsel %vm216, %v497, 0
    %v506 = vsel %vm216, %v499, 0
    %v508 = vsel %vm216, %v501, 0
    %v510 = vsel %vm216, %v503, 0
    %512 = vmatprep.subr.mxu0 0.0
    %513 = vmatpush1.xpose.msra.mxu0 0.0
    %514 = vmatprep.subr.mxu0 0.0
    %515 = vmatpush1.xpose.msra.mxu0 0.0
    %516 = vmatprep.subr.mxu0 0.0
    %517 = vmatpush1.xpose.msra.mxu0 0.0
    %518 = vmatprep.subr.mxu0 0.0
    %519 = vmatpush1.xpose.msra.mxu0 0.0
    %520 = vmatprep.subr.mxu0 0.0
    %521 = vmatpush1.xpose.msra.mxu0 0.0
    %522 = vmatprep.subr.mxu0 0.0
    %523 = vmatpush1.xpose.msra.mxu0 0.0
    %524 = vmatprep.subr.mxu0 0.0
    %525 = vmatpush1.xpose.msra.mxu0 0.0
    %526 = vmatprep.subr.mxu0 0.0
    %527 = vmatpush1.xpose.msra.mxu0 0.0
    %528 = vmatprep.subr.mxu0 0.0
    %529 = vmatpush1.xpose.msra.mxu0 0.0
    %530 = vmatprep.subr.mxu0 0.0
    %531 = vmatpush1.xpose.msra.mxu0 0.0
    %532 = vmatprep.subr.mxu0 0.0
    %533 = vmatpush1.xpose.msra.mxu0 0.0
    %534 = vmatprep.subr.mxu0 0.0
    %535 = vmatpush1.xpose.msra.mxu0 0.0
    %536 = vmatprep.subr.mxu0 0.0
    %537 = vmatpush1.xpose.msra.mxu0 0.0
    %538 = vmatprep.subr.mxu0 0.0
    %539 = vmatpush1.xpose.msra.mxu0 0.0
    %540 = vmatprep.subr.mxu0 0.0
    %541 = vmatpush1.xpose.msra.mxu0 %v510
    %542 = vmatprep.subr.mxu0 0.0
    %543 = vmatpush1.xpose.msra.mxu0 %v508
    %544 = vmatprep.subr.mxu0 0.0
    %545 = vmatpush2.xpose.msra.mxu0 0.0
    %546 = vmatprep.subr.mxu0 0.0
    %547 = vmatpush2.xpose.msra.mxu0 0.0
    %548 = vmatprep.subr.mxu0 0.0
    %549 = vmatpush2.xpose.msra.mxu0 0.0
    %550 = vmatprep.subr.mxu0 0.0
    %551 = vmatpush2.xpose.msra.mxu0 0.0
    %552 = vmatprep.subr.mxu0 0.0
    %553 = vmatpush2.xpose.msra.mxu0 0.0
    %554 = vmatprep.subr.mxu0 0.0
    %555 = vmatpush2.xpose.msra.mxu0 0.0
    %556 = vmatprep.subr.mxu0 0.0
    %557 = vmatpush2.xpose.msra.mxu0 0.0
    %558 = vmatprep.subr.mxu0 0.0
    %559 = vmatpush2.xpose.msra.mxu0 0.0
    %560 = vmatprep.subr.mxu0 0.0
    %561 = vmatpush2.xpose.msra.mxu0 0.0
    %562 = vmatprep.subr.mxu0 0.0
    %563 = vmatpush2.xpose.msra.mxu0 0.0
    %564 = vmatprep.subr.mxu0 0.0
    %565 = vmatpush2.xpose.msra.mxu0 0.0
    %566 = vmatprep.subr.mxu0 0.0
    %567 = vmatpush2.xpose.msra.mxu0 0.0
    %568 = vmatprep.subr.mxu0 0.0
    %569 = vmatpush2.xpose.msra.mxu0 0.0
    %570 = vmatprep.subr.mxu0 0.0
    %571 = vmatpush2.xpose.msra.mxu0 0.0
    %572 = vmatprep.subr.mxu0 0.0
    %573 = vmatpush2.xpose.msra.mxu0 0.0
    %574 = vmatprep.subr.mxu0 0.0
    %575 = vmatpush2.xpose.msra.mxu0 0.0
    %576 = vmatprep.mubr.f32.mxu0 0.0
    %577 = vmatmul.mubr.f32.gmra.mxu0 %v504
    %v578 = vpop.f32.mrf.mxu0
    %v579 = vadd.f32 0.0, %v578
    %v580 = vpop.f32.mrf.mxu0
    %581 = vmatprep.mubr.f32.mxu0 0.0
    %582 = vmatmul.mubr.f32.gmra.mxu0 %v506
    %v583 = vpop.f32.mrf.mxu0
    %v584 = vadd.f32 0.0, %v583
    %v585 = vpop.f32.mrf.mxu0
    %586 = vdwg.mxu0
    %587 = vrot.lane.b32.xlu0 %v300, 120
    %v588 = vpop.permute.xlu0 %587
    %589 = vrot.lane.b32.xlu0 %v301, 120
    %v590 = vpop.permute.xlu0 %589
    %v593 = vsel %vm216, %v588, 0.0
    %594 = vadd.xlane.f32.xlu0 %v593
    %v595 = vpop.xlane.xlu0 %594
    %v596 = vsel %vm216, %v590, 0.0
    %597 = vadd.xlane.f32.xlu0 %v596
    %v598 = vpop.xlane.xlu0 %597
    %599 = vrot.lane.b32.xlu0 %v300, 88
    %v600 = vpop.permute.xlu0 %599
    %601 = vrot.lane.b32.xlu0 %v301, 88
    %v602 = vpop.permute.xlu0 %601
    %v605 = vsel %vm216, %v600, 0.0
    %606 = vadd.xlane.f32.xlu0 %v605
    %v607 = vpop.xlane.xlu0 %606
    %v608 = vsel %vm216, %v602, 0.0
    %609 = vadd.xlane.f32.xlu0 %v608
    %v610 = vpop.xlane.xlu0 %609
    %611 = vxpose.xlu0.b32.start [1/16] %v607, 128
    %612 = vxpose.xlu0.b32.cont [2/16] %v610, 128
    %613 = vxpose.xlu0.b32.cont [3/16] 0.0, 128
    %614 = vxpose.xlu0.b32.cont [4/16] 0.0, 128
    %615 = vxpose.xlu0.b32.cont [5/16] 0.0, 128
    %616 = vxpose.xlu0.b32.cont [6/16] 0.0, 128
    %617 = vxpose.xlu0.b32.cont [7/16] 0.0, 128
    %618 = vxpose.xlu0.b32.cont [8/16] 0.0, 128
    %619 = vxpose.xlu0.b32.cont [9/16] 0.0, 128
    %620 = vxpose.xlu0.b32.cont [10/16] 0.0, 128
    %621 = vxpose.xlu0.b32.cont [11/16] 0.0, 128
    %622 = vxpose.xlu0.b32.cont [12/16] 0.0, 128
    %623 = vxpose.xlu0.b32.cont [13/16] 0.0, 128
    %624 = vxpose.xlu0.b32.cont [14/16] 0.0, 128
    %625 = vxpose.xlu0.b32.cont [15/16] 0.0, 128
    %626 = vxpose.xlu0.b32.end [16/16] 0.0, 128
    %v627 = vpop.trf.xlu0
    %v628 = vpop.trf.xlu0
    %v629 = vpop.trf.xlu0
    %v630 = vpop.trf.xlu0
    %v631 = vpop.trf.xlu0
    %v632 = vpop.trf.xlu0
    %v633 = vpop.trf.xlu0
    %v634 = vpop.trf.xlu0
    %v635 = vpop.trf.xlu0
    %v636 = vpop.trf.xlu0
    %v637 = vpop.trf.xlu0
    %v638 = vpop.trf.xlu0
    %v639 = vpop.trf.xlu0
    %v640 = vpop.trf.xlu0
    %v641 = vpop.trf.xlu0
    %v642 = vpop.trf.xlu0
    %v643 = vlaneseq
    %v644 = vshrl.u32 %v643, 7
    %v645 = vsub.s32 0, %v644
    %v646 = vrot.slane %v627, %v645
    %v647 = vadd.f32 %v595, %v646
    %v648 = vadd.f32 %v598, %v646
    %v649 = vmul.f32 %v579, 2.0
    %v650 = vmul.f32 %v584, 2.0
    %v651 = vsub.f32 %v647, %v649
    %v652 = vsub.f32 %v648, %v650
    %v653 = vmax.f32 %v651, 0.0
    %v654 = vmax.f32 %v652, 0.0
    %v655 = vrsqrt.pop %v653
    %v656 = vmul.f32 %v653, %v655
    %vm657 = vcmp.eq.f32.partialorder %v653, inf
    %v658 = vsel %vm657, %v653, %v656
    %vm659 = vcmp.eq.f32.partialorder %v653, 0.0
    %v660 = vand.u32 %v653, 2147483648
    %v661 = vsel %vm659, %v660, %v658
    %v662 = vrsqrt.pop %v654
    %v663 = vmul.f32 %v654, %v662
    %vm664 = vcmp.eq.f32.partialorder %v654, inf
    %v665 = vsel %vm664, %v654, %v663
    %vm666 = vcmp.eq.f32.partialorder %v654, 0.0
    %v667 = vand.u32 %v654, 2147483648
    %v668 = vsel %vm666, %v667, %v665
    %v669 = vsub.f32 0.0, %v661
    %v670 = vsub.f32 0.0, %v668
    %v671 = vmul.f32 %v669, 0.35355338
    %v672 = vmul.f32 %v670, 0.35355338
    %v673 = vsel %vm87, %v671, -inf
    %v674 = vsel %vm88, %v672, -inf
    %v675 = vsel %vm386, %v673, -inf
    %676 = vmax.xlane.f32.xlu0 %v675
    %v677 = vpop.xlane.xlu0 %676
    %v678 = vsel %vm386, %v674, -inf
    %679 = vmax.xlane.f32.xlu0 %v678
    %v680 = vpop.xlane.xlu0 %679
    %v681 = vsub.f32 %v673, %v677
    %v682 = vsub.f32 %v674, %v680
    %v683 = vmul.f32 %v681, 1.442695
    %v684 = vpow.pop %v683
    %v685 = vmul.f32 %v682, 1.442695
    %v686 = vpow.pop %v685
    %v687 = vsel %vm386, %v684, 0.0
    %688 = vadd.xlane.f32.xlu0 %v687
    %v689 = vpop.xlane.xlu0 %688
    %v690 = vsel %vm386, %v686, 0.0
    %691 = vadd.xlane.f32.xlu0 %v690
    %v692 = vpop.xlane.xlu0 %691
    %v693 = vrcp.pop %v689
    %v694 = vrcp.pop %v692
    %v695 = vmul.f32 %v684, %v693
    %v696 = vmul.f32 %v686, %v694
    %697 = vrot.lane.b32.xlu0 %v204, 56
    %v698 = vpop.permute.xlu0 %697
    %699 = vrot.lane.b32.xlu0 %v207, 56
    %v700 = vpop.permute.xlu0 %699
    %v704 = vsel %vm386, %v695, 0
    %v707 = vsel %vm386, %v696, 0
    %709 = vmatprep.subr.mxu0 0.0
    %710 = vmatpush1.msra.mxu0 0.0
    %711 = vmatprep.subr.mxu0 0.0
    %712 = vmatpush1.msra.mxu0 0.0
    %713 = vmatprep.subr.mxu0 0.0
    %714 = vmatpush1.msra.mxu0 0.0
    %715 = vmatprep.subr.mxu0 0.0
    %716 = vmatpush1.msra.mxu0 0.0
    %717 = vmatprep.subr.mxu0 0.0
    %718 = vmatpush1.msra.mxu0 0.0
    %719 = vmatprep.subr.mxu0 0.0
    %720 = vmatpush1.msra.mxu0 0.0
    %721 = vmatprep.subr.mxu0 0.0
    %722 = vmatpush1.msra.mxu0 0.0
    %723 = vmatprep.subr.mxu0 0.0
    %724 = vmatpush1.msra.mxu0 0.0
    %725 = vmatprep.subr.mxu0 0.0
    %726 = vmatpush1.msra.mxu0 0.0
    %727 = vmatprep.subr.mxu0 0.0
    %728 = vmatpush1.msra.mxu0 0.0
    %729 = vmatprep.subr.mxu0 0.0
    %730 = vmatpush1.msra.mxu0 0.0
    %731 = vmatprep.subr.mxu0 0.0
    %732 = vmatpush1.msra.mxu0 0.0
    %733 = vmatprep.subr.mxu0 0.0
    %734 = vmatpush1.msra.mxu0 0.0
    %735 = vmatprep.subr.mxu0 0.0
    %736 = vmatpush1.msra.mxu0 0.0
    %737 = vmatprep.subr.mxu0 0.0
    %738 = vmatpush1.msra.mxu0 %v700
    %739 = vmatprep.subr.mxu0 0.0
    %740 = vmatpush1.msra.mxu0 %v698
    %741 = vmatprep.subr.mxu0 0.0
    %742 = vmatpush2.msra.mxu0 0.0
    %743 = vmatprep.subr.mxu0 0.0
    %744 = vmatpush2.msra.mxu0 0.0
    %745 = vmatprep.subr.mxu0 0.0
    %746 = vmatpush2.msra.mxu0 0.0
    %747 = vmatprep.subr.mxu0 0.0
    %748 = vmatpush2.msra.mxu0 0.0
    %749 = vmatprep.subr.mxu0 0.0
    %750 = vmatpush2.msra.mxu0 0.0
    %751 = vmatprep.subr.mxu0 0.0
    %752 = vmatpush2.msra.mxu0 0.0
    %753 = vmatprep.subr.mxu0 0.0
    %754 = vmatpush2.msra.mxu0 0.0
    %755 = vmatprep.subr.mxu0 0.0
    %756 = vmatpush2.msra.mxu0 0.0
    %757 = vmatprep.subr.mxu0 0.0
    %758 = vmatpush2.msra.mxu0 0.0
    %759 = vmatprep.subr.mxu0 0.0
    %760 = vmatpush2.msra.mxu0 0.0
    %761 = vmatprep.subr.mxu0 0.0
    %762 = vmatpush2.msra.mxu0 0.0
    %763 = vmatprep.subr.mxu0 0.0
    %764 = vmatpush2.msra.mxu0 0.0
    %765 = vmatprep.subr.mxu0 0.0
    %766 = vmatpush2.msra.mxu0 0.0
    %767 = vmatprep.subr.mxu0 0.0
    %768 = vmatpush2.msra.mxu0 0.0
    %769 = vmatprep.subr.mxu0 0.0
    %770 = vmatpush2.msra.mxu0 0.0
    %771 = vmatprep.subr.mxu0 0.0
    %772 = vmatpush2.msra.mxu0 0.0
    %773 = vmatprep.mubr.f32.mxu0 0.0
    %774 = vmatmul.mubr.f32.gmra.mxu0 %v704
    %v775 = vpop.f32.mrf.mxu0
    %v776 = vadd.f32 0.0, %v775
    %v777 = vpop.f32.mrf.mxu0
    %778 = vmatprep.mubr.f32.mxu0 0.0
    %779 = vmatmul.mubr.f32.gmra.mxu0 %v707
    %v780 = vpop.f32.mrf.mxu0
    %v781 = vadd.f32 0.0, %v780
    %v782 = vpop.f32.mrf.mxu0
    %783 = vdwg.mxu0
    %784 = vrot.lane.b32.xlu0 %v204, 112
    %v785 = vpop.permute.xlu0 %784
    %786 = vrot.lane.b32.xlu0 %v207, 112
    %v787 = vpop.permute.xlu0 %786
    %788 = vrot.lane.b32.xlu0 %v204, 80
    %v789 = vpop.permute.xlu0 %788
    %790 = vrot.lane.b32.xlu0 %v207, 80
    %v791 = vpop.permute.xlu0 %790
    %v792 = vsel %vm216, %v785, 0
    %v794 = vsel %vm216, %v787, 0
    %v796 = vsel %vm216, %v789, 0
    %v798 = vsel %vm216, %v791, 0
    %800 = vmatprep.subr.mxu0 0.0
    %801 = vmatpush1.xpose.msra.mxu0 0.0
    %802 = vmatprep.subr.mxu0 0.0
    %803 = vmatpush1.xpose.msra.mxu0 0.0
    %804 = vmatprep.subr.mxu0 0.0
    %805 = vmatpush1.xpose.msra.mxu0 0.0
    %806 = vmatprep.subr.mxu0 0.0
    %807 = vmatpush1.xpose.msra.mxu0 0.0
    %808 = vmatprep.subr.mxu0 0.0
    %809 = vmatpush1.xpose.msra.mxu0 0.0
    %810 = vmatprep.subr.mxu0 0.0
    %811 = vmatpush1.xpose.msra.mxu0 0.0
    %812 = vmatprep.subr.mxu0 0.0
    %813 = vmatpush1.xpose.msra.mxu0 0.0
    %814 = vmatprep.subr.mxu0 0.0
    %815 = vmatpush1.xpose.msra.mxu0 0.0
    %816 = vmatprep.subr.mxu0 0.0
    %817 = vmatpush1.xpose.msra.mxu0 0.0
    %818 = vmatprep.subr.mxu0 0.0
    %819 = vmatpush1.xpose.msra.mxu0 0.0
    %820 = vmatprep.subr.mxu0 0.0
    %821 = vmatpush1.xpose.msra.mxu0 0.0
    %822 = vmatprep.subr.mxu0 0.0
    %823 = vmatpush1.xpose.msra.mxu0 0.0
    %824 = vmatprep.subr.mxu0 0.0
    %825 = vmatpush1.xpose.msra.mxu0 0.0
    %826 = vmatprep.subr.mxu0 0.0
    %827 = vmatpush1.xpose.msra.mxu0 0.0
    %828 = vmatprep.subr.mxu0 0.0
    %829 = vmatpush1.xpose.msra.mxu0 %v798
    %830 = vmatprep.subr.mxu0 0.0
    %831 = vmatpush1.xpose.msra.mxu0 %v796
    %832 = vmatprep.subr.mxu0 0.0
    %833 = vmatpush2.xpose.msra.mxu0 0.0
    %834 = vmatprep.subr.mxu0 0.0
    %835 = vmatpush2.xpose.msra.mxu0 0.0
    %836 = vmatprep.subr.mxu0 0.0
    %837 = vmatpush2.xpose.msra.mxu0 0.0
    %838 = vmatprep.subr.mxu0 0.0
    %839 = vmatpush2.xpose.msra.mxu0 0.0
    %840 = vmatprep.subr.mxu0 0.0
    %841 = vmatpush2.xpose.msra.mxu0 0.0
    %842 = vmatprep.subr.mxu0 0.0
    %843 = vmatpush2.xpose.msra.mxu0 0.0
    %844 = vmatprep.subr.mxu0 0.0
    %845 = vmatpush2.xpose.msra.mxu0 0.0
    %846 = vmatprep.subr.mxu0 0.0
    %847 = vmatpush2.xpose.msra.mxu0 0.0
    %848 = vmatprep.subr.mxu0 0.0
    %849 = vmatpush2.xpose.msra.mxu0 0.0
    %850 = vmatprep.subr.mxu0 0.0
    %851 = vmatpush2.xpose.msra.mxu0 0.0
    %852 = vmatprep.subr.mxu0 0.0
    %853 = vmatpush2.xpose.msra.mxu0 0.0
    %854 = vmatprep.subr.mxu0 0.0
    %855 = vmatpush2.xpose.msra.mxu0 0.0
    %856 = vmatprep.subr.mxu0 0.0
    %857 = vmatpush2.xpose.msra.mxu0 0.0
    %858 = vmatprep.subr.mxu0 0.0
    %859 = vmatpush2.xpose.msra.mxu0 0.0
    %860 = vmatprep.subr.mxu0 0.0
    %861 = vmatpush2.xpose.msra.mxu0 0.0
    %862 = vmatprep.subr.mxu0 0.0
    %863 = vmatpush2.xpose.msra.mxu0 0.0
    %864 = vmatprep.mubr.f32.mxu0 0.0
    %865 = vmatmul.mubr.f32.gmra.mxu0 %v792
    %v866 = vpop.f32.mrf.mxu0
    %v867 = vadd.f32 0.0, %v866
    %v868 = vpop.f32.mrf.mxu0
    %869 = vmatprep.mubr.f32.mxu0 0.0
    %870 = vmatmul.mubr.f32.gmra.mxu0 %v794
    %v871 = vpop.f32.mrf.mxu0
    %v872 = vadd.f32 0.0, %v871
    %v873 = vpop.f32.mrf.mxu0
    %874 = vdwg.mxu0
    %875 = vrot.lane.b32.xlu0 %v300, 112
    %v876 = vpop.permute.xlu0 %875
    %877 = vrot.lane.b32.xlu0 %v301, 112
    %v878 = vpop.permute.xlu0 %877
    %v881 = vsel %vm216, %v876, 0.0
    %882 = vadd.xlane.f32.xlu0 %v881
    %v883 = vpop.xlane.xlu0 %882
    %v884 = vsel %vm216, %v878, 0.0
    %885 = vadd.xlane.f32.xlu0 %v884
    %v886 = vpop.xlane.xlu0 %885
    %887 = vrot.lane.b32.xlu0 %v300, 80
    %v888 = vpop.permute.xlu0 %887
    %889 = vrot.lane.b32.xlu0 %v301, 80
    %v890 = vpop.permute.xlu0 %889
    %v893 = vsel %vm216, %v888, 0.0
    %894 = vadd.xlane.f32.xlu0 %v893
    %v895 = vpop.xlane.xlu0 %894
    %v896 = vsel %vm216, %v890, 0.0
    %897 = vadd.xlane.f32.xlu0 %v896
    %v898 = vpop.xlane.xlu0 %897
    %899 = vxpose.xlu0.b32.start [1/16] %v895, 128
    %900 = vxpose.xlu0.b32.cont [2/16] %v898, 128
    %901 = vxpose.xlu0.b32.cont [3/16] 0.0, 128
    %902 = vxpose.xlu0.b32.cont [4/16] 0.0, 128
    %903 = vxpose.xlu0.b32.cont [5/16] 0.0, 128
    %904 = vxpose.xlu0.b32.cont [6/16] 0.0, 128
    %905 = vxpose.xlu0.b32.cont [7/16] 0.0, 128
    %906 = vxpose.xlu0.b32.cont [8/16] 0.0, 128
    %907 = vxpose.xlu0.b32.cont [9/16] 0.0, 128
    %908 = vxpose.xlu0.b32.cont [10/16] 0.0, 128
    %909 = vxpose.xlu0.b32.cont [11/16] 0.0, 128
    %910 = vxpose.xlu0.b32.cont [12/16] 0.0, 128
    %911 = vxpose.xlu0.b32.cont [13/16] 0.0, 128
    %912 = vxpose.xlu0.b32.cont [14/16] 0.0, 128
    %913 = vxpose.xlu0.b32.cont [15/16] 0.0, 128
    %914 = vxpose.xlu0.b32.end [16/16] 0.0, 128
    %v915 = vpop.trf.xlu0
    %v916 = vpop.trf.xlu0
    %v917 = vpop.trf.xlu0
    %v918 = vpop.trf.xlu0
    %v919 = vpop.trf.xlu0
    %v920 = vpop.trf.xlu0
    %v921 = vpop.trf.xlu0
    %v922 = vpop.trf.xlu0
    %v923 = vpop.trf.xlu0
    %v924 = vpop.trf.xlu0
    %v925 = vpop.trf.xlu0
    %v926 = vpop.trf.xlu0
    %v927 = vpop.trf.xlu0
    %v928 = vpop.trf.xlu0
    %v929 = vpop.trf.xlu0
    %v930 = vpop.trf.xlu0
    %v931 = vlaneseq
    %v932 = vshrl.u32 %v931, 7
    %v933 = vsub.s32 0, %v932
    %v934 = vrot.slane %v915, %v933
    %v935 = vadd.f32 %v883, %v934
    %v936 = vadd.f32 %v886, %v934
    %v937 = vmul.f32 %v867, 2.0
    %v938 = vmul.f32 %v872, 2.0
    %v939 = vsub.f32 %v935, %v937
    %v940 = vsub.f32 %v936, %v938
    %v941 = vmax.f32 %v939, 0.0
    %v942 = vmax.f32 %v940, 0.0
    %v943 = vrsqrt.pop %v941
    %v944 = vmul.f32 %v941, %v943
    %vm945 = vcmp.eq.f32.partialorder %v941, inf
    %v946 = vsel %vm945, %v941, %v944
    %vm947 = vcmp.eq.f32.partialorder %v941, 0.0
    %v948 = vand.u32 %v941, 2147483648
    %v949 = vsel %vm947, %v948, %v946
    %v950 = vrsqrt.pop %v942
    %v951 = vmul.f32 %v942, %v950
    %vm952 = vcmp.eq.f32.partialorder %v942, inf
    %v953 = vsel %vm952, %v942, %v951
    %vm954 = vcmp.eq.f32.partialorder %v942, 0.0
    %v955 = vand.u32 %v942, 2147483648
    %v956 = vsel %vm954, %v955, %v953
    %v957 = vsub.f32 0.0, %v949
    %v958 = vsub.f32 0.0, %v956
    %v959 = vmul.f32 %v957, 0.35355338
    %v960 = vmul.f32 %v958, 0.35355338
    %v961 = vsel %vm87, %v959, -inf
    %v962 = vsel %vm88, %v960, -inf
    %v963 = vsel %vm386, %v961, -inf
    %964 = vmax.xlane.f32.xlu0 %v963
    %v965 = vpop.xlane.xlu0 %964
    %v966 = vsel %vm386, %v962, -inf
    %967 = vmax.xlane.f32.xlu0 %v966
    %v968 = vpop.xlane.xlu0 %967
    %v969 = vsub.f32 %v961, %v965
    %v970 = vsub.f32 %v962, %v968
    %v971 = vmul.f32 %v969, 1.442695
    %v972 = vpow.pop %v971
    %v973 = vmul.f32 %v970, 1.442695
    %v974 = vpow.pop %v973
    %v975 = vsel %vm386, %v972, 0.0
    %976 = vadd.xlane.f32.xlu0 %v975
    %v977 = vpop.xlane.xlu0 %976
    %v978 = vsel %vm386, %v974, 0.0
    %979 = vadd.xlane.f32.xlu0 %v978
    %v980 = vpop.xlane.xlu0 %979
    %v981 = vrcp.pop %v977
    %v982 = vrcp.pop %v980
    %v983 = vmul.f32 %v972, %v981
    %v984 = vmul.f32 %v974, %v982
    %985 = vrot.lane.b32.xlu0 %v204, 48
    %v986 = vpop.permute.xlu0 %985
    %987 = vrot.lane.b32.xlu0 %v207, 48
    %v988 = vpop.permute.xlu0 %987
    %v992 = vsel %vm386, %v983, 0
    %v995 = vsel %vm386, %v984, 0
    %997 = vmatprep.subr.mxu0 0.0
    %998 = vmatpush1.msra.mxu0 0.0
    %999 = vmatprep.subr.mxu0 0.0
    %1000 = vmatpush1.msra.mxu0 0.0
    %1001 = vmatprep.subr.mxu0 0.0
    %1002 = vmatpush1.msra.mxu0 0.0
    %1003 = vmatprep.subr.mxu0 0.0
    %1004 = vmatpush1.msra.mxu0 0.0
    %1005 = vmatprep.subr.mxu0 0.0
    %1006 = vmatpush1.msra.mxu0 0.0
    %1007 = vmatprep.subr.mxu0 0.0
    %1008 = vmatpush1.msra.mxu0 0.0
    %1009 = vmatprep.subr.mxu0 0.0
    %1010 = vmatpush1.msra.mxu0 0.0
    %1011 = vmatprep.subr.mxu0 0.0
    %1012 = vmatpush1.msra.mxu0 0.0
    %1013 = vmatprep.subr.mxu0 0.0
    %1014 = vmatpush1.msra.mxu0 0.0
    %1015 = vmatprep.subr.mxu0 0.0
    %1016 = vmatpush1.msra.mxu0 0.0
    %1017 = vmatprep.subr.mxu0 0.0
    %1018 = vmatpush1.msra.mxu0 0.0
    %1019 = vmatprep.subr.mxu0 0.0
    %1020 = vmatpush1.msra.mxu0 0.0
    %1021 = vmatprep.subr.mxu0 0.0
    %1022 = vmatpush1.msra.mxu0 0.0
    %1023 = vmatprep.subr.mxu0 0.0
    %1024 = vmatpush1.msra.mxu0 0.0
    %1025 = vmatprep.subr.mxu0 0.0
    %1026 = vmatpush1.msra.mxu0 %v988
    %1027 = vmatprep.subr.mxu0 0.0
    %1028 = vmatpush1.msra.mxu0 %v986
    %1029 = vmatprep.subr.mxu0 0.0
    %1030 = vmatpush2.msra.mxu0 0.0
    %1031 = vmatprep.subr.mxu0 0.0
    %1032 = vmatpush2.msra.mxu0 0.0
    %1033 = vmatprep.subr.mxu0 0.0
    %1034 = vmatpush2.msra.mxu0 0.0
    %1035 = vmatprep.subr.mxu0 0.0
    %1036 = vmatpush2.msra.mxu0 0.0
    %1037 = vmatprep.subr.mxu0 0.0
    %1038 = vmatpush2.msra.mxu0 0.0
    %1039 = vmatprep.subr.mxu0 0.0
    %1040 = vmatpush2.msra.mxu0 0.0
    %1041 = vmatprep.subr.mxu0 0.0
    %1042 = vmatpush2.msra.mxu0 0.0
    %1043 = vmatprep.subr.mxu0 0.0
    %1044 = vmatpush2.msra.mxu0 0.0
    %1045 = vmatprep.subr.mxu0 0.0
    %1046 = vmatpush2.msra.mxu0 0.0
    %1047 = vmatprep.subr.mxu0 0.0
    %1048 = vmatpush2.msra.mxu0 0.0
    %1049 = vmatprep.subr.mxu0 0.0
    %1050 = vmatpush2.msra.mxu0 0.0
    %1051 = vmatprep.subr.mxu0 0.0
    %1052 = vmatpush2.msra.mxu0 0.0
    %1053 = vmatprep.subr.mxu0 0.0
    %1054 = vmatpush2.msra.mxu0 0.0
    %1055 = vmatprep.subr.mxu0 0.0
    %1056 = vmatpush2.msra.mxu0 0.0
    %1057 = vmatprep.subr.mxu0 0.0
    %1058 = vmatpush2.msra.mxu0 0.0
    %1059 = vmatprep.subr.mxu0 0.0
    %1060 = vmatpush2.msra.mxu0 0.0
    %1061 = vmatprep.mubr.f32.mxu0 0.0
    %1062 = vmatmul.mubr.f32.gmra.mxu0 %v992
    %v1063 = vpop.f32.mrf.mxu0
    %v1064 = vadd.f32 0.0, %v1063
    %v1065 = vpop.f32.mrf.mxu0
    %1066 = vmatprep.mubr.f32.mxu0 0.0
    %1067 = vmatmul.mubr.f32.gmra.mxu0 %v995
    %v1068 = vpop.f32.mrf.mxu0
    %v1069 = vadd.f32 0.0, %v1068
    %v1070 = vpop.f32.mrf.mxu0
    %1071 = vdwg.mxu0
    %1072 = vrot.lane.b32.xlu0 %v204, 104
    %v1073 = vpop.permute.xlu0 %1072
    %1074 = vrot.lane.b32.xlu0 %v207, 104
    %v1075 = vpop.permute.xlu0 %1074
    %1076 = vrot.lane.b32.xlu0 %v204, 72
    %v1077 = vpop.permute.xlu0 %1076
    %1078 = vrot.lane.b32.xlu0 %v207, 72
    %v1079 = vpop.permute.xlu0 %1078
    %v1080 = vsel %vm216, %v1073, 0
    %v1082 = vsel %vm216, %v1075, 0
    %v1084 = vsel %vm216, %v1077, 0
    %v1086 = vsel %vm216, %v1079, 0
    %1088 = vmatprep.subr.mxu0 0.0
    %1089 = vmatpush1.xpose.msra.mxu0 0.0
    %1090 = vmatprep.subr.mxu0 0.0
    %1091 = vmatpush1.xpose.msra.mxu0 0.0
    %1092 = vmatprep.subr.mxu0 0.0
    %1093 = vmatpush1.xpose.msra.mxu0 0.0
    %1094 = vmatprep.subr.mxu0 0.0
    %1095 = vmatpush1.xpose.msra.mxu0 0.0
    %1096 = vmatprep.subr.mxu0 0.0
    %1097 = vmatpush1.xpose.msra.mxu0 0.0
    %1098 = vmatprep.subr.mxu0 0.0
    %1099 = vmatpush1.xpose.msra.mxu0 0.0
    %1100 = vmatprep.subr.mxu0 0.0
    %1101 = vmatpush1.xpose.msra.mxu0 0.0
    %1102 = vmatprep.subr.mxu0 0.0
    %1103 = vmatpush1.xpose.msra.mxu0 0.0
    %1104 = vmatprep.subr.mxu0 0.0
    %1105 = vmatpush1.xpose.msra.mxu0 0.0
    %1106 = vmatprep.subr.mxu0 0.0
    %1107 = vmatpush1.xpose.msra.mxu0 0.0
    %1108 = vmatprep.subr.mxu0 0.0
    %1109 = vmatpush1.xpose.msra.mxu0 0.0
    %1110 = vmatprep.subr.mxu0 0.0
    %1111 = vmatpush1.xpose.msra.mxu0 0.0
    %1112 = vmatprep.subr.mxu0 0.0
    %1113 = vmatpush1.xpose.msra.mxu0 0.0
    %1114 = vmatprep.subr.mxu0 0.0
    %1115 = vmatpush1.xpose.msra.mxu0 0.0
    %1116 = vmatprep.subr.mxu0 0.0
    %1117 = vmatpush1.xpose.msra.mxu0 %v1086
    %1118 = vmatprep.subr.mxu0 0.0
    %1119 = vmatpush1.xpose.msra.mxu0 %v1084
    %1120 = vmatprep.subr.mxu0 0.0
    %1121 = vmatpush2.xpose.msra.mxu0 0.0
    %1122 = vmatprep.subr.mxu0 0.0
    %1123 = vmatpush2.xpose.msra.mxu0 0.0
    %1124 = vmatprep.subr.mxu0 0.0
    %1125 = vmatpush2.xpose.msra.mxu0 0.0
    %1126 = vmatprep.subr.mxu0 0.0
    %1127 = vmatpush2.xpose.msra.mxu0 0.0
    %1128 = vmatprep.subr.mxu0 0.0
    %1129 = vmatpush2.xpose.msra.mxu0 0.0
    %1130 = vmatprep.subr.mxu0 0.0
    %1131 = vmatpush2.xpose.msra.mxu0 0.0
    %1132 = vmatprep.subr.mxu0 0.0
    %1133 = vmatpush2.xpose.msra.mxu0 0.0
    %1134 = vmatprep.subr.mxu0 0.0
    %1135 = vmatpush2.xpose.msra.mxu0 0.0
    %1136 = vmatprep.subr.mxu0 0.0
    %1137 = vmatpush2.xpose.msra.mxu0 0.0
    %1138 = vmatprep.subr.mxu0 0.0
    %1139 = vmatpush2.xpose.msra.mxu0 0.0
    %1140 = vmatprep.subr.mxu0 0.0
    %1141 = vmatpush2.xpose.msra.mxu0 0.0
    %1142 = vmatprep.subr.mxu0 0.0
    %1143 = vmatpush2.xpose.msra.mxu0 0.0
    %1144 = vmatprep.subr.mxu0 0.0
    %1145 = vmatpush2.xpose.msra.mxu0 0.0
    %1146 = vmatprep.subr.mxu0 0.0
    %1147 = vmatpush2.xpose.msra.mxu0 0.0
    %1148 = vmatprep.subr.mxu0 0.0
    %1149 = vmatpush2.xpose.msra.mxu0 0.0
    %1150 = vmatprep.subr.mxu0 0.0
    %1151 = vmatpush2.xpose.msra.mxu0 0.0
    %1152 = vmatprep.mubr.f32.mxu0 0.0
    %1153 = vmatmul.mubr.f32.gmra.mxu0 %v1080
    %v1154 = vpop.f32.mrf.mxu0
    %v1155 = vadd.f32 0.0, %v1154
    %v1156 = vpop.f32.mrf.mxu0
    %1157 = vmatprep.mubr.f32.mxu0 0.0
    %1158 = vmatmul.mubr.f32.gmra.mxu0 %v1082
    %v1159 = vpop.f32.mrf.mxu0
    %v1160 = vadd.f32 0.0, %v1159
    %v1161 = vpop.f32.mrf.mxu0
    %1162 = vdwg.mxu0
    %1163 = vrot.lane.b32.xlu0 %v300, 104
    %v1164 = vpop.permute.xlu0 %1163
    %1165 = vrot.lane.b32.xlu0 %v301, 104
    %v1166 = vpop.permute.xlu0 %1165
    %v1169 = vsel %vm216, %v1164, 0.0
    %1170 = vadd.xlane.f32.xlu0 %v1169
    %v1171 = vpop.xlane.xlu0 %1170
    %v1172 = vsel %vm216, %v1166, 0.0
    %1173 = vadd.xlane.f32.xlu0 %v1172
    %v1174 = vpop.xlane.xlu0 %1173
    %1175 = vrot.lane.b32.xlu0 %v300, 72
    %v1176 = vpop.permute.xlu0 %1175
    %1177 = vrot.lane.b32.xlu0 %v301, 72
    %v1178 = vpop.permute.xlu0 %1177
    %v1181 = vsel %vm216, %v1176, 0.0
    %1182 = vadd.xlane.f32.xlu0 %v1181
    %v1183 = vpop.xlane.xlu0 %1182
    %v1184 = vsel %vm216, %v1178, 0.0
    %1185 = vadd.xlane.f32.xlu0 %v1184
    %v1186 = vpop.xlane.xlu0 %1185
    %1187 = vxpose.xlu0.b32.start [1/16] %v1183, 128
    %1188 = vxpose.xlu0.b32.cont [2/16] %v1186, 128
    %1189 = vxpose.xlu0.b32.cont [3/16] 0.0, 128
    %1190 = vxpose.xlu0.b32.cont [4/16] 0.0, 128
    %1191 = vxpose.xlu0.b32.cont [5/16] 0.0, 128
    %1192 = vxpose.xlu0.b32.cont [6/16] 0.0, 128
    %1193 = vxpose.xlu0.b32.cont [7/16] 0.0, 128
    %1194 = vxpose.xlu0.b32.cont [8/16] 0.0, 128
    %1195 = vxpose.xlu0.b32.cont [9/16] 0.0, 128
    %1196 = vxpose.xlu0.b32.cont [10/16] 0.0, 128
    %1197 = vxpose.xlu0.b32.cont [11/16] 0.0, 128
    %1198 = vxpose.xlu0.b32.cont [12/16] 0.0, 128
    %1199 = vxpose.xlu0.b32.cont [13/16] 0.0, 128
    %1200 = vxpose.xlu0.b32.cont [14/16] 0.0, 128
    %1201 = vxpose.xlu0.b32.cont [15/16] 0.0, 128
    %1202 = vxpose.xlu0.b32.end [16/16] 0.0, 128
    %v1203 = vpop.trf.xlu0
    %v1204 = vpop.trf.xlu0
    %v1205 = vpop.trf.xlu0
    %v1206 = vpop.trf.xlu0
    %v1207 = vpop.trf.xlu0
    %v1208 = vpop.trf.xlu0
    %v1209 = vpop.trf.xlu0
    %v1210 = vpop.trf.xlu0
    %v1211 = vpop.trf.xlu0
    %v1212 = vpop.trf.xlu0
    %v1213 = vpop.trf.xlu0
    %v1214 = vpop.trf.xlu0
    %v1215 = vpop.trf.xlu0
    %v1216 = vpop.trf.xlu0
    %v1217 = vpop.trf.xlu0
    %v1218 = vpop.trf.xlu0
    %v1219 = vlaneseq
    %v1220 = vshrl.u32 %v1219, 7
    %v1221 = vsub.s32 0, %v1220
    %v1222 = vrot.slane %v1203, %v1221
    %v1223 = vadd.f32 %v1171, %v1222
    %v1224 = vadd.f32 %v1174, %v1222
    %v1225 = vmul.f32 %v1155, 2.0
    %v1226 = vmul.f32 %v1160, 2.0
    %v1227 = vsub.f32 %v1223, %v1225
    %v1228 = vsub.f32 %v1224, %v1226
    %v1229 = vmax.f32 %v1227, 0.0
    %v1230 = vmax.f32 %v1228, 0.0
    %v1231 = vrsqrt.pop %v1229
    %v1232 = vmul.f32 %v1229, %v1231
    %vm1233 = vcmp.eq.f32.partialorder %v1229, inf
    %v1234 = vsel %vm1233, %v1229, %v1232
    %vm1235 = vcmp.eq.f32.partialorder %v1229, 0.0
    %v1236 = vand.u32 %v1229, 2147483648
    %v1237 = vsel %vm1235, %v1236, %v1234
    %v1238 = vrsqrt.pop %v1230
    %v1239 = vmul.f32 %v1230, %v1238
    %vm1240 = vcmp.eq.f32.partialorder %v1230, inf
    %v1241 = vsel %vm1240, %v1230, %v1239
    %vm1242 = vcmp.eq.f32.partialorder %v1230, 0.0
    %v1243 = vand.u32 %v1230, 2147483648
    %v1244 = vsel %vm1242, %v1243, %v1241
    %v1245 = vsub.f32 0.0, %v1237
    %v1246 = vsub.f32 0.0, %v1244
    %v1247 = vmul.f32 %v1245, 0.35355338
    %v1248 = vmul.f32 %v1246, 0.35355338
    %v1249 = vsel %vm87, %v1247, -inf
    %v1250 = vsel %vm88, %v1248, -inf
    %v1251 = vsel %vm386, %v1249, -inf
    %1252 = vmax.xlane.f32.xlu0 %v1251
    %v1253 = vpop.xlane.xlu0 %1252
    %v1254 = vsel %vm386, %v1250, -inf
    %1255 = vmax.xlane.f32.xlu0 %v1254
    %v1256 = vpop.xlane.xlu0 %1255
    %v1257 = vsub.f32 %v1249, %v1253
    %v1258 = vsub.f32 %v1250, %v1256
    %v1259 = vmul.f32 %v1257, 1.442695
    %v1260 = vpow.pop %v1259
    %v1261 = vmul.f32 %v1258, 1.442695
    %v1262 = vpow.pop %v1261
    %v1263 = vsel %vm386, %v1260, 0.0
    %1264 = vadd.xlane.f32.xlu0 %v1263
    %v1265 = vpop.xlane.xlu0 %1264
    %v1266 = vsel %vm386, %v1262, 0.0
    %1267 = vadd.xlane.f32.xlu0 %v1266
    %v1268 = vpop.xlane.xlu0 %1267
    %v1269 = vrcp.pop %v1265
    %v1270 = vrcp.pop %v1268
    %v1271 = vmul.f32 %v1260, %v1269
    %v1272 = vmul.f32 %v1262, %v1270
    %1273 = vrot.lane.b32.xlu0 %v204, 40
    %v1274 = vpop.permute.xlu0 %1273
    %1275 = vrot.lane.b32.xlu0 %v207, 40
    %v1276 = vpop.permute.xlu0 %1275
    %v1280 = vsel %vm386, %v1271, 0
    %v1283 = vsel %vm386, %v1272, 0
    %1285 = vmatprep.subr.mxu0 0.0
    %1286 = vmatpush1.msra.mxu0 0.0
    %1287 = vmatprep.subr.mxu0 0.0
    %1288 = vmatpush1.msra.mxu0 0.0
    %1289 = vmatprep.subr.mxu0 0.0
    %1290 = vmatpush1.msra.mxu0 0.0
    %1291 = vmatprep.subr.mxu0 0.0
    %1292 = vmatpush1.msra.mxu0 0.0
    %1293 = vmatprep.subr.mxu0 0.0
    %1294 = vmatpush1.msra.mxu0 0.0
    %1295 = vmatprep.subr.mxu0 0.0
    %1296 = vmatpush1.msra.mxu0 0.0
    %1297 = vmatprep.subr.mxu0 0.0
    %1298 = vmatpush1.msra.mxu0 0.0
    %1299 = vmatprep.subr.mxu0 0.0
    %1300 = vmatpush1.msra.mxu0 0.0
    %1301 = vmatprep.subr.mxu0 0.0
    %1302 = vmatpush1.msra.mxu0 0.0
    %1303 = vmatprep.subr.mxu0 0.0
    %1304 = vmatpush1.msra.mxu0 0.0
    %1305 = vmatprep.subr.mxu0 0.0
    %1306 = vmatpush1.msra.mxu0 0.0
    %1307 = vmatprep.subr.mxu0 0.0
    %1308 = vmatpush1.msra.mxu0 0.0
    %1309 = vmatprep.subr.mxu0 0.0
    %1310 = vmatpush1.msra.mxu0 0.0
    %1311 = vmatprep.subr.mxu0 0.0
    %1312 = vmatpush1.msra.mxu0 0.0
    %1313 = vmatprep.subr.mxu0 0.0
    %1314 = vmatpush1.msra.mxu0 %v1276
    %1315 = vmatprep.subr.mxu0 0.0
    %1316 = vmatpush1.msra.mxu0 %v1274
    %1317 = vmatprep.subr.mxu0 0.0
    %1318 = vmatpush2.msra.mxu0 0.0
    %1319 = vmatprep.subr.mxu0 0.0
    %1320 = vmatpush2.msra.mxu0 0.0
    %1321 = vmatprep.subr.mxu0 0.0
    %1322 = vmatpush2.msra.mxu0 0.0
    %1323 = vmatprep.subr.mxu0 0.0
    %1324 = vmatpush2.msra.mxu0 0.0
    %1325 = vmatprep.subr.mxu0 0.0
    %1326 = vmatpush2.msra.mxu0 0.0
    %1327 = vmatprep.subr.mxu0 0.0
    %1328 = vmatpush2.msra.mxu0 0.0
    %1329 = vmatprep.subr.mxu0 0.0
    %1330 = vmatpush2.msra.mxu0 0.0
    %1331 = vmatprep.subr.mxu0 0.0
    %1332 = vmatpush2.msra.mxu0 0.0
    %1333 = vmatprep.subr.mxu0 0.0
    %1334 = vmatpush2.msra.mxu0 0.0
    %1335 = vmatprep.subr.mxu0 0.0
    %1336 = vmatpush2.msra.mxu0 0.0
    %1337 = vmatprep.subr.mxu0 0.0
    %1338 = vmatpush2.msra.mxu0 0.0
    %1339 = vmatprep.subr.mxu0 0.0
    %1340 = vmatpush2.msra.mxu0 0.0
    %1341 = vmatprep.subr.mxu0 0.0
    %1342 = vmatpush2.msra.mxu0 0.0
    %1343 = vmatprep.subr.mxu0 0.0
    %1344 = vmatpush2.msra.mxu0 0.0
    %1345 = vmatprep.subr.mxu0 0.0
    %1346 = vmatpush2.msra.mxu0 0.0
    %1347 = vmatprep.subr.mxu0 0.0
    %1348 = vmatpush2.msra.mxu0 0.0
    %1349 = vmatprep.mubr.f32.mxu0 0.0
    %1350 = vmatmul.mubr.f32.gmra.mxu0 %v1280
    %v1351 = vpop.f32.mrf.mxu0
    %v1352 = vadd.f32 0.0, %v1351
    %v1353 = vpop.f32.mrf.mxu0
    %1354 = vmatprep.mubr.f32.mxu0 0.0
    %1355 = vmatmul.mubr.f32.gmra.mxu0 %v1283
    %v1356 = vpop.f32.mrf.mxu0
    %v1357 = vadd.f32 0.0, %v1356
    %v1358 = vpop.f32.mrf.mxu0
    %1359 = vdwg.mxu0
    %1362 = vrot.lane.b32.xlu0 %v776, 8
    %v1363 = vpop.permute.xlu0 %1362
    %1364 = vrot.lane.b32.xlu0 %v781, 8
    %v1365 = vpop.permute.xlu0 %1364
    %1370 = vrot.lane.b32.xlu0 %v1064, 16
    %v1371 = vpop.permute.xlu0 %1370
    %1372 = vrot.lane.b32.xlu0 %v1069, 16
    %v1373 = vpop.permute.xlu0 %1372
    %1378 = vrot.lane.b32.xlu0 %v1352, 24
    %v1379 = vpop.permute.xlu0 %1378
    %1380 = vrot.lane.b32.xlu0 %v1357, 24
    %v1381 = vpop.permute.xlu0 %1380
    %v1384 = vsel %vm216, %v488, %v1363
    %v1385 = vsel %vm216, %v493, %v1365
    %v1386 = vsel %vm386, %v1384, %v1371
    %v1387 = vsel %vm386, %v1385, %v1373
    %vm1388 = vcmask 195584
    %v1389 = vsel %vm1388, %v1386, %v1379
    %v1390 = vsel %vm1388, %v1387, %v1381
    %v1391 = vpack.c.bf16 %v1390, %v1389
    %v1392 = vld [vmem:[%s3] sm:$0xf]
    %v1393 = vld [vmem:[%s3 + $0x4] sm:$0xf]
    %v1394 = vld [vmem:[%s3 + $0x8] sm:$0xf]
    %v1395 = vld [vmem:[%s3 + $0xc] sm:$0xf]
    %v1396 = vld [vmem:[%s4] sm:$0x1]
    %v1398 = vlaneseq
    %v1399 = vshrl.u32 %v1398, 7
    %v1400 = vsub.s32 0, %v1399
    %v1401 = vrot.slane %v1396, %v1400
    %v1407 = vunpack.c.l.b16 %v1392
    %v1408 = vunpack.c.l.b16 %v1393
    %v1409 = vunpack.c.l.b16 %v1394
    %v1410 = vunpack.c.l.b16 %v1395
    %v1411 = vpack.c.b16 %v1408, %v1407
    %v1412 = vpack.c.b16 %v1410, %v1409
    %v1416 = vsel %vm165, %v1391, 0
    %1418 = vmatprep.subr.bf16.mxu0 0
    %1419 = vmatpush1.bf16.msra.mxu0 0
    %1420 = vmatprep.subr.bf16.mxu0 0
    %1421 = vmatpush1.bf16.msra.mxu0 0
    %1422 = vmatprep.subr.bf16.mxu0 0
    %1423 = vmatpush1.bf16.msra.mxu0 0
    %1424 = vmatprep.subr.bf16.mxu0 0
    %1425 = vmatpush1.bf16.msra.mxu0 0
    %1426 = vmatprep.subr.bf16.mxu0 0
    %1427 = vmatpush1.bf16.msra.mxu0 0
    %1428 = vmatprep.subr.bf16.mxu0 0
    %1429 = vmatpush1.bf16.msra.mxu0 0
    %1430 = vmatprep.subr.bf16.mxu0 0
    %1431 = vmatpush1.bf16.msra.mxu0 %v1412
    %1432 = vmatprep.subr.bf16.mxu0 0
    %1433 = vmatpush1.bf16.msra.mxu0 %v1411
    %1434 = vmatprep.subr.bf16.mxu0 0
    %1435 = vmatpush2.bf16.msra.mxu0 0
    %1436 = vmatprep.subr.bf16.mxu0 0
    %1437 = vmatpush2.bf16.msra.mxu0 0
    %1438 = vmatprep.subr.bf16.mxu0 0
    %1439 = vmatpush2.bf16.msra.mxu0 0
    %1440 = vmatprep.subr.bf16.mxu0 0
    %1441 = vmatpush2.bf16.msra.mxu0 0
    %1442 = vmatprep.subr.bf16.mxu0 0
    %1443 = vmatpush2.bf16.msra.mxu0 0
    %1444 = vmatprep.subr.bf16.mxu0 0
    %1445 = vmatpush2.bf16.msra.mxu0 0
    %1446 = vmatprep.subr.bf16.mxu0 0
    %1447 = vmatpush2.bf16.msra.mxu0 0
    %1448 = vmatprep.subr.bf16.mxu0 0
    %1449 = vmatpush2.bf16.msra.mxu0 0
    %1450 = vmatprep.mubr.bf16.mxu0 0
    %1451 = vmatmul.mubr.bf16.gmra.mxu0 %v1416
    %v1452 = vpop.f32.mrf.mxu0
    %v1453 = vadd.f32 %v1401, %v1452
    %v1454 = vpop.f32.mrf.mxu0
    %v1455 = vpop.f32.mrf.mxu0
    %v1456 = vadd.f32 %v1401, %v1455
    %v1457 = vpop.f32.mrf.mxu0
    %1458 = vdwg.mxu0
    %v1461 = vcombine.high %v1453, %v1453
    %v1463 = vunpack.c.l.s4 1983009808
    %v1464 = vunpack.c.0.s8 %v1463
    %v1465 = vlaneseq
    %v1466 = vshrl.u32 %v1465, 7
    %v1467 = vsub.s32 %v1464, %v1466
    %v1468 = vrot.slane %v1453, %v1467
    %v1470 = vunpack.c.l.s4 1983009808
    %v1471 = vunpack.c.0.s8 %v1470
    %v1472 = vlaneseq
    %v1473 = vshrl.u32 %v1472, 7
    %v1474 = vsub.s32 %v1471, %v1473
    %v1475 = vrot.slane %v1461, %v1474
    %v1476 = vcombine.high %v1468, %v1468
    %v1477 = vcombine.high %v1475, %v1475
    %v1478 = vcombine.high %v1456, %v1456
    %v1480 = vunpack.c.l.s4 1983009808
    %v1481 = vunpack.c.0.s8 %v1480
    %v1482 = vlaneseq
    %v1483 = vshrl.u32 %v1482, 7
    %v1484 = vsub.s32 %v1481, %v1483
    %v1485 = vrot.slane %v1456, %v1484
    %v1487 = vunpack.c.l.s4 1983009808
    %v1488 = vunpack.c.0.s8 %v1487
    %v1489 = vlaneseq
    %v1490 = vshrl.u32 %v1489, 7
    %v1491 = vsub.s32 %v1488, %v1490
    %v1492 = vrot.slane %v1478, %v1491
    %v1493 = vcombine.high %v1485, %v1485
    %v1494 = vcombine.high %v1492, %v1492
    %v1503 = vadd.f32 %v89, %v1468
    %v1504 = vadd.f32 %v90, %v1476
    %v1505 = vadd.f32 %v91, %v1475
    %v1506 = vadd.f32 %v92, %v1477
    %v1507 = vadd.f32 %v93, %v1485
    %v1508 = vadd.f32 %v94, %v1493
    %v1509 = vadd.f32 %v95, %v1492
    %v1510 = vadd.f32 %v96, %v1494
    %v1519 = vcombine.low %v1503, %v1504
    %v1520 = vcombine.low %v1505, %v1506
    %v1522 = vunpack.c.l.s4 1983009808
    %v1523 = vunpack.c.0.s8 %v1522
    %v1524 = vlaneseq
    %v1525 = vshrl.u32 %v1524, 7
    %v1526 = vsub.s32 %v1523, %v1525
    %v1527 = vrot.slane %v1519, %v1526
    %v1529 = vunpack.c.l.s4 1983009808
    %v1530 = vunpack.c.0.s8 %v1529
    %v1531 = vlaneseq
    %v1532 = vshrl.u32 %v1531, 7
    %v1533 = vsub.s32 %v1530, %v1532
    %v1534 = vrot.slane %v1520, %v1533
    %v1535 = vcombine.low %v1527, %v1534
    %v1536 = vcombine.low %v1507, %v1508
    %v1537 = vcombine.low %v1509, %v1510
    %v1539 = vunpack.c.l.s4 1983009808
    %v1540 = vunpack.c.0.s8 %v1539
    %v1541 = vlaneseq
    %v1542 = vshrl.u32 %v1541, 7
    %v1543 = vsub.s32 %v1540, %v1542
    %v1544 = vrot.slane %v1536, %v1543
    %v1546 = vunpack.c.l.s4 1983009808
    %v1547 = vunpack.c.0.s8 %v1546
    %v1548 = vlaneseq
    %v1549 = vshrl.u32 %v1548, 7
    %v1550 = vsub.s32 %v1547, %v1549
    %v1551 = vrot.slane %v1537, %v1550
    %v1552 = vcombine.low %v1544, %v1551
    %v1555 = vsel %vm165, %v1535, 0.0
    %1556 = vadd.xlane.f32.xlu0 %v1555
    %v1557 = vpop.xlane.xlu0 %1556
    %v1558 = vsel %vm165, %v1552, 0.0
    %1559 = vadd.xlane.f32.xlu0 %v1558
    %v1560 = vpop.xlane.xlu0 %1559
    %v1561 = vrcp.pop 32.0
    %v1562 = vmul.f32 %v1557, %v1561
    %v1563 = vmul.f32 %v1560, %v1561
    %v1567 = vunpack.c.l.s4 269488144
    %v1568 = vunpack.c.0.s8 %v1567
    %v1569 = vlaneseq
    %v1570 = vshrl.u32 %v1569, 7
    %v1571 = vsub.s32 %v1568, %v1570
    %v1572 = vrot.slane %v1562, %v1571
    %v1574 = vunpack.c.l.s4 842150450
    %v1575 = vunpack.c.0.s8 %v1574
    %v1576 = vlaneseq
    %v1577 = vshrl.u32 %v1576, 7
    %v1578 = vsub.s32 %v1575, %v1577
    %v1579 = vrot.slane %v1562, %v1578
    %v1581 = vunpack.c.l.s4 1414812756
    %v1582 = vunpack.c.0.s8 %v1581
    %v1583 = vlaneseq
    %v1584 = vshrl.u32 %v1583, 7
    %v1585 = vsub.s32 %v1582, %v1584
    %v1586 = vrot.slane %v1562, %v1585
    %v1588 = vunpack.c.l.s4 1987475062
    %v1589 = vunpack.c.0.s8 %v1588
    %v1590 = vlaneseq
    %v1591 = vshrl.u32 %v1590, 7
    %v1592 = vsub.s32 %v1589, %v1591
    %v1593 = vrot.slane %v1562, %v1592
    %v1595 = vunpack.c.l.s4 269488144
    %v1596 = vunpack.c.0.s8 %v1595
    %v1597 = vlaneseq
    %v1598 = vshrl.u32 %v1597, 7
    %v1599 = vsub.s32 %v1596, %v1598
    %v1600 = vrot.slane %v1563, %v1599
    %v1602 = vunpack.c.l.s4 842150450
    %v1603 = vunpack.c.0.s8 %v1602
    %v1604 = vlaneseq
    %v1605 = vshrl.u32 %v1604, 7
    %v1606 = vsub.s32 %v1603, %v1605
    %v1607 = vrot.slane %v1563, %v1606
    %v1609 = vunpack.c.l.s4 1414812756
    %v1610 = vunpack.c.0.s8 %v1609
    %v1611 = vlaneseq
    %v1612 = vshrl.u32 %v1611, 7
    %v1613 = vsub.s32 %v1610, %v1612
    %v1614 = vrot.slane %v1563, %v1613
    %v1616 = vunpack.c.l.s4 1987475062
    %v1617 = vunpack.c.0.s8 %v1616
    %v1618 = vlaneseq
    %v1619 = vshrl.u32 %v1618, 7
    %v1620 = vsub.s32 %v1617, %v1619
    %v1621 = vrot.slane %v1563, %v1620
    %v1630 = vsub.f32 %v1503, %v1572
    %v1631 = vsub.f32 %v1504, %v1579
    %v1632 = vsub.f32 %v1505, %v1586
    %v1633 = vsub.f32 %v1506, %v1593
    %v1634 = vsub.f32 %v1507, %v1600
    %v1635 = vsub.f32 %v1508, %v1607
    %v1636 = vsub.f32 %v1509, %v1614
    %v1637 = vsub.f32 %v1510, %v1621
    %v1638 = vmul.f32 %v1630, %v1630
    %v1639 = vmul.f32 %v1631, %v1631
    %v1640 = vmul.f32 %v1632, %v1632
    %v1641 = vmul.f32 %v1633, %v1633
    %v1642 = vmul.f32 %v1634, %v1634
    %v1643 = vmul.f32 %v1635, %v1635
    %v1644 = vmul.f32 %v1636, %v1636
    %v1645 = vmul.f32 %v1637, %v1637
    %v1654 = vcombine.low %v1638, %v1639
    %v1655 = vcombine.low %v1640, %v1641
    %v1657 = vunpack.c.l.s4 1983009808
    %v1658 = vunpack.c.0.s8 %v1657
    %v1659 = vlaneseq
    %v1660 = vshrl.u32 %v1659, 7
    %v1661 = vsub.s32 %v1658, %v1660
    %v1662 = vrot.slane %v1654, %v1661
    %v1664 = vunpack.c.l.s4 1983009808
    %v1665 = vunpack.c.0.s8 %v1664
    %v1666 = vlaneseq
    %v1667 = vshrl.u32 %v1666, 7
    %v1668 = vsub.s32 %v1665, %v1667
    %v1669 = vrot.slane %v1655, %v1668
    %v1670 = vcombine.low %v1662, %v1669
    %v1671 = vcombine.low %v1642, %v1643
    %v1672 = vcombine.low %v1644, %v1645
    %v1674 = vunpack.c.l.s4 1983009808
    %v1675 = vunpack.c.0.s8 %v1674
    %v1676 = vlaneseq
    %v1677 = vshrl.u32 %v1676, 7
    %v1678 = vsub.s32 %v1675, %v1677
    %v1679 = vrot.slane %v1671, %v1678
    %v1681 = vunpack.c.l.s4 1983009808
    %v1682 = vunpack.c.0.s8 %v1681
    %v1683 = vlaneseq
    %v1684 = vshrl.u32 %v1683, 7
    %v1685 = vsub.s32 %v1682, %v1684
    %v1686 = vrot.slane %v1672, %v1685
    %v1687 = vcombine.low %v1679, %v1686
    %v1690 = vsel %vm165, %v1670, 0.0
    %1691 = vadd.xlane.f32.xlu0 %v1690
    %v1692 = vpop.xlane.xlu0 %1691
    %v1693 = vsel %vm165, %v1687, 0.0
    %1694 = vadd.xlane.f32.xlu0 %v1693
    %v1695 = vpop.xlane.xlu0 %1694
    %v1696 = vmul.f32 %v1692, %v1561
    %v1697 = vmul.f32 %v1695, %v1561
    %v1698 = vadd.f32 %v1696, 1e-05
    %v1699 = vadd.f32 %v1697, 1e-05
    %v1700 = vrsqrt.pop %v1698
    %v1701 = vrsqrt.pop %v1699
    %v1705 = vunpack.c.l.s4 269488144
    %v1706 = vunpack.c.0.s8 %v1705
    %v1707 = vlaneseq
    %v1708 = vshrl.u32 %v1707, 7
    %v1709 = vsub.s32 %v1706, %v1708
    %v1710 = vrot.slane %v1700, %v1709
    %v1712 = vunpack.c.l.s4 842150450
    %v1713 = vunpack.c.0.s8 %v1712
    %v1714 = vlaneseq
    %v1715 = vshrl.u32 %v1714, 7
    %v1716 = vsub.s32 %v1713, %v1715
    %v1717 = vrot.slane %v1700, %v1716
    %v1719 = vunpack.c.l.s4 1414812756
    %v1720 = vunpack.c.0.s8 %v1719
    %v1721 = vlaneseq
    %v1722 = vshrl.u32 %v1721, 7
    %v1723 = vsub.s32 %v1720, %v1722
    %v1724 = vrot.slane %v1700, %v1723
    %v1726 = vunpack.c.l.s4 1987475062
    %v1727 = vunpack.c.0.s8 %v1726
    %v1728 = vlaneseq
    %v1729 = vshrl.u32 %v1728, 7
    %v1730 = vsub.s32 %v1727, %v1729
    %v1731 = vrot.slane %v1700, %v1730
    %v1733 = vunpack.c.l.s4 269488144
    %v1734 = vunpack.c.0.s8 %v1733
    %v1735 = vlaneseq
    %v1736 = vshrl.u32 %v1735, 7
    %v1737 = vsub.s32 %v1734, %v1736
    %v1738 = vrot.slane %v1701, %v1737
    %v1740 = vunpack.c.l.s4 842150450
    %v1741 = vunpack.c.0.s8 %v1740
    %v1742 = vlaneseq
    %v1743 = vshrl.u32 %v1742, 7
    %v1744 = vsub.s32 %v1741, %v1743
    %v1745 = vrot.slane %v1701, %v1744
    %v1747 = vunpack.c.l.s4 1414812756
    %v1748 = vunpack.c.0.s8 %v1747
    %v1749 = vlaneseq
    %v1750 = vshrl.u32 %v1749, 7
    %v1751 = vsub.s32 %v1748, %v1750
    %v1752 = vrot.slane %v1701, %v1751
    %v1754 = vunpack.c.l.s4 1987475062
    %v1755 = vunpack.c.0.s8 %v1754
    %v1756 = vlaneseq
    %v1757 = vshrl.u32 %v1756, 7
    %v1758 = vsub.s32 %v1755, %v1757
    %v1759 = vrot.slane %v1701, %v1758
    %v1768 = vmul.f32 %v1630, %v1710
    %v1769 = vmul.f32 %v1631, %v1717
    %v1770 = vmul.f32 %v1632, %v1724
    %v1771 = vmul.f32 %v1633, %v1731
    %v1772 = vmul.f32 %v1634, %v1738
    %v1773 = vmul.f32 %v1635, %v1745
    %v1774 = vmul.f32 %v1636, %v1752
    %v1775 = vmul.f32 %v1637, %v1759
    %v1776 = vld [vmem:[%s5] sm:$0x1]
    %v1778 = vlaneseq
    %v1779 = vshrl.u32 %v1778, 7
    %v1780 = vsub.s32 0, %v1779
    %v1781 = vrot.slane %v1776, %v1780
    %v1782 = vcombine.high %v1781, %v1781
    %v1784 = vunpack.c.l.s4 1983009808
    %v1785 = vunpack.c.0.s8 %v1784
    %v1786 = vlaneseq
    %v1787 = vshrl.u32 %v1786, 7
    %v1788 = vsub.s32 %v1785, %v1787
    %v1789 = vrot.slane %v1781, %v1788
    %v1791 = vunpack.c.l.s4 1983009808
    %v1792 = vunpack.c.0.s8 %v1791
    %v1793 = vlaneseq
    %v1794 = vshrl.u32 %v1793, 7
    %v1795 = vsub.s32 %v1792, %v1794
    %v1796 = vrot.slane %v1782, %v1795
    %v1797 = vcombine.high %v1789, %v1789
    %v1798 = vcombine.high %v1796, %v1796
    %v1803 = vmul.f32 %v1768, %v1789
    %v1804 = vmul.f32 %v1769, %v1797
    %v1805 = vmul.f32 %v1770, %v1796
    %v1806 = vmul.f32 %v1771, %v1798
    %v1807 = vmul.f32 %v1772, %v1789
    %v1808 = vmul.f32 %v1773, %v1797
    %v1809 = vmul.f32 %v1774, %v1796
    %v1810 = vmul.f32 %v1775, %v1798
    %v1811 = vld [vmem:[%s6] sm:$0x1]
    %v1813 = vlaneseq
    %v1814 = vshrl.u32 %v1813, 7
    %v1815 = vsub.s32 0, %v1814
    %v1816 = vrot.slane %v1811, %v1815
    %v1817 = vcombine.high %v1816, %v1816
    %v1819 = vunpack.c.l.s4 1983009808
    %v1820 = vunpack.c.0.s8 %v1819
    %v1821 = vlaneseq
    %v1822 = vshrl.u32 %v1821, 7
    %v1823 = vsub.s32 %v1820, %v1822
    %v1824 = vrot.slane %v1816, %v1823
    %v1826 = vunpack.c.l.s4 1983009808
    %v1827 = vunpack.c.0.s8 %v1826
    %v1828 = vlaneseq
    %v1829 = vshrl.u32 %v1828, 7
    %v1830 = vsub.s32 %v1827, %v1829
    %v1831 = vrot.slane %v1817, %v1830
    %v1832 = vcombine.high %v1824, %v1824
    %v1833 = vcombine.high %v1831, %v1831
    %v1838 = vadd.f32 %v1803, %v1824
    %v1839 = vadd.f32 %v1804, %v1832
    %v1840 = vadd.f32 %v1805, %v1831
    %v1841 = vadd.f32 %v1806, %v1833
    %v1842 = vadd.f32 %v1807, %v1824
    %v1843 = vadd.f32 %v1808, %v1832
    %v1844 = vadd.f32 %v1809, %v1831
    %v1845 = vadd.f32 %v1810, %v1833
    %v1854 = vcombine.low %v1838, %v1839
    %v1855 = vcombine.low %v1840, %v1841
    %v1857 = vunpack.c.l.s4 1983009808
    %v1858 = vunpack.c.0.s8 %v1857
    %v1859 = vlaneseq
    %v1860 = vshrl.u32 %v1859, 7
    %v1861 = vsub.s32 %v1858, %v1860
    %v1862 = vrot.slane %v1854, %v1861
    %v1864 = vunpack.c.l.s4 1983009808
    %v1865 = vunpack.c.0.s8 %v1864
    %v1866 = vlaneseq
    %v1867 = vshrl.u32 %v1866, 7
    %v1868 = vsub.s32 %v1865, %v1867
    %v1869 = vrot.slane %v1855, %v1868
    %v1870 = vcombine.low %v1862, %v1869
    %v1871 = vcombine.low %v1842, %v1843
    %v1872 = vcombine.low %v1844, %v1845
    %v1874 = vunpack.c.l.s4 1983009808
    %v1875 = vunpack.c.0.s8 %v1874
    %v1876 = vlaneseq
    %v1877 = vshrl.u32 %v1876, 7
    %v1878 = vsub.s32 %v1875, %v1877
    %v1879 = vrot.slane %v1871, %v1878
    %v1881 = vunpack.c.l.s4 1983009808
    %v1882 = vunpack.c.0.s8 %v1881
    %v1883 = vlaneseq
    %v1884 = vshrl.u32 %v1883, 7
    %v1885 = vsub.s32 %v1882, %v1884
    %v1886 = vrot.slane %v1872, %v1885
    %v1887 = vcombine.low %v1879, %v1886
    %v1890 = vpack.c.bf16 %v1887, %v1870
    %v1891 = vld [vmem:[%s7] sm:$0xff]
    %v1892 = vld [vmem:[%s7 + $0x8] sm:$0xff]
    %v1893 = vld [vmem:[%s7 + $0x10] sm:$0xff]
    %v1894 = vld [vmem:[%s7 + $0x18] sm:$0xff]
    %v1895 = vld [vmem:[%s7 + $0x20] sm:$0xff]
    %v1896 = vld [vmem:[%s7 + $0x28] sm:$0xff]
    %v1897 = vld [vmem:[%s7 + $0x30] sm:$0xff]
    %v1898 = vld [vmem:[%s7 + $0x38] sm:$0xff]
    %v1899 = vld [vmem:[%s7 + $0x40] sm:$0xff]
    %v1900 = vld [vmem:[%s7 + $0x48] sm:$0xff]
    %v1901 = vld [vmem:[%s7 + $0x50] sm:$0xff]
    %v1902 = vld [vmem:[%s7 + $0x58] sm:$0xff]
    %v1903 = vld [vmem:[%s7 + $0x60] sm:$0xff]
    %v1904 = vld [vmem:[%s7 + $0x68] sm:$0xff]
    %v1905 = vld [vmem:[%s7 + $0x70] sm:$0xff]
    %v1906 = vld [vmem:[%s7 + $0x78] sm:$0xff]
    %v1907 = vld [vmem:[%s7 + $0x80] sm:$0xff]
    %v1908 = vld [vmem:[%s7 + $0x88] sm:$0xff]
    %v1909 = vld [vmem:[%s7 + $0x90] sm:$0xff]
    %v1910 = vld [vmem:[%s7 + $0x98] sm:$0xff]
    %v1911 = vld [vmem:[%s7 + $0xa0] sm:$0xff]
    %v1912 = vld [vmem:[%s7 + $0xa8] sm:$0xff]
    %v1913 = vld [vmem:[%s7 + $0xb0] sm:$0xff]
    %v1914 = vld [vmem:[%s7 + $0xb8] sm:$0xff]
    %v1915 = vld [vmem:[%s7 + $0xc0] sm:$0xff]
    %v1916 = vld [vmem:[%s7 + $0xc8] sm:$0xff]
    %v1917 = vld [vmem:[%s7 + $0xd0] sm:$0xff]
    %v1918 = vld [vmem:[%s7 + $0xd8] sm:$0xff]
    %v1919 = vld [vmem:[%s7 + $0xe0] sm:$0xff]
    %v1920 = vld [vmem:[%s7 + $0xe8] sm:$0xff]
    %v1921 = vld [vmem:[%s7 + $0xf0] sm:$0xff]
    %v1922 = vld [vmem:[%s7 + $0xf8] sm:$0xff]
    %v1923 = vld [vmem:[%s8] sm:$0xff]
    %v1924 = vld [vmem:[%s8 + $0x8] sm:$0xff]
    %v1927 = vlaneseq
    %v1928 = vshrl.u32 %v1927, 7
    %v1929 = vsub.s32 0, %v1928
    %v1930 = vrot.slane %v1923, %v1929
    %v1931 = vlaneseq
    %v1932 = vshrl.u32 %v1931, 7
    %v1933 = vsub.s32 1, %v1932
    %v1934 = vrot.slane %v1923, %v1933
    %v1935 = vlaneseq
    %v1936 = vshrl.u32 %v1935, 7
    %v1937 = vsub.s32 2, %v1936
    %v1938 = vrot.slane %v1923, %v1937
    %v1939 = vlaneseq
    %v1940 = vshrl.u32 %v1939, 7
    %v1941 = vsub.s32 3, %v1940
    %v1942 = vrot.slane %v1923, %v1941
    %v1943 = vlaneseq
    %v1944 = vshrl.u32 %v1943, 7
    %v1945 = vsub.s32 4, %v1944
    %v1946 = vrot.slane %v1923, %v1945
    %v1947 = vlaneseq
    %v1948 = vshrl.u32 %v1947, 7
    %v1949 = vsub.s32 5, %v1948
    %v1950 = vrot.slane %v1923, %v1949
    %v1951 = vlaneseq
    %v1952 = vshrl.u32 %v1951, 7
    %v1953 = vsub.s32 6, %v1952
    %v1954 = vrot.slane %v1923, %v1953
    %v1955 = vlaneseq
    %v1956 = vshrl.u32 %v1955, 7
    %v1957 = vsub.s32 7, %v1956
    %v1958 = vrot.slane %v1923, %v1957
    %v1959 = vlaneseq
    %v1960 = vshrl.u32 %v1959, 7
    %v1961 = vsub.s32 0, %v1960
    %v1962 = vrot.slane %v1924, %v1961
    %v1963 = vlaneseq
    %v1964 = vshrl.u32 %v1963, 7
    %v1965 = vsub.s32 1, %v1964
    %v1966 = vrot.slane %v1924, %v1965
    %v1967 = vlaneseq
    %v1968 = vshrl.u32 %v1967, 7
    %v1969 = vsub.s32 2, %v1968
    %v1970 = vrot.slane %v1924, %v1969
    %v1971 = vlaneseq
    %v1972 = vshrl.u32 %v1971, 7
    %v1973 = vsub.s32 3, %v1972
    %v1974 = vrot.slane %v1924, %v1973
    %v1975 = vlaneseq
    %v1976 = vshrl.u32 %v1975, 7
    %v1977 = vsub.s32 4, %v1976
    %v1978 = vrot.slane %v1924, %v1977
    %v1979 = vlaneseq
    %v1980 = vshrl.u32 %v1979, 7
    %v1981 = vsub.s32 5, %v1980
    %v1982 = vrot.slane %v1924, %v1981
    %v1983 = vlaneseq
    %v1984 = vshrl.u32 %v1983, 7
    %v1985 = vsub.s32 6, %v1984
    %v1986 = vrot.slane %v1924, %v1985
    %v1987 = vlaneseq
    %v1988 = vshrl.u32 %v1987, 7
    %v1989 = vsub.s32 7, %v1988
    %v1990 = vrot.slane %v1924, %v1989
    %v2039 = vunpack.c.l.b16 %v1891
    %v2040 = vunpack.c.h.b16 %v1891
    %v2041 = vunpack.c.l.b16 %v1892
    %v2042 = vunpack.c.h.b16 %v1892
    %v2043 = vunpack.c.l.b16 %v1893
    %v2044 = vunpack.c.h.b16 %v1893
    %v2045 = vunpack.c.l.b16 %v1894
    %v2046 = vunpack.c.h.b16 %v1894
    %v2047 = vunpack.c.l.b16 %v1895
    %v2048 = vunpack.c.h.b16 %v1895
    %v2049 = vunpack.c.l.b16 %v1896
    %v2050 = vunpack.c.h.b16 %v1896
    %v2051 = vunpack.c.l.b16 %v1897
    %v2052 = vunpack.c.h.b16 %v1897
    %v2053 = vunpack.c.l.b16 %v1898
    %v2054 = vunpack.c.h.b16 %v1898
    %v2055 = vunpack.c.l.b16 %v1899
    %v2056 = vunpack.c.h.b16 %v1899
    %v2057 = vunpack.c.l.b16 %v1900
    %v2058 = vunpack.c.h.b16 %v1900
    %v2059 = vunpack.c.l.b16 %v1901
    %v2060 = vunpack.c.h.b16 %v1901
    %v2061 = vunpack.c.l.b16 %v1902
    %v2062 = vunpack.c.h.b16 %v1902
    %v2063 = vunpack.c.l.b16 %v1903
    %v2064 = vunpack.c.h.b16 %v1903
    %v2065 = vunpack.c.l.b16 %v1904
    %v2066 = vunpack.c.h.b16 %v1904
    %v2067 = vunpack.c.l.b16 %v1905
    %v2068 = vunpack.c.h.b16 %v1905
    %v2069 = vunpack.c.l.b16 %v1906
    %v2070 = vunpack.c.h.b16 %v1906
    %v2071 = vunpack.c.l.b16 %v1907
    %v2072 = vunpack.c.h.b16 %v1907
    %v2073 = vunpack.c.l.b16 %v1908
    %v2074 = vunpack.c.h.b16 %v1908
    %v2075 = vunpack.c.l.b16 %v1909
    %v2076 = vunpack.c.h.b16 %v1909
    %v2077 = vunpack.c.l.b16 %v1910
    %v2078 = vunpack.c.h.b16 %v1910
    %v2079 = vunpack.c.l.b16 %v1911
    %v2080 = vunpack.c.h.b16 %v1911
    %v2081 = vunpack.c.l.b16 %v1912
    %v2082 = vunpack.c.h.b16 %v1912
    %v2083 = vunpack.c.l.b16 %v1913
    %v2084 = vunpack.c.h.b16 %v1913
    %v2085 = vunpack.c.l.b16 %v1914
    %v2086 = vunpack.c.h.b16 %v1914
    %v2087 = vunpack.c.l.b16 %v1915
    %v2088 = vunpack.c.h.b16 %v1915
    %v2089 = vunpack.c.l.b16 %v1916
    %v2090 = vunpack.c.h.b16 %v1916
    %v2091 = vunpack.c.l.b16 %v1917
    %v2092 = vunpack.c.h.b16 %v1917
    %v2093 = vunpack.c.l.b16 %v1918
    %v2094 = vunpack.c.h.b16 %v1918
    %v2095 = vunpack.c.l.b16 %v1919
    %v2096 = vunpack.c.h.b16 %v1919
    %v2097 = vunpack.c.l.b16 %v1920
    %v2098 = vunpack.c.h.b16 %v1920
    %v2099 = vunpack.c.l.b16 %v1921
    %v2100 = vunpack.c.h.b16 %v1921
    %v2101 = vunpack.c.l.b16 %v1922
    %v2102 = vunpack.c.h.b16 %v1922
    %v2103 = vpack.c.b16 %v2055, %v2039
    %v2104 = vpack.c.b16 %v2056, %v2040
    %v2105 = vpack.c.b16 %v2057, %v2041
    %v2106 = vpack.c.b16 %v2058, %v2042
    %v2107 = vpack.c.b16 %v2059, %v2043
    %v2108 = vpack.c.b16 %v2060, %v2044
    %v2109 = vpack.c.b16 %v2061, %v2045
    %v2110 = vpack.c.b16 %v2062, %v2046
    %v2111 = vpack.c.b16 %v2063, %v2047
    %v2112 = vpack.c.b16 %v2064, %v2048
    %v2113 = vpack.c.b16 %v2065, %v2049
    %v2114 = vpack.c.b16 %v2066, %v2050
    %v2115 = vpack.c.b16 %v2067, %v2051
    %v2116 = vpack.c.b16 %v2068, %v2052
    %v2117 = vpack.c.b16 %v2069, %v2053
    %v2118 = vpack.c.b16 %v2070, %v2054
    %v2119 = vpack.c.b16 %v2087, %v2071
    %v2120 = vpack.c.b16 %v2088, %v2072
    %v2121 = vpack.c.b16 %v2089, %v2073
    %v2122 = vpack.c.b16 %v2090, %v2074
    %v2123 = vpack.c.b16 %v2091, %v2075
    %v2124 = vpack.c.b16 %v2092, %v2076
    %v2125 = vpack.c.b16 %v2093, %v2077
    %v2126 = vpack.c.b16 %v2094, %v2078
    %v2127 = vpack.c.b16 %v2095, %v2079
    %v2128 = vpack.c.b16 %v2096, %v2080
    %v2129 = vpack.c.b16 %v2097, %v2081
    %v2130 = vpack.c.b16 %v2098, %v2082
    %v2131 = vpack.c.b16 %v2099, %v2083
    %v2132 = vpack.c.b16 %v2100, %v2084
    %v2133 = vpack.c.b16 %v2101, %v2085
    %v2134 = vpack.c.b16 %v2102, %v2086
    %v2168 = vsel %vm165, %v1890, 0
    %2170 = vmatprep.subr.bf16.mxu0 0
    %2171 = vmatpush1.bf16.msra.mxu0 0
    %2172 = vmatprep.subr.bf16.mxu0 0
    %2173 = vmatpush1.bf16.msra.mxu0 0
    %2174 = vmatprep.subr.bf16.mxu0 0
    %2175 = vmatpush1.bf16.msra.mxu0 0
    %2176 = vmatprep.subr.bf16.mxu0 0
    %2177 = vmatpush1.bf16.msra.mxu0 0
    %2178 = vmatprep.subr.bf16.mxu0 0
    %2179 = vmatpush1.bf16.msra.mxu0 0
    %2180 = vmatprep.subr.bf16.mxu0 0
    %2181 = vmatpush1.bf16.msra.mxu0 0
    %2182 = vmatprep.subr.bf16.mxu0 %v2120
    %2183 = vmatpush1.bf16.msra.mxu0 %v2119
    %2184 = vmatprep.subr.bf16.mxu0 %v2104
    %2185 = vmatpush1.bf16.msra.mxu0 %v2103
    %2186 = vmatprep.subr.bf16.mxu0 0
    %2187 = vmatpush2.bf16.msra.mxu0 0
    %2188 = vmatprep.subr.bf16.mxu0 0
    %2189 = vmatpush2.bf16.msra.mxu0 0
    %2190 = vmatprep.subr.bf16.mxu0 0
    %2191 = vmatpush2.bf16.msra.mxu0 0
    %2192 = vmatprep.subr.bf16.mxu0 0
    %2193 = vmatpush2.bf16.msra.mxu0 0
    %2194 = vmatprep.subr.bf16.mxu0 0
    %2195 = vmatpush2.bf16.msra.mxu0 0
    %2196 = vmatprep.subr.bf16.mxu0 0
    %2197 = vmatpush2.bf16.msra.mxu0 0
    %2198 = vmatprep.subr.bf16.mxu0 0
    %2199 = vmatpush2.bf16.msra.mxu0 0
    %2200 = vmatprep.subr.bf16.mxu0 0
    %2201 = vmatpush2.bf16.msra.mxu0 0
    %2202 = vmatprep.mubr.bf16.mxu0 0
    %2203 = vmatmul.mubr.bf16.gmra.mxu0 %v2168
    %v2204 = vpop.f32.mrf.mxu0
    %v2205 = vadd.f32 %v1930, %v2204
    %v2206 = vpop.f32.mrf.mxu0
    %v2207 = vadd.f32 %v1934, %v2206
    %v2208 = vpop.f32.mrf.mxu0
    %v2209 = vadd.f32 %v1930, %v2208
    %v2210 = vpop.f32.mrf.mxu0
    %v2211 = vadd.f32 %v1934, %v2210
    %2212 = vdwg.mxu0
    %2213 = vmatprep.subr.bf16.mxu0 0
    %2214 = vmatpush1.bf16.msra.mxu0 0
    %2215 = vmatprep.subr.bf16.mxu0 0
    %2216 = vmatpush1.bf16.msra.mxu0 0
    %2217 = vmatprep.subr.bf16.mxu0 0
    %2218 = vmatpush1.bf16.msra.mxu0 0
    %2219 = vmatprep.subr.bf16.mxu0 0
    %2220 = vmatpush1.bf16.msra.mxu0 0
    %2221 = vmatprep.subr.bf16.mxu0 0
    %2222 = vmatpush1.bf16.msra.mxu0 0
    %2223 = vmatprep.subr.bf16.mxu0 0
    %2224 = vmatpush1.bf16.msra.mxu0 0
    %2225 = vmatprep.subr.bf16.mxu0 %v2122
    %2226 = vmatpush1.bf16.msra.mxu0 %v2121
    %2227 = vmatprep.subr.bf16.mxu0 %v2106
    %2228 = vmatpush1.bf16.msra.mxu0 %v2105
    %2229 = vmatprep.subr.bf16.mxu0 0
    %2230 = vmatpush2.bf16.msra.mxu0 0
    %2231 = vmatprep.subr.bf16.mxu0 0
    %2232 = vmatpush2.bf16.msra.mxu0 0
    %2233 = vmatprep.subr.bf16.mxu0 0
    %2234 = vmatpush2.bf16.msra.mxu0 0
    %2235 = vmatprep.subr.bf16.mxu0 0
    %2236 = vmatpush2.bf16.msra.mxu0 0
    %2237 = vmatprep.subr.bf16.mxu0 0
    %2238 = vmatpush2.bf16.msra.mxu0 0
    %2239 = vmatprep.subr.bf16.mxu0 0
    %2240 = vmatpush2.bf16.msra.mxu0 0
    %2241 = vmatprep.subr.bf16.mxu0 0
    %2242 = vmatpush2.bf16.msra.mxu0 0
    %2243 = vmatprep.subr.bf16.mxu0 0
    %2244 = vmatpush2.bf16.msra.mxu0 0
    %2245 = vmatprep.mubr.bf16.mxu0 0
    %2246 = vmatmul.mubr.bf16.gmra.mxu0 %v2168
    %v2247 = vpop.f32.mrf.mxu0
    %v2248 = vadd.f32 %v1938, %v2247
    %v2249 = vpop.f32.mrf.mxu0
    %v2250 = vadd.f32 %v1942, %v2249
    %v2251 = vpop.f32.mrf.mxu0
    %v2252 = vadd.f32 %v1938, %v2251
    %v2253 = vpop.f32.mrf.mxu0
    %v2254 = vadd.f32 %v1942, %v2253
    %2255 = vdwg.mxu0
    %2256 = vmatprep.subr.bf16.mxu0 0
    %2257 = vmatpush1.bf16.msra.mxu0 0
    %2258 = vmatprep.subr.bf16.mxu0 0
    %2259 = vmatpush1.bf16.msra.mxu0 0
    %2260 = vmatprep.subr.bf16.mxu0 0
    %2261 = vmatpush1.bf16.msra.mxu0 0
    %2262 = vmatprep.subr.bf16.mxu0 0
    %2263 = vmatpush1.bf16.msra.mxu0 0
    %2264 = vmatprep.subr.bf16.mxu0 0
    %2265 = vmatpush1.bf16.msra.mxu0 0
    %2266 = vmatprep.subr.bf16.mxu0 0
    %2267 = vmatpush1.bf16.msra.mxu0 0
    %2268 = vmatprep.subr.bf16.mxu0 %v2124
    %2269 = vmatpush1.bf16.msra.mxu0 %v2123
    %2270 = vmatprep.subr.bf16.mxu0 %v2108
    %2271 = vmatpush1.bf16.msra.mxu0 %v2107
    %2272 = vmatprep.subr.bf16.mxu0 0
    %2273 = vmatpush2.bf16.msra.mxu0 0
    %2274 = vmatprep.subr.bf16.mxu0 0
    %2275 = vmatpush2.bf16.msra.mxu0 0
    %2276 = vmatprep.subr.bf16.mxu0 0
    %2277 = vmatpush2.bf16.msra.mxu0 0
    %2278 = vmatprep.subr.bf16.mxu0 0
    %2279 = vmatpush2.bf16.msra.mxu0 0
    %2280 = vmatprep.subr.bf16.mxu0 0
    %2281 = vmatpush2.bf16.msra.mxu0 0
    %2282 = vmatprep.subr.bf16.mxu0 0
    %2283 = vmatpush2.bf16.msra.mxu0 0
    %2284 = vmatprep.subr.bf16.mxu0 0
    %2285 = vmatpush2.bf16.msra.mxu0 0
    %2286 = vmatprep.subr.bf16.mxu0 0
    %2287 = vmatpush2.bf16.msra.mxu0 0
    %2288 = vmatprep.mubr.bf16.mxu0 0
    %2289 = vmatmul.mubr.bf16.gmra.mxu0 %v2168
    %v2290 = vpop.f32.mrf.mxu0
    %v2291 = vadd.f32 %v1946, %v2290
    %v2292 = vpop.f32.mrf.mxu0
    %v2293 = vadd.f32 %v1950, %v2292
    %v2294 = vpop.f32.mrf.mxu0
    %v2295 = vadd.f32 %v1946, %v2294
    %v2296 = vpop.f32.mrf.mxu0
    %v2297 = vadd.f32 %v1950, %v2296
    %2298 = vdwg.mxu0
    %2299 = vmatprep.subr.bf16.mxu0 0
    %2300 = vmatpush1.bf16.msra.mxu0 0
    %2301 = vmatprep.subr.bf16.mxu0 0
    %2302 = vmatpush1.bf16.msra.mxu0 0
    %2303 = vmatprep.subr.bf16.mxu0 0
    %2304 = vmatpush1.bf16.msra.mxu0 0
    %2305 = vmatprep.subr.bf16.mxu0 0
    %2306 = vmatpush1.bf16.msra.mxu0 0
    %2307 = vmatprep.subr.bf16.mxu0 0
    %2308 = vmatpush1.bf16.msra.mxu0 0
    %2309 = vmatprep.subr.bf16.mxu0 0
    %2310 = vmatpush1.bf16.msra.mxu0 0
    %2311 = vmatprep.subr.bf16.mxu0 %v2126
    %2312 = vmatpush1.bf16.msra.mxu0 %v2125
    %2313 = vmatprep.subr.bf16.mxu0 %v2110
    %2314 = vmatpush1.bf16.msra.mxu0 %v2109
    %2315 = vmatprep.subr.bf16.mxu0 0
    %2316 = vmatpush2.bf16.msra.mxu0 0
    %2317 = vmatprep.subr.bf16.mxu0 0
    %2318 = vmatpush2.bf16.msra.mxu0 0
    %2319 = vmatprep.subr.bf16.mxu0 0
    %2320 = vmatpush2.bf16.msra.mxu0 0
    %2321 = vmatprep.subr.bf16.mxu0 0
    %2322 = vmatpush2.bf16.msra.mxu0 0
    %2323 = vmatprep.subr.bf16.mxu0 0
    %2324 = vmatpush2.bf16.msra.mxu0 0
    %2325 = vmatprep.subr.bf16.mxu0 0
    %2326 = vmatpush2.bf16.msra.mxu0 0
    %2327 = vmatprep.subr.bf16.mxu0 0
    %2328 = vmatpush2.bf16.msra.mxu0 0
    %2329 = vmatprep.subr.bf16.mxu0 0
    %2330 = vmatpush2.bf16.msra.mxu0 0
    %2331 = vmatprep.mubr.bf16.mxu0 0
    %2332 = vmatmul.mubr.bf16.gmra.mxu0 %v2168
    %v2333 = vpop.f32.mrf.mxu0
    %v2334 = vadd.f32 %v1954, %v2333
    %v2335 = vpop.f32.mrf.mxu0
    %v2336 = vadd.f32 %v1958, %v2335
    %v2337 = vpop.f32.mrf.mxu0
    %v2338 = vadd.f32 %v1954, %v2337
    %v2339 = vpop.f32.mrf.mxu0
    %v2340 = vadd.f32 %v1958, %v2339
    %2341 = vdwg.mxu0
    %2342 = vmatprep.subr.bf16.mxu0 0
    %2343 = vmatpush1.bf16.msra.mxu0 0
    %2344 = vmatprep.subr.bf16.mxu0 0
    %2345 = vmatpush1.bf16.msra.mxu0 0
    %2346 = vmatprep.subr.bf16.mxu0 0
    %2347 = vmatpush1.bf16.msra.mxu0 0
    %2348 = vmatprep.subr.bf16.mxu0 0
    %2349 = vmatpush1.bf16.msra.mxu0 0
    %2350 = vmatprep.subr.bf16.mxu0 0
    %2351 = vmatpush1.bf16.msra.mxu0 0
    %2352 = vmatprep.subr.bf16.mxu0 0
    %2353 = vmatpush1.bf16.msra.mxu0 0
    %2354 = vmatprep.subr.bf16.mxu0 %v2128
    %2355 = vmatpush1.bf16.msra.mxu0 %v2127
    %2356 = vmatprep.subr.bf16.mxu0 %v2112
    %2357 = vmatpush1.bf16.msra.mxu0 %v2111
    %2358 = vmatprep.subr.bf16.mxu0 0
    %2359 = vmatpush2.bf16.msra.mxu0 0
    %2360 = vmatprep.subr.bf16.mxu0 0
    %2361 = vmatpush2.bf16.msra.mxu0 0
    %2362 = vmatprep.subr.bf16.mxu0 0
    %2363 = vmatpush2.bf16.msra.mxu0 0
    %2364 = vmatprep.subr.bf16.mxu0 0
    %2365 = vmatpush2.bf16.msra.mxu0 0
    %2366 = vmatprep.subr.bf16.mxu0 0
    %2367 = vmatpush2.bf16.msra.mxu0 0
    %2368 = vmatprep.subr.bf16.mxu0 0
    %2369 = vmatpush2.bf16.msra.mxu0 0
    %2370 = vmatprep.subr.bf16.mxu0 0
    %2371 = vmatpush2.bf16.msra.mxu0 0
    %2372 = vmatprep.subr.bf16.mxu0 0
    %2373 = vmatpush2.bf16.msra.mxu0 0
    %2374 = vmatprep.mubr.bf16.mxu0 0
    %2375 = vmatmul.mubr.bf16.gmra.mxu0 %v2168
    %v2376 = vpop.f32.mrf.mxu0
    %v2377 = vadd.f32 %v1962, %v2376
    %v2378 = vpop.f32.mrf.mxu0
    %v2379 = vadd.f32 %v1966, %v2378
    %v2380 = vpop.f32.mrf.mxu0
    %v2381 = vadd.f32 %v1962, %v2380
    %v2382 = vpop.f32.mrf.mxu0
    %v2383 = vadd.f32 %v1966, %v2382
    %2384 = vdwg.mxu0
    %2385 = vmatprep.subr.bf16.mxu0 0
    %2386 = vmatpush1.bf16.msra.mxu0 0
    %2387 = vmatprep.subr.bf16.mxu0 0
    %2388 = vmatpush1.bf16.msra.mxu0 0
    %2389 = vmatprep.subr.bf16.mxu0 0
    %2390 = vmatpush1.bf16.msra.mxu0 0
    %2391 = vmatprep.subr.bf16.mxu0 0
    %2392 = vmatpush1.bf16.msra.mxu0 0
    %2393 = vmatprep.subr.bf16.mxu0 0
    %2394 = vmatpush1.bf16.msra.mxu0 0
    %2395 = vmatprep.subr.bf16.mxu0 0
    %2396 = vmatpush1.bf16.msra.mxu0 0
    %2397 = vmatprep.subr.bf16.mxu0 %v2130
    %2398 = vmatpush1.bf16.msra.mxu0 %v2129
    %2399 = vmatprep.subr.bf16.mxu0 %v2114
    %2400 = vmatpush1.bf16.msra.mxu0 %v2113
    %2401 = vmatprep.subr.bf16.mxu0 0
    %2402 = vmatpush2.bf16.msra.mxu0 0
    %2403 = vmatprep.subr.bf16.mxu0 0
    %2404 = vmatpush2.bf16.msra.mxu0 0
    %2405 = vmatprep.subr.bf16.mxu0 0
    %2406 = vmatpush2.bf16.msra.mxu0 0
    %2407 = vmatprep.subr.bf16.mxu0 0
    %2408 = vmatpush2.bf16.msra.mxu0 0
    %2409 = vmatprep.subr.bf16.mxu0 0
    %2410 = vmatpush2.bf16.msra.mxu0 0
    %2411 = vmatprep.subr.bf16.mxu0 0
    %2412 = vmatpush2.bf16.msra.mxu0 0
    %2413 = vmatprep.subr.bf16.mxu0 0
    %2414 = vmatpush2.bf16.msra.mxu0 0
    %2415 = vmatprep.subr.bf16.mxu0 0
    %2416 = vmatpush2.bf16.msra.mxu0 0
    %2417 = vmatprep.mubr.bf16.mxu0 0
    %2418 = vmatmul.mubr.bf16.gmra.mxu0 %v2168
    %v2419 = vpop.f32.mrf.mxu0
    %v2420 = vadd.f32 %v1970, %v2419
    %v2421 = vpop.f32.mrf.mxu0
    %v2422 = vadd.f32 %v1974, %v2421
    %v2423 = vpop.f32.mrf.mxu0
    %v2424 = vadd.f32 %v1970, %v2423
    %v2425 = vpop.f32.mrf.mxu0
    %v2426 = vadd.f32 %v1974, %v2425
    %2427 = vdwg.mxu0
    %2428 = vmatprep.subr.bf16.mxu0 0
    %2429 = vmatpush1.bf16.msra.mxu0 0
    %2430 = vmatprep.subr.bf16.mxu0 0
    %2431 = vmatpush1.bf16.msra.mxu0 0
    %2432 = vmatprep.subr.bf16.mxu0 0
    %2433 = vmatpush1.bf16.msra.mxu0 0
    %2434 = vmatprep.subr.bf16.mxu0 0
    %2435 = vmatpush1.bf16.msra.mxu0 0
    %2436 = vmatprep.subr.bf16.mxu0 0
    %2437 = vmatpush1.bf16.msra.mxu0 0
    %2438 = vmatprep.subr.bf16.mxu0 0
    %2439 = vmatpush1.bf16.msra.mxu0 0
    %2440 = vmatprep.subr.bf16.mxu0 %v2132
    %2441 = vmatpush1.bf16.msra.mxu0 %v2131
    %2442 = vmatprep.subr.bf16.mxu0 %v2116
    %2443 = vmatpush1.bf16.msra.mxu0 %v2115
    %2444 = vmatprep.subr.bf16.mxu0 0
    %2445 = vmatpush2.bf16.msra.mxu0 0
    %2446 = vmatprep.subr.bf16.mxu0 0
    %2447 = vmatpush2.bf16.msra.mxu0 0
    %2448 = vmatprep.subr.bf16.mxu0 0
    %2449 = vmatpush2.bf16.msra.mxu0 0
    %2450 = vmatprep.subr.bf16.mxu0 0
    %2451 = vmatpush2.bf16.msra.mxu0 0
    %2452 = vmatprep.subr.bf16.mxu0 0
    %2453 = vmatpush2.bf16.msra.mxu0 0
    %2454 = vmatprep.subr.bf16.mxu0 0
    %2455 = vmatpush2.bf16.msra.mxu0 0
    %2456 = vmatprep.subr.bf16.mxu0 0
    %2457 = vmatpush2.bf16.msra.mxu0 0
    %2458 = vmatprep.subr.bf16.mxu0 0
    %2459 = vmatpush2.bf16.msra.mxu0 0
    %2460 = vmatprep.mubr.bf16.mxu0 0
    %2461 = vmatmul.mubr.bf16.gmra.mxu0 %v2168
    %v2462 = vpop.f32.mrf.mxu0
    %v2463 = vadd.f32 %v1978, %v2462
    %v2464 = vpop.f32.mrf.mxu0
    %v2465 = vadd.f32 %v1982, %v2464
    %v2466 = vpop.f32.mrf.mxu0
    %v2467 = vadd.f32 %v1978, %v2466
    %v2468 = vpop.f32.mrf.mxu0
    %v2469 = vadd.f32 %v1982, %v2468
    %2470 = vdwg.mxu0
    %2471 = vmatprep.subr.bf16.mxu0 0
    %2472 = vmatpush1.bf16.msra.mxu0 0
    %2473 = vmatprep.subr.bf16.mxu0 0
    %2474 = vmatpush1.bf16.msra.mxu0 0
    %2475 = vmatprep.subr.bf16.mxu0 0
    %2476 = vmatpush1.bf16.msra.mxu0 0
    %2477 = vmatprep.subr.bf16.mxu0 0
    %2478 = vmatpush1.bf16.msra.mxu0 0
    %2479 = vmatprep.subr.bf16.mxu0 0
    %2480 = vmatpush1.bf16.msra.mxu0 0
    %2481 = vmatprep.subr.bf16.mxu0 0
    %2482 = vmatpush1.bf16.msra.mxu0 0
    %2483 = vmatprep.subr.bf16.mxu0 %v2134
    %2484 = vmatpush1.bf16.msra.mxu0 %v2133
    %2485 = vmatprep.subr.bf16.mxu0 %v2118
    %2486 = vmatpush1.bf16.msra.mxu0 %v2117
    %2487 = vmatprep.subr.bf16.mxu0 0
    %2488 = vmatpush2.bf16.msra.mxu0 0
    %2489 = vmatprep.subr.bf16.mxu0 0
    %2490 = vmatpush2.bf16.msra.mxu0 0
    %2491 = vmatprep.subr.bf16.mxu0 0
    %2492 = vmatpush2.bf16.msra.mxu0 0
    %2493 = vmatprep.subr.bf16.mxu0 0
    %2494 = vmatpush2.bf16.msra.mxu0 0
    %2495 = vmatprep.subr.bf16.mxu0 0
    %2496 = vmatpush2.bf16.msra.mxu0 0
    %2497 = vmatprep.subr.bf16.mxu0 0
    %2498 = vmatpush2.bf16.msra.mxu0 0
    %2499 = vmatprep.subr.bf16.mxu0 0
    %2500 = vmatpush2.bf16.msra.mxu0 0
    %2501 = vmatprep.subr.bf16.mxu0 0
    %2502 = vmatpush2.bf16.msra.mxu0 0
    %2503 = vmatprep.mubr.bf16.mxu0 0
    %2504 = vmatmul.mubr.bf16.gmra.mxu0 %v2168
    %v2505 = vpop.f32.mrf.mxu0
    %v2506 = vadd.f32 %v1986, %v2505
    %v2507 = vpop.f32.mrf.mxu0
    %v2508 = vadd.f32 %v1990, %v2507
    %v2509 = vpop.f32.mrf.mxu0
    %v2510 = vadd.f32 %v1986, %v2509
    %v2511 = vpop.f32.mrf.mxu0
    %v2512 = vadd.f32 %v1990, %v2511
    %2513 = vdwg.mxu0
    %v2514 = vmax.f32 %v2205, 0.0
    %v2515 = vmax.f32 %v2207, 0.0
    %v2516 = vmax.f32 %v2248, 0.0
    %v2517 = vmax.f32 %v2250, 0.0
    %v2518 = vmax.f32 %v2291, 0.0
    %v2519 = vmax.f32 %v2293, 0.0
    %v2520 = vmax.f32 %v2334, 0.0
    %v2521 = vmax.f32 %v2336, 0.0
    %v2522 = vmax.f32 %v2377, 0.0
    %v2523 = vmax.f32 %v2379, 0.0
    %v2524 = vmax.f32 %v2420, 0.0
    %v2525 = vmax.f32 %v2422, 0.0
    %v2526 = vmax.f32 %v2463, 0.0
    %v2527 = vmax.f32 %v2465, 0.0
    %v2528 = vmax.f32 %v2506, 0.0
    %v2529 = vmax.f32 %v2508, 0.0
    %v2530 = vmax.f32 %v2209, 0.0
    %v2531 = vmax.f32 %v2211, 0.0
    %v2532 = vmax.f32 %v2252, 0.0
    %v2533 = vmax.f32 %v2254, 0.0
    %v2534 = vmax.f32 %v2295, 0.0
    %v2535 = vmax.f32 %v2297, 0.0
    %v2536 = vmax.f32 %v2338, 0.0
    %v2537 = vmax.f32 %v2340, 0.0
    %v2538 = vmax.f32 %v2381, 0.0
    %v2539 = vmax.f32 %v2383, 0.0
    %v2540 = vmax.f32 %v2424, 0.0
    %v2541 = vmax.f32 %v2426, 0.0
    %v2542 = vmax.f32 %v2467, 0.0
    %v2543 = vmax.f32 %v2469, 0.0
    %v2544 = vmax.f32 %v2510, 0.0
    %v2545 = vmax.f32 %v2512, 0.0
    %v2546 = vpack.c.bf16 %v2530, %v2514
    %v2547 = vpack.c.bf16 %v2531, %v2515
    %v2548 = vpack.c.bf16 %v2532, %v2516
    %v2549 = vpack.c.bf16 %v2533, %v2517
    %v2550 = vpack.c.bf16 %v2534, %v2518
    %v2551 = vpack.c.bf16 %v2535, %v2519
    %v2552 = vpack.c.bf16 %v2536, %v2520
    %v2553 = vpack.c.bf16 %v2537, %v2521
    %v2554 = vpack.c.bf16 %v2538, %v2522
    %v2555 = vpack.c.bf16 %v2539, %v2523
    %v2556 = vpack.c.bf16 %v2540, %v2524
    %v2557 = vpack.c.bf16 %v2541, %v2525
    %v2558 = vpack.c.bf16 %v2542, %v2526
    %v2559 = vpack.c.bf16 %v2543, %v2527
    %v2560 = vpack.c.bf16 %v2544, %v2528
    %v2561 = vpack.c.bf16 %v2545, %v2529
    %v2562 = vld [vmem:[%s9] sm:$0xf]
    %v2563 = vld [vmem:[%s9 + $0x4] sm:$0xf]
    %v2564 = vld [vmem:[%s9 + $0x8] sm:$0xf]
    %v2565 = vld [vmem:[%s9 + $0xc] sm:$0xf]
    %v2566 = vld [vmem:[%s9 + $0x10] sm:$0xf]
    %v2567 = vld [vmem:[%s9 + $0x14] sm:$0xf]
    %v2568 = vld [vmem:[%s9 + $0x18] sm:$0xf]
    %v2569 = vld [vmem:[%s9 + $0x1c] sm:$0xf]
    %v2570 = vld [vmem:[%s9 + $0x20] sm:$0xf]
    %v2571 = vld [vmem:[%s9 + $0x24] sm:$0xf]
    %v2572 = vld [vmem:[%s9 + $0x28] sm:$0xf]
    %v2573 = vld [vmem:[%s9 + $0x2c] sm:$0xf]
    %v2574 = vld [vmem:[%s9 + $0x30] sm:$0xf]
    %v2575 = vld [vmem:[%s9 + $0x34] sm:$0xf]
    %v2576 = vld [vmem:[%s9 + $0x38] sm:$0xf]
    %v2577 = vld [vmem:[%s9 + $0x3c] sm:$0xf]
    %v2578 = vld [vmem:[%s9 + $0x40] sm:$0xf]
    %v2579 = vld [vmem:[%s9 + $0x44] sm:$0xf]
    %v2580 = vld [vmem:[%s9 + $0x48] sm:$0xf]
    %v2581 = vld [vmem:[%s9 + $0x4c] sm:$0xf]
    %v2582 = vld [vmem:[%s9 + $0x50] sm:$0xf]
    %v2583 = vld [vmem:[%s9 + $0x54] sm:$0xf]
    %v2584 = vld [vmem:[%s9 + $0x58] sm:$0xf]
    %v2585 = vld [vmem:[%s9 + $0x5c] sm:$0xf]
    %v2586 = vld [vmem:[%s9 + $0x60] sm:$0xf]
    %v2587 = vld [vmem:[%s9 + $0x64] sm:$0xf]
    %v2588 = vld [vmem:[%s9 + $0x68] sm:$0xf]
    %v2589 = vld [vmem:[%s9 + $0x6c] sm:$0xf]
    %v2590 = vld [vmem:[%s9 + $0x70] sm:$0xf]
    %v2591 = vld [vmem:[%s9 + $0x74] sm:$0xf]
    %v2592 = vld [vmem:[%s9 + $0x78] sm:$0xf]
    %v2593 = vld [vmem:[%s9 + $0x7c] sm:$0xf]
    %v2594 = vld [vmem:[%s9 + $0x80] sm:$0xf]
    %v2595 = vld [vmem:[%s9 + $0x84] sm:$0xf]
    %v2596 = vld [vmem:[%s9 + $0x88] sm:$0xf]
    %v2597 = vld [vmem:[%s9 + $0x8c] sm:$0xf]
    %v2598 = vld [vmem:[%s9 + $0x90] sm:$0xf]
    %v2599 = vld [vmem:[%s9 + $0x94] sm:$0xf]
    %v2600 = vld [vmem:[%s9 + $0x98] sm:$0xf]
    %v2601 = vld [vmem:[%s9 + $0x9c] sm:$0xf]
    %v2602 = vld [vmem:[%s9 + $0xa0] sm:$0xf]
    %v2603 = vld [vmem:[%s9 + $0xa4] sm:$0xf]
    %v2604 = vld [vmem:[%s9 + $0xa8] sm:$0xf]
    %v2605 = vld [vmem:[%s9 + $0xac] sm:$0xf]
    %v2606 = vld [vmem:[%s9 + $0xb0] sm:$0xf]
    %v2607 = vld [vmem:[%s9 + $0xb4] sm:$0xf]
    %v2608 = vld [vmem:[%s9 + $0xb8] sm:$0xf]
    %v2609 = vld [vmem:[%s9 + $0xbc] sm:$0xf]
    %v2610 = vld [vmem:[%s9 + $0xc0] sm:$0xf]
    %v2611 = vld [vmem:[%s9 + $0xc4] sm:$0xf]
    %v2612 = vld [vmem:[%s9 + $0xc8] sm:$0xf]
    %v2613 = vld [vmem:[%s9 + $0xcc] sm:$0xf]
    %v2614 = vld [vmem:[%s9 + $0xd0] sm:$0xf]
    %v2615 = vld [vmem:[%s9 + $0xd4] sm:$0xf]
    %v2616 = vld [vmem:[%s9 + $0xd8] sm:$0xf]
    %v2617 = vld [vmem:[%s9 + $0xdc] sm:$0xf]
    %v2618 = vld [vmem:[%s9 + $0xe0] sm:$0xf]
    %v2619 = vld [vmem:[%s9 + $0xe4] sm:$0xf]
    %v2620 = vld [vmem:[%s9 + $0xe8] sm:$0xf]
    %v2621 = vld [vmem:[%s9 + $0xec] sm:$0xf]
    %v2622 = vld [vmem:[%s9 + $0xf0] sm:$0xf]
    %v2623 = vld [vmem:[%s9 + $0xf4] sm:$0xf]
    %v2624 = vld [vmem:[%s9 + $0xf8] sm:$0xf]
    %v2625 = vld [vmem:[%s9 + $0xfc] sm:$0xf]
    %v2626 = vld [vmem:[%s9 + $0x100] sm:$0xf]
    %v2627 = vld [vmem:[%s9 + $0x104] sm:$0xf]
    %v2628 = vld [vmem:[%s9 + $0x108] sm:$0xf]
    %v2629 = vld [vmem:[%s9 + $0x10c] sm:$0xf]
    %v2630 = vld [vmem:[%s9 + $0x110] sm:$0xf]
    %v2631 = vld [vmem:[%s9 + $0x114] sm:$0xf]
    %v2632 = vld [vmem:[%s9 + $0x118] sm:$0xf]
    %v2633 = vld [vmem:[%s9 + $0x11c] sm:$0xf]
    %v2634 = vld [vmem:[%s9 + $0x120] sm:$0xf]
    %v2635 = vld [vmem:[%s9 + $0x124] sm:$0xf]
    %v2636 = vld [vmem:[%s9 + $0x128] sm:$0xf]
    %v2637 = vld [vmem:[%s9 + $0x12c] sm:$0xf]
    %v2638 = vld [vmem:[%s9 + $0x130] sm:$0xf]
    %v2639 = vld [vmem:[%s9 + $0x134] sm:$0xf]
    %v2640 = vld [vmem:[%s9 + $0x138] sm:$0xf]
    %v2641 = vld [vmem:[%s9 + $0x13c] sm:$0xf]
    %v2642 = vld [vmem:[%s9 + $0x140] sm:$0xf]
    %v2643 = vld [vmem:[%s9 + $0x144] sm:$0xf]
    %v2644 = vld [vmem:[%s9 + $0x148] sm:$0xf]
    %v2645 = vld [vmem:[%s9 + $0x14c] sm:$0xf]
    %v2646 = vld [vmem:[%s9 + $0x150] sm:$0xf]
    %v2647 = vld [vmem:[%s9 + $0x154] sm:$0xf]
    %v2648 = vld [vmem:[%s9 + $0x158] sm:$0xf]
    %v2649 = vld [vmem:[%s9 + $0x15c] sm:$0xf]
    %v2650 = vld [vmem:[%s9 + $0x160] sm:$0xf]
    %v2651 = vld [vmem:[%s9 + $0x164] sm:$0xf]
    %v2652 = vld [vmem:[%s9 + $0x168] sm:$0xf]
    %v2653 = vld [vmem:[%s9 + $0x16c] sm:$0xf]
    %v2654 = vld [vmem:[%s9 + $0x170] sm:$0xf]
    %v2655 = vld [vmem:[%s9 + $0x174] sm:$0xf]
    %v2656 = vld [vmem:[%s9 + $0x178] sm:$0xf]
    %v2657 = vld [vmem:[%s9 + $0x17c] sm:$0xf]
    %v2658 = vld [vmem:[%s9 + $0x180] sm:$0xf]
    %v2659 = vld [vmem:[%s9 + $0x184] sm:$0xf]
    %v2660 = vld [vmem:[%s9 + $0x188] sm:$0xf]
    %v2661 = vld [vmem:[%s9 + $0x18c] sm:$0xf]
    %v2662 = vld [vmem:[%s9 + $0x190] sm:$0xf]
    %v2663 = vld [vmem:[%s9 + $0x194] sm:$0xf]
    %v2664 = vld [vmem:[%s9 + $0x198] sm:$0xf]
    %v2665 = vld [vmem:[%s9 + $0x19c] sm:$0xf]
    %v2666 = vld [vmem:[%s9 + $0x1a0] sm:$0xf]
    %v2667 = vld [vmem:[%s9 + $0x1a4] sm:$0xf]
    %v2668 = vld [vmem:[%s9 + $0x1a8] sm:$0xf]
    %v2669 = vld [vmem:[%s9 + $0x1ac] sm:$0xf]
    %v2670 = vld [vmem:[%s9 + $0x1b0] sm:$0xf]
    %v2671 = vld [vmem:[%s9 + $0x1b4] sm:$0xf]
    %v2672 = vld [vmem:[%s9 + $0x1b8] sm:$0xf]
    %v2673 = vld [vmem:[%s9 + $0x1bc] sm:$0xf]
    %v2674 = vld [vmem:[%s9 + $0x1c0] sm:$0xf]
    %v2675 = vld [vmem:[%s9 + $0x1c4] sm:$0xf]
    %v2676 = vld [vmem:[%s9 + $0x1c8] sm:$0xf]
    %v2677 = vld [vmem:[%s9 + $0x1cc] sm:$0xf]
    %v2678 = vld [vmem:[%s9 + $0x1d0] sm:$0xf]
    %v2679 = vld [vmem:[%s9 + $0x1d4] sm:$0xf]
    %v2680 = vld [vmem:[%s9 + $0x1d8] sm:$0xf]
    %v2681 = vld [vmem:[%s9 + $0x1dc] sm:$0xf]
    %v2682 = vld [vmem:[%s9 + $0x1e0] sm:$0xf]
    %v2683 = vld [vmem:[%s9 + $0x1e4] sm:$0xf]
    %v2684 = vld [vmem:[%s9 + $0x1e8] sm:$0xf]
    %v2685 = vld [vmem:[%s9 + $0x1ec] sm:$0xf]
    %v2686 = vld [vmem:[%s9 + $0x1f0] sm:$0xf]
    %v2687 = vld [vmem:[%s9 + $0x1f4] sm:$0xf]
    %v2688 = vld [vmem:[%s9 + $0x1f8] sm:$0xf]
    %v2689 = vld [vmem:[%s9 + $0x1fc] sm:$0xf]
    %v2690 = vld [vmem:[%s9 + $0x200] sm:$0xf]
    %v2691 = vld [vmem:[%s9 + $0x204] sm:$0xf]
    %v2692 = vld [vmem:[%s9 + $0x208] sm:$0xf]
    %v2693 = vld [vmem:[%s9 + $0x20c] sm:$0xf]
    %v2694 = vld [vmem:[%s9 + $0x210] sm:$0xf]
    %v2695 = vld [vmem:[%s9 + $0x214] sm:$0xf]
    %v2696 = vld [vmem:[%s9 + $0x218] sm:$0xf]
    %v2697 = vld [vmem:[%s9 + $0x21c] sm:$0xf]
    %v2698 = vld [vmem:[%s9 + $0x220] sm:$0xf]
    %v2699 = vld [vmem:[%s9 + $0x224] sm:$0xf]
    %v2700 = vld [vmem:[%s9 + $0x228] sm:$0xf]
    %v2701 = vld [vmem:[%s9 + $0x22c] sm:$0xf]
    %v2702 = vld [vmem:[%s9 + $0x230] sm:$0xf]
    %v2703 = vld [vmem:[%s9 + $0x234] sm:$0xf]
    %v2704 = vld [vmem:[%s9 + $0x238] sm:$0xf]
    %v2705 = vld [vmem:[%s9 + $0x23c] sm:$0xf]
    %v2706 = vld [vmem:[%s9 + $0x240] sm:$0xf]
    %v2707 = vld [vmem:[%s9 + $0x244] sm:$0xf]
    %v2708 = vld [vmem:[%s9 + $0x248] sm:$0xf]
    %v2709 = vld [vmem:[%s9 + $0x24c] sm:$0xf]
    %v2710 = vld [vmem:[%s9 + $0x250] sm:$0xf]
    %v2711 = vld [vmem:[%s9 + $0x254] sm:$0xf]
    %v2712 = vld [vmem:[%s9 + $0x258] sm:$0xf]
    %v2713 = vld [vmem:[%s9 + $0x25c] sm:$0xf]
    %v2714 = vld [vmem:[%s9 + $0x260] sm:$0xf]
    %v2715 = vld [vmem:[%s9 + $0x264] sm:$0xf]
    %v2716 = vld [vmem:[%s9 + $0x268] sm:$0xf]
    %v2717 = vld [vmem:[%s9 + $0x26c] sm:$0xf]
    %v2718 = vld [vmem:[%s9 + $0x270] sm:$0xf]
    %v2719 = vld [vmem:[%s9 + $0x274] sm:$0xf]
    %v2720 = vld [vmem:[%s9 + $0x278] sm:$0xf]
    %v2721 = vld [vmem:[%s9 + $0x27c] sm:$0xf]
    %v2722 = vld [vmem:[%s9 + $0x280] sm:$0xf]
    %v2723 = vld [vmem:[%s9 + $0x284] sm:$0xf]
    %v2724 = vld [vmem:[%s9 + $0x288] sm:$0xf]
    %v2725 = vld [vmem:[%s9 + $0x28c] sm:$0xf]
    %v2726 = vld [vmem:[%s9 + $0x290] sm:$0xf]
    %v2727 = vld [vmem:[%s9 + $0x294] sm:$0xf]
    %v2728 = vld [vmem:[%s9 + $0x298] sm:$0xf]
    %v2729 = vld [vmem:[%s9 + $0x29c] sm:$0xf]
    %v2730 = vld [vmem:[%s9 + $0x2a0] sm:$0xf]
    %v2731 = vld [vmem:[%s9 + $0x2a4] sm:$0xf]
    %v2732 = vld [vmem:[%s9 + $0x2a8] sm:$0xf]
    %v2733 = vld [vmem:[%s9 + $0x2ac] sm:$0xf]
    %v2734 = vld [vmem:[%s9 + $0x2b0] sm:$0xf]
    %v2735 = vld [vmem:[%s9 + $0x2b4] sm:$0xf]
    %v2736 = vld [vmem:[%s9 + $0x2b8] sm:$0xf]
    %v2737 = vld [vmem:[%s9 + $0x2bc] sm:$0xf]
    %v2738 = vld [vmem:[%s9 + $0x2c0] sm:$0xf]
    %v2739 = vld [vmem:[%s9 + $0x2c4] sm:$0xf]
    %v2740 = vld [vmem:[%s9 + $0x2c8] sm:$0xf]
    %v2741 = vld [vmem:[%s9 + $0x2cc] sm:$0xf]
    %v2742 = vld [vmem:[%s9 + $0x2d0] sm:$0xf]
    %v2743 = vld [vmem:[%s9 + $0x2d4] sm:$0xf]
    %v2744 = vld [vmem:[%s9 + $0x2d8] sm:$0xf]
    %v2745 = vld [vmem:[%s9 + $0x2dc] sm:$0xf]
    %v2746 = vld [vmem:[%s9 + $0x2e0] sm:$0xf]
    %v2747 = vld [vmem:[%s9 + $0x2e4] sm:$0xf]
    %v2748 = vld [vmem:[%s9 + $0x2e8] sm:$0xf]
    %v2749 = vld [vmem:[%s9 + $0x2ec] sm:$0xf]
    %v2750 = vld [vmem:[%s9 + $0x2f0] sm:$0xf]
    %v2751 = vld [vmem:[%s9 + $0x2f4] sm:$0xf]
    %v2752 = vld [vmem:[%s9 + $0x2f8] sm:$0xf]
    %v2753 = vld [vmem:[%s9 + $0x2fc] sm:$0xf]
    %v2754 = vld [vmem:[%s9 + $0x300] sm:$0xf]
    %v2755 = vld [vmem:[%s9 + $0x304] sm:$0xf]
    %v2756 = vld [vmem:[%s9 + $0x308] sm:$0xf]
    %v2757 = vld [vmem:[%s9 + $0x30c] sm:$0xf]
    %v2758 = vld [vmem:[%s9 + $0x310] sm:$0xf]
    %v2759 = vld [vmem:[%s9 + $0x314] sm:$0xf]
    %v2760 = vld [vmem:[%s9 + $0x318] sm:$0xf]
    %v2761 = vld [vmem:[%s9 + $0x31c] sm:$0xf]
    %v2762 = vld [vmem:[%s9 + $0x320] sm:$0xf]
    %v2763 = vld [vmem:[%s9 + $0x324] sm:$0xf]
    %v2764 = vld [vmem:[%s9 + $0x328] sm:$0xf]
    %v2765 = vld [vmem:[%s9 + $0x32c] sm:$0xf]
    %v2766 = vld [vmem:[%s9 + $0x330] sm:$0xf]
    %v2767 = vld [vmem:[%s9 + $0x334] sm:$0xf]
    %v2768 = vld [vmem:[%s9 + $0x338] sm:$0xf]
    %v2769 = vld [vmem:[%s9 + $0x33c] sm:$0xf]
    %v2770 = vld [vmem:[%s9 + $0x340] sm:$0xf]
    %v2771 = vld [vmem:[%s9 + $0x344] sm:$0xf]
    %v2772 = vld [vmem:[%s9 + $0x348] sm:$0xf]
    %v2773 = vld [vmem:[%s9 + $0x34c] sm:$0xf]
    %v2774 = vld [vmem:[%s9 + $0x350] sm:$0xf]
    %v2775 = vld [vmem:[%s9 + $0x354] sm:$0xf]
    %v2776 = vld [vmem:[%s9 + $0x358] sm:$0xf]
    %v2777 = vld [vmem:[%s9 + $0x35c] sm:$0xf]
    %v2778 = vld [vmem:[%s9 + $0x360] sm:$0xf]
    %v2779 = vld [vmem:[%s9 + $0x364] sm:$0xf]
    %v2780 = vld [vmem:[%s9 + $0x368] sm:$0xf]
    %v2781 = vld [vmem:[%s9 + $0x36c] sm:$0xf]
    %v2782 = vld [vmem:[%s9 + $0x370] sm:$0xf]
    %v2783 = vld [vmem:[%s9 + $0x374] sm:$0xf]
    %v2784 = vld [vmem:[%s9 + $0x378] sm:$0xf]
    %v2785 = vld [vmem:[%s9 + $0x37c] sm:$0xf]
    %v2786 = vld [vmem:[%s9 + $0x380] sm:$0xf]
    %v2787 = vld [vmem:[%s9 + $0x384] sm:$0xf]
    %v2788 = vld [vmem:[%s9 + $0x388] sm:$0xf]
    %v2789 = vld [vmem:[%s9 + $0x38c] sm:$0xf]
    %v2790 = vld [vmem:[%s9 + $0x390] sm:$0xf]
    %v2791 = vld [vmem:[%s9 + $0x394] sm:$0xf]
    %v2792 = vld [vmem:[%s9 + $0x398] sm:$0xf]
    %v2793 = vld [vmem:[%s9 + $0x39c] sm:$0xf]
    %v2794 = vld [vmem:[%s9 + $0x3a0] sm:$0xf]
    %v2795 = vld [vmem:[%s9 + $0x3a4] sm:$0xf]
    %v2796 = vld [vmem:[%s9 + $0x3a8] sm:$0xf]
    %v2797 = vld [vmem:[%s9 + $0x3ac] sm:$0xf]
    %v2798 = vld [vmem:[%s9 + $0x3b0] sm:$0xf]
    %v2799 = vld [vmem:[%s9 + $0x3b4] sm:$0xf]
    %v2800 = vld [vmem:[%s9 + $0x3b8] sm:$0xf]
    %v2801 = vld [vmem:[%s9 + $0x3bc] sm:$0xf]
    %v2802 = vld [vmem:[%s9 + $0x3c0] sm:$0xf]
    %v2803 = vld [vmem:[%s9 + $0x3c4] sm:$0xf]
    %v2804 = vld [vmem:[%s9 + $0x3c8] sm:$0xf]
    %v2805 = vld [vmem:[%s9 + $0x3cc] sm:$0xf]
    %v2806 = vld [vmem:[%s9 + $0x3d0] sm:$0xf]
    %v2807 = vld [vmem:[%s9 + $0x3d4] sm:$0xf]
    %v2808 = vld [vmem:[%s9 + $0x3d8] sm:$0xf]
    %v2809 = vld [vmem:[%s9 + $0x3dc] sm:$0xf]
    %v2810 = vld [vmem:[%s9 + $0x3e0] sm:$0xf]
    %v2811 = vld [vmem:[%s9 + $0x3e4] sm:$0xf]
    %v2812 = vld [vmem:[%s9 + $0x3e8] sm:$0xf]
    %v2813 = vld [vmem:[%s9 + $0x3ec] sm:$0xf]
    %v2814 = vld [vmem:[%s9 + $0x3f0] sm:$0xf]
    %v2815 = vld [vmem:[%s9 + $0x3f4] sm:$0xf]
    %v2816 = vld [vmem:[%s9 + $0x3f8] sm:$0xf]
    %v2817 = vld [vmem:[%s9 + $0x3fc] sm:$0xf]
    %v2818 = vld [vmem:[%s10] sm:$0x1]
    %v2820 = vlaneseq
    %v2821 = vshrl.u32 %v2820, 7
    %v2822 = vsub.s32 0, %v2821
    %v2823 = vrot.slane %v2818, %v2822
    %v3081 = vunpack.c.l.b16 %v2562
    %v3082 = vunpack.c.l.b16 %v2563
    %v3083 = vunpack.c.l.b16 %v2564
    %v3084 = vunpack.c.l.b16 %v2565
    %v3085 = vunpack.c.l.b16 %v2566
    %v3086 = vunpack.c.l.b16 %v2567
    %v3087 = vunpack.c.l.b16 %v2568
    %v3088 = vunpack.c.l.b16 %v2569
    %v3089 = vunpack.c.l.b16 %v2570
    %v3090 = vunpack.c.l.b16 %v2571
    %v3091 = vunpack.c.l.b16 %v2572
    %v3092 = vunpack.c.l.b16 %v2573
    %v3093 = vunpack.c.l.b16 %v2574
    %v3094 = vunpack.c.l.b16 %v2575
    %v3095 = vunpack.c.l.b16 %v2576
    %v3096 = vunpack.c.l.b16 %v2577
    %v3097 = vunpack.c.l.b16 %v2578
    %v3098 = vunpack.c.l.b16 %v2579
    %v3099 = vunpack.c.l.b16 %v2580
    %v3100 = vunpack.c.l.b16 %v2581
    %v3101 = vunpack.c.l.b16 %v2582
    %v3102 = vunpack.c.l.b16 %v2583
    %v3103 = vunpack.c.l.b16 %v2584
    %v3104 = vunpack.c.l.b16 %v2585
    %v3105 = vunpack.c.l.b16 %v2586
    %v3106 = vunpack.c.l.b16 %v2587
    %v3107 = vunpack.c.l.b16 %v2588
    %v3108 = vunpack.c.l.b16 %v2589
    %v3109 = vunpack.c.l.b16 %v2590
    %v3110 = vunpack.c.l.b16 %v2591
    %v3111 = vunpack.c.l.b16 %v2592
    %v3112 = vunpack.c.l.b16 %v2593
    %v3113 = vunpack.c.l.b16 %v2594
    %v3114 = vunpack.c.l.b16 %v2595
    %v3115 = vunpack.c.l.b16 %v2596
    %v3116 = vunpack.c.l.b16 %v2597
    %v3117 = vunpack.c.l.b16 %v2598
    %v3118 = vunpack.c.l.b16 %v2599
    %v3119 = vunpack.c.l.b16 %v2600
    %v3120 = vunpack.c.l.b16 %v2601
    %v3121 = vunpack.c.l.b16 %v2602
    %v3122 = vunpack.c.l.b16 %v2603
    %v3123 = vunpack.c.l.b16 %v2604
    %v3124 = vunpack.c.l.b16 %v2605
    %v3125 = vunpack.c.l.b16 %v2606
    %v3126 = vunpack.c.l.b16 %v2607
    %v3127 = vunpack.c.l.b16 %v2608
    %v3128 = vunpack.c.l.b16 %v2609
    %v3129 = vunpack.c.l.b16 %v2610
    %v3130 = vunpack.c.l.b16 %v2611
    %v3131 = vunpack.c.l.b16 %v2612
    %v3132 = vunpack.c.l.b16 %v2613
    %v3133 = vunpack.c.l.b16 %v2614
    %v3134 = vunpack.c.l.b16 %v2615
    %v3135 = vunpack.c.l.b16 %v2616
    %v3136 = vunpack.c.l.b16 %v2617
    %v3137 = vunpack.c.l.b16 %v2618
    %v3138 = vunpack.c.l.b16 %v2619
    %v3139 = vunpack.c.l.b16 %v2620
    %v3140 = vunpack.c.l.b16 %v2621
    %v3141 = vunpack.c.l.b16 %v2622
    %v3142 = vunpack.c.l.b16 %v2623
    %v3143 = vunpack.c.l.b16 %v2624
    %v3144 = vunpack.c.l.b16 %v2625
    %v3145 = vunpack.c.l.b16 %v2626
    %v3146 = vunpack.c.l.b16 %v2627
    %v3147 = vunpack.c.l.b16 %v2628
    %v3148 = vunpack.c.l.b16 %v2629
    %v3149 = vunpack.c.l.b16 %v2630
    %v3150 = vunpack.c.l.b16 %v2631
    %v3151 = vunpack.c.l.b16 %v2632
    %v3152 = vunpack.c.l.b16 %v2633
    %v3153 = vunpack.c.l.b16 %v2634
    %v3154 = vunpack.c.l.b16 %v2635
    %v3155 = vunpack.c.l.b16 %v2636
    %v3156 = vunpack.c.l.b16 %v2637
    %v3157 = vunpack.c.l.b16 %v2638
    %v3158 = vunpack.c.l.b16 %v2639
    %v3159 = vunpack.c.l.b16 %v2640
    %v3160 = vunpack.c.l.b16 %v2641
    %v3161 = vunpack.c.l.b16 %v2642
    %v3162 = vunpack.c.l.b16 %v2643
    %v3163 = vunpack.c.l.b16 %v2644
    %v3164 = vunpack.c.l.b16 %v2645
    %v3165 = vunpack.c.l.b16 %v2646
    %v3166 = vunpack.c.l.b16 %v2647
    %v3167 = vunpack.c.l.b16 %v2648
    %v3168 = vunpack.c.l.b16 %v2649
    %v3169 = vunpack.c.l.b16 %v2650
    %v3170 = vunpack.c.l.b16 %v2651
    %v3171 = vunpack.c.l.b16 %v2652
    %v3172 = vunpack.c.l.b16 %v2653
    %v3173 = vunpack.c.l.b16 %v2654
    %v3174 = vunpack.c.l.b16 %v2655
    %v3175 = vunpack.c.l.b16 %v2656
    %v3176 = vunpack.c.l.b16 %v2657
    %v3177 = vunpack.c.l.b16 %v2658
    %v3178 = vunpack.c.l.b16 %v2659
    %v3179 = vunpack.c.l.b16 %v2660
    %v3180 = vunpack.c.l.b16 %v2661
    %v3181 = vunpack.c.l.b16 %v2662
    %v3182 = vunpack.c.l.b16 %v2663
    %v3183 = vunpack.c.l.b16 %v2664
    %v3184 = vunpack.c.l.b16 %v2665
    %v3185 = vunpack.c.l.b16 %v2666
    %v3186 = vunpack.c.l.b16 %v2667
    %v3187 = vunpack.c.l.b16 %v2668
    %v3188 = vunpack.c.l.b16 %v2669
    %v3189 = vunpack.c.l.b16 %v2670
    %v3190 = vunpack.c.l.b16 %v2671
    %v3191 = vunpack.c.l.b16 %v2672
    %v3192 = vunpack.c.l.b16 %v2673
    %v3193 = vunpack.c.l.b16 %v2674
    %v3194 = vunpack.c.l.b16 %v2675
    %v3195 = vunpack.c.l.b16 %v2676
    %v3196 = vunpack.c.l.b16 %v2677
    %v3197 = vunpack.c.l.b16 %v2678
    %v3198 = vunpack.c.l.b16 %v2679
    %v3199 = vunpack.c.l.b16 %v2680
    %v3200 = vunpack.c.l.b16 %v2681
    %v3201 = vunpack.c.l.b16 %v2682
    %v3202 = vunpack.c.l.b16 %v2683
    %v3203 = vunpack.c.l.b16 %v2684
    %v3204 = vunpack.c.l.b16 %v2685
    %v3205 = vunpack.c.l.b16 %v2686
    %v3206 = vunpack.c.l.b16 %v2687
    %v3207 = vunpack.c.l.b16 %v2688
    %v3208 = vunpack.c.l.b16 %v2689
    %v3209 = vunpack.c.l.b16 %v2690
    %v3210 = vunpack.c.l.b16 %v2691
    %v3211 = vunpack.c.l.b16 %v2692
    %v3212 = vunpack.c.l.b16 %v2693
    %v3213 = vunpack.c.l.b16 %v2694
    %v3214 = vunpack.c.l.b16 %v2695
    %v3215 = vunpack.c.l.b16 %v2696
    %v3216 = vunpack.c.l.b16 %v2697
    %v3217 = vunpack.c.l.b16 %v2698
    %v3218 = vunpack.c.l.b16 %v2699
    %v3219 = vunpack.c.l.b16 %v2700
    %v3220 = vunpack.c.l.b16 %v2701
    %v3221 = vunpack.c.l.b16 %v2702
    %v3222 = vunpack.c.l.b16 %v2703
    %v3223 = vunpack.c.l.b16 %v2704
    %v3224 = vunpack.c.l.b16 %v2705
    %v3225 = vunpack.c.l.b16 %v2706
    %v3226 = vunpack.c.l.b16 %v2707
    %v3227 = vunpack.c.l.b16 %v2708
    %v3228 = vunpack.c.l.b16 %v2709
    %v3229 = vunpack.c.l.b16 %v2710
    %v3230 = vunpack.c.l.b16 %v2711
    %v3231 = vunpack.c.l.b16 %v2712
    %v3232 = vunpack.c.l.b16 %v2713
    %v3233 = vunpack.c.l.b16 %v2714
    %v3234 = vunpack.c.l.b16 %v2715
    %v3235 = vunpack.c.l.b16 %v2716
    %v3236 = vunpack.c.l.b16 %v2717
    %v3237 = vunpack.c.l.b16 %v2718
    %v3238 = vunpack.c.l.b16 %v2719
    %v3239 = vunpack.c.l.b16 %v2720
    %v3240 = vunpack.c.l.b16 %v2721
    %v3241 = vunpack.c.l.b16 %v2722
    %v3242 = vunpack.c.l.b16 %v2723
    %v3243 = vunpack.c.l.b16 %v2724
    %v3244 = vunpack.c.l.b16 %v2725
    %v3245 = vunpack.c.l.b16 %v2726
    %v3246 = vunpack.c.l.b16 %v2727
    %v3247 = vunpack.c.l.b16 %v2728
    %v3248 = vunpack.c.l.b16 %v2729
    %v3249 = vunpack.c.l.b16 %v2730
    %v3250 = vunpack.c.l.b16 %v2731
    %v3251 = vunpack.c.l.b16 %v2732
    %v3252 = vunpack.c.l.b16 %v2733
    %v3253 = vunpack.c.l.b16 %v2734
    %v3254 = vunpack.c.l.b16 %v2735
    %v3255 = vunpack.c.l.b16 %v2736
    %v3256 = vunpack.c.l.b16 %v2737
    %v3257 = vunpack.c.l.b16 %v2738
    %v3258 = vunpack.c.l.b16 %v2739
    %v3259 = vunpack.c.l.b16 %v2740
    %v3260 = vunpack.c.l.b16 %v2741
    %v3261 = vunpack.c.l.b16 %v2742
    %v3262 = vunpack.c.l.b16 %v2743
    %v3263 = vunpack.c.l.b16 %v2744
    %v3264 = vunpack.c.l.b16 %v2745
    %v3265 = vunpack.c.l.b16 %v2746
    %v3266 = vunpack.c.l.b16 %v2747
    %v3267 = vunpack.c.l.b16 %v2748
    %v3268 = vunpack.c.l.b16 %v2749
    %v3269 = vunpack.c.l.b16 %v2750
    %v3270 = vunpack.c.l.b16 %v2751
    %v3271 = vunpack.c.l.b16 %v2752
    %v3272 = vunpack.c.l.b16 %v2753
    %v3273 = vunpack.c.l.b16 %v2754
    %v3274 = vunpack.c.l.b16 %v2755
    %v3275 = vunpack.c.l.b16 %v2756
    %v3276 = vunpack.c.l.b16 %v2757
    %v3277 = vunpack.c.l.b16 %v2758
    %v3278 = vunpack.c.l.b16 %v2759
    %v3279 = vunpack.c.l.b16 %v2760
    %v3280 = vunpack.c.l.b16 %v2761
    %v3281 = vunpack.c.l.b16 %v2762
    %v3282 = vunpack.c.l.b16 %v2763
    %v3283 = vunpack.c.l.b16 %v2764
    %v3284 = vunpack.c.l.b16 %v2765
    %v3285 = vunpack.c.l.b16 %v2766
    %v3286 = vunpack.c.l.b16 %v2767
    %v3287 = vunpack.c.l.b16 %v2768
    %v3288 = vunpack.c.l.b16 %v2769
    %v3289 = vunpack.c.l.b16 %v2770
    %v3290 = vunpack.c.l.b16 %v2771
    %v3291 = vunpack.c.l.b16 %v2772
    %v3292 = vunpack.c.l.b16 %v2773
    %v3293 = vunpack.c.l.b16 %v2774
    %v3294 = vunpack.c.l.b16 %v2775
    %v3295 = vunpack.c.l.b16 %v2776
    %v3296 = vunpack.c.l.b16 %v2777
    %v3297 = vunpack.c.l.b16 %v2778
    %v3298 = vunpack.c.l.b16 %v2779
    %v3299 = vunpack.c.l.b16 %v2780
    %v3300 = vunpack.c.l.b16 %v2781
    %v3301 = vunpack.c.l.b16 %v2782
    %v3302 = vunpack.c.l.b16 %v2783
    %v3303 = vunpack.c.l.b16 %v2784
    %v3304 = vunpack.c.l.b16 %v2785
    %v3305 = vunpack.c.l.b16 %v2786
    %v3306 = vunpack.c.l.b16 %v2787
    %v3307 = vunpack.c.l.b16 %v2788
    %v3308 = vunpack.c.l.b16 %v2789
    %v3309 = vunpack.c.l.b16 %v2790
    %v3310 = vunpack.c.l.b16 %v2791
    %v3311 = vunpack.c.l.b16 %v2792
    %v3312 = vunpack.c.l.b16 %v2793
    %v3313 = vunpack.c.l.b16 %v2794
    %v3314 = vunpack.c.l.b16 %v2795
    %v3315 = vunpack.c.l.b16 %v2796
    %v3316 = vunpack.c.l.b16 %v2797
    %v3317 = vunpack.c.l.b16 %v2798
    %v3318 = vunpack.c.l.b16 %v2799
    %v3319 = vunpack.c.l.b16 %v2800
    %v3320 = vunpack.c.l.b16 %v2801
    %v3321 = vunpack.c.l.b16 %v2802
    %v3322 = vunpack.c.l.b16 %v2803
    %v3323 = vunpack.c.l.b16 %v2804
    %v3324 = vunpack.c.l.b16 %v2805
    %v3325 = vunpack.c.l.b16 %v2806
    %v3326 = vunpack.c.l.b16 %v2807
    %v3327 = vunpack.c.l.b16 %v2808
    %v3328 = vunpack.c.l.b16 %v2809
    %v3329 = vunpack.c.l.b16 %v2810
    %v3330 = vunpack.c.l.b16 %v2811
    %v3331 = vunpack.c.l.b16 %v2812
    %v3332 = vunpack.c.l.b16 %v2813
    %v3333 = vunpack.c.l.b16 %v2814
    %v3334 = vunpack.c.l.b16 %v2815
    %v3335 = vunpack.c.l.b16 %v2816
    %v3336 = vunpack.c.l.b16 %v2817
    %v3337 = vpack.c.b16 %v3082, %v3081
    %v3338 = vpack.c.b16 %v3084, %v3083
    %v3339 = vpack.c.b16 %v3086, %v3085
    %v3340 = vpack.c.b16 %v3088, %v3087
    %v3341 = vpack.c.b16 %v3090, %v3089
    %v3342 = vpack.c.b16 %v3092, %v3091
    %v3343 = vpack.c.b16 %v3094, %v3093
    %v3344 = vpack.c.b16 %v3096, %v3095
    %v3345 = vpack.c.b16 %v3098, %v3097
    %v3346 = vpack.c.b16 %v3100, %v3099
    %v3347 = vpack.c.b16 %v3102, %v3101
    %v3348 = vpack.c.b16 %v3104, %v3103
    %v3349 = vpack.c.b16 %v3106, %v3105
    %v3350 = vpack.c.b16 %v3108, %v3107
    %v3351 = vpack.c.b16 %v3110, %v3109
    %v3352 = vpack.c.b16 %v3112, %v3111
    %v3353 = vpack.c.b16 %v3114, %v3113
    %v3354 = vpack.c.b16 %v3116, %v3115
    %v3355 = vpack.c.b16 %v3118, %v3117
    %v3356 = vpack.c.b16 %v3120, %v3119
    %v3357 = vpack.c.b16 %v3122, %v3121
    %v3358 = vpack.c.b16 %v3124, %v3123
    %v3359 = vpack.c.b16 %v3126, %v3125
    %v3360 = vpack.c.b16 %v3128, %v3127
    %v3361 = vpack.c.b16 %v3130, %v3129
    %v3362 = vpack.c.b16 %v3132, %v3131
    %v3363 = vpack.c.b16 %v3134, %v3133
    %v3364 = vpack.c.b16 %v3136, %v3135
    %v3365 = vpack.c.b16 %v3138, %v3137
    %v3366 = vpack.c.b16 %v3140, %v3139
    %v3367 = vpack.c.b16 %v3142, %v3141
    %v3368 = vpack.c.b16 %v3144, %v3143
    %v3369 = vpack.c.b16 %v3146, %v3145
    %v3370 = vpack.c.b16 %v3148, %v3147
    %v3371 = vpack.c.b16 %v3150, %v3149
    %v3372 = vpack.c.b16 %v3152, %v3151
    %v3373 = vpack.c.b16 %v3154, %v3153
    %v3374 = vpack.c.b16 %v3156, %v3155
    %v3375 = vpack.c.b16 %v3158, %v3157
    %v3376 = vpack.c.b16 %v3160, %v3159
    %v3377 = vpack.c.b16 %v3162, %v3161
    %v3378 = vpack.c.b16 %v3164, %v3163
    %v3379 = vpack.c.b16 %v3166, %v3165
    %v3380 = vpack.c.b16 %v3168, %v3167
    %v3381 = vpack.c.b16 %v3170, %v3169
    %v3382 = vpack.c.b16 %v3172, %v3171
    %v3383 = vpack.c.b16 %v3174, %v3173
    %v3384 = vpack.c.b16 %v3176, %v3175
    %v3385 = vpack.c.b16 %v3178, %v3177
    %v3386 = vpack.c.b16 %v3180, %v3179
    %v3387 = vpack.c.b16 %v3182, %v3181
    %v3388 = vpack.c.b16 %v3184, %v3183
    %v3389 = vpack.c.b16 %v3186, %v3185
    %v3390 = vpack.c.b16 %v3188, %v3187
    %v3391 = vpack.c.b16 %v3190, %v3189
    %v3392 = vpack.c.b16 %v3192, %v3191
    %v3393 = vpack.c.b16 %v3194, %v3193
    %v3394 = vpack.c.b16 %v3196, %v3195
    %v3395 = vpack.c.b16 %v3198, %v3197
    %v3396 = vpack.c.b16 %v3200, %v3199
    %v3397 = vpack.c.b16 %v3202, %v3201
    %v3398 = vpack.c.b16 %v3204, %v3203
    %v3399 = vpack.c.b16 %v3206, %v3205
    %v3400 = vpack.c.b16 %v3208, %v3207
    %v3401 = vpack.c.b16 %v3210, %v3209
    %v3402 = vpack.c.b16 %v3212, %v3211
    %v3403 = vpack.c.b16 %v3214, %v3213
    %v3404 = vpack.c.b16 %v3216, %v3215
    %v3405 = vpack.c.b16 %v3218, %v3217
    %v3406 = vpack.c.b16 %v3220, %v3219
    %v3407 = vpack.c.b16 %v3222, %v3221
    %v3408 = vpack.c.b16 %v3224, %v3223
    %v3409 = vpack.c.b16 %v3226, %v3225
    %v3410 = vpack.c.b16 %v3228, %v3227
    %v3411 = vpack.c.b16 %v3230, %v3229
    %v3412 = vpack.c.b16 %v3232, %v3231
    %v3413 = vpack.c.b16 %v3234, %v3233
    %v3414 = vpack.c.b16 %v3236, %v3235
    %v3415 = vpack.c.b16 %v3238, %v3237
    %v3416 = vpack.c.b16 %v3240, %v3239
    %v3417 = vpack.c.b16 %v3242, %v3241
    %v3418 = vpack.c.b16 %v3244, %v3243
    %v3419 = vpack.c.b16 %v3246, %v3245
    %v3420 = vpack.c.b16 %v3248, %v3247
    %v3421 = vpack.c.b16 %v3250, %v3249
    %v3422 = vpack.c.b16 %v3252, %v3251
    %v3423 = vpack.c.b16 %v3254, %v3253
    %v3424 = vpack.c.b16 %v3256, %v3255
    %v3425 = vpack.c.b16 %v3258, %v3257
    %v3426 = vpack.c.b16 %v3260, %v3259
    %v3427 = vpack.c.b16 %v3262, %v3261
    %v3428 = vpack.c.b16 %v3264, %v3263
    %v3429 = vpack.c.b16 %v3266, %v3265
    %v3430 = vpack.c.b16 %v3268, %v3267
    %v3431 = vpack.c.b16 %v3270, %v3269
    %v3432 = vpack.c.b16 %v3272, %v3271
    %v3433 = vpack.c.b16 %v3274, %v3273
    %v3434 = vpack.c.b16 %v3276, %v3275
    %v3435 = vpack.c.b16 %v3278, %v3277
    %v3436 = vpack.c.b16 %v3280, %v3279
    %v3437 = vpack.c.b16 %v3282, %v3281
    %v3438 = vpack.c.b16 %v3284, %v3283
    %v3439 = vpack.c.b16 %v3286, %v3285
    %v3440 = vpack.c.b16 %v3288, %v3287
    %v3441 = vpack.c.b16 %v3290, %v3289
    %v3442 = vpack.c.b16 %v3292, %v3291
    %v3443 = vpack.c.b16 %v3294, %v3293
    %v3444 = vpack.c.b16 %v3296, %v3295
    %v3445 = vpack.c.b16 %v3298, %v3297
    %v3446 = vpack.c.b16 %v3300, %v3299
    %v3447 = vpack.c.b16 %v3302, %v3301
    %v3448 = vpack.c.b16 %v3304, %v3303
    %v3449 = vpack.c.b16 %v3306, %v3305
    %v3450 = vpack.c.b16 %v3308, %v3307
    %v3451 = vpack.c.b16 %v3310, %v3309
    %v3452 = vpack.c.b16 %v3312, %v3311
    %v3453 = vpack.c.b16 %v3314, %v3313
    %v3454 = vpack.c.b16 %v3316, %v3315
    %v3455 = vpack.c.b16 %v3318, %v3317
    %v3456 = vpack.c.b16 %v3320, %v3319
    %v3457 = vpack.c.b16 %v3322, %v3321
    %v3458 = vpack.c.b16 %v3324, %v3323
    %v3459 = vpack.c.b16 %v3326, %v3325
    %v3460 = vpack.c.b16 %v3328, %v3327
    %v3461 = vpack.c.b16 %v3330, %v3329
    %v3462 = vpack.c.b16 %v3332, %v3331
    %v3463 = vpack.c.b16 %v3334, %v3333
    %v3464 = vpack.c.b16 %v3336, %v3335
    %3593 = vmatprep.subr.bf16.mxu0 0
    %3594 = vmatpush1.bf16.msra.mxu0 %v3344
    %3595 = vmatprep.subr.bf16.mxu0 0
    %3596 = vmatpush1.bf16.msra.mxu0 %v3343
    %3597 = vmatprep.subr.bf16.mxu0 0
    %3598 = vmatpush1.bf16.msra.mxu0 %v3342
    %3599 = vmatprep.subr.bf16.mxu0 0
    %3600 = vmatpush1.bf16.msra.mxu0 %v3341
    %3601 = vmatprep.subr.bf16.mxu0 0
    %3602 = vmatpush1.bf16.msra.mxu0 %v3340
    %3603 = vmatprep.subr.bf16.mxu0 0
    %3604 = vmatpush1.bf16.msra.mxu0 %v3339
    %3605 = vmatprep.subr.bf16.mxu0 0
    %3606 = vmatpush1.bf16.msra.mxu0 %v3338
    %3607 = vmatprep.subr.bf16.mxu0 0
    %3608 = vmatpush1.bf16.msra.mxu0 %v3337
    %3609 = vmatprep.subr.bf16.mxu0 0
    %3610 = vmatpush2.bf16.msra.mxu0 %v3352
    %3611 = vmatprep.subr.bf16.mxu0 0
    %3612 = vmatpush2.bf16.msra.mxu0 %v3351
    %3613 = vmatprep.subr.bf16.mxu0 0
    %3614 = vmatpush2.bf16.msra.mxu0 %v3350
    %3615 = vmatprep.subr.bf16.mxu0 0
    %3616 = vmatpush2.bf16.msra.mxu0 %v3349
    %3617 = vmatprep.subr.bf16.mxu0 0
    %3618 = vmatpush2.bf16.msra.mxu0 %v3348
    %3619 = vmatprep.subr.bf16.mxu0 0
    %3620 = vmatpush2.bf16.msra.mxu0 %v3347
    %3621 = vmatprep.subr.bf16.mxu0 0
    %3622 = vmatpush2.bf16.msra.mxu0 %v3346
    %3623 = vmatprep.subr.bf16.mxu0 0
    %3624 = vmatpush2.bf16.msra.mxu0 %v3345
    %3625 = vmatprep.mubr.bf16.mxu0 %v2547
    %3626 = vmatmul.mubr.bf16.gmra.mxu0 %v2546
    %v3627 = vpop.f32.mrf.mxu0
    %v3628 = vadd.f32 %v2823, %v3627
    %v3629 = vpop.f32.mrf.mxu0
    %v3630 = vpop.f32.mrf.mxu0
    %v3631 = vadd.f32 %v2823, %v3630
    %v3632 = vpop.f32.mrf.mxu0
    %3633 = vdwg.mxu0
    %3634 = vmatprep.subr.bf16.mxu0 0
    %3635 = vmatpush1.bf16.msra.mxu0 %v3360
    %3636 = vmatprep.subr.bf16.mxu0 0
    %3637 = vmatpush1.bf16.msra.mxu0 %v3359
    %3638 = vmatprep.subr.bf16.mxu0 0
    %3639 = vmatpush1.bf16.msra.mxu0 %v3358
    %3640 = vmatprep.subr.bf16.mxu0 0
    %3641 = vmatpush1.bf16.msra.mxu0 %v3357
    %3642 = vmatprep.subr.bf16.mxu0 0
    %3643 = vmatpush1.bf16.msra.mxu0 %v3356
    %3644 = vmatprep.subr.bf16.mxu0 0
    %3645 = vmatpush1.bf16.msra.mxu0 %v3355
    %3646 = vmatprep.subr.bf16.mxu0 0
    %3647 = vmatpush1.bf16.msra.mxu0 %v3354
    %3648 = vmatprep.subr.bf16.mxu0 0
    %3649 = vmatpush1.bf16.msra.mxu0 %v3353
    %3650 = vmatprep.subr.bf16.mxu0 0
    %3651 = vmatpush2.bf16.msra.mxu0 %v3368
    %3652 = vmatprep.subr.bf16.mxu0 0
    %3653 = vmatpush2.bf16.msra.mxu0 %v3367
    %3654 = vmatprep.subr.bf16.mxu0 0
    %3655 = vmatpush2.bf16.msra.mxu0 %v3366
    %3656 = vmatprep.subr.bf16.mxu0 0
    %3657 = vmatpush2.bf16.msra.mxu0 %v3365
    %3658 = vmatprep.subr.bf16.mxu0 0
    %3659 = vmatpush2.bf16.msra.mxu0 %v3364
    %3660 = vmatprep.subr.bf16.mxu0 0
    %3661 = vmatpush2.bf16.msra.mxu0 %v3363
    %3662 = vmatprep.subr.bf16.mxu0 0
    %3663 = vmatpush2.bf16.msra.mxu0 %v3362
    %3664 = vmatprep.subr.bf16.mxu0 0
    %3665 = vmatpush2.bf16.msra.mxu0 %v3361
    %3666 = vmatprep.mubr.bf16.mxu0 %v2549
    %3667 = vmatmul.mubr.bf16.gmra.mxu0 %v2548
    %v3668 = vpop.f32.mrf.mxu0
    %v3669 = vadd.f32 %v3628, %v3668
    %v3670 = vpop.f32.mrf.mxu0
    %v3671 = vpop.f32.mrf.mxu0
    %v3672 = vadd.f32 %v3631, %v3671
    %v3673 = vpop.f32.mrf.mxu0
    %3674 = vdwg.mxu0
    %3675 = vmatprep.subr.bf16.mxu0 0
    %3676 = vmatpush1.bf16.msra.mxu0 %v3376
    %3677 = vmatprep.subr.bf16.mxu0 0
    %3678 = vmatpush1.bf16.msra.mxu0 %v3375
    %3679 = vmatprep.subr.bf16.mxu0 0
    %3680 = vmatpush1.bf16.msra.mxu0 %v3374
    %3681 = vmatprep.subr.bf16.mxu0 0
    %3682 = vmatpush1.bf16.msra.mxu0 %v3373
    %3683 = vmatprep.subr.bf16.mxu0 0
    %3684 = vmatpush1.bf16.msra.mxu0 %v3372
    %3685 = vmatprep.subr.bf16.mxu0 0
    %3686 = vmatpush1.bf16.msra.mxu0 %v3371
    %3687 = vmatprep.subr.bf16.mxu0 0
    %3688 = vmatpush1.bf16.msra.mxu0 %v3370
    %3689 = vmatprep.subr.bf16.mxu0 0
    %3690 = vmatpush1.bf16.msra.mxu0 %v3369
    %3691 = vmatprep.subr.bf16.mxu0 0
    %3692 = vmatpush2.bf16.msra.mxu0 %v3384
    %3693 = vmatprep.subr.bf16.mxu0 0
    %3694 = vmatpush2.bf16.msra.mxu0 %v3383
    %3695 = vmatprep.subr.bf16.mxu0 0
    %3696 = vmatpush2.bf16.msra.mxu0 %v3382
    %3697 = vmatprep.subr.bf16.mxu0 0
    %3698 = vmatpush2.bf16.msra.mxu0 %v3381
    %3699 = vmatprep.subr.bf16.mxu0 0
    %3700 = vmatpush2.bf16.msra.mxu0 %v3380
    %3701 = vmatprep.subr.bf16.mxu0 0
    %3702 = vmatpush2.bf16.msra.mxu0 %v3379
    %3703 = vmatprep.subr.bf16.mxu0 0
    %3704 = vmatpush2.bf16.msra.mxu0 %v3378
    %3705 = vmatprep.subr.bf16.mxu0 0
    %3706 = vmatpush2.bf16.msra.mxu0 %v3377
    %3707 = vmatprep.mubr.bf16.mxu0 %v2551
    %3708 = vmatmul.mubr.bf16.gmra.mxu0 %v2550
    %v3709 = vpop.f32.mrf.mxu0
    %v3710 = vadd.f32 %v3669, %v3709
    %v3711 = vpop.f32.mrf.mxu0
    %v3712 = vpop.f32.mrf.mxu0
    %v3713 = vadd.f32 %v3672, %v3712
    %v3714 = vpop.f32.mrf.mxu0
    %3715 = vdwg.mxu0
    %3716 = vmatprep.subr.bf16.mxu0 0
    %3717 = vmatpush1.bf16.msra.mxu0 %v3392
    %3718 = vmatprep.subr.bf16.mxu0 0
    %3719 = vmatpush1.bf16.msra.mxu0 %v3391
    %3720 = vmatprep.subr.bf16.mxu0 0
    %3721 = vmatpush1.bf16.msra.mxu0 %v3390
    %3722 = vmatprep.subr.bf16.mxu0 0
    %3723 = vmatpush1.bf16.msra.mxu0 %v3389
    %3724 = vmatprep.subr.bf16.mxu0 0
    %3725 = vmatpush1.bf16.msra.mxu0 %v3388
    %3726 = vmatprep.subr.bf16.mxu0 0
    %3727 = vmatpush1.bf16.msra.mxu0 %v3387
    %3728 = vmatprep.subr.bf16.mxu0 0
    %3729 = vmatpush1.bf16.msra.mxu0 %v3386
    %3730 = vmatprep.subr.bf16.mxu0 0
    %3731 = vmatpush1.bf16.msra.mxu0 %v3385
    %3732 = vmatprep.subr.bf16.mxu0 0
    %3733 = vmatpush2.bf16.msra.mxu0 %v3400
    %3734 = vmatprep.subr.bf16.mxu0 0
    %3735 = vmatpush2.bf16.msra.mxu0 %v3399
    %3736 = vmatprep.subr.bf16.mxu0 0
    %3737 = vmatpush2.bf16.msra.mxu0 %v3398
    %3738 = vmatprep.subr.bf16.mxu0 0
    %3739 = vmatpush2.bf16.msra.mxu0 %v3397
    %3740 = vmatprep.subr.bf16.mxu0 0
    %3741 = vmatpush2.bf16.msra.mxu0 %v3396
    %3742 = vmatprep.subr.bf16.mxu0 0
    %3743 = vmatpush2.bf16.msra.mxu0 %v3395
    %3744 = vmatprep.subr.bf16.mxu0 0
    %3745 = vmatpush2.bf16.msra.mxu0 %v3394
    %3746 = vmatprep.subr.bf16.mxu0 0
    %3747 = vmatpush2.bf16.msra.mxu0 %v3393
    %3748 = vmatprep.mubr.bf16.mxu0 %v2553
    %3749 = vmatmul.mubr.bf16.gmra.mxu0 %v2552
    %v3750 = vpop.f32.mrf.mxu0
    %v3751 = vadd.f32 %v3710, %v3750
    %v3752 = vpop.f32.mrf.mxu0
    %v3753 = vpop.f32.mrf.mxu0
    %v3754 = vadd.f32 %v3713, %v3753
    %v3755 = vpop.f32.mrf.mxu0
    %3756 = vdwg.mxu0
    %3757 = vmatprep.subr.bf16.mxu0 0
    %3758 = vmatpush1.bf16.msra.mxu0 %v3408
    %3759 = vmatprep.subr.bf16.mxu0 0
    %3760 = vmatpush1.bf16.msra.mxu0 %v3407
    %3761 = vmatprep.subr.bf16.mxu0 0
    %3762 = vmatpush1.bf16.msra.mxu0 %v3406
    %3763 = vmatprep.subr.bf16.mxu0 0
    %3764 = vmatpush1.bf16.msra.mxu0 %v3405
    %3765 = vmatprep.subr.bf16.mxu0 0
    %3766 = vmatpush1.bf16.msra.mxu0 %v3404
    %3767 = vmatprep.subr.bf16.mxu0 0
    %3768 = vmatpush1.bf16.msra.mxu0 %v3403
    %3769 = vmatprep.subr.bf16.mxu0 0
    %3770 = vmatpush1.bf16.msra.mxu0 %v3402
    %3771 = vmatprep.subr.bf16.mxu0 0
    %3772 = vmatpush1.bf16.msra.mxu0 %v3401
    %3773 = vmatprep.subr.bf16.mxu0 0
    %3774 = vmatpush2.bf16.msra.mxu0 %v3416
    %3775 = vmatprep.subr.bf16.mxu0 0
    %3776 = vmatpush2.bf16.msra.mxu0 %v3415
    %3777 = vmatprep.subr.bf16.mxu0 0
    %3778 = vmatpush2.bf16.msra.mxu0 %v3414
    %3779 = vmatprep.subr.bf16.mxu0 0
    %3780 = vmatpush2.bf16.msra.mxu0 %v3413
    %3781 = vmatprep.subr.bf16.mxu0 0
    %3782 = vmatpush2.bf16.msra.mxu0 %v3412
    %3783 = vmatprep.subr.bf16.mxu0 0
    %3784 = vmatpush2.bf16.msra.mxu0 %v3411
    %3785 = vmatprep.subr.bf16.mxu0 0
    %3786 = vmatpush2.bf16.msra.mxu0 %v3410
    %3787 = vmatprep.subr.bf16.mxu0 0
    %3788 = vmatpush2.bf16.msra.mxu0 %v3409
    %3789 = vmatprep.mubr.bf16.mxu0 %v2555
    %3790 = vmatmul.mubr.bf16.gmra.mxu0 %v2554
    %v3791 = vpop.f32.mrf.mxu0
    %v3792 = vadd.f32 %v3751, %v3791
    %v3793 = vpop.f32.mrf.mxu0
    %v3794 = vpop.f32.mrf.mxu0
    %v3795 = vadd.f32 %v3754, %v3794
    %v3796 = vpop.f32.mrf.mxu0
    %3797 = vdwg.mxu0
    %3798 = vmatprep.subr.bf16.mxu0 0
    %3799 = vmatpush1.bf16.msra.mxu0 %v3424
    %3800 = vmatprep.subr.bf16.mxu0 0
    %3801 = vmatpush1.bf16.msra.mxu0 %v3423
    %3802 = vmatprep.subr.bf16.mxu0 0
    %3803 = vmatpush1.bf16.msra.mxu0 %v3422
    %3804 = vmatprep.subr.bf16.mxu0 0
    %3805 = vmatpush1.bf16.msra.mxu0 %v3421
    %3806 = vmatprep.subr.bf16.mxu0 0
    %3807 = vmatpush1.bf16.msra.mxu0 %v3420
    %3808 = vmatprep.subr.bf16.mxu0 0
    %3809 = vmatpush1.bf16.msra.mxu0 %v3419
    %3810 = vmatprep.subr.bf16.mxu0 0
    %3811 = vmatpush1.bf16.msra.mxu0 %v3418
    %3812 = vmatprep.subr.bf16.mxu0 0
    %3813 = vmatpush1.bf16.msra.mxu0 %v3417
    %3814 = vmatprep.subr.bf16.mxu0 0
    %3815 = vmatpush2.bf16.msra.mxu0 %v3432
    %3816 = vmatprep.subr.bf16.mxu0 0
    %3817 = vmatpush2.bf16.msra.mxu0 %v3431
    %3818 = vmatprep.subr.bf16.mxu0 0
    %3819 = vmatpush2.bf16.msra.mxu0 %v3430
    %3820 = vmatprep.subr.bf16.mxu0 0
    %3821 = vmatpush2.bf16.msra.mxu0 %v3429
    %3822 = vmatprep.subr.bf16.mxu0 0
    %3823 = vmatpush2.bf16.msra.mxu0 %v3428
    %3824 = vmatprep.subr.bf16.mxu0 0
    %3825 = vmatpush2.bf16.msra.mxu0 %v3427
    %3826 = vmatprep.subr.bf16.mxu0 0
    %3827 = vmatpush2.bf16.msra.mxu0 %v3426
    %3828 = vmatprep.subr.bf16.mxu0 0
    %3829 = vmatpush2.bf16.msra.mxu0 %v3425
    %3830 = vmatprep.mubr.bf16.mxu0 %v2557
    %3831 = vmatmul.mubr.bf16.gmra.mxu0 %v2556
    %v3832 = vpop.f32.mrf.mxu0
    %v3833 = vadd.f32 %v3792, %v3832
    %v3834 = vpop.f32.mrf.mxu0
    %v3835 = vpop.f32.mrf.mxu0
    %v3836 = vadd.f32 %v3795, %v3835
    %v3837 = vpop.f32.mrf.mxu0
    %3838 = vdwg.mxu0
    %3839 = vmatprep.subr.bf16.mxu0 0
    %3840 = vmatpush1.bf16.msra.mxu0 %v3440
    %3841 = vmatprep.subr.bf16.mxu0 0
    %3842 = vmatpush1.bf16.msra.mxu0 %v3439
    %3843 = vmatprep.subr.bf16.mxu0 0
    %3844 = vmatpush1.bf16.msra.mxu0 %v3438
    %3845 = vmatprep.subr.bf16.mxu0 0
    %3846 = vmatpush1.bf16.msra.mxu0 %v3437
    %3847 = vmatprep.subr.bf16.mxu0 0
    %3848 = vmatpush1.bf16.msra.mxu0 %v3436
    %3849 = vmatprep.subr.bf16.mxu0 0
    %3850 = vmatpush1.bf16.msra.mxu0 %v3435
    %3851 = vmatprep.subr.bf16.mxu0 0
    %3852 = vmatpush1.bf16.msra.mxu0 %v3434
    %3853 = vmatprep.subr.bf16.mxu0 0
    %3854 = vmatpush1.bf16.msra.mxu0 %v3433
    %3855 = vmatprep.subr.bf16.mxu0 0
    %3856 = vmatpush2.bf16.msra.mxu0 %v3448
    %3857 = vmatprep.subr.bf16.mxu0 0
    %3858 = vmatpush2.bf16.msra.mxu0 %v3447
    %3859 = vmatprep.subr.bf16.mxu0 0
    %3860 = vmatpush2.bf16.msra.mxu0 %v3446
    %3861 = vmatprep.subr.bf16.mxu0 0
    %3862 = vmatpush2.bf16.msra.mxu0 %v3445
    %3863 = vmatprep.subr.bf16.mxu0 0
    %3864 = vmatpush2.bf16.msra.mxu0 %v3444
    %3865 = vmatprep.subr.bf16.mxu0 0
    %3866 = vmatpush2.bf16.msra.mxu0 %v3443
    %3867 = vmatprep.subr.bf16.mxu0 0
    %3868 = vmatpush2.bf16.msra.mxu0 %v3442
    %3869 = vmatprep.subr.bf16.mxu0 0
    %3870 = vmatpush2.bf16.msra.mxu0 %v3441
    %3871 = vmatprep.mubr.bf16.mxu0 %v2559
    %3872 = vmatmul.mubr.bf16.gmra.mxu0 %v2558
    %v3873 = vpop.f32.mrf.mxu0
    %v3874 = vadd.f32 %v3833, %v3873
    %v3875 = vpop.f32.mrf.mxu0
    %v3876 = vpop.f32.mrf.mxu0
    %v3877 = vadd.f32 %v3836, %v3876
    %v3878 = vpop.f32.mrf.mxu0
    %3879 = vdwg.mxu0
    %3880 = vmatprep.subr.bf16.mxu0 0
    %3881 = vmatpush1.bf16.msra.mxu0 %v3456
    %3882 = vmatprep.subr.bf16.mxu0 0
    %3883 = vmatpush1.bf16.msra.mxu0 %v3455
    %3884 = vmatprep.subr.bf16.mxu0 0
    %3885 = vmatpush1.bf16.msra.mxu0 %v3454
    %3886 = vmatprep.subr.bf16.mxu0 0
    %3887 = vmatpush1.bf16.msra.mxu0 %v3453
    %3888 = vmatprep.subr.bf16.mxu0 0
    %3889 = vmatpush1.bf16.msra.mxu0 %v3452
    %3890 = vmatprep.subr.bf16.mxu0 0
    %3891 = vmatpush1.bf16.msra.mxu0 %v3451
    %3892 = vmatprep.subr.bf16.mxu0 0
    %3893 = vmatpush1.bf16.msra.mxu0 %v3450
    %3894 = vmatprep.subr.bf16.mxu0 0
    %3895 = vmatpush1.bf16.msra.mxu0 %v3449
    %3896 = vmatprep.subr.bf16.mxu0 0
    %3897 = vmatpush2.bf16.msra.mxu0 %v3464
    %3898 = vmatprep.subr.bf16.mxu0 0
    %3899 = vmatpush2.bf16.msra.mxu0 %v3463
    %3900 = vmatprep.subr.bf16.mxu0 0
    %3901 = vmatpush2.bf16.msra.mxu0 %v3462
    %3902 = vmatprep.subr.bf16.mxu0 0
    %3903 = vmatpush2.bf16.msra.mxu0 %v3461
    %3904 = vmatprep.subr.bf16.mxu0 0
    %3905 = vmatpush2.bf16.msra.mxu0 %v3460
    %3906 = vmatprep.subr.bf16.mxu0 0
    %3907 = vmatpush2.bf16.msra.mxu0 %v3459
    %3908 = vmatprep.subr.bf16.mxu0 0
    %3909 = vmatpush2.bf16.msra.mxu0 %v3458
    %3910 = vmatprep.subr.bf16.mxu0 0
    %3911 = vmatpush2.bf16.msra.mxu0 %v3457
    %3912 = vmatprep.mubr.bf16.mxu0 %v2561
    %3913 = vmatmul.mubr.bf16.gmra.mxu0 %v2560
    %v3914 = vpop.f32.mrf.mxu0
    %v3915 = vadd.f32 %v3874, %v3914
    %v3916 = vpop.f32.mrf.mxu0
    %v3917 = vpop.f32.mrf.mxu0
    %v3918 = vadd.f32 %v3877, %v3917
    %v3919 = vpop.f32.mrf.mxu0
    %3920 = vdwg.mxu0
    %v3923 = vcombine.high %v3915, %v3915
    %v3925 = vunpack.c.l.s4 1983009808
    %v3926 = vunpack.c.0.s8 %v3925
    %v3927 = vlaneseq
    %v3928 = vshrl.u32 %v3927, 7
    %v3929 = vsub.s32 %v3926, %v3928
    %v3930 = vrot.slane %v3915, %v3929
    %v3932 = vunpack.c.l.s4 1983009808
    %v3933 = vunpack.c.0.s8 %v3932
    %v3934 = vlaneseq
    %v3935 = vshrl.u32 %v3934, 7
    %v3936 = vsub.s32 %v3933, %v3935
    %v3937 = vrot.slane %v3923, %v3936
    %v3938 = vcombine.high %v3930, %v3930
    %v3939 = vcombine.high %v3937, %v3937
    %v3940 = vcombine.high %v3918, %v3918
    %v3942 = vunpack.c.l.s4 1983009808
    %v3943 = vunpack.c.0.s8 %v3942
    %v3944 = vlaneseq
    %v3945 = vshrl.u32 %v3944, 7
    %v3946 = vsub.s32 %v3943, %v3945
    %v3947 = vrot.slane %v3918, %v3946
    %v3949 = vunpack.c.l.s4 1983009808
    %v3950 = vunpack.c.0.s8 %v3949
    %v3951 = vlaneseq
    %v3952 = vshrl.u32 %v3951, 7
    %v3953 = vsub.s32 %v3950, %v3952
    %v3954 = vrot.slane %v3940, %v3953
    %v3955 = vcombine.high %v3947, %v3947
    %v3956 = vcombine.high %v3954, %v3954
    %v3965 = vadd.f32 %v1838, %v3930
    %v3966 = vadd.f32 %v1839, %v3938
    %v3967 = vadd.f32 %v1840, %v3937
    %v3968 = vadd.f32 %v1841, %v3939
    %v3969 = vadd.f32 %v1842, %v3947
    %v3970 = vadd.f32 %v1843, %v3955
    %v3971 = vadd.f32 %v1844, %v3954
    %v3972 = vadd.f32 %v1845, %v3956
    %v3981 = vcombine.low %v3965, %v3966
    %v3982 = vcombine.low %v3967, %v3968
    %v3984 = vunpack.c.l.s4 1983009808
    %v3985 = vunpack.c.0.s8 %v3984
    %v3986 = vlaneseq
    %v3987 = vshrl.u32 %v3986, 7
    %v3988 = vsub.s32 %v3985, %v3987
    %v3989 = vrot.slane %v3981, %v3988
    %v3991 = vunpack.c.l.s4 1983009808
    %v3992 = vunpack.c.0.s8 %v3991
    %v3993 = vlaneseq
    %v3994 = vshrl.u32 %v3993, 7
    %v3995 = vsub.s32 %v3992, %v3994
    %v3996 = vrot.slane %v3982, %v3995
    %v3997 = vcombine.low %v3989, %v3996
    %v3998 = vcombine.low %v3969, %v3970
    %v3999 = vcombine.low %v3971, %v3972
    %v4001 = vunpack.c.l.s4 1983009808
    %v4002 = vunpack.c.0.s8 %v4001
    %v4003 = vlaneseq
    %v4004 = vshrl.u32 %v4003, 7
    %v4005 = vsub.s32 %v4002, %v4004
    %v4006 = vrot.slane %v3998, %v4005
    %v4008 = vunpack.c.l.s4 1983009808
    %v4009 = vunpack.c.0.s8 %v4008
    %v4010 = vlaneseq
    %v4011 = vshrl.u32 %v4010, 7
    %v4012 = vsub.s32 %v4009, %v4011
    %v4013 = vrot.slane %v3999, %v4012
    %v4014 = vcombine.low %v4006, %v4013
    %v4017 = vsel %vm165, %v3997, 0.0
    %4018 = vadd.xlane.f32.xlu0 %v4017
    %v4019 = vpop.xlane.xlu0 %4018
    %v4020 = vsel %vm165, %v4014, 0.0
    %4021 = vadd.xlane.f32.xlu0 %v4020
    %v4022 = vpop.xlane.xlu0 %4021
    %v4023 = vmul.f32 %v4019, %v1561
    %v4024 = vmul.f32 %v4022, %v1561
    %v4028 = vunpack.c.l.s4 269488144
    %v4029 = vunpack.c.0.s8 %v4028
    %v4030 = vlaneseq
    %v4031 = vshrl.u32 %v4030, 7
    %v4032 = vsub.s32 %v4029, %v4031
    %v4033 = vrot.slane %v4023, %v4032
    %v4035 = vunpack.c.l.s4 842150450
    %v4036 = vunpack.c.0.s8 %v4035
    %v4037 = vlaneseq
    %v4038 = vshrl.u32 %v4037, 7
    %v4039 = vsub.s32 %v4036, %v4038
    %v4040 = vrot.slane %v4023, %v4039
    %v4042 = vunpack.c.l.s4 1414812756
    %v4043 = vunpack.c.0.s8 %v4042
    %v4044 = vlaneseq
    %v4045 = vshrl.u32 %v4044, 7
    %v4046 = vsub.s32 %v4043, %v4045
    %v4047 = vrot.slane %v4023, %v4046
    %v4049 = vunpack.c.l.s4 1987475062
    %v4050 = vunpack.c.0.s8 %v4049
    %v4051 = vlaneseq
    %v4052 = vshrl.u32 %v4051, 7
    %v4053 = vsub.s32 %v4050, %v4052
    %v4054 = vrot.slane %v4023, %v4053
    %v4056 = vunpack.c.l.s4 269488144
    %v4057 = vunpack.c.0.s8 %v4056
    %v4058 = vlaneseq
    %v4059 = vshrl.u32 %v4058, 7
    %v4060 = vsub.s32 %v4057, %v4059
    %v4061 = vrot.slane %v4024, %v4060
    %v4063 = vunpack.c.l.s4 842150450
    %v4064 = vunpack.c.0.s8 %v4063
    %v4065 = vlaneseq
    %v4066 = vshrl.u32 %v4065, 7
    %v4067 = vsub.s32 %v4064, %v4066
    %v4068 = vrot.slane %v4024, %v4067
    %v4070 = vunpack.c.l.s4 1414812756
    %v4071 = vunpack.c.0.s8 %v4070
    %v4072 = vlaneseq
    %v4073 = vshrl.u32 %v4072, 7
    %v4074 = vsub.s32 %v4071, %v4073
    %v4075 = vrot.slane %v4024, %v4074
    %v4077 = vunpack.c.l.s4 1987475062
    %v4078 = vunpack.c.0.s8 %v4077
    %v4079 = vlaneseq
    %v4080 = vshrl.u32 %v4079, 7
    %v4081 = vsub.s32 %v4078, %v4080
    %v4082 = vrot.slane %v4024, %v4081
    %v4091 = vsub.f32 %v3965, %v4033
    %v4092 = vsub.f32 %v3966, %v4040
    %v4093 = vsub.f32 %v3967, %v4047
    %v4094 = vsub.f32 %v3968, %v4054
    %v4095 = vsub.f32 %v3969, %v4061
    %v4096 = vsub.f32 %v3970, %v4068
    %v4097 = vsub.f32 %v3971, %v4075
    %v4098 = vsub.f32 %v3972, %v4082
    %v4099 = vmul.f32 %v4091, %v4091
    %v4100 = vmul.f32 %v4092, %v4092
    %v4101 = vmul.f32 %v4093, %v4093
    %v4102 = vmul.f32 %v4094, %v4094
    %v4103 = vmul.f32 %v4095, %v4095
    %v4104 = vmul.f32 %v4096, %v4096
    %v4105 = vmul.f32 %v4097, %v4097
    %v4106 = vmul.f32 %v4098, %v4098
    %v4115 = vcombine.low %v4099, %v4100
    %v4116 = vcombine.low %v4101, %v4102
    %v4118 = vunpack.c.l.s4 1983009808
    %v4119 = vunpack.c.0.s8 %v4118
    %v4120 = vlaneseq
    %v4121 = vshrl.u32 %v4120, 7
    %v4122 = vsub.s32 %v4119, %v4121
    %v4123 = vrot.slane %v4115, %v4122
    %v4125 = vunpack.c.l.s4 1983009808
    %v4126 = vunpack.c.0.s8 %v4125
    %v4127 = vlaneseq
    %v4128 = vshrl.u32 %v4127, 7
    %v4129 = vsub.s32 %v4126, %v4128
    %v4130 = vrot.slane %v4116, %v4129
    %v4131 = vcombine.low %v4123, %v4130
    %v4132 = vcombine.low %v4103, %v4104
    %v4133 = vcombine.low %v4105, %v4106
    %v4135 = vunpack.c.l.s4 1983009808
    %v4136 = vunpack.c.0.s8 %v4135
    %v4137 = vlaneseq
    %v4138 = vshrl.u32 %v4137, 7
    %v4139 = vsub.s32 %v4136, %v4138
    %v4140 = vrot.slane %v4132, %v4139
    %v4142 = vunpack.c.l.s4 1983009808
    %v4143 = vunpack.c.0.s8 %v4142
    %v4144 = vlaneseq
    %v4145 = vshrl.u32 %v4144, 7
    %v4146 = vsub.s32 %v4143, %v4145
    %v4147 = vrot.slane %v4133, %v4146
    %v4148 = vcombine.low %v4140, %v4147
    %v4151 = vsel %vm165, %v4131, 0.0
    %4152 = vadd.xlane.f32.xlu0 %v4151
    %v4153 = vpop.xlane.xlu0 %4152
    %v4154 = vsel %vm165, %v4148, 0.0
    %4155 = vadd.xlane.f32.xlu0 %v4154
    %v4156 = vpop.xlane.xlu0 %4155
    %v4157 = vmul.f32 %v4153, %v1561
    %v4158 = vmul.f32 %v4156, %v1561
    %v4159 = vadd.f32 %v4157, 1e-05
    %v4160 = vadd.f32 %v4158, 1e-05
    %v4161 = vrsqrt.pop %v4159
    %v4162 = vrsqrt.pop %v4160
    %v4166 = vunpack.c.l.s4 269488144
    %v4167 = vunpack.c.0.s8 %v4166
    %v4168 = vlaneseq
    %v4169 = vshrl.u32 %v4168, 7
    %v4170 = vsub.s32 %v4167, %v4169
    %v4171 = vrot.slane %v4161, %v4170
    %v4173 = vunpack.c.l.s4 842150450
    %v4174 = vunpack.c.0.s8 %v4173
    %v4175 = vlaneseq
    %v4176 = vshrl.u32 %v4175, 7
    %v4177 = vsub.s32 %v4174, %v4176
    %v4178 = vrot.slane %v4161, %v4177
    %v4180 = vunpack.c.l.s4 1414812756
    %v4181 = vunpack.c.0.s8 %v4180
    %v4182 = vlaneseq
    %v4183 = vshrl.u32 %v4182, 7
    %v4184 = vsub.s32 %v4181, %v4183
    %v4185 = vrot.slane %v4161, %v4184
    %v4187 = vunpack.c.l.s4 1987475062
    %v4188 = vunpack.c.0.s8 %v4187
    %v4189 = vlaneseq
    %v4190 = vshrl.u32 %v4189, 7
    %v4191 = vsub.s32 %v4188, %v4190
    %v4192 = vrot.slane %v4161, %v4191
    %v4194 = vunpack.c.l.s4 269488144
    %v4195 = vunpack.c.0.s8 %v4194
    %v4196 = vlaneseq
    %v4197 = vshrl.u32 %v4196, 7
    %v4198 = vsub.s32 %v4195, %v4197
    %v4199 = vrot.slane %v4162, %v4198
    %v4201 = vunpack.c.l.s4 842150450
    %v4202 = vunpack.c.0.s8 %v4201
    %v4203 = vlaneseq
    %v4204 = vshrl.u32 %v4203, 7
    %v4205 = vsub.s32 %v4202, %v4204
    %v4206 = vrot.slane %v4162, %v4205
    %v4208 = vunpack.c.l.s4 1414812756
    %v4209 = vunpack.c.0.s8 %v4208
    %v4210 = vlaneseq
    %v4211 = vshrl.u32 %v4210, 7
    %v4212 = vsub.s32 %v4209, %v4211
    %v4213 = vrot.slane %v4162, %v4212
    %v4215 = vunpack.c.l.s4 1987475062
    %v4216 = vunpack.c.0.s8 %v4215
    %v4217 = vlaneseq
    %v4218 = vshrl.u32 %v4217, 7
    %v4219 = vsub.s32 %v4216, %v4218
    %v4220 = vrot.slane %v4162, %v4219
    %v4229 = vmul.f32 %v4091, %v4171
    %v4230 = vmul.f32 %v4092, %v4178
    %v4231 = vmul.f32 %v4093, %v4185
    %v4232 = vmul.f32 %v4094, %v4192
    %v4233 = vmul.f32 %v4095, %v4199
    %v4234 = vmul.f32 %v4096, %v4206
    %v4235 = vmul.f32 %v4097, %v4213
    %v4236 = vmul.f32 %v4098, %v4220
    %v4237 = vld [vmem:[%s11] sm:$0x1]
    %v4239 = vlaneseq
    %v4240 = vshrl.u32 %v4239, 7
    %v4241 = vsub.s32 0, %v4240
    %v4242 = vrot.slane %v4237, %v4241
    %v4243 = vcombine.high %v4242, %v4242
    %v4245 = vunpack.c.l.s4 1983009808
    %v4246 = vunpack.c.0.s8 %v4245
    %v4247 = vlaneseq
    %v4248 = vshrl.u32 %v4247, 7
    %v4249 = vsub.s32 %v4246, %v4248
    %v4250 = vrot.slane %v4242, %v4249
    %v4252 = vunpack.c.l.s4 1983009808
    %v4253 = vunpack.c.0.s8 %v4252
    %v4254 = vlaneseq
    %v4255 = vshrl.u32 %v4254, 7
    %v4256 = vsub.s32 %v4253, %v4255
    %v4257 = vrot.slane %v4243, %v4256
    %v4258 = vcombine.high %v4250, %v4250
    %v4259 = vcombine.high %v4257, %v4257
    %v4264 = vmul.f32 %v4229, %v4250
    %v4265 = vmul.f32 %v4230, %v4258
    %v4266 = vmul.f32 %v4231, %v4257
    %v4267 = vmul.f32 %v4232, %v4259
    %v4268 = vmul.f32 %v4233, %v4250
    %v4269 = vmul.f32 %v4234, %v4258
    %v4270 = vmul.f32 %v4235, %v4257
    %v4271 = vmul.f32 %v4236, %v4259
    %v4272 = vld [vmem:[%s12] sm:$0x1]
    %v4274 = vlaneseq
    %v4275 = vshrl.u32 %v4274, 7
    %v4276 = vsub.s32 0, %v4275
    %v4277 = vrot.slane %v4272, %v4276
    %v4278 = vcombine.high %v4277, %v4277
    %v4280 = vunpack.c.l.s4 1983009808
    %v4281 = vunpack.c.0.s8 %v4280
    %v4282 = vlaneseq
    %v4283 = vshrl.u32 %v4282, 7
    %v4284 = vsub.s32 %v4281, %v4283
    %v4285 = vrot.slane %v4277, %v4284
    %v4287 = vunpack.c.l.s4 1983009808
    %v4288 = vunpack.c.0.s8 %v4287
    %v4289 = vlaneseq
    %v4290 = vshrl.u32 %v4289, 7
    %v4291 = vsub.s32 %v4288, %v4290
    %v4292 = vrot.slane %v4278, %v4291
    %v4293 = vcombine.high %v4285, %v4285
    %v4294 = vcombine.high %v4292, %v4292
    %v4299 = vadd.f32 %v4264, %v4285
    %v4300 = vadd.f32 %v4265, %v4293
    %v4301 = vadd.f32 %v4266, %v4292
    %v4302 = vadd.f32 %v4267, %v4294
    %v4303 = vadd.f32 %v4268, %v4285
    %v4304 = vadd.f32 %v4269, %v4293
    %v4305 = vadd.f32 %v4270, %v4292
    %v4306 = vadd.f32 %v4271, %v4294
    %v4315 = vcombine.low %v4299, %v4300
    %v4316 = vcombine.low %v4301, %v4302
    %v4318 = vunpack.c.l.s4 1983009808
    %v4319 = vunpack.c.0.s8 %v4318
    %v4320 = vlaneseq
    %v4321 = vshrl.u32 %v4320, 7
    %v4322 = vsub.s32 %v4319, %v4321
    %v4323 = vrot.slane %v4315, %v4322
    %v4325 = vunpack.c.l.s4 1983009808
    %v4326 = vunpack.c.0.s8 %v4325
    %v4327 = vlaneseq
    %v4328 = vshrl.u32 %v4327, 7
    %v4329 = vsub.s32 %v4326, %v4328
    %v4330 = vrot.slane %v4316, %v4329
    %v4331 = vcombine.low %v4323, %v4330
    %v4332 = vcombine.low %v4303, %v4304
    %v4333 = vcombine.low %v4305, %v4306
    %v4335 = vunpack.c.l.s4 1983009808
    %v4336 = vunpack.c.0.s8 %v4335
    %v4337 = vlaneseq
    %v4338 = vshrl.u32 %v4337, 7
    %v4339 = vsub.s32 %v4336, %v4338
    %v4340 = vrot.slane %v4332, %v4339
    %v4342 = vunpack.c.l.s4 1983009808
    %v4343 = vunpack.c.0.s8 %v4342
    %v4344 = vlaneseq
    %v4345 = vshrl.u32 %v4344, 7
    %v4346 = vsub.s32 %v4343, %v4345
    %v4347 = vrot.slane %v4333, %v4346
    %v4348 = vcombine.low %v4340, %v4347
    %v4351 = vpack.c.bf16 %v4348, %v4331
    %s4352 = scalar_lea.vmem %s1, 16
    %v4353 = vld [vmem:[%s4352] sm:$0xf]
    %v4354 = vld [vmem:[%s4352 + $0x4] sm:$0xf]
    %v4355 = vld [vmem:[%s4352 + $0x8] sm:$0xf]
    %v4356 = vld [vmem:[%s4352 + $0xc] sm:$0xf]
    %s4357 = scalar_lea.vmem %s2, 1
    %v4358 = vld [vmem:[%s4357] sm:$0x1]
    %v4360 = vlaneseq
    %v4361 = vshrl.u32 %v4360, 7
    %v4362 = vsub.s32 0, %v4361
    %v4363 = vrot.slane %v4358, %v4362
    %v4369 = vunpack.c.l.b16 %v4353
    %v4370 = vunpack.c.l.b16 %v4354
    %v4371 = vunpack.c.l.b16 %v4355
    %v4372 = vunpack.c.l.b16 %v4356
    %v4373 = vpack.c.b16 %v4370, %v4369
    %v4374 = vpack.c.b16 %v4372, %v4371
    %v4378 = vsel %vm165, %v4351, 0
    %4380 = vmatprep.subr.bf16.mxu0 0
    %4381 = vmatpush1.bf16.msra.mxu0 0
    %4382 = vmatprep.subr.bf16.mxu0 0
    %4383 = vmatpush1.bf16.msra.mxu0 0
    %4384 = vmatprep.subr.bf16.mxu0 0
    %4385 = vmatpush1.bf16.msra.mxu0 0
    %4386 = vmatprep.subr.bf16.mxu0 0
    %4387 = vmatpush1.bf16.msra.mxu0 0
    %4388 = vmatprep.subr.bf16.mxu0 0
    %4389 = vmatpush1.bf16.msra.mxu0 0
    %4390 = vmatprep.subr.bf16.mxu0 0
    %4391 = vmatpush1.bf16.msra.mxu0 0
    %4392 = vmatprep.subr.bf16.mxu0 0
    %4393 = vmatpush1.bf16.msra.mxu0 %v4374
    %4394 = vmatprep.subr.bf16.mxu0 0
    %4395 = vmatpush1.bf16.msra.mxu0 %v4373
    %4396 = vmatprep.subr.bf16.mxu0 0
    %4397 = vmatpush2.bf16.msra.mxu0 0
    %4398 = vmatprep.subr.bf16.mxu0 0
    %4399 = vmatpush2.bf16.msra.mxu0 0
    %4400 = vmatprep.subr.bf16.mxu0 0
    %4401 = vmatpush2.bf16.msra.mxu0 0
    %4402 = vmatprep.subr.bf16.mxu0 0
    %4403 = vmatpush2.bf16.msra.mxu0 0
    %4404 = vmatprep.subr.bf16.mxu0 0
    %4405 = vmatpush2.bf16.msra.mxu0 0
    %4406 = vmatprep.subr.bf16.mxu0 0
    %4407 = vmatpush2.bf16.msra.mxu0 0
    %4408 = vmatprep.subr.bf16.mxu0 0
    %4409 = vmatpush2.bf16.msra.mxu0 0
    %4410 = vmatprep.subr.bf16.mxu0 0
    %4411 = vmatpush2.bf16.msra.mxu0 0
    %4412 = vmatprep.mubr.bf16.mxu0 0
    %4413 = vmatmul.mubr.bf16.gmra.mxu0 %v4378
    %v4414 = vpop.f32.mrf.mxu0
    %v4415 = vadd.f32 %v4363, %v4414
    %v4416 = vpop.f32.mrf.mxu0
    %v4417 = vpop.f32.mrf.mxu0
    %v4418 = vadd.f32 %v4363, %v4417
    %v4419 = vpop.f32.mrf.mxu0
    %4420 = vdwg.mxu0
    %4423 = vrot.lane.b32.xlu0 %v4415, 96
    %v4424 = vpop.permute.xlu0 %4423
    %4425 = vrot.lane.b32.xlu0 %v4418, 96
    %v4426 = vpop.permute.xlu0 %4425
    %v4427 = vsel %vm216, %v4415, 0
    %v4429 = vsel %vm216, %v4418, 0
    %v4431 = vsel %vm216, %v4424, 0
    %v4433 = vsel %vm216, %v4426, 0
    %4435 = vmatprep.subr.mxu0 0.0
    %4436 = vmatpush1.xpose.msra.mxu0 0.0
    %4437 = vmatprep.subr.mxu0 0.0
    %4438 = vmatpush1.xpose.msra.mxu0 0.0
    %4439 = vmatprep.subr.mxu0 0.0
    %4440 = vmatpush1.xpose.msra.mxu0 0.0
    %4441 = vmatprep.subr.mxu0 0.0
    %4442 = vmatpush1.xpose.msra.mxu0 0.0
    %4443 = vmatprep.subr.mxu0 0.0
    %4444 = vmatpush1.xpose.msra.mxu0 0.0
    %4445 = vmatprep.subr.mxu0 0.0
    %4446 = vmatpush1.xpose.msra.mxu0 0.0
    %4447 = vmatprep.subr.mxu0 0.0
    %4448 = vmatpush1.xpose.msra.mxu0 0.0
    %4449 = vmatprep.subr.mxu0 0.0
    %4450 = vmatpush1.xpose.msra.mxu0 0.0
    %4451 = vmatprep.subr.mxu0 0.0
    %4452 = vmatpush1.xpose.msra.mxu0 0.0
    %4453 = vmatprep.subr.mxu0 0.0
    %4454 = vmatpush1.xpose.msra.mxu0 0.0
    %4455 = vmatprep.subr.mxu0 0.0
    %4456 = vmatpush1.xpose.msra.mxu0 0.0
    %4457 = vmatprep.subr.mxu0 0.0
    %4458 = vmatpush1.xpose.msra.mxu0 0.0
    %4459 = vmatprep.subr.mxu0 0.0
    %4460 = vmatpush1.xpose.msra.mxu0 0.0
    %4461 = vmatprep.subr.mxu0 0.0
    %4462 = vmatpush1.xpose.msra.mxu0 0.0
    %4463 = vmatprep.subr.mxu0 0.0
    %4464 = vmatpush1.xpose.msra.mxu0 %v4433
    %4465 = vmatprep.subr.mxu0 0.0
    %4466 = vmatpush1.xpose.msra.mxu0 %v4431
    %4467 = vmatprep.subr.mxu0 0.0
    %4468 = vmatpush2.xpose.msra.mxu0 0.0
    %4469 = vmatprep.subr.mxu0 0.0
    %4470 = vmatpush2.xpose.msra.mxu0 0.0
    %4471 = vmatprep.subr.mxu0 0.0
    %4472 = vmatpush2.xpose.msra.mxu0 0.0
    %4473 = vmatprep.subr.mxu0 0.0
    %4474 = vmatpush2.xpose.msra.mxu0 0.0
    %4475 = vmatprep.subr.mxu0 0.0
    %4476 = vmatpush2.xpose.msra.mxu0 0.0
    %4477 = vmatprep.subr.mxu0 0.0
    %4478 = vmatpush2.xpose.msra.mxu0 0.0
    %4479 = vmatprep.subr.mxu0 0.0
    %4480 = vmatpush2.xpose.msra.mxu0 0.0
    %4481 = vmatprep.subr.mxu0 0.0
    %4482 = vmatpush2.xpose.msra.mxu0 0.0
    %4483 = vmatprep.subr.mxu0 0.0
    %4484 = vmatpush2.xpose.msra.mxu0 0.0
    %4485 = vmatprep.subr.mxu0 0.0
    %4486 = vmatpush2.xpose.msra.mxu0 0.0
    %4487 = vmatprep.subr.mxu0 0.0
    %4488 = vmatpush2.xpose.msra.mxu0 0.0
    %4489 = vmatprep.subr.mxu0 0.0
    %4490 = vmatpush2.xpose.msra.mxu0 0.0
    %4491 = vmatprep.subr.mxu0 0.0
    %4492 = vmatpush2.xpose.msra.mxu0 0.0
    %4493 = vmatprep.subr.mxu0 0.0
    %4494 = vmatpush2.xpose.msra.mxu0 0.0
    %4495 = vmatprep.subr.mxu0 0.0
    %4496 = vmatpush2.xpose.msra.mxu0 0.0
    %4497 = vmatprep.subr.mxu0 0.0
    %4498 = vmatpush2.xpose.msra.mxu0 0.0
    %4499 = vmatprep.mubr.f32.mxu0 0.0
    %4500 = vmatmul.mubr.f32.gmra.mxu0 %v4427
    %v4501 = vpop.f32.mrf.mxu0
    %v4502 = vadd.f32 0.0, %v4501
    %v4503 = vpop.f32.mrf.mxu0
    %4504 = vmatprep.mubr.f32.mxu0 0.0
    %4505 = vmatmul.mubr.f32.gmra.mxu0 %v4429
    %v4506 = vpop.f32.mrf.mxu0
    %v4507 = vadd.f32 0.0, %v4506
    %v4508 = vpop.f32.mrf.mxu0
    %4509 = vdwg.mxu0
    %v4510 = vmul.f32 %v4415, %v4415
    %v4511 = vmul.f32 %v4418, %v4418
    %v4512 = vsel %vm216, %v4510, 0.0
    %4513 = vadd.xlane.f32.xlu0 %v4512
    %v4514 = vpop.xlane.xlu0 %4513
    %v4515 = vsel %vm216, %v4511, 0.0
    %4516 = vadd.xlane.f32.xlu0 %v4515
    %v4517 = vpop.xlane.xlu0 %4516
    %4520 = vrot.lane.b32.xlu0 %v4510, 96
    %v4521 = vpop.permute.xlu0 %4520
    %4522 = vrot.lane.b32.xlu0 %v4511, 96
    %v4523 = vpop.permute.xlu0 %4522
    %v4526 = vsel %vm216, %v4521, 0.0
    %4527 = vadd.xlane.f32.xlu0 %v4526
    %v4528 = vpop.xlane.xlu0 %4527
    %v4529 = vsel %vm216, %v4523, 0.0
    %4530 = vadd.xlane.f32.xlu0 %v4529
    %v4531 = vpop.xlane.xlu0 %4530
    %4532 = vxpose.xlu0.b32.start [1/16] %v4528, 128
    %4533 = vxpose.xlu0.b32.cont [2/16] %v4531, 128
    %4534 = vxpose.xlu0.b32.cont [3/16] 0.0, 128
    %4535 = vxpose.xlu0.b32.cont [4/16] 0.0, 128
    %4536 = vxpose.xlu0.b32.cont [5/16] 0.0, 128
    %4537 = vxpose.xlu0.b32.cont [6/16] 0.0, 128
    %4538 = vxpose.xlu0.b32.cont [7/16] 0.0, 128
    %4539 = vxpose.xlu0.b32.cont [8/16] 0.0, 128
    %4540 = vxpose.xlu0.b32.cont [9/16] 0.0, 128
    %4541 = vxpose.xlu0.b32.cont [10/16] 0.0, 128
    %4542 = vxpose.xlu0.b32.cont [11/16] 0.0, 128
    %4543 = vxpose.xlu0.b32.cont [12/16] 0.0, 128
    %4544 = vxpose.xlu0.b32.cont [13/16] 0.0, 128
    %4545 = vxpose.xlu0.b32.cont [14/16] 0.0, 128
    %4546 = vxpose.xlu0.b32.cont [15/16] 0.0, 128
    %4547 = vxpose.xlu0.b32.end [16/16] 0.0, 128
    %v4548 = vpop.trf.xlu0
    %v4549 = vpop.trf.xlu0
    %v4550 = vpop.trf.xlu0
    %v4551 = vpop.trf.xlu0
    %v4552 = vpop.trf.xlu0
    %v4553 = vpop.trf.xlu0
    %v4554 = vpop.trf.xlu0
    %v4555 = vpop.trf.xlu0
    %v4556 = vpop.trf.xlu0
    %v4557 = vpop.trf.xlu0
    %v4558 = vpop.trf.xlu0
    %v4559 = vpop.trf.xlu0
    %v4560 = vpop.trf.xlu0
    %v4561 = vpop.trf.xlu0
    %v4562 = vpop.trf.xlu0
    %v4563 = vpop.trf.xlu0
    %v4564 = vlaneseq
    %v4565 = vshrl.u32 %v4564, 7
    %v4566 = vsub.s32 0, %v4565
    %v4567 = vrot.slane %v4548, %v4566
    %v4568 = vadd.f32 %v4514, %v4567
    %v4569 = vadd.f32 %v4517, %v4567
    %v4570 = vmul.f32 %v4502, 2.0
    %v4571 = vmul.f32 %v4507, 2.0
    %v4572 = vsub.f32 %v4568, %v4570
    %v4573 = vsub.f32 %v4569, %v4571
    %v4574 = vmax.f32 %v4572, 0.0
    %v4575 = vmax.f32 %v4573, 0.0
    %v4576 = vrsqrt.pop %v4574
    %v4577 = vmul.f32 %v4574, %v4576
    %vm4578 = vcmp.eq.f32.partialorder %v4574, inf
    %v4579 = vsel %vm4578, %v4574, %v4577
    %vm4580 = vcmp.eq.f32.partialorder %v4574, 0.0
    %v4581 = vand.u32 %v4574, 2147483648
    %v4582 = vsel %vm4580, %v4581, %v4579
    %v4583 = vrsqrt.pop %v4575
    %v4584 = vmul.f32 %v4575, %v4583
    %vm4585 = vcmp.eq.f32.partialorder %v4575, inf
    %v4586 = vsel %vm4585, %v4575, %v4584
    %vm4587 = vcmp.eq.f32.partialorder %v4575, 0.0
    %v4588 = vand.u32 %v4575, 2147483648
    %v4589 = vsel %vm4587, %v4588, %v4586
    %v4590 = vsub.f32 0.0, %v4582
    %v4591 = vsub.f32 0.0, %v4589
    %v4592 = vmul.f32 %v4590, 0.35355338
    %v4593 = vmul.f32 %v4591, 0.35355338
    %v4594 = vsel %vm87, %v4592, -inf
    %v4595 = vsel %vm88, %v4593, -inf
    %v4596 = vsel %vm386, %v4594, -inf
    %4597 = vmax.xlane.f32.xlu0 %v4596
    %v4598 = vpop.xlane.xlu0 %4597
    %v4599 = vsel %vm386, %v4595, -inf
    %4600 = vmax.xlane.f32.xlu0 %v4599
    %v4601 = vpop.xlane.xlu0 %4600
    %v4602 = vsub.f32 %v4594, %v4598
    %v4603 = vsub.f32 %v4595, %v4601
    %v4604 = vmul.f32 %v4602, 1.442695
    %v4605 = vpow.pop %v4604
    %v4606 = vmul.f32 %v4603, 1.442695
    %v4607 = vpow.pop %v4606
    %v4608 = vsel %vm386, %v4605, 0.0
    %4609 = vadd.xlane.f32.xlu0 %v4608
    %v4610 = vpop.xlane.xlu0 %4609
    %v4611 = vsel %vm386, %v4607, 0.0
    %4612 = vadd.xlane.f32.xlu0 %v4611
    %v4613 = vpop.xlane.xlu0 %4612
    %v4614 = vrcp.pop %v4610
    %v4615 = vrcp.pop %v4613
    %v4616 = vmul.f32 %v4605, %v4614
    %v4617 = vmul.f32 %v4607, %v4615
    %4618 = vrot.lane.b32.xlu0 %v4415, 64
    %v4619 = vpop.permute.xlu0 %4618
    %4620 = vrot.lane.b32.xlu0 %v4418, 64
    %v4621 = vpop.permute.xlu0 %4620
    %v4625 = vsel %vm386, %v4616, 0
    %v4628 = vsel %vm386, %v4617, 0
    %4630 = vmatprep.subr.mxu0 0.0
    %4631 = vmatpush1.msra.mxu0 0.0
    %4632 = vmatprep.subr.mxu0 0.0
    %4633 = vmatpush1.msra.mxu0 0.0
    %4634 = vmatprep.subr.mxu0 0.0
    %4635 = vmatpush1.msra.mxu0 0.0
    %4636 = vmatprep.subr.mxu0 0.0
    %4637 = vmatpush1.msra.mxu0 0.0
    %4638 = vmatprep.subr.mxu0 0.0
    %4639 = vmatpush1.msra.mxu0 0.0
    %4640 = vmatprep.subr.mxu0 0.0
    %4641 = vmatpush1.msra.mxu0 0.0
    %4642 = vmatprep.subr.mxu0 0.0
    %4643 = vmatpush1.msra.mxu0 0.0
    %4644 = vmatprep.subr.mxu0 0.0
    %4645 = vmatpush1.msra.mxu0 0.0
    %4646 = vmatprep.subr.mxu0 0.0
    %4647 = vmatpush1.msra.mxu0 0.0
    %4648 = vmatprep.subr.mxu0 0.0
    %4649 = vmatpush1.msra.mxu0 0.0
    %4650 = vmatprep.subr.mxu0 0.0
    %4651 = vmatpush1.msra.mxu0 0.0
    %4652 = vmatprep.subr.mxu0 0.0
    %4653 = vmatpush1.msra.mxu0 0.0
    %4654 = vmatprep.subr.mxu0 0.0
    %4655 = vmatpush1.msra.mxu0 0.0
    %4656 = vmatprep.subr.mxu0 0.0
    %4657 = vmatpush1.msra.mxu0 0.0
    %4658 = vmatprep.subr.mxu0 0.0
    %4659 = vmatpush1.msra.mxu0 %v4621
    %4660 = vmatprep.subr.mxu0 0.0
    %4661 = vmatpush1.msra.mxu0 %v4619
    %4662 = vmatprep.subr.mxu0 0.0
    %4663 = vmatpush2.msra.mxu0 0.0
    %4664 = vmatprep.subr.mxu0 0.0
    %4665 = vmatpush2.msra.mxu0 0.0
    %4666 = vmatprep.subr.mxu0 0.0
    %4667 = vmatpush2.msra.mxu0 0.0
    %4668 = vmatprep.subr.mxu0 0.0
    %4669 = vmatpush2.msra.mxu0 0.0
    %4670 = vmatprep.subr.mxu0 0.0
    %4671 = vmatpush2.msra.mxu0 0.0
    %4672 = vmatprep.subr.mxu0 0.0
    %4673 = vmatpush2.msra.mxu0 0.0
    %4674 = vmatprep.subr.mxu0 0.0
    %4675 = vmatpush2.msra.mxu0 0.0
    %4676 = vmatprep.subr.mxu0 0.0
    %4677 = vmatpush2.msra.mxu0 0.0
    %4678 = vmatprep.subr.mxu0 0.0
    %4679 = vmatpush2.msra.mxu0 0.0
    %4680 = vmatprep.subr.mxu0 0.0
    %4681 = vmatpush2.msra.mxu0 0.0
    %4682 = vmatprep.subr.mxu0 0.0
    %4683 = vmatpush2.msra.mxu0 0.0
    %4684 = vmatprep.subr.mxu0 0.0
    %4685 = vmatpush2.msra.mxu0 0.0
    %4686 = vmatprep.subr.mxu0 0.0
    %4687 = vmatpush2.msra.mxu0 0.0
    %4688 = vmatprep.subr.mxu0 0.0
    %4689 = vmatpush2.msra.mxu0 0.0
    %4690 = vmatprep.subr.mxu0 0.0
    %4691 = vmatpush2.msra.mxu0 0.0
    %4692 = vmatprep.subr.mxu0 0.0
    %4693 = vmatpush2.msra.mxu0 0.0
    %4694 = vmatprep.mubr.f32.mxu0 0.0
    %4695 = vmatmul.mubr.f32.gmra.mxu0 %v4625
    %v4696 = vpop.f32.mrf.mxu0
    %v4697 = vadd.f32 0.0, %v4696
    %v4698 = vpop.f32.mrf.mxu0
    %4699 = vmatprep.mubr.f32.mxu0 0.0
    %4700 = vmatmul.mubr.f32.gmra.mxu0 %v4628
    %v4701 = vpop.f32.mrf.mxu0
    %v4702 = vadd.f32 0.0, %v4701
    %v4703 = vpop.f32.mrf.mxu0
    %4704 = vdwg.mxu0
    %4705 = vrot.lane.b32.xlu0 %v4415, 120
    %v4706 = vpop.permute.xlu0 %4705
    %4707 = vrot.lane.b32.xlu0 %v4418, 120
    %v4708 = vpop.permute.xlu0 %4707
    %4709 = vrot.lane.b32.xlu0 %v4415, 88
    %v4710 = vpop.permute.xlu0 %4709
    %4711 = vrot.lane.b32.xlu0 %v4418, 88
    %v4712 = vpop.permute.xlu0 %4711
    %v4713 = vsel %vm216, %v4706, 0
    %v4715 = vsel %vm216, %v4708, 0
    %v4717 = vsel %vm216, %v4710, 0
    %v4719 = vsel %vm216, %v4712, 0
    %4721 = vmatprep.subr.mxu0 0.0
    %4722 = vmatpush1.xpose.msra.mxu0 0.0
    %4723 = vmatprep.subr.mxu0 0.0
    %4724 = vmatpush1.xpose.msra.mxu0 0.0
    %4725 = vmatprep.subr.mxu0 0.0
    %4726 = vmatpush1.xpose.msra.mxu0 0.0
    %4727 = vmatprep.subr.mxu0 0.0
    %4728 = vmatpush1.xpose.msra.mxu0 0.0
    %4729 = vmatprep.subr.mxu0 0.0
    %4730 = vmatpush1.xpose.msra.mxu0 0.0
    %4731 = vmatprep.subr.mxu0 0.0
    %4732 = vmatpush1.xpose.msra.mxu0 0.0
    %4733 = vmatprep.subr.mxu0 0.0
    %4734 = vmatpush1.xpose.msra.mxu0 0.0
    %4735 = vmatprep.subr.mxu0 0.0
    %4736 = vmatpush1.xpose.msra.mxu0 0.0
    %4737 = vmatprep.subr.mxu0 0.0
    %4738 = vmatpush1.xpose.msra.mxu0 0.0
    %4739 = vmatprep.subr.mxu0 0.0
    %4740 = vmatpush1.xpose.msra.mxu0 0.0
    %4741 = vmatprep.subr.mxu0 0.0
    %4742 = vmatpush1.xpose.msra.mxu0 0.0
    %4743 = vmatprep.subr.mxu0 0.0
    %4744 = vmatpush1.xpose.msra.mxu0 0.0
    %4745 = vmatprep.subr.mxu0 0.0
    %4746 = vmatpush1.xpose.msra.mxu0 0.0
    %4747 = vmatprep.subr.mxu0 0.0
    %4748 = vmatpush1.xpose.msra.mxu0 0.0
    %4749 = vmatprep.subr.mxu0 0.0
    %4750 = vmatpush1.xpose.msra.mxu0 %v4719
    %4751 = vmatprep.subr.mxu0 0.0
    %4752 = vmatpush1.xpose.msra.mxu0 %v4717
    %4753 = vmatprep.subr.mxu0 0.0
    %4754 = vmatpush2.xpose.msra.mxu0 0.0
    %4755 = vmatprep.subr.mxu0 0.0
    %4756 = vmatpush2.xpose.msra.mxu0 0.0
    %4757 = vmatprep.subr.mxu0 0.0
    %4758 = vmatpush2.xpose.msra.mxu0 0.0
    %4759 = vmatprep.subr.mxu0 0.0
    %4760 = vmatpush2.xpose.msra.mxu0 0.0
    %4761 = vmatprep.subr.mxu0 0.0
    %4762 = vmatpush2.xpose.msra.mxu0 0.0
    %4763 = vmatprep.subr.mxu0 0.0
    %4764 = vmatpush2.xpose.msra.mxu0 0.0
    %4765 = vmatprep.subr.mxu0 0.0
    %4766 = vmatpush2.xpose.msra.mxu0 0.0
    %4767 = vmatprep.subr.mxu0 0.0
    %4768 = vmatpush2.xpose.msra.mxu0 0.0
    %4769 = vmatprep.subr.mxu0 0.0
    %4770 = vmatpush2.xpose.msra.mxu0 0.0
    %4771 = vmatprep.subr.mxu0 0.0
    %4772 = vmatpush2.xpose.msra.mxu0 0.0
    %4773 = vmatprep.subr.mxu0 0.0
    %4774 = vmatpush2.xpose.msra.mxu0 0.0
    %4775 = vmatprep.subr.mxu0 0.0
    %4776 = vmatpush2.xpose.msra.mxu0 0.0
    %4777 = vmatprep.subr.mxu0 0.0
    %4778 = vmatpush2.xpose.msra.mxu0 0.0
    %4779 = vmatprep.subr.mxu0 0.0
    %4780 = vmatpush2.xpose.msra.mxu0 0.0
    %4781 = vmatprep.subr.mxu0 0.0
    %4782 = vmatpush2.xpose.msra.mxu0 0.0
    %4783 = vmatprep.subr.mxu0 0.0
    %4784 = vmatpush2.xpose.msra.mxu0 0.0
    %4785 = vmatprep.mubr.f32.mxu0 0.0
    %4786 = vmatmul.mubr.f32.gmra.mxu0 %v4713
    %v4787 = vpop.f32.mrf.mxu0
    %v4788 = vadd.f32 0.0, %v4787
    %v4789 = vpop.f32.mrf.mxu0
    %4790 = vmatprep.mubr.f32.mxu0 0.0
    %4791 = vmatmul.mubr.f32.gmra.mxu0 %v4715
    %v4792 = vpop.f32.mrf.mxu0
    %v4793 = vadd.f32 0.0, %v4792
    %v4794 = vpop.f32.mrf.mxu0
    %4795 = vdwg.mxu0
    %4796 = vrot.lane.b32.xlu0 %v4510, 120
    %v4797 = vpop.permute.xlu0 %4796
    %4798 = vrot.lane.b32.xlu0 %v4511, 120
    %v4799 = vpop.permute.xlu0 %4798
    %v4802 = vsel %vm216, %v4797, 0.0
    %4803 = vadd.xlane.f32.xlu0 %v4802
    %v4804 = vpop.xlane.xlu0 %4803
    %v4805 = vsel %vm216, %v4799, 0.0
    %4806 = vadd.xlane.f32.xlu0 %v4805
    %v4807 = vpop.xlane.xlu0 %4806
    %4808 = vrot.lane.b32.xlu0 %v4510, 88
    %v4809 = vpop.permute.xlu0 %4808
    %4810 = vrot.lane.b32.xlu0 %v4511, 88
    %v4811 = vpop.permute.xlu0 %4810
    %v4814 = vsel %vm216, %v4809, 0.0
    %4815 = vadd.xlane.f32.xlu0 %v4814
    %v4816 = vpop.xlane.xlu0 %4815
    %v4817 = vsel %vm216, %v4811, 0.0
    %4818 = vadd.xlane.f32.xlu0 %v4817
    %v4819 = vpop.xlane.xlu0 %4818
    %4820 = vxpose.xlu0.b32.start [1/16] %v4816, 128
    %4821 = vxpose.xlu0.b32.cont [2/16] %v4819, 128
    %4822 = vxpose.xlu0.b32.cont [3/16] 0.0, 128
    %4823 = vxpose.xlu0.b32.cont [4/16] 0.0, 128
    %4824 = vxpose.xlu0.b32.cont [5/16] 0.0, 128
    %4825 = vxpose.xlu0.b32.cont [6/16] 0.0, 128
    %4826 = vxpose.xlu0.b32.cont [7/16] 0.0, 128
    %4827 = vxpose.xlu0.b32.cont [8/16] 0.0, 128
    %4828 = vxpose.xlu0.b32.cont [9/16] 0.0, 128
    %4829 = vxpose.xlu0.b32.cont [10/16] 0.0, 128
    %4830 = vxpose.xlu0.b32.cont [11/16] 0.0, 128
    %4831 = vxpose.xlu0.b32.cont [12/16] 0.0, 128
    %4832 = vxpose.xlu0.b32.cont [13/16] 0.0, 128
    %4833 = vxpose.xlu0.b32.cont [14/16] 0.0, 128
    %4834 = vxpose.xlu0.b32.cont [15/16] 0.0, 128
    %4835 = vxpose.xlu0.b32.end [16/16] 0.0, 128
    %v4836 = vpop.trf.xlu0
    %v4837 = vpop.trf.xlu0
    %v4838 = vpop.trf.xlu0
    %v4839 = vpop.trf.xlu0
    %v4840 = vpop.trf.xlu0
    %v4841 = vpop.trf.xlu0
    %v4842 = vpop.trf.xlu0
    %v4843 = vpop.trf.xlu0
    %v4844 = vpop.trf.xlu0
    %v4845 = vpop.trf.xlu0
    %v4846 = vpop.trf.xlu0
    %v4847 = vpop.trf.xlu0
    %v4848 = vpop.trf.xlu0
    %v4849 = vpop.trf.xlu0
    %v4850 = vpop.trf.xlu0
    %v4851 = vpop.trf.xlu0
    %v4852 = vlaneseq
    %v4853 = vshrl.u32 %v4852, 7
    %v4854 = vsub.s32 0, %v4853
    %v4855 = vrot.slane %v4836, %v4854
    %v4856 = vadd.f32 %v4804, %v4855
    %v4857 = vadd.f32 %v4807, %v4855
    %v4858 = vmul.f32 %v4788, 2.0
    %v4859 = vmul.f32 %v4793, 2.0
    %v4860 = vsub.f32 %v4856, %v4858
    %v4861 = vsub.f32 %v4857, %v4859
    %v4862 = vmax.f32 %v4860, 0.0
    %v4863 = vmax.f32 %v4861, 0.0
    %v4864 = vrsqrt.pop %v4862
    %v4865 = vmul.f32 %v4862, %v4864
    %vm4866 = vcmp.eq.f32.partialorder %v4862, inf
    %v4867 = vsel %vm4866, %v4862, %v4865
    %vm4868 = vcmp.eq.f32.partialorder %v4862, 0.0
    %v4869 = vand.u32 %v4862, 2147483648
    %v4870 = vsel %vm4868, %v4869, %v4867
    %v4871 = vrsqrt.pop %v4863
    %v4872 = vmul.f32 %v4863, %v4871
    %vm4873 = vcmp.eq.f32.partialorder %v4863, inf
    %v4874 = vsel %vm4873, %v4863, %v4872
    %vm4875 = vcmp.eq.f32.partialorder %v4863, 0.0
    %v4876 = vand.u32 %v4863, 2147483648
    %v4877 = vsel %vm4875, %v4876, %v4874
    %v4878 = vsub.f32 0.0, %v4870
    %v4879 = vsub.f32 0.0, %v4877
    %v4880 = vmul.f32 %v4878, 0.35355338
    %v4881 = vmul.f32 %v4879, 0.35355338
    %v4882 = vsel %vm87, %v4880, -inf
    %v4883 = vsel %vm88, %v4881, -inf
    %v4884 = vsel %vm386, %v4882, -inf
    %4885 = vmax.xlane.f32.xlu0 %v4884
    %v4886 = vpop.xlane.xlu0 %4885
    %v4887 = vsel %vm386, %v4883, -inf
    %4888 = vmax.xlane.f32.xlu0 %v4887
    %v4889 = vpop.xlane.xlu0 %4888
    %v4890 = vsub.f32 %v4882, %v4886
    %v4891 = vsub.f32 %v4883, %v4889
    %v4892 = vmul.f32 %v4890, 1.442695
    %v4893 = vpow.pop %v4892
    %v4894 = vmul.f32 %v4891, 1.442695
    %v4895 = vpow.pop %v4894
    %v4896 = vsel %vm386, %v4893, 0.0
    %4897 = vadd.xlane.f32.xlu0 %v4896
    %v4898 = vpop.xlane.xlu0 %4897
    %v4899 = vsel %vm386, %v4895, 0.0
    %4900 = vadd.xlane.f32.xlu0 %v4899
    %v4901 = vpop.xlane.xlu0 %4900
    %v4902 = vrcp.pop %v4898
    %v4903 = vrcp.pop %v4901
    %v4904 = vmul.f32 %v4893, %v4902
    %v4905 = vmul.f32 %v4895, %v4903
    %4906 = vrot.lane.b32.xlu0 %v4415, 56
    %v4907 = vpop.permute.xlu0 %4906
    %4908 = vrot.lane.b32.xlu0 %v4418, 56
    %v4909 = vpop.permute.xlu0 %4908
    %v4913 = vsel %vm386, %v4904, 0
    %v4916 = vsel %vm386, %v4905, 0
    %4918 = vmatprep.subr.mxu0 0.0
    %4919 = vmatpush1.msra.mxu0 0.0
    %4920 = vmatprep.subr.mxu0 0.0
    %4921 = vmatpush1.msra.mxu0 0.0
    %4922 = vmatprep.subr.mxu0 0.0
    %4923 = vmatpush1.msra.mxu0 0.0
    %4924 = vmatprep.subr.mxu0 0.0
    %4925 = vmatpush1.msra.mxu0 0.0
    %4926 = vmatprep.subr.mxu0 0.0
    %4927 = vmatpush1.msra.mxu0 0.0
    %4928 = vmatprep.subr.mxu0 0.0
    %4929 = vmatpush1.msra.mxu0 0.0
    %4930 = vmatprep.subr.mxu0 0.0
    %4931 = vmatpush1.msra.mxu0 0.0
    %4932 = vmatprep.subr.mxu0 0.0
    %4933 = vmatpush1.msra.mxu0 0.0
    %4934 = vmatprep.subr.mxu0 0.0
    %4935 = vmatpush1.msra.mxu0 0.0
    %4936 = vmatprep.subr.mxu0 0.0
    %4937 = vmatpush1.msra.mxu0 0.0
    %4938 = vmatprep.subr.mxu0 0.0
    %4939 = vmatpush1.msra.mxu0 0.0
    %4940 = vmatprep.subr.mxu0 0.0
    %4941 = vmatpush1.msra.mxu0 0.0
    %4942 = vmatprep.subr.mxu0 0.0
    %4943 = vmatpush1.msra.mxu0 0.0
    %4944 = vmatprep.subr.mxu0 0.0
    %4945 = vmatpush1.msra.mxu0 0.0
    %4946 = vmatprep.subr.mxu0 0.0
    %4947 = vmatpush1.msra.mxu0 %v4909
    %4948 = vmatprep.subr.mxu0 0.0
    %4949 = vmatpush1.msra.mxu0 %v4907
    %4950 = vmatprep.subr.mxu0 0.0
    %4951 = vmatpush2.msra.mxu0 0.0
    %4952 = vmatprep.subr.mxu0 0.0
    %4953 = vmatpush2.msra.mxu0 0.0
    %4954 = vmatprep.subr.mxu0 0.0
    %4955 = vmatpush2.msra.mxu0 0.0
    %4956 = vmatprep.subr.mxu0 0.0
    %4957 = vmatpush2.msra.mxu0 0.0
    %4958 = vmatprep.subr.mxu0 0.0
    %4959 = vmatpush2.msra.mxu0 0.0
    %4960 = vmatprep.subr.mxu0 0.0
    %4961 = vmatpush2.msra.mxu0 0.0
    %4962 = vmatprep.subr.mxu0 0.0
    %4963 = vmatpush2.msra.mxu0 0.0
    %4964 = vmatprep.subr.mxu0 0.0
    %4965 = vmatpush2.msra.mxu0 0.0
    %4966 = vmatprep.subr.mxu0 0.0
    %4967 = vmatpush2.msra.mxu0 0.0
    %4968 = vmatprep.subr.mxu0 0.0
    %4969 = vmatpush2.msra.mxu0 0.0
    %4970 = vmatprep.subr.mxu0 0.0
    %4971 = vmatpush2.msra.mxu0 0.0
    %4972 = vmatprep.subr.mxu0 0.0
    %4973 = vmatpush2.msra.mxu0 0.0
    %4974 = vmatprep.subr.mxu0 0.0
    %4975 = vmatpush2.msra.mxu0 0.0
    %4976 = vmatprep.subr.mxu0 0.0
    %4977 = vmatpush2.msra.mxu0 0.0
    %4978 = vmatprep.subr.mxu0 0.0
    %4979 = vmatpush2.msra.mxu0 0.0
    %4980 = vmatprep.subr.mxu0 0.0
    %4981 = vmatpush2.msra.mxu0 0.0
    %4982 = vmatprep.mubr.f32.mxu0 0.0
    %4983 = vmatmul.mubr.f32.gmra.mxu0 %v4913
    %v4984 = vpop.f32.mrf.mxu0
    %v4985 = vadd.f32 0.0, %v4984
    %v4986 = vpop.f32.mrf.mxu0
    %4987 = vmatprep.mubr.f32.mxu0 0.0
    %4988 = vmatmul.mubr.f32.gmra.mxu0 %v4916
    %v4989 = vpop.f32.mrf.mxu0
    %v4990 = vadd.f32 0.0, %v4989
    %v4991 = vpop.f32.mrf.mxu0
    %4992 = vdwg.mxu0
    %4993 = vrot.lane.b32.xlu0 %v4415, 112
    %v4994 = vpop.permute.xlu0 %4993
    %4995 = vrot.lane.b32.xlu0 %v4418, 112
    %v4996 = vpop.permute.xlu0 %4995
    %4997 = vrot.lane.b32.xlu0 %v4415, 80
    %v4998 = vpop.permute.xlu0 %4997
    %4999 = vrot.lane.b32.xlu0 %v4418, 80
    %v5000 = vpop.permute.xlu0 %4999
    %v5001 = vsel %vm216, %v4994, 0
    %v5003 = vsel %vm216, %v4996, 0
    %v5005 = vsel %vm216, %v4998, 0
    %v5007 = vsel %vm216, %v5000, 0
    %5009 = vmatprep.subr.mxu0 0.0
    %5010 = vmatpush1.xpose.msra.mxu0 0.0
    %5011 = vmatprep.subr.mxu0 0.0
    %5012 = vmatpush1.xpose.msra.mxu0 0.0
    %5013 = vmatprep.subr.mxu0 0.0
    %5014 = vmatpush1.xpose.msra.mxu0 0.0
    %5015 = vmatprep.subr.mxu0 0.0
    %5016 = vmatpush1.xpose.msra.mxu0 0.0
    %5017 = vmatprep.subr.mxu0 0.0
    %5018 = vmatpush1.xpose.msra.mxu0 0.0
    %5019 = vmatprep.subr.mxu0 0.0
    %5020 = vmatpush1.xpose.msra.mxu0 0.0
    %5021 = vmatprep.subr.mxu0 0.0
    %5022 = vmatpush1.xpose.msra.mxu0 0.0
    %5023 = vmatprep.subr.mxu0 0.0
    %5024 = vmatpush1.xpose.msra.mxu0 0.0
    %5025 = vmatprep.subr.mxu0 0.0
    %5026 = vmatpush1.xpose.msra.mxu0 0.0
    %5027 = vmatprep.subr.mxu0 0.0
    %5028 = vmatpush1.xpose.msra.mxu0 0.0
    %5029 = vmatprep.subr.mxu0 0.0
    %5030 = vmatpush1.xpose.msra.mxu0 0.0
    %5031 = vmatprep.subr.mxu0 0.0
    %5032 = vmatpush1.xpose.msra.mxu0 0.0
    %5033 = vmatprep.subr.mxu0 0.0
    %5034 = vmatpush1.xpose.msra.mxu0 0.0
    %5035 = vmatprep.subr.mxu0 0.0
    %5036 = vmatpush1.xpose.msra.mxu0 0.0
    %5037 = vmatprep.subr.mxu0 0.0
    %5038 = vmatpush1.xpose.msra.mxu0 %v5007
    %5039 = vmatprep.subr.mxu0 0.0
    %5040 = vmatpush1.xpose.msra.mxu0 %v5005
    %5041 = vmatprep.subr.mxu0 0.0
    %5042 = vmatpush2.xpose.msra.mxu0 0.0
    %5043 = vmatprep.subr.mxu0 0.0
    %5044 = vmatpush2.xpose.msra.mxu0 0.0
    %5045 = vmatprep.subr.mxu0 0.0
    %5046 = vmatpush2.xpose.msra.mxu0 0.0
    %5047 = vmatprep.subr.mxu0 0.0
    %5048 = vmatpush2.xpose.msra.mxu0 0.0
    %5049 = vmatprep.subr.mxu0 0.0
    %5050 = vmatpush2.xpose.msra.mxu0 0.0
    %5051 = vmatprep.subr.mxu0 0.0
    %5052 = vmatpush2.xpose.msra.mxu0 0.0
    %5053 = vmatprep.subr.mxu0 0.0
    %5054 = vmatpush2.xpose.msra.mxu0 0.0
    %5055 = vmatprep.subr.mxu0 0.0
    %5056 = vmatpush2.xpose.msra.mxu0 0.0
    %5057 = vmatprep.subr.mxu0 0.0
    %5058 = vmatpush2.xpose.msra.mxu0 0.0
    %5059 = vmatprep.subr.mxu0 0.0
    %5060 = vmatpush2.xpose.msra.mxu0 0.0
    %5061 = vmatprep.subr.mxu0 0.0
    %5062 = vmatpush2.xpose.msra.mxu0 0.0
    %5063 = vmatprep.subr.mxu0 0.0
    %5064 = vmatpush2.xpose.msra.mxu0 0.0
    %5065 = vmatprep.subr.mxu0 0.0
    %5066 = vmatpush2.xpose.msra.mxu0 0.0
    %5067 = vmatprep.subr.mxu0 0.0
    %5068 = vmatpush2.xpose.msra.mxu0 0.0
    %5069 = vmatprep.subr.mxu0 0.0
    %5070 = vmatpush2.xpose.msra.mxu0 0.0
    %5071 = vmatprep.subr.mxu0 0.0
    %5072 = vmatpush2.xpose.msra.mxu0 0.0
    %5073 = vmatprep.mubr.f32.mxu0 0.0
    %5074 = vmatmul.mubr.f32.gmra.mxu0 %v5001
    %v5075 = vpop.f32.mrf.mxu0
    %v5076 = vadd.f32 0.0, %v5075
    %v5077 = vpop.f32.mrf.mxu0
    %5078 = vmatprep.mubr.f32.mxu0 0.0
    %5079 = vmatmul.mubr.f32.gmra.mxu0 %v5003
    %v5080 = vpop.f32.mrf.mxu0
    %v5081 = vadd.f32 0.0, %v5080
    %v5082 = vpop.f32.mrf.mxu0
    %5083 = vdwg.mxu0
    %5084 = vrot.lane.b32.xlu0 %v4510, 112
    %v5085 = vpop.permute.xlu0 %5084
    %5086 = vrot.lane.b32.xlu0 %v4511, 112
    %v5087 = vpop.permute.xlu0 %5086
    %v5090 = vsel %vm216, %v5085, 0.0
    %5091 = vadd.xlane.f32.xlu0 %v5090
    %v5092 = vpop.xlane.xlu0 %5091
    %v5093 = vsel %vm216, %v5087, 0.0
    %5094 = vadd.xlane.f32.xlu0 %v5093
    %v5095 = vpop.xlane.xlu0 %5094
    %5096 = vrot.lane.b32.xlu0 %v4510, 80
    %v5097 = vpop.permute.xlu0 %5096
    %5098 = vrot.lane.b32.xlu0 %v4511, 80
    %v5099 = vpop.permute.xlu0 %5098
    %v5102 = vsel %vm216, %v5097, 0.0
    %5103 = vadd.xlane.f32.xlu0 %v5102
    %v5104 = vpop.xlane.xlu0 %5103
    %v5105 = vsel %vm216, %v5099, 0.0
    %5106 = vadd.xlane.f32.xlu0 %v5105
    %v5107 = vpop.xlane.xlu0 %5106
    %5108 = vxpose.xlu0.b32.start [1/16] %v5104, 128
    %5109 = vxpose.xlu0.b32.cont [2/16] %v5107, 128
    %5110 = vxpose.xlu0.b32.cont [3/16] 0.0, 128
    %5111 = vxpose.xlu0.b32.cont [4/16] 0.0, 128
    %5112 = vxpose.xlu0.b32.cont [5/16] 0.0, 128
    %5113 = vxpose.xlu0.b32.cont [6/16] 0.0, 128
    %5114 = vxpose.xlu0.b32.cont [7/16] 0.0, 128
    %5115 = vxpose.xlu0.b32.cont [8/16] 0.0, 128
    %5116 = vxpose.xlu0.b32.cont [9/16] 0.0, 128
    %5117 = vxpose.xlu0.b32.cont [10/16] 0.0, 128
    %5118 = vxpose.xlu0.b32.cont [11/16] 0.0, 128
    %5119 = vxpose.xlu0.b32.cont [12/16] 0.0, 128
    %5120 = vxpose.xlu0.b32.cont [13/16] 0.0, 128
    %5121 = vxpose.xlu0.b32.cont [14/16] 0.0, 128
    %5122 = vxpose.xlu0.b32.cont [15/16] 0.0, 128
    %5123 = vxpose.xlu0.b32.end [16/16] 0.0, 128
    %v5124 = vpop.trf.xlu0
    %v5125 = vpop.trf.xlu0
    %v5126 = vpop.trf.xlu0
    %v5127 = vpop.trf.xlu0
    %v5128 = vpop.trf.xlu0
    %v5129 = vpop.trf.xlu0
    %v5130 = vpop.trf.xlu0
    %v5131 = vpop.trf.xlu0
    %v5132 = vpop.trf.xlu0
    %v5133 = vpop.trf.xlu0
    %v5134 = vpop.trf.xlu0
    %v5135 = vpop.trf.xlu0
    %v5136 = vpop.trf.xlu0
    %v5137 = vpop.trf.xlu0
    %v5138 = vpop.trf.xlu0
    %v5139 = vpop.trf.xlu0
    %v5140 = vlaneseq
    %v5141 = vshrl.u32 %v5140, 7
    %v5142 = vsub.s32 0, %v5141
    %v5143 = vrot.slane %v5124, %v5142
    %v5144 = vadd.f32 %v5092, %v5143
    %v5145 = vadd.f32 %v5095, %v5143
    %v5146 = vmul.f32 %v5076, 2.0
    %v5147 = vmul.f32 %v5081, 2.0
    %v5148 = vsub.f32 %v5144, %v5146
    %v5149 = vsub.f32 %v5145, %v5147
    %v5150 = vmax.f32 %v5148, 0.0
    %v5151 = vmax.f32 %v5149, 0.0
    %v5152 = vrsqrt.pop %v5150
    %v5153 = vmul.f32 %v5150, %v5152
    %vm5154 = vcmp.eq.f32.partialorder %v5150, inf
    %v5155 = vsel %vm5154, %v5150, %v5153
    %vm5156 = vcmp.eq.f32.partialorder %v5150, 0.0
    %v5157 = vand.u32 %v5150, 2147483648
    %v5158 = vsel %vm5156, %v5157, %v5155
    %v5159 = vrsqrt.pop %v5151
    %v5160 = vmul.f32 %v5151, %v5159
    %vm5161 = vcmp.eq.f32.partialorder %v5151, inf
    %v5162 = vsel %vm5161, %v5151, %v5160
    %vm5163 = vcmp.eq.f32.partialorder %v5151, 0.0
    %v5164 = vand.u32 %v5151, 2147483648
    %v5165 = vsel %vm5163, %v5164, %v5162
    %v5166 = vsub.f32 0.0, %v5158
    %v5167 = vsub.f32 0.0, %v5165
    %v5168 = vmul.f32 %v5166, 0.35355338
    %v5169 = vmul.f32 %v5167, 0.35355338
    %v5170 = vsel %vm87, %v5168, -inf
    %v5171 = vsel %vm88, %v5169, -inf
    %v5172 = vsel %vm386, %v5170, -inf
    %5173 = vmax.xlane.f32.xlu0 %v5172
    %v5174 = vpop.xlane.xlu0 %5173
    %v5175 = vsel %vm386, %v5171, -inf
    %5176 = vmax.xlane.f32.xlu0 %v5175
    %v5177 = vpop.xlane.xlu0 %5176
    %v5178 = vsub.f32 %v5170, %v5174
    %v5179 = vsub.f32 %v5171, %v5177
    %v5180 = vmul.f32 %v5178, 1.442695
    %v5181 = vpow.pop %v5180
    %v5182 = vmul.f32 %v5179, 1.442695
    %v5183 = vpow.pop %v5182
    %v5184 = vsel %vm386, %v5181, 0.0
    %5185 = vadd.xlane.f32.xlu0 %v5184
    %v5186 = vpop.xlane.xlu0 %5185
    %v5187 = vsel %vm386, %v5183, 0.0
    %5188 = vadd.xlane.f32.xlu0 %v5187
    %v5189 = vpop.xlane.xlu0 %5188
    %v5190 = vrcp.pop %v5186
    %v5191 = vrcp.pop %v5189
    %v5192 = vmul.f32 %v5181, %v5190
    %v5193 = vmul.f32 %v5183, %v5191
    %5194 = vrot.lane.b32.xlu0 %v4415, 48
    %v5195 = vpop.permute.xlu0 %5194
    %5196 = vrot.lane.b32.xlu0 %v4418, 48
    %v5197 = vpop.permute.xlu0 %5196
    %v5201 = vsel %vm386, %v5192, 0
    %v5204 = vsel %vm386, %v5193, 0
    %5206 = vmatprep.subr.mxu0 0.0
    %5207 = vmatpush1.msra.mxu0 0.0
    %5208 = vmatprep.subr.mxu0 0.0
    %5209 = vmatpush1.msra.mxu0 0.0
    %5210 = vmatprep.subr.mxu0 0.0
    %5211 = vmatpush1.msra.mxu0 0.0
    %5212 = vmatprep.subr.mxu0 0.0
    %5213 = vmatpush1.msra.mxu0 0.0
    %5214 = vmatprep.subr.mxu0 0.0
    %5215 = vmatpush1.msra.mxu0 0.0
    %5216 = vmatprep.subr.mxu0 0.0
    %5217 = vmatpush1.msra.mxu0 0.0
    %5218 = vmatprep.subr.mxu0 0.0
    %5219 = vmatpush1.msra.mxu0 0.0
    %5220 = vmatprep.subr.mxu0 0.0
    %5221 = vmatpush1.msra.mxu0 0.0
    %5222 = vmatprep.subr.mxu0 0.0
    %5223 = vmatpush1.msra.mxu0 0.0
    %5224 = vmatprep.subr.mxu0 0.0
    %5225 = vmatpush1.msra.mxu0 0.0
    %5226 = vmatprep.subr.mxu0 0.0
    %5227 = vmatpush1.msra.mxu0 0.0
    %5228 = vmatprep.subr.mxu0 0.0
    %5229 = vmatpush1.msra.mxu0 0.0
    %5230 = vmatprep.subr.mxu0 0.0
    %5231 = vmatpush1.msra.mxu0 0.0
    %5232 = vmatprep.subr.mxu0 0.0
    %5233 = vmatpush1.msra.mxu0 0.0
    %5234 = vmatprep.subr.mxu0 0.0
    %5235 = vmatpush1.msra.mxu0 %v5197
    %5236 = vmatprep.subr.mxu0 0.0
    %5237 = vmatpush1.msra.mxu0 %v5195
    %5238 = vmatprep.subr.mxu0 0.0
    %5239 = vmatpush2.msra.mxu0 0.0
    %5240 = vmatprep.subr.mxu0 0.0
    %5241 = vmatpush2.msra.mxu0 0.0
    %5242 = vmatprep.subr.mxu0 0.0
    %5243 = vmatpush2.msra.mxu0 0.0
    %5244 = vmatprep.subr.mxu0 0.0
    %5245 = vmatpush2.msra.mxu0 0.0
    %5246 = vmatprep.subr.mxu0 0.0
    %5247 = vmatpush2.msra.mxu0 0.0
    %5248 = vmatprep.subr.mxu0 0.0
    %5249 = vmatpush2.msra.mxu0 0.0
    %5250 = vmatprep.subr.mxu0 0.0
    %5251 = vmatpush2.msra.mxu0 0.0
    %5252 = vmatprep.subr.mxu0 0.0
    %5253 = vmatpush2.msra.mxu0 0.0
    %5254 = vmatprep.subr.mxu0 0.0
    %5255 = vmatpush2.msra.mxu0 0.0
    %5256 = vmatprep.subr.mxu0 0.0
    %5257 = vmatpush2.msra.mxu0 0.0
    %5258 = vmatprep.subr.mxu0 0.0
    %5259 = vmatpush2.msra.mxu0 0.0
    %5260 = vmatprep.subr.mxu0 0.0
    %5261 = vmatpush2.msra.mxu0 0.0
    %5262 = vmatprep.subr.mxu0 0.0
    %5263 = vmatpush2.msra.mxu0 0.0
    %5264 = vmatprep.subr.mxu0 0.0
    %5265 = vmatpush2.msra.mxu0 0.0
    %5266 = vmatprep.subr.mxu0 0.0
    %5267 = vmatpush2.msra.mxu0 0.0
    %5268 = vmatprep.subr.mxu0 0.0
    %5269 = vmatpush2.msra.mxu0 0.0
    %5270 = vmatprep.mubr.f32.mxu0 0.0
    %5271 = vmatmul.mubr.f32.gmra.mxu0 %v5201
    %v5272 = vpop.f32.mrf.mxu0
    %v5273 = vadd.f32 0.0, %v5272
    %v5274 = vpop.f32.mrf.mxu0
    %5275 = vmatprep.mubr.f32.mxu0 0.0
    %5276 = vmatmul.mubr.f32.gmra.mxu0 %v5204
    %v5277 = vpop.f32.mrf.mxu0
    %v5278 = vadd.f32 0.0, %v5277
    %v5279 = vpop.f32.mrf.mxu0
    %5280 = vdwg.mxu0
    %5281 = vrot.lane.b32.xlu0 %v4415, 104
    %v5282 = vpop.permute.xlu0 %5281
    %5283 = vrot.lane.b32.xlu0 %v4418, 104
    %v5284 = vpop.permute.xlu0 %5283
    %5285 = vrot.lane.b32.xlu0 %v4415, 72
    %v5286 = vpop.permute.xlu0 %5285
    %5287 = vrot.lane.b32.xlu0 %v4418, 72
    %v5288 = vpop.permute.xlu0 %5287
    %v5289 = vsel %vm216, %v5282, 0
    %v5291 = vsel %vm216, %v5284, 0
    %v5293 = vsel %vm216, %v5286, 0
    %v5295 = vsel %vm216, %v5288, 0
    %5297 = vmatprep.subr.mxu0 0.0
    %5298 = vmatpush1.xpose.msra.mxu0 0.0
    %5299 = vmatprep.subr.mxu0 0.0
    %5300 = vmatpush1.xpose.msra.mxu0 0.0
    %5301 = vmatprep.subr.mxu0 0.0
    %5302 = vmatpush1.xpose.msra.mxu0 0.0
    %5303 = vmatprep.subr.mxu0 0.0
    %5304 = vmatpush1.xpose.msra.mxu0 0.0
    %5305 = vmatprep.subr.mxu0 0.0
    %5306 = vmatpush1.xpose.msra.mxu0 0.0
    %5307 = vmatprep.subr.mxu0 0.0
    %5308 = vmatpush1.xpose.msra.mxu0 0.0
    %5309 = vmatprep.subr.mxu0 0.0
    %5310 = vmatpush1.xpose.msra.mxu0 0.0
    %5311 = vmatprep.subr.mxu0 0.0
    %5312 = vmatpush1.xpose.msra.mxu0 0.0
    %5313 = vmatprep.subr.mxu0 0.0
    %5314 = vmatpush1.xpose.msra.mxu0 0.0
    %5315 = vmatprep.subr.mxu0 0.0
    %5316 = vmatpush1.xpose.msra.mxu0 0.0
    %5317 = vmatprep.subr.mxu0 0.0
    %5318 = vmatpush1.xpose.msra.mxu0 0.0
    %5319 = vmatprep.subr.mxu0 0.0
    %5320 = vmatpush1.xpose.msra.mxu0 0.0
    %5321 = vmatprep.subr.mxu0 0.0
    %5322 = vmatpush1.xpose.msra.mxu0 0.0
    %5323 = vmatprep.subr.mxu0 0.0
    %5324 = vmatpush1.xpose.msra.mxu0 0.0
    %5325 = vmatprep.subr.mxu0 0.0
    %5326 = vmatpush1.xpose.msra.mxu0 %v5295
    %5327 = vmatprep.subr.mxu0 0.0
    %5328 = vmatpush1.xpose.msra.mxu0 %v5293
    %5329 = vmatprep.subr.mxu0 0.0
    %5330 = vmatpush2.xpose.msra.mxu0 0.0
    %5331 = vmatprep.subr.mxu0 0.0
    %5332 = vmatpush2.xpose.msra.mxu0 0.0
    %5333 = vmatprep.subr.mxu0 0.0
    %5334 = vmatpush2.xpose.msra.mxu0 0.0
    %5335 = vmatprep.subr.mxu0 0.0
    %5336 = vmatpush2.xpose.msra.mxu0 0.0
    %5337 = vmatprep.subr.mxu0 0.0
    %5338 = vmatpush2.xpose.msra.mxu0 0.0
    %5339 = vmatprep.subr.mxu0 0.0
    %5340 = vmatpush2.xpose.msra.mxu0 0.0
    %5341 = vmatprep.subr.mxu0 0.0
    %5342 = vmatpush2.xpose.msra.mxu0 0.0
    %5343 = vmatprep.subr.mxu0 0.0
    %5344 = vmatpush2.xpose.msra.mxu0 0.0
    %5345 = vmatprep.subr.mxu0 0.0
    %5346 = vmatpush2.xpose.msra.mxu0 0.0
    %5347 = vmatprep.subr.mxu0 0.0
    %5348 = vmatpush2.xpose.msra.mxu0 0.0
    %5349 = vmatprep.subr.mxu0 0.0
    %5350 = vmatpush2.xpose.msra.mxu0 0.0
    %5351 = vmatprep.subr.mxu0 0.0
    %5352 = vmatpush2.xpose.msra.mxu0 0.0
    %5353 = vmatprep.subr.mxu0 0.0
    %5354 = vmatpush2.xpose.msra.mxu0 0.0
    %5355 = vmatprep.subr.mxu0 0.0
    %5356 = vmatpush2.xpose.msra.mxu0 0.0
    %5357 = vmatprep.subr.mxu0 0.0
    %5358 = vmatpush2.xpose.msra.mxu0 0.0
    %5359 = vmatprep.subr.mxu0 0.0
    %5360 = vmatpush2.xpose.msra.mxu0 0.0
    %5361 = vmatprep.mubr.f32.mxu0 0.0
    %5362 = vmatmul.mubr.f32.gmra.mxu0 %v5289
    %v5363 = vpop.f32.mrf.mxu0
    %v5364 = vadd.f32 0.0, %v5363
    %v5365 = vpop.f32.mrf.mxu0
    %5366 = vmatprep.mubr.f32.mxu0 0.0
    %5367 = vmatmul.mubr.f32.gmra.mxu0 %v5291
    %v5368 = vpop.f32.mrf.mxu0
    %v5369 = vadd.f32 0.0, %v5368
    %v5370 = vpop.f32.mrf.mxu0
    %5371 = vdwg.mxu0
    %5372 = vrot.lane.b32.xlu0 %v4510, 104
    %v5373 = vpop.permute.xlu0 %5372
    %5374 = vrot.lane.b32.xlu0 %v4511, 104
    %v5375 = vpop.permute.xlu0 %5374
    %v5378 = vsel %vm216, %v5373, 0.0
    %5379 = vadd.xlane.f32.xlu0 %v5378
    %v5380 = vpop.xlane.xlu0 %5379
    %v5381 = vsel %vm216, %v5375, 0.0
    %5382 = vadd.xlane.f32.xlu0 %v5381
    %v5383 = vpop.xlane.xlu0 %5382
    %5384 = vrot.lane.b32.xlu0 %v4510, 72
    %v5385 = vpop.permute.xlu0 %5384
    %5386 = vrot.lane.b32.xlu0 %v4511, 72
    %v5387 = vpop.permute.xlu0 %5386
    %v5390 = vsel %vm216, %v5385, 0.0
    %5391 = vadd.xlane.f32.xlu0 %v5390
    %v5392 = vpop.xlane.xlu0 %5391
    %v5393 = vsel %vm216, %v5387, 0.0
    %5394 = vadd.xlane.f32.xlu0 %v5393
    %v5395 = vpop.xlane.xlu0 %5394
    %5396 = vxpose.xlu0.b32.start [1/16] %v5392, 128
    %5397 = vxpose.xlu0.b32.cont [2/16] %v5395, 128
    %5398 = vxpose.xlu0.b32.cont [3/16] 0.0, 128
    %5399 = vxpose.xlu0.b32.cont [4/16] 0.0, 128
    %5400 = vxpose.xlu0.b32.cont [5/16] 0.0, 128
    %5401 = vxpose.xlu0.b32.cont [6/16] 0.0, 128
    %5402 = vxpose.xlu0.b32.cont [7/16] 0.0, 128
    %5403 = vxpose.xlu0.b32.cont [8/16] 0.0, 128
    %5404 = vxpose.xlu0.b32.cont [9/16] 0.0, 128
    %5405 = vxpose.xlu0.b32.cont [10/16] 0.0, 128
    %5406 = vxpose.xlu0.b32.cont [11/16] 0.0, 128
    %5407 = vxpose.xlu0.b32.cont [12/16] 0.0, 128
    %5408 = vxpose.xlu0.b32.cont [13/16] 0.0, 128
    %5409 = vxpose.xlu0.b32.cont [14/16] 0.0, 128
    %5410 = vxpose.xlu0.b32.cont [15/16] 0.0, 128
    %5411 = vxpose.xlu0.b32.end [16/16] 0.0, 128
    %v5412 = vpop.trf.xlu0
    %v5413 = vpop.trf.xlu0
    %v5414 = vpop.trf.xlu0
    %v5415 = vpop.trf.xlu0
    %v5416 = vpop.trf.xlu0
    %v5417 = vpop.trf.xlu0
    %v5418 = vpop.trf.xlu0
    %v5419 = vpop.trf.xlu0
    %v5420 = vpop.trf.xlu0
    %v5421 = vpop.trf.xlu0
    %v5422 = vpop.trf.xlu0
    %v5423 = vpop.trf.xlu0
    %v5424 = vpop.trf.xlu0
    %v5425 = vpop.trf.xlu0
    %v5426 = vpop.trf.xlu0
    %v5427 = vpop.trf.xlu0
    %v5428 = vlaneseq
    %v5429 = vshrl.u32 %v5428, 7
    %v5430 = vsub.s32 0, %v5429
    %v5431 = vrot.slane %v5412, %v5430
    %v5432 = vadd.f32 %v5380, %v5431
    %v5433 = vadd.f32 %v5383, %v5431
    %v5434 = vmul.f32 %v5364, 2.0
    %v5435 = vmul.f32 %v5369, 2.0
    %v5436 = vsub.f32 %v5432, %v5434
    %v5437 = vsub.f32 %v5433, %v5435
    %v5438 = vmax.f32 %v5436, 0.0
    %v5439 = vmax.f32 %v5437, 0.0
    %v5440 = vrsqrt.pop %v5438
    %v5441 = vmul.f32 %v5438, %v5440
    %vm5442 = vcmp.eq.f32.partialorder %v5438, inf
    %v5443 = vsel %vm5442, %v5438, %v5441
    %vm5444 = vcmp.eq.f32.partialorder %v5438, 0.0
    %v5445 = vand.u32 %v5438, 2147483648
    %v5446 = vsel %vm5444, %v5445, %v5443
    %v5447 = vrsqrt.pop %v5439
    %v5448 = vmul.f32 %v5439, %v5447
    %vm5449 = vcmp.eq.f32.partialorder %v5439, inf
    %v5450 = vsel %vm5449, %v5439, %v5448
    %vm5451 = vcmp.eq.f32.partialorder %v5439, 0.0
    %v5452 = vand.u32 %v5439, 2147483648
    %v5453 = vsel %vm5451, %v5452, %v5450
    %v5454 = vsub.f32 0.0, %v5446
    %v5455 = vsub.f32 0.0, %v5453
    %v5456 = vmul.f32 %v5454, 0.35355338
    %v5457 = vmul.f32 %v5455, 0.35355338
    %v5458 = vsel %vm87, %v5456, -inf
    %v5459 = vsel %vm88, %v5457, -inf
    %v5460 = vsel %vm386, %v5458, -inf
    %5461 = vmax.xlane.f32.xlu0 %v5460
    %v5462 = vpop.xlane.xlu0 %5461
    %v5463 = vsel %vm386, %v5459, -inf
    %5464 = vmax.xlane.f32.xlu0 %v5463
    %v5465 = vpop.xlane.xlu0 %5464
    %v5466 = vsub.f32 %v5458, %v5462
    %v5467 = vsub.f32 %v5459, %v5465
    %v5468 = vmul.f32 %v5466, 1.442695
    %v5469 = vpow.pop %v5468
    %v5470 = vmul.f32 %v5467, 1.442695
    %v5471 = vpow.pop %v5470
    %v5472 = vsel %vm386, %v5469, 0.0
    %5473 = vadd.xlane.f32.xlu0 %v5472
    %v5474 = vpop.xlane.xlu0 %5473
    %v5475 = vsel %vm386, %v5471, 0.0
    %5476 = vadd.xlane.f32.xlu0 %v5475
    %v5477 = vpop.xlane.xlu0 %5476
    %v5478 = vrcp.pop %v5474
    %v5479 = vrcp.pop %v5477
    %v5480 = vmul.f32 %v5469, %v5478
    %v5481 = vmul.f32 %v5471, %v5479
    %5482 = vrot.lane.b32.xlu0 %v4415, 40
    %v5483 = vpop.permute.xlu0 %5482
    %5484 = vrot.lane.b32.xlu0 %v4418, 40
    %v5485 = vpop.permute.xlu0 %5484
    %v5489 = vsel %vm386, %v5480, 0
    %v5492 = vsel %vm386, %v5481, 0
    %5494 = vmatprep.subr.mxu0 0.0
    %5495 = vmatpush1.msra.mxu0 0.0
    %5496 = vmatprep.subr.mxu0 0.0
    %5497 = vmatpush1.msra.mxu0 0.0
    %5498 = vmatprep.subr.mxu0 0.0
    %5499 = vmatpush1.msra.mxu0 0.0
    %5500 = vmatprep.subr.mxu0 0.0
    %5501 = vmatpush1.msra.mxu0 0.0
    %5502 = vmatprep.subr.mxu0 0.0
    %5503 = vmatpush1.msra.mxu0 0.0
    %5504 = vmatprep.subr.mxu0 0.0
    %5505 = vmatpush1.msra.mxu0 0.0
    %5506 = vmatprep.subr.mxu0 0.0
    %5507 = vmatpush1.msra.mxu0 0.0
    %5508 = vmatprep.subr.mxu0 0.0
    %5509 = vmatpush1.msra.mxu0 0.0
    %5510 = vmatprep.subr.mxu0 0.0
    %5511 = vmatpush1.msra.mxu0 0.0
    %5512 = vmatprep.subr.mxu0 0.0
    %5513 = vmatpush1.msra.mxu0 0.0
    %5514 = vmatprep.subr.mxu0 0.0
    %5515 = vmatpush1.msra.mxu0 0.0
    %5516 = vmatprep.subr.mxu0 0.0
    %5517 = vmatpush1.msra.mxu0 0.0
    %5518 = vmatprep.subr.mxu0 0.0
    %5519 = vmatpush1.msra.mxu0 0.0
    %5520 = vmatprep.subr.mxu0 0.0
    %5521 = vmatpush1.msra.mxu0 0.0
    %5522 = vmatprep.subr.mxu0 0.0
    %5523 = vmatpush1.msra.mxu0 %v5485
    %5524 = vmatprep.subr.mxu0 0.0
    %5525 = vmatpush1.msra.mxu0 %v5483
    %5526 = vmatprep.subr.mxu0 0.0
    %5527 = vmatpush2.msra.mxu0 0.0
    %5528 = vmatprep.subr.mxu0 0.0
    %5529 = vmatpush2.msra.mxu0 0.0
    %5530 = vmatprep.subr.mxu0 0.0
    %5531 = vmatpush2.msra.mxu0 0.0
    %5532 = vmatprep.subr.mxu0 0.0
    %5533 = vmatpush2.msra.mxu0 0.0
    %5534 = vmatprep.subr.mxu0 0.0
    %5535 = vmatpush2.msra.mxu0 0.0
    %5536 = vmatprep.subr.mxu0 0.0
    %5537 = vmatpush2.msra.mxu0 0.0
    %5538 = vmatprep.subr.mxu0 0.0
    %5539 = vmatpush2.msra.mxu0 0.0
    %5540 = vmatprep.subr.mxu0 0.0
    %5541 = vmatpush2.msra.mxu0 0.0
    %5542 = vmatprep.subr.mxu0 0.0
    %5543 = vmatpush2.msra.mxu0 0.0
    %5544 = vmatprep.subr.mxu0 0.0
    %5545 = vmatpush2.msra.mxu0 0.0
    %5546 = vmatprep.subr.mxu0 0.0
    %5547 = vmatpush2.msra.mxu0 0.0
    %5548 = vmatprep.subr.mxu0 0.0
    %5549 = vmatpush2.msra.mxu0 0.0
    %5550 = vmatprep.subr.mxu0 0.0
    %5551 = vmatpush2.msra.mxu0 0.0
    %5552 = vmatprep.subr.mxu0 0.0
    %5553 = vmatpush2.msra.mxu0 0.0
    %5554 = vmatprep.subr.mxu0 0.0
    %5555 = vmatpush2.msra.mxu0 0.0
    %5556 = vmatprep.subr.mxu0 0.0
    %5557 = vmatpush2.msra.mxu0 0.0
    %5558 = vmatprep.mubr.f32.mxu0 0.0
    %5559 = vmatmul.mubr.f32.gmra.mxu0 %v5489
    %v5560 = vpop.f32.mrf.mxu0
    %v5561 = vadd.f32 0.0, %v5560
    %v5562 = vpop.f32.mrf.mxu0
    %5563 = vmatprep.mubr.f32.mxu0 0.0
    %5564 = vmatmul.mubr.f32.gmra.mxu0 %v5492
    %v5565 = vpop.f32.mrf.mxu0
    %v5566 = vadd.f32 0.0, %v5565
    %v5567 = vpop.f32.mrf.mxu0
    %5568 = vdwg.mxu0
    %5571 = vrot.lane.b32.xlu0 %v4985, 8
    %v5572 = vpop.permute.xlu0 %5571
    %5573 = vrot.lane.b32.xlu0 %v4990, 8
    %v5574 = vpop.permute.xlu0 %5573
    %5579 = vrot.lane.b32.xlu0 %v5273, 16
    %v5580 = vpop.permute.xlu0 %5579
    %5581 = vrot.lane.b32.xlu0 %v5278, 16
    %v5582 = vpop.permute.xlu0 %5581
    %5587 = vrot.lane.b32.xlu0 %v5561, 24
    %v5588 = vpop.permute.xlu0 %5587
    %5589 = vrot.lane.b32.xlu0 %v5566, 24
    %v5590 = vpop.permute.xlu0 %5589
    %v5593 = vsel %vm216, %v4697, %v5572
    %v5594 = vsel %vm216, %v4702, %v5574
    %v5595 = vsel %vm386, %v5593, %v5580
    %v5596 = vsel %vm386, %v5594, %v5582
    %v5597 = vsel %vm1388, %v5595, %v5588
    %v5598 = vsel %vm1388, %v5596, %v5590
    %v5599 = vpack.c.bf16 %v5598, %v5597
    %s5600 = scalar_lea.vmem %s3, 16
    %v5601 = vld [vmem:[%s5600] sm:$0xf]
    %v5602 = vld [vmem:[%s5600 + $0x4] sm:$0xf]
    %v5603 = vld [vmem:[%s5600 + $0x8] sm:$0xf]
    %v5604 = vld [vmem:[%s5600 + $0xc] sm:$0xf]
    %s5605 = scalar_lea.vmem %s4, 1
    %v5606 = vld [vmem:[%s5605] sm:$0x1]
    %v5608 = vlaneseq
    %v5609 = vshrl.u32 %v5608, 7
    %v5610 = vsub.s32 0, %v5609
    %v5611 = vrot.slane %v5606, %v5610
    %v5617 = vunpack.c.l.b16 %v5601
    %v5618 = vunpack.c.l.b16 %v5602
    %v5619 = vunpack.c.l.b16 %v5603
    %v5620 = vunpack.c.l.b16 %v5604
    %v5621 = vpack.c.b16 %v5618, %v5617
    %v5622 = vpack.c.b16 %v5620, %v5619
    %v5626 = vsel %vm165, %v5599, 0
    %5628 = vmatprep.subr.bf16.mxu0 0
    %5629 = vmatpush1.bf16.msra.mxu0 0
    %5630 = vmatprep.subr.bf16.mxu0 0
    %5631 = vmatpush1.bf16.msra.mxu0 0
    %5632 = vmatprep.subr.bf16.mxu0 0
    %5633 = vmatpush1.bf16.msra.mxu0 0
    %5634 = vmatprep.subr.bf16.mxu0 0
    %5635 = vmatpush1.bf16.msra.mxu0 0
    %5636 = vmatprep.subr.bf16.mxu0 0
    %5637 = vmatpush1.bf16.msra.mxu0 0
    %5638 = vmatprep.subr.bf16.mxu0 0
    %5639 = vmatpush1.bf16.msra.mxu0 0
    %5640 = vmatprep.subr.bf16.mxu0 0
    %5641 = vmatpush1.bf16.msra.mxu0 %v5622
    %5642 = vmatprep.subr.bf16.mxu0 0
    %5643 = vmatpush1.bf16.msra.mxu0 %v5621
    %5644 = vmatprep.subr.bf16.mxu0 0
    %5645 = vmatpush2.bf16.msra.mxu0 0
    %5646 = vmatprep.subr.bf16.mxu0 0
    %5647 = vmatpush2.bf16.msra.mxu0 0
    %5648 = vmatprep.subr.bf16.mxu0 0
    %5649 = vmatpush2.bf16.msra.mxu0 0
    %5650 = vmatprep.subr.bf16.mxu0 0
    %5651 = vmatpush2.bf16.msra.mxu0 0
    %5652 = vmatprep.subr.bf16.mxu0 0
    %5653 = vmatpush2.bf16.msra.mxu0 0
    %5654 = vmatprep.subr.bf16.mxu0 0
    %5655 = vmatpush2.bf16.msra.mxu0 0
    %5656 = vmatprep.subr.bf16.mxu0 0
    %5657 = vmatpush2.bf16.msra.mxu0 0
    %5658 = vmatprep.subr.bf16.mxu0 0
    %5659 = vmatpush2.bf16.msra.mxu0 0
    %5660 = vmatprep.mubr.bf16.mxu0 0
    %5661 = vmatmul.mubr.bf16.gmra.mxu0 %v5626
    %v5662 = vpop.f32.mrf.mxu0
    %v5663 = vadd.f32 %v5611, %v5662
    %v5664 = vpop.f32.mrf.mxu0
    %v5665 = vpop.f32.mrf.mxu0
    %v5666 = vadd.f32 %v5611, %v5665
    %v5667 = vpop.f32.mrf.mxu0
    %5668 = vdwg.mxu0
    %v5671 = vcombine.high %v5663, %v5663
    %v5673 = vunpack.c.l.s4 1983009808
    %v5674 = vunpack.c.0.s8 %v5673
    %v5675 = vlaneseq
    %v5676 = vshrl.u32 %v5675, 7
    %v5677 = vsub.s32 %v5674, %v5676
    %v5678 = vrot.slane %v5663, %v5677
    %v5680 = vunpack.c.l.s4 1983009808
    %v5681 = vunpack.c.0.s8 %v5680
    %v5682 = vlaneseq
    %v5683 = vshrl.u32 %v5682, 7
    %v5684 = vsub.s32 %v5681, %v5683
    %v5685 = vrot.slane %v5671, %v5684
    %v5686 = vcombine.high %v5678, %v5678
    %v5687 = vcombine.high %v5685, %v5685
    %v5688 = vcombine.high %v5666, %v5666
    %v5690 = vunpack.c.l.s4 1983009808
    %v5691 = vunpack.c.0.s8 %v5690
    %v5692 = vlaneseq
    %v5693 = vshrl.u32 %v5692, 7
    %v5694 = vsub.s32 %v5691, %v5693
    %v5695 = vrot.slane %v5666, %v5694
    %v5697 = vunpack.c.l.s4 1983009808
    %v5698 = vunpack.c.0.s8 %v5697
    %v5699 = vlaneseq
    %v5700 = vshrl.u32 %v5699, 7
    %v5701 = vsub.s32 %v5698, %v5700
    %v5702 = vrot.slane %v5688, %v5701
    %v5703 = vcombine.high %v5695, %v5695
    %v5704 = vcombine.high %v5702, %v5702
    %v5713 = vadd.f32 %v4299, %v5678
    %v5714 = vadd.f32 %v4300, %v5686
    %v5715 = vadd.f32 %v4301, %v5685
    %v5716 = vadd.f32 %v4302, %v5687
    %v5717 = vadd.f32 %v4303, %v5695
    %v5718 = vadd.f32 %v4304, %v5703
    %v5719 = vadd.f32 %v4305, %v5702
    %v5720 = vadd.f32 %v4306, %v5704
    %v5729 = vcombine.low %v5713, %v5714
    %v5730 = vcombine.low %v5715, %v5716
    %v5732 = vunpack.c.l.s4 1983009808
    %v5733 = vunpack.c.0.s8 %v5732
    %v5734 = vlaneseq
    %v5735 = vshrl.u32 %v5734, 7
    %v5736 = vsub.s32 %v5733, %v5735
    %v5737 = vrot.slane %v5729, %v5736
    %v5739 = vunpack.c.l.s4 1983009808
    %v5740 = vunpack.c.0.s8 %v5739
    %v5741 = vlaneseq
    %v5742 = vshrl.u32 %v5741, 7
    %v5743 = vsub.s32 %v5740, %v5742
    %v5744 = vrot.slane %v5730, %v5743
    %v5745 = vcombine.low %v5737, %v5744
    %v5746 = vcombine.low %v5717, %v5718
    %v5747 = vcombine.low %v5719, %v5720
    %v5749 = vunpack.c.l.s4 1983009808
    %v5750 = vunpack.c.0.s8 %v5749
    %v5751 = vlaneseq
    %v5752 = vshrl.u32 %v5751, 7
    %v5753 = vsub.s32 %v5750, %v5752
    %v5754 = vrot.slane %v5746, %v5753
    %v5756 = vunpack.c.l.s4 1983009808
    %v5757 = vunpack.c.0.s8 %v5756
    %v5758 = vlaneseq
    %v5759 = vshrl.u32 %v5758, 7
    %v5760 = vsub.s32 %v5757, %v5759
    %v5761 = vrot.slane %v5747, %v5760
    %v5762 = vcombine.low %v5754, %v5761
    %v5765 = vsel %vm165, %v5745, 0.0
    %5766 = vadd.xlane.f32.xlu0 %v5765
    %v5767 = vpop.xlane.xlu0 %5766
    %v5768 = vsel %vm165, %v5762, 0.0
    %5769 = vadd.xlane.f32.xlu0 %v5768
    %v5770 = vpop.xlane.xlu0 %5769
    %v5771 = vmul.f32 %v5767, %v1561
    %v5772 = vmul.f32 %v5770, %v1561
    %v5776 = vunpack.c.l.s4 269488144
    %v5777 = vunpack.c.0.s8 %v5776
    %v5778 = vlaneseq
    %v5779 = vshrl.u32 %v5778, 7
    %v5780 = vsub.s32 %v5777, %v5779
    %v5781 = vrot.slane %v5771, %v5780
    %v5783 = vunpack.c.l.s4 842150450
    %v5784 = vunpack.c.0.s8 %v5783
    %v5785 = vlaneseq
    %v5786 = vshrl.u32 %v5785, 7
    %v5787 = vsub.s32 %v5784, %v5786
    %v5788 = vrot.slane %v5771, %v5787
    %v5790 = vunpack.c.l.s4 1414812756
    %v5791 = vunpack.c.0.s8 %v5790
    %v5792 = vlaneseq
    %v5793 = vshrl.u32 %v5792, 7
    %v5794 = vsub.s32 %v5791, %v5793
    %v5795 = vrot.slane %v5771, %v5794
    %v5797 = vunpack.c.l.s4 1987475062
    %v5798 = vunpack.c.0.s8 %v5797
    %v5799 = vlaneseq
    %v5800 = vshrl.u32 %v5799, 7
    %v5801 = vsub.s32 %v5798, %v5800
    %v5802 = vrot.slane %v5771, %v5801
    %v5804 = vunpack.c.l.s4 269488144
    %v5805 = vunpack.c.0.s8 %v5804
    %v5806 = vlaneseq
    %v5807 = vshrl.u32 %v5806, 7
    %v5808 = vsub.s32 %v5805, %v5807
    %v5809 = vrot.slane %v5772, %v5808
    %v5811 = vunpack.c.l.s4 842150450
    %v5812 = vunpack.c.0.s8 %v5811
    %v5813 = vlaneseq
    %v5814 = vshrl.u32 %v5813, 7
    %v5815 = vsub.s32 %v5812, %v5814
    %v5816 = vrot.slane %v5772, %v5815
    %v5818 = vunpack.c.l.s4 1414812756
    %v5819 = vunpack.c.0.s8 %v5818
    %v5820 = vlaneseq
    %v5821 = vshrl.u32 %v5820, 7
    %v5822 = vsub.s32 %v5819, %v5821
    %v5823 = vrot.slane %v5772, %v5822
    %v5825 = vunpack.c.l.s4 1987475062
    %v5826 = vunpack.c.0.s8 %v5825
    %v5827 = vlaneseq
    %v5828 = vshrl.u32 %v5827, 7
    %v5829 = vsub.s32 %v5826, %v5828
    %v5830 = vrot.slane %v5772, %v5829
    %v5839 = vsub.f32 %v5713, %v5781
    %v5840 = vsub.f32 %v5714, %v5788
    %v5841 = vsub.f32 %v5715, %v5795
    %v5842 = vsub.f32 %v5716, %v5802
    %v5843 = vsub.f32 %v5717, %v5809
    %v5844 = vsub.f32 %v5718, %v5816
    %v5845 = vsub.f32 %v5719, %v5823
    %v5846 = vsub.f32 %v5720, %v5830
    %v5847 = vmul.f32 %v5839, %v5839
    %v5848 = vmul.f32 %v5840, %v5840
    %v5849 = vmul.f32 %v5841, %v5841
    %v5850 = vmul.f32 %v5842, %v5842
    %v5851 = vmul.f32 %v5843, %v5843
    %v5852 = vmul.f32 %v5844, %v5844
    %v5853 = vmul.f32 %v5845, %v5845
    %v5854 = vmul.f32 %v5846, %v5846
    %v5863 = vcombine.low %v5847, %v5848
    %v5864 = vcombine.low %v5849, %v5850
    %v5866 = vunpack.c.l.s4 1983009808
    %v5867 = vunpack.c.0.s8 %v5866
    %v5868 = vlaneseq
    %v5869 = vshrl.u32 %v5868, 7
    %v5870 = vsub.s32 %v5867, %v5869
    %v5871 = vrot.slane %v5863, %v5870
    %v5873 = vunpack.c.l.s4 1983009808
    %v5874 = vunpack.c.0.s8 %v5873
    %v5875 = vlaneseq
    %v5876 = vshrl.u32 %v5875, 7
    %v5877 = vsub.s32 %v5874, %v5876
    %v5878 = vrot.slane %v5864, %v5877
    %v5879 = vcombine.low %v5871, %v5878
    %v5880 = vcombine.low %v5851, %v5852
    %v5881 = vcombine.low %v5853, %v5854
    %v5883 = vunpack.c.l.s4 1983009808
    %v5884 = vunpack.c.0.s8 %v5883
    %v5885 = vlaneseq
    %v5886 = vshrl.u32 %v5885, 7
    %v5887 = vsub.s32 %v5884, %v5886
    %v5888 = vrot.slane %v5880, %v5887
    %v5890 = vunpack.c.l.s4 1983009808
    %v5891 = vunpack.c.0.s8 %v5890
    %v5892 = vlaneseq
    %v5893 = vshrl.u32 %v5892, 7
    %v5894 = vsub.s32 %v5891, %v5893
    %v5895 = vrot.slane %v5881, %v5894
    %v5896 = vcombine.low %v5888, %v5895
    %v5899 = vsel %vm165, %v5879, 0.0
    %5900 = vadd.xlane.f32.xlu0 %v5899
    %v5901 = vpop.xlane.xlu0 %5900
    %v5902 = vsel %vm165, %v5896, 0.0
    %5903 = vadd.xlane.f32.xlu0 %v5902
    %v5904 = vpop.xlane.xlu0 %5903
    %v5905 = vmul.f32 %v5901, %v1561
    %v5906 = vmul.f32 %v5904, %v1561
    %v5907 = vadd.f32 %v5905, 1e-05
    %v5908 = vadd.f32 %v5906, 1e-05
    %v5909 = vrsqrt.pop %v5907
    %v5910 = vrsqrt.pop %v5908
    %v5914 = vunpack.c.l.s4 269488144
    %v5915 = vunpack.c.0.s8 %v5914
    %v5916 = vlaneseq
    %v5917 = vshrl.u32 %v5916, 7
    %v5918 = vsub.s32 %v5915, %v5917
    %v5919 = vrot.slane %v5909, %v5918
    %v5921 = vunpack.c.l.s4 842150450
    %v5922 = vunpack.c.0.s8 %v5921
    %v5923 = vlaneseq
    %v5924 = vshrl.u32 %v5923, 7
    %v5925 = vsub.s32 %v5922, %v5924
    %v5926 = vrot.slane %v5909, %v5925
    %v5928 = vunpack.c.l.s4 1414812756
    %v5929 = vunpack.c.0.s8 %v5928
    %v5930 = vlaneseq
    %v5931 = vshrl.u32 %v5930, 7
    %v5932 = vsub.s32 %v5929, %v5931
    %v5933 = vrot.slane %v5909, %v5932
    %v5935 = vunpack.c.l.s4 1987475062
    %v5936 = vunpack.c.0.s8 %v5935
    %v5937 = vlaneseq
    %v5938 = vshrl.u32 %v5937, 7
    %v5939 = vsub.s32 %v5936, %v5938
    %v5940 = vrot.slane %v5909, %v5939
    %v5942 = vunpack.c.l.s4 269488144
    %v5943 = vunpack.c.0.s8 %v5942
    %v5944 = vlaneseq
    %v5945 = vshrl.u32 %v5944, 7
    %v5946 = vsub.s32 %v5943, %v5945
    %v5947 = vrot.slane %v5910, %v5946
    %v5949 = vunpack.c.l.s4 842150450
    %v5950 = vunpack.c.0.s8 %v5949
    %v5951 = vlaneseq
    %v5952 = vshrl.u32 %v5951, 7
    %v5953 = vsub.s32 %v5950, %v5952
    %v5954 = vrot.slane %v5910, %v5953
    %v5956 = vunpack.c.l.s4 1414812756
    %v5957 = vunpack.c.0.s8 %v5956
    %v5958 = vlaneseq
    %v5959 = vshrl.u32 %v5958, 7
    %v5960 = vsub.s32 %v5957, %v5959
    %v5961 = vrot.slane %v5910, %v5960
    %v5963 = vunpack.c.l.s4 1987475062
    %v5964 = vunpack.c.0.s8 %v5963
    %v5965 = vlaneseq
    %v5966 = vshrl.u32 %v5965, 7
    %v5967 = vsub.s32 %v5964, %v5966
    %v5968 = vrot.slane %v5910, %v5967
    %v5977 = vmul.f32 %v5839, %v5919
    %v5978 = vmul.f32 %v5840, %v5926
    %v5979 = vmul.f32 %v5841, %v5933
    %v5980 = vmul.f32 %v5842, %v5940
    %v5981 = vmul.f32 %v5843, %v5947
    %v5982 = vmul.f32 %v5844, %v5954
    %v5983 = vmul.f32 %v5845, %v5961
    %v5984 = vmul.f32 %v5846, %v5968
    %s5985 = scalar_lea.vmem %s5, 1
    %v5986 = vld [vmem:[%s5985] sm:$0x1]
    %v5988 = vlaneseq
    %v5989 = vshrl.u32 %v5988, 7
    %v5990 = vsub.s32 0, %v5989
    %v5991 = vrot.slane %v5986, %v5990
    %v5992 = vcombine.high %v5991, %v5991
    %v5994 = vunpack.c.l.s4 1983009808
    %v5995 = vunpack.c.0.s8 %v5994
    %v5996 = vlaneseq
    %v5997 = vshrl.u32 %v5996, 7
    %v5998 = vsub.s32 %v5995, %v5997
    %v5999 = vrot.slane %v5991, %v5998
    %v6001 = vunpack.c.l.s4 1983009808
    %v6002 = vunpack.c.0.s8 %v6001
    %v6003 = vlaneseq
    %v6004 = vshrl.u32 %v6003, 7
    %v6005 = vsub.s32 %v6002, %v6004
    %v6006 = vrot.slane %v5992, %v6005
    %v6007 = vcombine.high %v5999, %v5999
    %v6008 = vcombine.high %v6006, %v6006
    %v6013 = vmul.f32 %v5977, %v5999
    %v6014 = vmul.f32 %v5978, %v6007
    %v6015 = vmul.f32 %v5979, %v6006
    %v6016 = vmul.f32 %v5980, %v6008
    %v6017 = vmul.f32 %v5981, %v5999
    %v6018 = vmul.f32 %v5982, %v6007
    %v6019 = vmul.f32 %v5983, %v6006
    %v6020 = vmul.f32 %v5984, %v6008
    %s6021 = scalar_lea.vmem %s6, 1
    %v6022 = vld [vmem:[%s6021] sm:$0x1]
    %v6024 = vlaneseq
    %v6025 = vshrl.u32 %v6024, 7
    %v6026 = vsub.s32 0, %v6025
    %v6027 = vrot.slane %v6022, %v6026
    %v6028 = vcombine.high %v6027, %v6027
    %v6030 = vunpack.c.l.s4 1983009808
    %v6031 = vunpack.c.0.s8 %v6030
    %v6032 = vlaneseq
    %v6033 = vshrl.u32 %v6032, 7
    %v6034 = vsub.s32 %v6031, %v6033
    %v6035 = vrot.slane %v6027, %v6034
    %v6037 = vunpack.c.l.s4 1983009808
    %v6038 = vunpack.c.0.s8 %v6037
    %v6039 = vlaneseq
    %v6040 = vshrl.u32 %v6039, 7
    %v6041 = vsub.s32 %v6038, %v6040
    %v6042 = vrot.slane %v6028, %v6041
    %v6043 = vcombine.high %v6035, %v6035
    %v6044 = vcombine.high %v6042, %v6042
    %v6049 = vadd.f32 %v6013, %v6035
    %v6050 = vadd.f32 %v6014, %v6043
    %v6051 = vadd.f32 %v6015, %v6042
    %v6052 = vadd.f32 %v6016, %v6044
    %v6053 = vadd.f32 %v6017, %v6035
    %v6054 = vadd.f32 %v6018, %v6043
    %v6055 = vadd.f32 %v6019, %v6042
    %v6056 = vadd.f32 %v6020, %v6044
    %v6065 = vcombine.low %v6049, %v6050
    %v6066 = vcombine.low %v6051, %v6052
    %v6068 = vunpack.c.l.s4 1983009808
    %v6069 = vunpack.c.0.s8 %v6068
    %v6070 = vlaneseq
    %v6071 = vshrl.u32 %v6070, 7
    %v6072 = vsub.s32 %v6069, %v6071
    %v6073 = vrot.slane %v6065, %v6072
    %v6075 = vunpack.c.l.s4 1983009808
    %v6076 = vunpack.c.0.s8 %v6075
    %v6077 = vlaneseq
    %v6078 = vshrl.u32 %v6077, 7
    %v6079 = vsub.s32 %v6076, %v6078
    %v6080 = vrot.slane %v6066, %v6079
    %v6081 = vcombine.low %v6073, %v6080
    %v6082 = vcombine.low %v6053, %v6054
    %v6083 = vcombine.low %v6055, %v6056
    %v6085 = vunpack.c.l.s4 1983009808
    %v6086 = vunpack.c.0.s8 %v6085
    %v6087 = vlaneseq
    %v6088 = vshrl.u32 %v6087, 7
    %v6089 = vsub.s32 %v6086, %v6088
    %v6090 = vrot.slane %v6082, %v6089
    %v6092 = vunpack.c.l.s4 1983009808
    %v6093 = vunpack.c.0.s8 %v6092
    %v6094 = vlaneseq
    %v6095 = vshrl.u32 %v6094, 7
    %v6096 = vsub.s32 %v6093, %v6095
    %v6097 = vrot.slane %v6083, %v6096
    %v6098 = vcombine.low %v6090, %v6097
    %v6101 = vpack.c.bf16 %v6098, %v6081
    %s6102 = scalar_lea.vmem %s7, 256
    %v6103 = vld [vmem:[%s6102] sm:$0xff]
    %v6104 = vld [vmem:[%s6102 + $0x8] sm:$0xff]
    %v6105 = vld [vmem:[%s6102 + $0x10] sm:$0xff]
    %v6106 = vld [vmem:[%s6102 + $0x18] sm:$0xff]
    %v6107 = vld [vmem:[%s6102 + $0x20] sm:$0xff]
    %v6108 = vld [vmem:[%s6102 + $0x28] sm:$0xff]
    %v6109 = vld [vmem:[%s6102 + $0x30] sm:$0xff]
    %v6110 = vld [vmem:[%s6102 + $0x38] sm:$0xff]
    %v6111 = vld [vmem:[%s6102 + $0x40] sm:$0xff]
    %v6112 = vld [vmem:[%s6102 + $0x48] sm:$0xff]
    %v6113 = vld [vmem:[%s6102 + $0x50] sm:$0xff]
    %v6114 = vld [vmem:[%s6102 + $0x58] sm:$0xff]
    %v6115 = vld [vmem:[%s6102 + $0x60] sm:$0xff]
    %v6116 = vld [vmem:[%s6102 + $0x68] sm:$0xff]
    %v6117 = vld [vmem:[%s6102 + $0x70] sm:$0xff]
    %v6118 = vld [vmem:[%s6102 + $0x78] sm:$0xff]
    %v6119 = vld [vmem:[%s6102 + $0x80] sm:$0xff]
    %v6120 = vld [vmem:[%s6102 + $0x88] sm:$0xff]
    %v6121 = vld [vmem:[%s6102 + $0x90] sm:$0xff]
    %v6122 = vld [vmem:[%s6102 + $0x98] sm:$0xff]
    %v6123 = vld [vmem:[%s6102 + $0xa0] sm:$0xff]
    %v6124 = vld [vmem:[%s6102 + $0xa8] sm:$0xff]
    %v6125 = vld [vmem:[%s6102 + $0xb0] sm:$0xff]
    %v6126 = vld [vmem:[%s6102 + $0xb8] sm:$0xff]
    %v6127 = vld [vmem:[%s6102 + $0xc0] sm:$0xff]
    %v6128 = vld [vmem:[%s6102 + $0xc8] sm:$0xff]
    %v6129 = vld [vmem:[%s6102 + $0xd0] sm:$0xff]
    %v6130 = vld [vmem:[%s6102 + $0xd8] sm:$0xff]
    %v6131 = vld [vmem:[%s6102 + $0xe0] sm:$0xff]
    %v6132 = vld [vmem:[%s6102 + $0xe8] sm:$0xff]
    %v6133 = vld [vmem:[%s6102 + $0xf0] sm:$0xff]
    %v6134 = vld [vmem:[%s6102 + $0xf8] sm:$0xff]
    %s6135 = scalar_lea.vmem %s8, 16
    %v6136 = vld [vmem:[%s6135] sm:$0xff]
    %v6137 = vld [vmem:[%s6135 + $0x8] sm:$0xff]
    %v6140 = vlaneseq
    %v6141 = vshrl.u32 %v6140, 7
    %v6142 = vsub.s32 0, %v6141
    %v6143 = vrot.slane %v6136, %v6142
    %v6144 = vlaneseq
    %v6145 = vshrl.u32 %v6144, 7
    %v6146 = vsub.s32 1, %v6145
    %v6147 = vrot.slane %v6136, %v6146
    %v6148 = vlaneseq
    %v6149 = vshrl.u32 %v6148, 7
    %v6150 = vsub.s32 2, %v6149
    %v6151 = vrot.slane %v6136, %v6150
    %v6152 = vlaneseq
    %v6153 = vshrl.u32 %v6152, 7
    %v6154 = vsub.s32 3, %v6153
    %v6155 = vrot.slane %v6136, %v6154
    %v6156 = vlaneseq
    %v6157 = vshrl.u32 %v6156, 7
    %v6158 = vsub.s32 4, %v6157
    %v6159 = vrot.slane %v6136, %v6158
    %v6160 = vlaneseq
    %v6161 = vshrl.u32 %v6160, 7
    %v6162 = vsub.s32 5, %v6161
    %v6163 = vrot.slane %v6136, %v6162
    %v6164 = vlaneseq
    %v6165 = vshrl.u32 %v6164, 7
    %v6166 = vsub.s32 6, %v6165
    %v6167 = vrot.slane %v6136, %v6166
    %v6168 = vlaneseq
    %v6169 = vshrl.u32 %v6168, 7
    %v6170 = vsub.s32 7, %v6169
    %v6171 = vrot.slane %v6136, %v6170
    %v6172 = vlaneseq
    %v6173 = vshrl.u32 %v6172, 7
    %v6174 = vsub.s32 0, %v6173
    %v6175 = vrot.slane %v6137, %v6174
    %v6176 = vlaneseq
    %v6177 = vshrl.u32 %v6176, 7
    %v6178 = vsub.s32 1, %v6177
    %v6179 = vrot.slane %v6137, %v6178
    %v6180 = vlaneseq
    %v6181 = vshrl.u32 %v6180, 7
    %v6182 = vsub.s32 2, %v6181
    %v6183 = vrot.slane %v6137, %v6182
    %v6184 = vlaneseq
    %v6185 = vshrl.u32 %v6184, 7
    %v6186 = vsub.s32 3, %v6185
    %v6187 = vrot.slane %v6137, %v6186
    %v6188 = vlaneseq
    %v6189 = vshrl.u32 %v6188, 7
    %v6190 = vsub.s32 4, %v6189
    %v6191 = vrot.slane %v6137, %v6190
    %v6192 = vlaneseq
    %v6193 = vshrl.u32 %v6192, 7
    %v6194 = vsub.s32 5, %v6193
    %v6195 = vrot.slane %v6137, %v6194
    %v6196 = vlaneseq
    %v6197 = vshrl.u32 %v6196, 7
    %v6198 = vsub.s32 6, %v6197
    %v6199 = vrot.slane %v6137, %v6198
    %v6200 = vlaneseq
    %v6201 = vshrl.u32 %v6200, 7
    %v6202 = vsub.s32 7, %v6201
    %v6203 = vrot.slane %v6137, %v6202
    %v6252 = vunpack.c.l.b16 %v6103
    %v6253 = vunpack.c.h.b16 %v6103
    %v6254 = vunpack.c.l.b16 %v6104
    %v6255 = vunpack.c.h.b16 %v6104
    %v6256 = vunpack.c.l.b16 %v6105
    %v6257 = vunpack.c.h.b16 %v6105
    %v6258 = vunpack.c.l.b16 %v6106
    %v6259 = vunpack.c.h.b16 %v6106
    %v6260 = vunpack.c.l.b16 %v6107
    %v6261 = vunpack.c.h.b16 %v6107
    %v6262 = vunpack.c.l.b16 %v6108
    %v6263 = vunpack.c.h.b16 %v6108
    %v6264 = vunpack.c.l.b16 %v6109
    %v6265 = vunpack.c.h.b16 %v6109
    %v6266 = vunpack.c.l.b16 %v6110
    %v6267 = vunpack.c.h.b16 %v6110
    %v6268 = vunpack.c.l.b16 %v6111
    %v6269 = vunpack.c.h.b16 %v6111
    %v6270 = vunpack.c.l.b16 %v6112
    %v6271 = vunpack.c.h.b16 %v6112
    %v6272 = vunpack.c.l.b16 %v6113
    %v6273 = vunpack.c.h.b16 %v6113
    %v6274 = vunpack.c.l.b16 %v6114
    %v6275 = vunpack.c.h.b16 %v6114
    %v6276 = vunpack.c.l.b16 %v6115
    %v6277 = vunpack.c.h.b16 %v6115
    %v6278 = vunpack.c.l.b16 %v6116
    %v6279 = vunpack.c.h.b16 %v6116
    %v6280 = vunpack.c.l.b16 %v6117
    %v6281 = vunpack.c.h.b16 %v6117
    %v6282 = vunpack.c.l.b16 %v6118
    %v6283 = vunpack.c.h.b16 %v6118
    %v6284 = vunpack.c.l.b16 %v6119
    %v6285 = vunpack.c.h.b16 %v6119
    %v6286 = vunpack.c.l.b16 %v6120
    %v6287 = vunpack.c.h.b16 %v6120
    %v6288 = vunpack.c.l.b16 %v6121
    %v6289 = vunpack.c.h.b16 %v6121
    %v6290 = vunpack.c.l.b16 %v6122
    %v6291 = vunpack.c.h.b16 %v6122
    %v6292 = vunpack.c.l.b16 %v6123
    %v6293 = vunpack.c.h.b16 %v6123
    %v6294 = vunpack.c.l.b16 %v6124
    %v6295 = vunpack.c.h.b16 %v6124
    %v6296 = vunpack.c.l.b16 %v6125
    %v6297 = vunpack.c.h.b16 %v6125
    %v6298 = vunpack.c.l.b16 %v6126
    %v6299 = vunpack.c.h.b16 %v6126
    %v6300 = vunpack.c.l.b16 %v6127
    %v6301 = vunpack.c.h.b16 %v6127
    %v6302 = vunpack.c.l.b16 %v6128
    %v6303 = vunpack.c.h.b16 %v6128
    %v6304 = vunpack.c.l.b16 %v6129
    %v6305 = vunpack.c.h.b16 %v6129
    %v6306 = vunpack.c.l.b16 %v6130
    %v6307 = vunpack.c.h.b16 %v6130
    %v6308 = vunpack.c.l.b16 %v6131
    %v6309 = vunpack.c.h.b16 %v6131
    %v6310 = vunpack.c.l.b16 %v6132
    %v6311 = vunpack.c.h.b16 %v6132
    %v6312 = vunpack.c.l.b16 %v6133
    %v6313 = vunpack.c.h.b16 %v6133
    %v6314 = vunpack.c.l.b16 %v6134
    %v6315 = vunpack.c.h.b16 %v6134
    %v6316 = vpack.c.b16 %v6268, %v6252
    %v6317 = vpack.c.b16 %v6269, %v6253
    %v6318 = vpack.c.b16 %v6270, %v6254
    %v6319 = vpack.c.b16 %v6271, %v6255
    %v6320 = vpack.c.b16 %v6272, %v6256
    %v6321 = vpack.c.b16 %v6273, %v6257
    %v6322 = vpack.c.b16 %v6274, %v6258
    %v6323 = vpack.c.b16 %v6275, %v6259
    %v6324 = vpack.c.b16 %v6276, %v6260
    %v6325 = vpack.c.b16 %v6277, %v6261
    %v6326 = vpack.c.b16 %v6278, %v6262
    %v6327 = vpack.c.b16 %v6279, %v6263
    %v6328 = vpack.c.b16 %v6280, %v6264
    %v6329 = vpack.c.b16 %v6281, %v6265
    %v6330 = vpack.c.b16 %v6282, %v6266
    %v6331 = vpack.c.b16 %v6283, %v6267
    %v6332 = vpack.c.b16 %v6300, %v6284
    %v6333 = vpack.c.b16 %v6301, %v6285
    %v6334 = vpack.c.b16 %v6302, %v6286
    %v6335 = vpack.c.b16 %v6303, %v6287
    %v6336 = vpack.c.b16 %v6304, %v6288
    %v6337 = vpack.c.b16 %v6305, %v6289
    %v6338 = vpack.c.b16 %v6306, %v6290
    %v6339 = vpack.c.b16 %v6307, %v6291
    %v6340 = vpack.c.b16 %v6308, %v6292
    %v6341 = vpack.c.b16 %v6309, %v6293
    %v6342 = vpack.c.b16 %v6310, %v6294
    %v6343 = vpack.c.b16 %v6311, %v6295
    %v6344 = vpack.c.b16 %v6312, %v6296
    %v6345 = vpack.c.b16 %v6313, %v6297
    %v6346 = vpack.c.b16 %v6314, %v6298
    %v6347 = vpack.c.b16 %v6315, %v6299
    %v6381 = vsel %vm165, %v6101, 0
    %6383 = vmatprep.subr.bf16.mxu0 0
    %6384 = vmatpush1.bf16.msra.mxu0 0
    %6385 = vmatprep.subr.bf16.mxu0 0
    %6386 = vmatpush1.bf16.msra.mxu0 0
    %6387 = vmatprep.subr.bf16.mxu0 0
    %6388 = vmatpush1.bf16.msra.mxu0 0
    %6389 = vmatprep.subr.bf16.mxu0 0
    %6390 = vmatpush1.bf16.msra.mxu0 0
    %6391 = vmatprep.subr.bf16.mxu0 0
    %6392 = vmatpush1.bf16.msra.mxu0 0
    %6393 = vmatprep.subr.bf16.mxu0 0
    %6394 = vmatpush1.bf16.msra.mxu0 0
    %6395 = vmatprep.subr.bf16.mxu0 %v6333
    %6396 = vmatpush1.bf16.msra.mxu0 %v6332
    %6397 = vmatprep.subr.bf16.mxu0 %v6317
    %6398 = vmatpush1.bf16.msra.mxu0 %v6316
    %6399 = vmatprep.subr.bf16.mxu0 0
    %6400 = vmatpush2.bf16.msra.mxu0 0
    %6401 = vmatprep.subr.bf16.mxu0 0
    %6402 = vmatpush2.bf16.msra.mxu0 0
    %6403 = vmatprep.subr.bf16.mxu0 0
    %6404 = vmatpush2.bf16.msra.mxu0 0
    %6405 = vmatprep.subr.bf16.mxu0 0
    %6406 = vmatpush2.bf16.msra.mxu0 0
    %6407 = vmatprep.subr.bf16.mxu0 0
    %6408 = vmatpush2.bf16.msra.mxu0 0
    %6409 = vmatprep.subr.bf16.mxu0 0
    %6410 = vmatpush2.bf16.msra.mxu0 0
    %6411 = vmatprep.subr.bf16.mxu0 0
    %6412 = vmatpush2.bf16.msra.mxu0 0
    %6413 = vmatprep.subr.bf16.mxu0 0
    %6414 = vmatpush2.bf16.msra.mxu0 0
    %6415 = vmatprep.mubr.bf16.mxu0 0
    %6416 = vmatmul.mubr.bf16.gmra.mxu0 %v6381
    %v6417 = vpop.f32.mrf.mxu0
    %v6418 = vadd.f32 %v6143, %v6417
    %v6419 = vpop.f32.mrf.mxu0
    %v6420 = vadd.f32 %v6147, %v6419
    %v6421 = vpop.f32.mrf.mxu0
    %v6422 = vadd.f32 %v6143, %v6421
    %v6423 = vpop.f32.mrf.mxu0
    %v6424 = vadd.f32 %v6147, %v6423
    %6425 = vdwg.mxu0
    %6426 = vmatprep.subr.bf16.mxu0 0
    %6427 = vmatpush1.bf16.msra.mxu0 0
    %6428 = vmatprep.subr.bf16.mxu0 0
    %6429 = vmatpush1.bf16.msra.mxu0 0
    %6430 = vmatprep.subr.bf16.mxu0 0
    %6431 = vmatpush1.bf16.msra.mxu0 0
    %6432 = vmatprep.subr.bf16.mxu0 0
    %6433 = vmatpush1.bf16.msra.mxu0 0
    %6434 = vmatprep.subr.bf16.mxu0 0
    %6435 = vmatpush1.bf16.msra.mxu0 0
    %6436 = vmatprep.subr.bf16.mxu0 0
    %6437 = vmatpush1.bf16.msra.mxu0 0
    %6438 = vmatprep.subr.bf16.mxu0 %v6335
    %6439 = vmatpush1.bf16.msra.mxu0 %v6334
    %6440 = vmatprep.subr.bf16.mxu0 %v6319
    %6441 = vmatpush1.bf16.msra.mxu0 %v6318
    %6442 = vmatprep.subr.bf16.mxu0 0
    %6443 = vmatpush2.bf16.msra.mxu0 0
    %6444 = vmatprep.subr.bf16.mxu0 0
    %6445 = vmatpush2.bf16.msra.mxu0 0
    %6446 = vmatprep.subr.bf16.mxu0 0
    %6447 = vmatpush2.bf16.msra.mxu0 0
    %6448 = vmatprep.subr.bf16.mxu0 0
    %6449 = vmatpush2.bf16.msra.mxu0 0
    %6450 = vmatprep.subr.bf16.mxu0 0
    %6451 = vmatpush2.bf16.msra.mxu0 0
    %6452 = vmatprep.subr.bf16.mxu0 0
    %6453 = vmatpush2.bf16.msra.mxu0 0
    %6454 = vmatprep.subr.bf16.mxu0 0
    %6455 = vmatpush2.bf16.msra.mxu0 0
    %6456 = vmatprep.subr.bf16.mxu0 0
    %6457 = vmatpush2.bf16.msra.mxu0 0
    %6458 = vmatprep.mubr.bf16.mxu0 0
    %6459 = vmatmul.mubr.bf16.gmra.mxu0 %v6381
    %v6460 = vpop.f32.mrf.mxu0
    %v6461 = vadd.f32 %v6151, %v6460
    %v6462 = vpop.f32.mrf.mxu0
    %v6463 = vadd.f32 %v6155, %v6462
    %v6464 = vpop.f32.mrf.mxu0
    %v6465 = vadd.f32 %v6151, %v6464
    %v6466 = vpop.f32.mrf.mxu0
    %v6467 = vadd.f32 %v6155, %v6466
    %6468 = vdwg.mxu0
    %6469 = vmatprep.subr.bf16.mxu0 0
    %6470 = vmatpush1.bf16.msra.mxu0 0
    %6471 = vmatprep.subr.bf16.mxu0 0
    %6472 = vmatpush1.bf16.msra.mxu0 0
    %6473 = vmatprep.subr.bf16.mxu0 0
    %6474 = vmatpush1.bf16.msra.mxu0 0
    %6475 = vmatprep.subr.bf16.mxu0 0
    %6476 = vmatpush1.bf16.msra.mxu0 0
    %6477 = vmatprep.subr.bf16.mxu0 0
    %6478 = vmatpush1.bf16.msra.mxu0 0
    %6479 = vmatprep.subr.bf16.mxu0 0
    %6480 = vmatpush1.bf16.msra.mxu0 0
    %6481 = vmatprep.subr.bf16.mxu0 %v6337
    %6482 = vmatpush1.bf16.msra.mxu0 %v6336
    %6483 = vmatprep.subr.bf16.mxu0 %v6321
    %6484 = vmatpush1.bf16.msra.mxu0 %v6320
    %6485 = vmatprep.subr.bf16.mxu0 0
    %6486 = vmatpush2.bf16.msra.mxu0 0
    %6487 = vmatprep.subr.bf16.mxu0 0
    %6488 = vmatpush2.bf16.msra.mxu0 0
    %6489 = vmatprep.subr.bf16.mxu0 0
    %6490 = vmatpush2.bf16.msra.mxu0 0
    %6491 = vmatprep.subr.bf16.mxu0 0
    %6492 = vmatpush2.bf16.msra.mxu0 0
    %6493 = vmatprep.subr.bf16.mxu0 0
    %6494 = vmatpush2.bf16.msra.mxu0 0
    %6495 = vmatprep.subr.bf16.mxu0 0
    %6496 = vmatpush2.bf16.msra.mxu0 0
    %6497 = vmatprep.subr.bf16.mxu0 0
    %6498 = vmatpush2.bf16.msra.mxu0 0
    %6499 = vmatprep.subr.bf16.mxu0 0
    %6500 = vmatpush2.bf16.msra.mxu0 0
    %6501 = vmatprep.mubr.bf16.mxu0 0
    %6502 = vmatmul.mubr.bf16.gmra.mxu0 %v6381
    %v6503 = vpop.f32.mrf.mxu0
    %v6504 = vadd.f32 %v6159, %v6503
    %v6505 = vpop.f32.mrf.mxu0
    %v6506 = vadd.f32 %v6163, %v6505
    %v6507 = vpop.f32.mrf.mxu0
    %v6508 = vadd.f32 %v6159, %v6507
    %v6509 = vpop.f32.mrf.mxu0
    %v6510 = vadd.f32 %v6163, %v6509
    %6511 = vdwg.mxu0
    %6512 = vmatprep.subr.bf16.mxu0 0
    %6513 = vmatpush1.bf16.msra.mxu0 0
    %6514 = vmatprep.subr.bf16.mxu0 0
    %6515 = vmatpush1.bf16.msra.mxu0 0
    %6516 = vmatprep.subr.bf16.mxu0 0
    %6517 = vmatpush1.bf16.msra.mxu0 0
    %6518 = vmatprep.subr.bf16.mxu0 0
    %6519 = vmatpush1.bf16.msra.mxu0 0
    %6520 = vmatprep.subr.bf16.mxu0 0
    %6521 = vmatpush1.bf16.msra.mxu0 0
    %6522 = vmatprep.subr.bf16.mxu0 0
    %6523 = vmatpush1.bf16.msra.mxu0 0
    %6524 = vmatprep.subr.bf16.mxu0 %v6339
    %6525 = vmatpush1.bf16.msra.mxu0 %v6338
    %6526 = vmatprep.subr.bf16.mxu0 %v6323
    %6527 = vmatpush1.bf16.msra.mxu0 %v6322
    %6528 = vmatprep.subr.bf16.mxu0 0
    %6529 = vmatpush2.bf16.msra.mxu0 0
    %6530 = vmatprep.subr.bf16.mxu0 0
    %6531 = vmatpush2.bf16.msra.mxu0 0
    %6532 = vmatprep.subr.bf16.mxu0 0
    %6533 = vmatpush2.bf16.msra.mxu0 0
    %6534 = vmatprep.subr.bf16.mxu0 0
    %6535 = vmatpush2.bf16.msra.mxu0 0
    %6536 = vmatprep.subr.bf16.mxu0 0
    %6537 = vmatpush2.bf16.msra.mxu0 0
    %6538 = vmatprep.subr.bf16.mxu0 0
    %6539 = vmatpush2.bf16.msra.mxu0 0
    %6540 = vmatprep.subr.bf16.mxu0 0
    %6541 = vmatpush2.bf16.msra.mxu0 0
    %6542 = vmatprep.subr.bf16.mxu0 0
    %6543 = vmatpush2.bf16.msra.mxu0 0
    %6544 = vmatprep.mubr.bf16.mxu0 0
    %6545 = vmatmul.mubr.bf16.gmra.mxu0 %v6381
    %v6546 = vpop.f32.mrf.mxu0
    %v6547 = vadd.f32 %v6167, %v6546
    %v6548 = vpop.f32.mrf.mxu0
    %v6549 = vadd.f32 %v6171, %v6548
    %v6550 = vpop.f32.mrf.mxu0
    %v6551 = vadd.f32 %v6167, %v6550
    %v6552 = vpop.f32.mrf.mxu0
    %v6553 = vadd.f32 %v6171, %v6552
    %6554 = vdwg.mxu0
    %6555 = vmatprep.subr.bf16.mxu0 0
    %6556 = vmatpush1.bf16.msra.mxu0 0
    %6557 = vmatprep.subr.bf16.mxu0 0
    %6558 = vmatpush1.bf16.msra.mxu0 0
    %6559 = vmatprep.subr.bf16.mxu0 0
    %6560 = vmatpush1.bf16.msra.mxu0 0
    %6561 = vmatprep.subr.bf16.mxu0 0
    %6562 = vmatpush1.bf16.msra.mxu0 0
    %6563 = vmatprep.subr.bf16.mxu0 0
    %6564 = vmatpush1.bf16.msra.mxu0 0
    %6565 = vmatprep.subr.bf16.mxu0 0
    %6566 = vmatpush1.bf16.msra.mxu0 0
    %6567 = vmatprep.subr.bf16.mxu0 %v6341
    %6568 = vmatpush1.bf16.msra.mxu0 %v6340
    %6569 = vmatprep.subr.bf16.mxu0 %v6325
    %6570 = vmatpush1.bf16.msra.mxu0 %v6324
    %6571 = vmatprep.subr.bf16.mxu0 0
    %6572 = vmatpush2.bf16.msra.mxu0 0
    %6573 = vmatprep.subr.bf16.mxu0 0
    %6574 = vmatpush2.bf16.msra.mxu0 0
    %6575 = vmatprep.subr.bf16.mxu0 0
    %6576 = vmatpush2.bf16.msra.mxu0 0
    %6577 = vmatprep.subr.bf16.mxu0 0
    %6578 = vmatpush2.bf16.msra.mxu0 0
    %6579 = vmatprep.subr.bf16.mxu0 0
    %6580 = vmatpush2.bf16.msra.mxu0 0
    %6581 = vmatprep.subr.bf16.mxu0 0
    %6582 = vmatpush2.bf16.msra.mxu0 0
    %6583 = vmatprep.subr.bf16.mxu0 0
    %6584 = vmatpush2.bf16.msra.mxu0 0
    %6585 = vmatprep.subr.bf16.mxu0 0
    %6586 = vmatpush2.bf16.msra.mxu0 0
    %6587 = vmatprep.mubr.bf16.mxu0 0
    %6588 = vmatmul.mubr.bf16.gmra.mxu0 %v6381
    %v6589 = vpop.f32.mrf.mxu0
    %v6590 = vadd.f32 %v6175, %v6589
    %v6591 = vpop.f32.mrf.mxu0
    %v6592 = vadd.f32 %v6179, %v6591
    %v6593 = vpop.f32.mrf.mxu0
    %v6594 = vadd.f32 %v6175, %v6593
    %v6595 = vpop.f32.mrf.mxu0
    %v6596 = vadd.f32 %v6179, %v6595
    %6597 = vdwg.mxu0
    %6598 = vmatprep.subr.bf16.mxu0 0
    %6599 = vmatpush1.bf16.msra.mxu0 0
    %6600 = vmatprep.subr.bf16.mxu0 0
    %6601 = vmatpush1.bf16.msra.mxu0 0
    %6602 = vmatprep.subr.bf16.mxu0 0
    %6603 = vmatpush1.bf16.msra.mxu0 0
    %6604 = vmatprep.subr.bf16.mxu0 0
    %6605 = vmatpush1.bf16.msra.mxu0 0
    %6606 = vmatprep.subr.bf16.mxu0 0
    %6607 = vmatpush1.bf16.msra.mxu0 0
    %6608 = vmatprep.subr.bf16.mxu0 0
    %6609 = vmatpush1.bf16.msra.mxu0 0
    %6610 = vmatprep.subr.bf16.mxu0 %v6343
    %6611 = vmatpush1.bf16.msra.mxu0 %v6342
    %6612 = vmatprep.subr.bf16.mxu0 %v6327
    %6613 = vmatpush1.bf16.msra.mxu0 %v6326
    %6614 = vmatprep.subr.bf16.mxu0 0
    %6615 = vmatpush2.bf16.msra.mxu0 0
    %6616 = vmatprep.subr.bf16.mxu0 0
    %6617 = vmatpush2.bf16.msra.mxu0 0
    %6618 = vmatprep.subr.bf16.mxu0 0
    %6619 = vmatpush2.bf16.msra.mxu0 0
    %6620 = vmatprep.subr.bf16.mxu0 0
    %6621 = vmatpush2.bf16.msra.mxu0 0
    %6622 = vmatprep.subr.bf16.mxu0 0
    %6623 = vmatpush2.bf16.msra.mxu0 0
    %6624 = vmatprep.subr.bf16.mxu0 0
    %6625 = vmatpush2.bf16.msra.mxu0 0
    %6626 = vmatprep.subr.bf16.mxu0 0
    %6627 = vmatpush2.bf16.msra.mxu0 0
    %6628 = vmatprep.subr.bf16.mxu0 0
    %6629 = vmatpush2.bf16.msra.mxu0 0
    %6630 = vmatprep.mubr.bf16.mxu0 0
    %6631 = vmatmul.mubr.bf16.gmra.mxu0 %v6381
    %v6632 = vpop.f32.mrf.mxu0
    %v6633 = vadd.f32 %v6183, %v6632
    %v6634 = vpop.f32.mrf.mxu0
    %v6635 = vadd.f32 %v6187, %v6634
    %v6636 = vpop.f32.mrf.mxu0
    %v6637 = vadd.f32 %v6183, %v6636
    %v6638 = vpop.f32.mrf.mxu0
    %v6639 = vadd.f32 %v6187, %v6638
    %6640 = vdwg.mxu0
    %6641 = vmatprep.subr.bf16.mxu0 0
    %6642 = vmatpush1.bf16.msra.mxu0 0
    %6643 = vmatprep.subr.bf16.mxu0 0
    %6644 = vmatpush1.bf16.msra.mxu0 0
    %6645 = vmatprep.subr.bf16.mxu0 0
    %6646 = vmatpush1.bf16.msra.mxu0 0
    %6647 = vmatprep.subr.bf16.mxu0 0
    %6648 = vmatpush1.bf16.msra.mxu0 0
    %6649 = vmatprep.subr.bf16.mxu0 0
    %6650 = vmatpush1.bf16.msra.mxu0 0
    %6651 = vmatprep.subr.bf16.mxu0 0
    %6652 = vmatpush1.bf16.msra.mxu0 0
    %6653 = vmatprep.subr.bf16.mxu0 %v6345
    %6654 = vmatpush1.bf16.msra.mxu0 %v6344
    %6655 = vmatprep.subr.bf16.mxu0 %v6329
    %6656 = vmatpush1.bf16.msra.mxu0 %v6328
    %6657 = vmatprep.subr.bf16.mxu0 0
    %6658 = vmatpush2.bf16.msra.mxu0 0
    %6659 = vmatprep.subr.bf16.mxu0 0
    %6660 = vmatpush2.bf16.msra.mxu0 0
    %6661 = vmatprep.subr.bf16.mxu0 0
    %6662 = vmatpush2.bf16.msra.mxu0 0
    %6663 = vmatprep.subr.bf16.mxu0 0
    %6664 = vmatpush2.bf16.msra.mxu0 0
    %6665 = vmatprep.subr.bf16.mxu0 0
    %6666 = vmatpush2.bf16.msra.mxu0 0
    %6667 = vmatprep.subr.bf16.mxu0 0
    %6668 = vmatpush2.bf16.msra.mxu0 0
    %6669 = vmatprep.subr.bf16.mxu0 0
    %6670 = vmatpush2.bf16.msra.mxu0 0
    %6671 = vmatprep.subr.bf16.mxu0 0
    %6672 = vmatpush2.bf16.msra.mxu0 0
    %6673 = vmatprep.mubr.bf16.mxu0 0
    %6674 = vmatmul.mubr.bf16.gmra.mxu0 %v6381
    %v6675 = vpop.f32.mrf.mxu0
    %v6676 = vadd.f32 %v6191, %v6675
    %v6677 = vpop.f32.mrf.mxu0
    %v6678 = vadd.f32 %v6195, %v6677
    %v6679 = vpop.f32.mrf.mxu0
    %v6680 = vadd.f32 %v6191, %v6679
    %v6681 = vpop.f32.mrf.mxu0
    %v6682 = vadd.f32 %v6195, %v6681
    %6683 = vdwg.mxu0
    %6684 = vmatprep.subr.bf16.mxu0 0
    %6685 = vmatpush1.bf16.msra.mxu0 0
    %6686 = vmatprep.subr.bf16.mxu0 0
    %6687 = vmatpush1.bf16.msra.mxu0 0
    %6688 = vmatprep.subr.bf16.mxu0 0
    %6689 = vmatpush1.bf16.msra.mxu0 0
    %6690 = vmatprep.subr.bf16.mxu0 0
    %6691 = vmatpush1.bf16.msra.mxu0 0
    %6692 = vmatprep.subr.bf16.mxu0 0
    %6693 = vmatpush1.bf16.msra.mxu0 0
    %6694 = vmatprep.subr.bf16.mxu0 0
    %6695 = vmatpush1.bf16.msra.mxu0 0
    %6696 = vmatprep.subr.bf16.mxu0 %v6347
    %6697 = vmatpush1.bf16.msra.mxu0 %v6346
    %6698 = vmatprep.subr.bf16.mxu0 %v6331
    %6699 = vmatpush1.bf16.msra.mxu0 %v6330
    %6700 = vmatprep.subr.bf16.mxu0 0
    %6701 = vmatpush2.bf16.msra.mxu0 0
    %6702 = vmatprep.subr.bf16.mxu0 0
    %6703 = vmatpush2.bf16.msra.mxu0 0
    %6704 = vmatprep.subr.bf16.mxu0 0
    %6705 = vmatpush2.bf16.msra.mxu0 0
    %6706 = vmatprep.subr.bf16.mxu0 0
    %6707 = vmatpush2.bf16.msra.mxu0 0
    %6708 = vmatprep.subr.bf16.mxu0 0
    %6709 = vmatpush2.bf16.msra.mxu0 0
    %6710 = vmatprep.subr.bf16.mxu0 0
    %6711 = vmatpush2.bf16.msra.mxu0 0
    %6712 = vmatprep.subr.bf16.mxu0 0
    %6713 = vmatpush2.bf16.msra.mxu0 0
    %6714 = vmatprep.subr.bf16.mxu0 0
    %6715 = vmatpush2.bf16.msra.mxu0 0
    %6716 = vmatprep.mubr.bf16.mxu0 0
    %6717 = vmatmul.mubr.bf16.gmra.mxu0 %v6381
    %v6718 = vpop.f32.mrf.mxu0
    %v6719 = vadd.f32 %v6199, %v6718
    %v6720 = vpop.f32.mrf.mxu0
    %v6721 = vadd.f32 %v6203, %v6720
    %v6722 = vpop.f32.mrf.mxu0
    %v6723 = vadd.f32 %v6199, %v6722
    %v6724 = vpop.f32.mrf.mxu0
    %v6725 = vadd.f32 %v6203, %v6724
    %6726 = vdwg.mxu0
    %v6727 = vmax.f32 %v6418, 0.0
    %v6728 = vmax.f32 %v6420, 0.0
    %v6729 = vmax.f32 %v6461, 0.0
    %v6730 = vmax.f32 %v6463, 0.0
    %v6731 = vmax.f32 %v6504, 0.0
    %v6732 = vmax.f32 %v6506, 0.0
    %v6733 = vmax.f32 %v6547, 0.0
    %v6734 = vmax.f32 %v6549, 0.0
    %v6735 = vmax.f32 %v6590, 0.0
    %v6736 = vmax.f32 %v6592, 0.0
    %v6737 = vmax.f32 %v6633, 0.0
    %v6738 = vmax.f32 %v6635, 0.0
    %v6739 = vmax.f32 %v6676, 0.0
    %v6740 = vmax.f32 %v6678, 0.0
    %v6741 = vmax.f32 %v6719, 0.0
    %v6742 = vmax.f32 %v6721, 0.0
    %v6743 = vmax.f32 %v6422, 0.0
    %v6744 = vmax.f32 %v6424, 0.0
    %v6745 = vmax.f32 %v6465, 0.0
    %v6746 = vmax.f32 %v6467, 0.0
    %v6747 = vmax.f32 %v6508, 0.0
    %v6748 = vmax.f32 %v6510, 0.0
    %v6749 = vmax.f32 %v6551, 0.0
    %v6750 = vmax.f32 %v6553, 0.0
    %v6751 = vmax.f32 %v6594, 0.0
    %v6752 = vmax.f32 %v6596, 0.0
    %v6753 = vmax.f32 %v6637, 0.0
    %v6754 = vmax.f32 %v6639, 0.0
    %v6755 = vmax.f32 %v6680, 0.0
    %v6756 = vmax.f32 %v6682, 0.0
    %v6757 = vmax.f32 %v6723, 0.0
    %v6758 = vmax.f32 %v6725, 0.0
    %v6759 = vpack.c.bf16 %v6743, %v6727
    %v6760 = vpack.c.bf16 %v6744, %v6728
    %v6761 = vpack.c.bf16 %v6745, %v6729
    %v6762 = vpack.c.bf16 %v6746, %v6730
    %v6763 = vpack.c.bf16 %v6747, %v6731
    %v6764 = vpack.c.bf16 %v6748, %v6732
    %v6765 = vpack.c.bf16 %v6749, %v6733
    %v6766 = vpack.c.bf16 %v6750, %v6734
    %v6767 = vpack.c.bf16 %v6751, %v6735
    %v6768 = vpack.c.bf16 %v6752, %v6736
    %v6769 = vpack.c.bf16 %v6753, %v6737
    %v6770 = vpack.c.bf16 %v6754, %v6738
    %v6771 = vpack.c.bf16 %v6755, %v6739
    %v6772 = vpack.c.bf16 %v6756, %v6740
    %v6773 = vpack.c.bf16 %v6757, %v6741
    %v6774 = vpack.c.bf16 %v6758, %v6742
    %s6775 = scalar_lea.vmem %s9, 1024
    %v6776 = vld [vmem:[%s6775] sm:$0xf]
    %v6777 = vld [vmem:[%s6775 + $0x4] sm:$0xf]
    %v6778 = vld [vmem:[%s6775 + $0x8] sm:$0xf]
    %v6779 = vld [vmem:[%s6775 + $0xc] sm:$0xf]
    %v6780 = vld [vmem:[%s6775 + $0x10] sm:$0xf]
    %v6781 = vld [vmem:[%s6775 + $0x14] sm:$0xf]
    %v6782 = vld [vmem:[%s6775 + $0x18] sm:$0xf]
    %v6783 = vld [vmem:[%s6775 + $0x1c] sm:$0xf]
    %v6784 = vld [vmem:[%s6775 + $0x20] sm:$0xf]
    %v6785 = vld [vmem:[%s6775 + $0x24] sm:$0xf]
    %v6786 = vld [vmem:[%s6775 + $0x28] sm:$0xf]
    %v6787 = vld [vmem:[%s6775 + $0x2c] sm:$0xf]
    %v6788 = vld [vmem:[%s6775 + $0x30] sm:$0xf]
    %v6789 = vld [vmem:[%s6775 + $0x34] sm:$0xf]
    %v6790 = vld [vmem:[%s6775 + $0x38] sm:$0xf]
    %v6791 = vld [vmem:[%s6775 + $0x3c] sm:$0xf]
    %v6792 = vld [vmem:[%s6775 + $0x40] sm:$0xf]
    %v6793 = vld [vmem:[%s6775 + $0x44] sm:$0xf]
    %v6794 = vld [vmem:[%s6775 + $0x48] sm:$0xf]
    %v6795 = vld [vmem:[%s6775 + $0x4c] sm:$0xf]
    %v6796 = vld [vmem:[%s6775 + $0x50] sm:$0xf]
    %v6797 = vld [vmem:[%s6775 + $0x54] sm:$0xf]
    %v6798 = vld [vmem:[%s6775 + $0x58] sm:$0xf]
    %v6799 = vld [vmem:[%s6775 + $0x5c] sm:$0xf]
    %v6800 = vld [vmem:[%s6775 + $0x60] sm:$0xf]
    %v6801 = vld [vmem:[%s6775 + $0x64] sm:$0xf]
    %v6802 = vld [vmem:[%s6775 + $0x68] sm:$0xf]
    %v6803 = vld [vmem:[%s6775 + $0x6c] sm:$0xf]
    %v6804 = vld [vmem:[%s6775 + $0x70] sm:$0xf]
    %v6805 = vld [vmem:[%s6775 + $0x74] sm:$0xf]
    %v6806 = vld [vmem:[%s6775 + $0x78] sm:$0xf]
    %v6807 = vld [vmem:[%s6775 + $0x7c] sm:$0xf]
    %v6808 = vld [vmem:[%s6775 + $0x80] sm:$0xf]
    %v6809 = vld [vmem:[%s6775 + $0x84] sm:$0xf]
    %v6810 = vld [vmem:[%s6775 + $0x88] sm:$0xf]
    %v6811 = vld [vmem:[%s6775 + $0x8c] sm:$0xf]
    %v6812 = vld [vmem:[%s6775 + $0x90] sm:$0xf]
    %v6813 = vld [vmem:[%s6775 + $0x94] sm:$0xf]
    %v6814 = vld [vmem:[%s6775 + $0x98] sm:$0xf]
    %v6815 = vld [vmem:[%s6775 + $0x9c] sm:$0xf]
    %v6816 = vld [vmem:[%s6775 + $0xa0] sm:$0xf]
    %v6817 = vld [vmem:[%s6775 + $0xa4] sm:$0xf]
    %v6818 = vld [vmem:[%s6775 + $0xa8] sm:$0xf]
    %v6819 = vld [vmem:[%s6775 + $0xac] sm:$0xf]
    %v6820 = vld [vmem:[%s6775 + $0xb0] sm:$0xf]
    %v6821 = vld [vmem:[%s6775 + $0xb4] sm:$0xf]
    %v6822 = vld [vmem:[%s6775 + $0xb8] sm:$0xf]
    %v6823 = vld [vmem:[%s6775 + $0xbc] sm:$0xf]
    %v6824 = vld [vmem:[%s6775 + $0xc0] sm:$0xf]
    %v6825 = vld [vmem:[%s6775 + $0xc4] sm:$0xf]
    %v6826 = vld [vmem:[%s6775 + $0xc8] sm:$0xf]
    %v6827 = vld [vmem:[%s6775 + $0xcc] sm:$0xf]
    %v6828 = vld [vmem:[%s6775 + $0xd0] sm:$0xf]
    %v6829 = vld [vmem:[%s6775 + $0xd4] sm:$0xf]
    %v6830 = vld [vmem:[%s6775 + $0xd8] sm:$0xf]
    %v6831 = vld [vmem:[%s6775 + $0xdc] sm:$0xf]
    %v6832 = vld [vmem:[%s6775 + $0xe0] sm:$0xf]
    %v6833 = vld [vmem:[%s6775 + $0xe4] sm:$0xf]
    %v6834 = vld [vmem:[%s6775 + $0xe8] sm:$0xf]
    %v6835 = vld [vmem:[%s6775 + $0xec] sm:$0xf]
    %v6836 = vld [vmem:[%s6775 + $0xf0] sm:$0xf]
    %v6837 = vld [vmem:[%s6775 + $0xf4] sm:$0xf]
    %v6838 = vld [vmem:[%s6775 + $0xf8] sm:$0xf]
    %v6839 = vld [vmem:[%s6775 + $0xfc] sm:$0xf]
    %v6840 = vld [vmem:[%s6775 + $0x100] sm:$0xf]
    %v6841 = vld [vmem:[%s6775 + $0x104] sm:$0xf]
    %v6842 = vld [vmem:[%s6775 + $0x108] sm:$0xf]
    %v6843 = vld [vmem:[%s6775 + $0x10c] sm:$0xf]
    %v6844 = vld [vmem:[%s6775 + $0x110] sm:$0xf]
    %v6845 = vld [vmem:[%s6775 + $0x114] sm:$0xf]
    %v6846 = vld [vmem:[%s6775 + $0x118] sm:$0xf]
    %v6847 = vld [vmem:[%s6775 + $0x11c] sm:$0xf]
    %v6848 = vld [vmem:[%s6775 + $0x120] sm:$0xf]
    %v6849 = vld [vmem:[%s6775 + $0x124] sm:$0xf]
    %v6850 = vld [vmem:[%s6775 + $0x128] sm:$0xf]
    %v6851 = vld [vmem:[%s6775 + $0x12c] sm:$0xf]
    %v6852 = vld [vmem:[%s6775 + $0x130] sm:$0xf]
    %v6853 = vld [vmem:[%s6775 + $0x134] sm:$0xf]
    %v6854 = vld [vmem:[%s6775 + $0x138] sm:$0xf]
    %v6855 = vld [vmem:[%s6775 + $0x13c] sm:$0xf]
    %v6856 = vld [vmem:[%s6775 + $0x140] sm:$0xf]
    %v6857 = vld [vmem:[%s6775 + $0x144] sm:$0xf]
    %v6858 = vld [vmem:[%s6775 + $0x148] sm:$0xf]
    %v6859 = vld [vmem:[%s6775 + $0x14c] sm:$0xf]
    %v6860 = vld [vmem:[%s6775 + $0x150] sm:$0xf]
    %v6861 = vld [vmem:[%s6775 + $0x154] sm:$0xf]
    %v6862 = vld [vmem:[%s6775 + $0x158] sm:$0xf]
    %v6863 = vld [vmem:[%s6775 + $0x15c] sm:$0xf]
    %v6864 = vld [vmem:[%s6775 + $0x160] sm:$0xf]
    %v6865 = vld [vmem:[%s6775 + $0x164] sm:$0xf]
    %v6866 = vld [vmem:[%s6775 + $0x168] sm:$0xf]
    %v6867 = vld [vmem:[%s6775 + $0x16c] sm:$0xf]
    %v6868 = vld [vmem:[%s6775 + $0x170] sm:$0xf]
    %v6869 = vld [vmem:[%s6775 + $0x174] sm:$0xf]
    %v6870 = vld [vmem:[%s6775 + $0x178] sm:$0xf]
    %v6871 = vld [vmem:[%s6775 + $0x17c] sm:$0xf]
    %v6872 = vld [vmem:[%s6775 + $0x180] sm:$0xf]
    %v6873 = vld [vmem:[%s6775 + $0x184] sm:$0xf]
    %v6874 = vld [vmem:[%s6775 + $0x188] sm:$0xf]
    %v6875 = vld [vmem:[%s6775 + $0x18c] sm:$0xf]
    %v6876 = vld [vmem:[%s6775 + $0x190] sm:$0xf]
    %v6877 = vld [vmem:[%s6775 + $0x194] sm:$0xf]
    %v6878 = vld [vmem:[%s6775 + $0x198] sm:$0xf]
    %v6879 = vld [vmem:[%s6775 + $0x19c] sm:$0xf]
    %v6880 = vld [vmem:[%s6775 + $0x1a0] sm:$0xf]
    %v6881 = vld [vmem:[%s6775 + $0x1a4] sm:$0xf]
    %v6882 = vld [vmem:[%s6775 + $0x1a8] sm:$0xf]
    %v6883 = vld [vmem:[%s6775 + $0x1ac] sm:$0xf]
    %v6884 = vld [vmem:[%s6775 + $0x1b0] sm:$0xf]
    %v6885 = vld [vmem:[%s6775 + $0x1b4] sm:$0xf]
    %v6886 = vld [vmem:[%s6775 + $0x1b8] sm:$0xf]
    %v6887 = vld [vmem:[%s6775 + $0x1bc] sm:$0xf]
    %v6888 = vld [vmem:[%s6775 + $0x1c0] sm:$0xf]
    %v6889 = vld [vmem:[%s6775 + $0x1c4] sm:$0xf]
    %v6890 = vld [vmem:[%s6775 + $0x1c8] sm:$0xf]
    %v6891 = vld [vmem:[%s6775 + $0x1cc] sm:$0xf]
    %v6892 = vld [vmem:[%s6775 + $0x1d0] sm:$0xf]
    %v6893 = vld [vmem:[%s6775 + $0x1d4] sm:$0xf]
    %v6894 = vld [vmem:[%s6775 + $0x1d8] sm:$0xf]
    %v6895 = vld [vmem:[%s6775 + $0x1dc] sm:$0xf]
    %v6896 = vld [vmem:[%s6775 + $0x1e0] sm:$0xf]
    %v6897 = vld [vmem:[%s6775 + $0x1e4] sm:$0xf]
    %v6898 = vld [vmem:[%s6775 + $0x1e8] sm:$0xf]
    %v6899 = vld [vmem:[%s6775 + $0x1ec] sm:$0xf]
    %v6900 = vld [vmem:[%s6775 + $0x1f0] sm:$0xf]
    %v6901 = vld [vmem:[%s6775 + $0x1f4] sm:$0xf]
    %v6902 = vld [vmem:[%s6775 + $0x1f8] sm:$0xf]
    %v6903 = vld [vmem:[%s6775 + $0x1fc] sm:$0xf]
    %v6904 = vld [vmem:[%s6775 + $0x200] sm:$0xf]
    %v6905 = vld [vmem:[%s6775 + $0x204] sm:$0xf]
    %v6906 = vld [vmem:[%s6775 + $0x208] sm:$0xf]
    %v6907 = vld [vmem:[%s6775 + $0x20c] sm:$0xf]
    %v6908 = vld [vmem:[%s6775 + $0x210] sm:$0xf]
    %v6909 = vld [vmem:[%s6775 + $0x214] sm:$0xf]
    %v6910 = vld [vmem:[%s6775 + $0x218] sm:$0xf]
    %v6911 = vld [vmem:[%s6775 + $0x21c] sm:$0xf]
    %v6912 = vld [vmem:[%s6775 + $0x220] sm:$0xf]
    %v6913 = vld [vmem:[%s6775 + $0x224] sm:$0xf]
    %v6914 = vld [vmem:[%s6775 + $0x228] sm:$0xf]
    %v6915 = vld [vmem:[%s6775 + $0x22c] sm:$0xf]
    %v6916 = vld [vmem:[%s6775 + $0x230] sm:$0xf]
    %v6917 = vld [vmem:[%s6775 + $0x234] sm:$0xf]
    %v6918 = vld [vmem:[%s6775 + $0x238] sm:$0xf]
    %v6919 = vld [vmem:[%s6775 + $0x23c] sm:$0xf]
    %v6920 = vld [vmem:[%s6775 + $0x240] sm:$0xf]
    %v6921 = vld [vmem:[%s6775 + $0x244] sm:$0xf]
    %v6922 = vld [vmem:[%s6775 + $0x248] sm:$0xf]
    %v6923 = vld [vmem:[%s6775 + $0x24c] sm:$0xf]
    %v6924 = vld [vmem:[%s6775 + $0x250] sm:$0xf]
    %v6925 = vld [vmem:[%s6775 + $0x254] sm:$0xf]
    %v6926 = vld [vmem:[%s6775 + $0x258] sm:$0xf]
    %v6927 = vld [vmem:[%s6775 + $0x25c] sm:$0xf]
    %v6928 = vld [vmem:[%s6775 + $0x260] sm:$0xf]
    %v6929 = vld [vmem:[%s6775 + $0x264] sm:$0xf]
    %v6930 = vld [vmem:[%s6775 + $0x268] sm:$0xf]
    %v6931 = vld [vmem:[%s6775 + $0x26c] sm:$0xf]
    %v6932 = vld [vmem:[%s6775 + $0x270] sm:$0xf]
    %v6933 = vld [vmem:[%s6775 + $0x274] sm:$0xf]
    %v6934 = vld [vmem:[%s6775 + $0x278] sm:$0xf]
    %v6935 = vld [vmem:[%s6775 + $0x27c] sm:$0xf]
    %v6936 = vld [vmem:[%s6775 + $0x280] sm:$0xf]
    %v6937 = vld [vmem:[%s6775 + $0x284] sm:$0xf]
    %v6938 = vld [vmem:[%s6775 + $0x288] sm:$0xf]
    %v6939 = vld [vmem:[%s6775 + $0x28c] sm:$0xf]
    %v6940 = vld [vmem:[%s6775 + $0x290] sm:$0xf]
    %v6941 = vld [vmem:[%s6775 + $0x294] sm:$0xf]
    %v6942 = vld [vmem:[%s6775 + $0x298] sm:$0xf]
    %v6943 = vld [vmem:[%s6775 + $0x29c] sm:$0xf]
    %v6944 = vld [vmem:[%s6775 + $0x2a0] sm:$0xf]
    %v6945 = vld [vmem:[%s6775 + $0x2a4] sm:$0xf]
    %v6946 = vld [vmem:[%s6775 + $0x2a8] sm:$0xf]
    %v6947 = vld [vmem:[%s6775 + $0x2ac] sm:$0xf]
    %v6948 = vld [vmem:[%s6775 + $0x2b0] sm:$0xf]
    %v6949 = vld [vmem:[%s6775 + $0x2b4] sm:$0xf]
    %v6950 = vld [vmem:[%s6775 + $0x2b8] sm:$0xf]
    %v6951 = vld [vmem:[%s6775 + $0x2bc] sm:$0xf]
    %v6952 = vld [vmem:[%s6775 + $0x2c0] sm:$0xf]
    %v6953 = vld [vmem:[%s6775 + $0x2c4] sm:$0xf]
    %v6954 = vld [vmem:[%s6775 + $0x2c8] sm:$0xf]
    %v6955 = vld [vmem:[%s6775 + $0x2cc] sm:$0xf]
    %v6956 = vld [vmem:[%s6775 + $0x2d0] sm:$0xf]
    %v6957 = vld [vmem:[%s6775 + $0x2d4] sm:$0xf]
    %v6958 = vld [vmem:[%s6775 + $0x2d8] sm:$0xf]
    %v6959 = vld [vmem:[%s6775 + $0x2dc] sm:$0xf]
    %v6960 = vld [vmem:[%s6775 + $0x2e0] sm:$0xf]
    %v6961 = vld [vmem:[%s6775 + $0x2e4] sm:$0xf]
    %v6962 = vld [vmem:[%s6775 + $0x2e8] sm:$0xf]
    %v6963 = vld [vmem:[%s6775 + $0x2ec] sm:$0xf]
    %v6964 = vld [vmem:[%s6775 + $0x2f0] sm:$0xf]
    %v6965 = vld [vmem:[%s6775 + $0x2f4] sm:$0xf]
    %v6966 = vld [vmem:[%s6775 + $0x2f8] sm:$0xf]
    %v6967 = vld [vmem:[%s6775 + $0x2fc] sm:$0xf]
    %v6968 = vld [vmem:[%s6775 + $0x300] sm:$0xf]
    %v6969 = vld [vmem:[%s6775 + $0x304] sm:$0xf]
    %v6970 = vld [vmem:[%s6775 + $0x308] sm:$0xf]
    %v6971 = vld [vmem:[%s6775 + $0x30c] sm:$0xf]
    %v6972 = vld [vmem:[%s6775 + $0x310] sm:$0xf]
    %v6973 = vld [vmem:[%s6775 + $0x314] sm:$0xf]
    %v6974 = vld [vmem:[%s6775 + $0x318] sm:$0xf]
    %v6975 = vld [vmem:[%s6775 + $0x31c] sm:$0xf]
    %v6976 = vld [vmem:[%s6775 + $0x320] sm:$0xf]
    %v6977 = vld [vmem:[%s6775 + $0x324] sm:$0xf]
    %v6978 = vld [vmem:[%s6775 + $0x328] sm:$0xf]
    %v6979 = vld [vmem:[%s6775 + $0x32c] sm:$0xf]
    %v6980 = vld [vmem:[%s6775 + $0x330] sm:$0xf]
    %v6981 = vld [vmem:[%s6775 + $0x334] sm:$0xf]
    %v6982 = vld [vmem:[%s6775 + $0x338] sm:$0xf]
    %v6983 = vld [vmem:[%s6775 + $0x33c] sm:$0xf]
    %v6984 = vld [vmem:[%s6775 + $0x340] sm:$0xf]
    %v6985 = vld [vmem:[%s6775 + $0x344] sm:$0xf]
    %v6986 = vld [vmem:[%s6775 + $0x348] sm:$0xf]
    %v6987 = vld [vmem:[%s6775 + $0x34c] sm:$0xf]
    %v6988 = vld [vmem:[%s6775 + $0x350] sm:$0xf]
    %v6989 = vld [vmem:[%s6775 + $0x354] sm:$0xf]
    %v6990 = vld [vmem:[%s6775 + $0x358] sm:$0xf]
    %v6991 = vld [vmem:[%s6775 + $0x35c] sm:$0xf]
    %v6992 = vld [vmem:[%s6775 + $0x360] sm:$0xf]
    %v6993 = vld [vmem:[%s6775 + $0x364] sm:$0xf]
    %v6994 = vld [vmem:[%s6775 + $0x368] sm:$0xf]
    %v6995 = vld [vmem:[%s6775 + $0x36c] sm:$0xf]
    %v6996 = vld [vmem:[%s6775 + $0x370] sm:$0xf]
    %v6997 = vld [vmem:[%s6775 + $0x374] sm:$0xf]
    %v6998 = vld [vmem:[%s6775 + $0x378] sm:$0xf]
    %v6999 = vld [vmem:[%s6775 + $0x37c] sm:$0xf]
    %v7000 = vld [vmem:[%s6775 + $0x380] sm:$0xf]
    %v7001 = vld [vmem:[%s6775 + $0x384] sm:$0xf]
    %v7002 = vld [vmem:[%s6775 + $0x388] sm:$0xf]
    %v7003 = vld [vmem:[%s6775 + $0x38c] sm:$0xf]
    %v7004 = vld [vmem:[%s6775 + $0x390] sm:$0xf]
    %v7005 = vld [vmem:[%s6775 + $0x394] sm:$0xf]
    %v7006 = vld [vmem:[%s6775 + $0x398] sm:$0xf]
    %v7007 = vld [vmem:[%s6775 + $0x39c] sm:$0xf]
    %v7008 = vld [vmem:[%s6775 + $0x3a0] sm:$0xf]
    %v7009 = vld [vmem:[%s6775 + $0x3a4] sm:$0xf]
    %v7010 = vld [vmem:[%s6775 + $0x3a8] sm:$0xf]
    %v7011 = vld [vmem:[%s6775 + $0x3ac] sm:$0xf]
    %v7012 = vld [vmem:[%s6775 + $0x3b0] sm:$0xf]
    %v7013 = vld [vmem:[%s6775 + $0x3b4] sm:$0xf]
    %v7014 = vld [vmem:[%s6775 + $0x3b8] sm:$0xf]
    %v7015 = vld [vmem:[%s6775 + $0x3bc] sm:$0xf]
    %v7016 = vld [vmem:[%s6775 + $0x3c0] sm:$0xf]
    %v7017 = vld [vmem:[%s6775 + $0x3c4] sm:$0xf]
    %v7018 = vld [vmem:[%s6775 + $0x3c8] sm:$0xf]
    %v7019 = vld [vmem:[%s6775 + $0x3cc] sm:$0xf]
    %v7020 = vld [vmem:[%s6775 + $0x3d0] sm:$0xf]
    %v7021 = vld [vmem:[%s6775 + $0x3d4] sm:$0xf]
    %v7022 = vld [vmem:[%s6775 + $0x3d8] sm:$0xf]
    %v7023 = vld [vmem:[%s6775 + $0x3dc] sm:$0xf]
    %v7024 = vld [vmem:[%s6775 + $0x3e0] sm:$0xf]
    %v7025 = vld [vmem:[%s6775 + $0x3e4] sm:$0xf]
    %v7026 = vld [vmem:[%s6775 + $0x3e8] sm:$0xf]
    %v7027 = vld [vmem:[%s6775 + $0x3ec] sm:$0xf]
    %v7028 = vld [vmem:[%s6775 + $0x3f0] sm:$0xf]
    %v7029 = vld [vmem:[%s6775 + $0x3f4] sm:$0xf]
    %v7030 = vld [vmem:[%s6775 + $0x3f8] sm:$0xf]
    %v7031 = vld [vmem:[%s6775 + $0x3fc] sm:$0xf]
    %s7032 = scalar_lea.vmem %s10, 1
    %v7033 = vld [vmem:[%s7032] sm:$0x1]
    %v7035 = vlaneseq
    %v7036 = vshrl.u32 %v7035, 7
    %v7037 = vsub.s32 0, %v7036
    %v7038 = vrot.slane %v7033, %v7037
    %v7296 = vunpack.c.l.b16 %v6776
    %v7297 = vunpack.c.l.b16 %v6777
    %v7298 = vunpack.c.l.b16 %v6778
    %v7299 = vunpack.c.l.b16 %v6779
    %v7300 = vunpack.c.l.b16 %v6780
    %v7301 = vunpack.c.l.b16 %v6781
    %v7302 = vunpack.c.l.b16 %v6782
    %v7303 = vunpack.c.l.b16 %v6783
    %v7304 = vunpack.c.l.b16 %v6784
    %v7305 = vunpack.c.l.b16 %v6785
    %v7306 = vunpack.c.l.b16 %v6786
    %v7307 = vunpack.c.l.b16 %v6787
    %v7308 = vunpack.c.l.b16 %v6788
    %v7309 = vunpack.c.l.b16 %v6789
    %v7310 = vunpack.c.l.b16 %v6790
    %v7311 = vunpack.c.l.b16 %v6791
    %v7312 = vunpack.c.l.b16 %v6792
    %v7313 = vunpack.c.l.b16 %v6793
    %v7314 = vunpack.c.l.b16 %v6794
    %v7315 = vunpack.c.l.b16 %v6795
    %v7316 = vunpack.c.l.b16 %v6796
    %v7317 = vunpack.c.l.b16 %v6797
    %v7318 = vunpack.c.l.b16 %v6798
    %v7319 = vunpack.c.l.b16 %v6799
    %v7320 = vunpack.c.l.b16 %v6800
    %v7321 = vunpack.c.l.b16 %v6801
    %v7322 = vunpack.c.l.b16 %v6802
    %v7323 = vunpack.c.l.b16 %v6803
    %v7324 = vunpack.c.l.b16 %v6804
    %v7325 = vunpack.c.l.b16 %v6805
    %v7326 = vunpack.c.l.b16 %v6806
    %v7327 = vunpack.c.l.b16 %v6807
    %v7328 = vunpack.c.l.b16 %v6808
    %v7329 = vunpack.c.l.b16 %v6809
    %v7330 = vunpack.c.l.b16 %v6810
    %v7331 = vunpack.c.l.b16 %v6811
    %v7332 = vunpack.c.l.b16 %v6812
    %v7333 = vunpack.c.l.b16 %v6813
    %v7334 = vunpack.c.l.b16 %v6814
    %v7335 = vunpack.c.l.b16 %v6815
    %v7336 = vunpack.c.l.b16 %v6816
    %v7337 = vunpack.c.l.b16 %v6817
    %v7338 = vunpack.c.l.b16 %v6818
    %v7339 = vunpack.c.l.b16 %v6819
    %v7340 = vunpack.c.l.b16 %v6820
    %v7341 = vunpack.c.l.b16 %v6821
    %v7342 = vunpack.c.l.b16 %v6822
    %v7343 = vunpack.c.l.b16 %v6823
    %v7344 = vunpack.c.l.b16 %v6824
    %v7345 = vunpack.c.l.b16 %v6825
    %v7346 = vunpack.c.l.b16 %v6826
    %v7347 = vunpack.c.l.b16 %v6827
    %v7348 = vunpack.c.l.b16 %v6828
    %v7349 = vunpack.c.l.b16 %v6829
    %v7350 = vunpack.c.l.b16 %v6830
    %v7351 = vunpack.c.l.b16 %v6831
    %v7352 = vunpack.c.l.b16 %v6832
    %v7353 = vunpack.c.l.b16 %v6833
    %v7354 = vunpack.c.l.b16 %v6834
    %v7355 = vunpack.c.l.b16 %v6835
    %v7356 = vunpack.c.l.b16 %v6836
    %v7357 = vunpack.c.l.b16 %v6837
    %v7358 = vunpack.c.l.b16 %v6838
    %v7359 = vunpack.c.l.b16 %v6839
    %v7360 = vunpack.c.l.b16 %v6840
    %v7361 = vunpack.c.l.b16 %v6841
    %v7362 = vunpack.c.l.b16 %v6842
    %v7363 = vunpack.c.l.b16 %v6843
    %v7364 = vunpack.c.l.b16 %v6844
    %v7365 = vunpack.c.l.b16 %v6845
    %v7366 = vunpack.c.l.b16 %v6846
    %v7367 = vunpack.c.l.b16 %v6847
    %v7368 = vunpack.c.l.b16 %v6848
    %v7369 = vunpack.c.l.b16 %v6849
    %v7370 = vunpack.c.l.b16 %v6850
    %v7371 = vunpack.c.l.b16 %v6851
    %v7372 = vunpack.c.l.b16 %v6852
    %v7373 = vunpack.c.l.b16 %v6853
    %v7374 = vunpack.c.l.b16 %v6854
    %v7375 = vunpack.c.l.b16 %v6855
    %v7376 = vunpack.c.l.b16 %v6856
    %v7377 = vunpack.c.l.b16 %v6857
    %v7378 = vunpack.c.l.b16 %v6858
    %v7379 = vunpack.c.l.b16 %v6859
    %v7380 = vunpack.c.l.b16 %v6860
    %v7381 = vunpack.c.l.b16 %v6861
    %v7382 = vunpack.c.l.b16 %v6862
    %v7383 = vunpack.c.l.b16 %v6863
    %v7384 = vunpack.c.l.b16 %v6864
    %v7385 = vunpack.c.l.b16 %v6865
    %v7386 = vunpack.c.l.b16 %v6866
    %v7387 = vunpack.c.l.b16 %v6867
    %v7388 = vunpack.c.l.b16 %v6868
    %v7389 = vunpack.c.l.b16 %v6869
    %v7390 = vunpack.c.l.b16 %v6870
    %v7391 = vunpack.c.l.b16 %v6871
    %v7392 = vunpack.c.l.b16 %v6872
    %v7393 = vunpack.c.l.b16 %v6873
    %v7394 = vunpack.c.l.b16 %v6874
    %v7395 = vunpack.c.l.b16 %v6875
    %v7396 = vunpack.c.l.b16 %v6876
    %v7397 = vunpack.c.l.b16 %v6877
    %v7398 = vunpack.c.l.b16 %v6878
    %v7399 = vunpack.c.l.b16 %v6879
    %v7400 = vunpack.c.l.b16 %v6880
    %v7401 = vunpack.c.l.b16 %v6881
    %v7402 = vunpack.c.l.b16 %v6882
    %v7403 = vunpack.c.l.b16 %v6883
    %v7404 = vunpack.c.l.b16 %v6884
    %v7405 = vunpack.c.l.b16 %v6885
    %v7406 = vunpack.c.l.b16 %v6886
    %v7407 = vunpack.c.l.b16 %v6887
    %v7408 = vunpack.c.l.b16 %v6888
    %v7409 = vunpack.c.l.b16 %v6889
    %v7410 = vunpack.c.l.b16 %v6890
    %v7411 = vunpack.c.l.b16 %v6891
    %v7412 = vunpack.c.l.b16 %v6892
    %v7413 = vunpack.c.l.b16 %v6893
    %v7414 = vunpack.c.l.b16 %v6894
    %v7415 = vunpack.c.l.b16 %v6895
    %v7416 = vunpack.c.l.b16 %v6896
    %v7417 = vunpack.c.l.b16 %v6897
    %v7418 = vunpack.c.l.b16 %v6898
    %v7419 = vunpack.c.l.b16 %v6899
    %v7420 = vunpack.c.l.b16 %v6900
    %v7421 = vunpack.c.l.b16 %v6901
    %v7422 = vunpack.c.l.b16 %v6902
    %v7423 = vunpack.c.l.b16 %v6903
    %v7424 = vunpack.c.l.b16 %v6904
    %v7425 = vunpack.c.l.b16 %v6905
    %v7426 = vunpack.c.l.b16 %v6906
    %v7427 = vunpack.c.l.b16 %v6907
    %v7428 = vunpack.c.l.b16 %v6908
    %v7429 = vunpack.c.l.b16 %v6909
    %v7430 = vunpack.c.l.b16 %v6910
    %v7431 = vunpack.c.l.b16 %v6911
    %v7432 = vunpack.c.l.b16 %v6912
    %v7433 = vunpack.c.l.b16 %v6913
    %v7434 = vunpack.c.l.b16 %v6914
    %v7435 = vunpack.c.l.b16 %v6915
    %v7436 = vunpack.c.l.b16 %v6916
    %v7437 = vunpack.c.l.b16 %v6917
    %v7438 = vunpack.c.l.b16 %v6918
    %v7439 = vunpack.c.l.b16 %v6919
    %v7440 = vunpack.c.l.b16 %v6920
    %v7441 = vunpack.c.l.b16 %v6921
    %v7442 = vunpack.c.l.b16 %v6922
    %v7443 = vunpack.c.l.b16 %v6923
    %v7444 = vunpack.c.l.b16 %v6924
    %v7445 = vunpack.c.l.b16 %v6925
    %v7446 = vunpack.c.l.b16 %v6926
    %v7447 = vunpack.c.l.b16 %v6927
    %v7448 = vunpack.c.l.b16 %v6928
    %v7449 = vunpack.c.l.b16 %v6929
    %v7450 = vunpack.c.l.b16 %v6930
    %v7451 = vunpack.c.l.b16 %v6931
    %v7452 = vunpack.c.l.b16 %v6932
    %v7453 = vunpack.c.l.b16 %v6933
    %v7454 = vunpack.c.l.b16 %v6934
    %v7455 = vunpack.c.l.b16 %v6935
    %v7456 = vunpack.c.l.b16 %v6936
    %v7457 = vunpack.c.l.b16 %v6937
    %v7458 = vunpack.c.l.b16 %v6938
    %v7459 = vunpack.c.l.b16 %v6939
    %v7460 = vunpack.c.l.b16 %v6940
    %v7461 = vunpack.c.l.b16 %v6941
    %v7462 = vunpack.c.l.b16 %v6942
    %v7463 = vunpack.c.l.b16 %v6943
    %v7464 = vunpack.c.l.b16 %v6944
    %v7465 = vunpack.c.l.b16 %v6945
    %v7466 = vunpack.c.l.b16 %v6946
    %v7467 = vunpack.c.l.b16 %v6947
    %v7468 = vunpack.c.l.b16 %v6948
    %v7469 = vunpack.c.l.b16 %v6949
    %v7470 = vunpack.c.l.b16 %v6950
    %v7471 = vunpack.c.l.b16 %v6951
    %v7472 = vunpack.c.l.b16 %v6952
    %v7473 = vunpack.c.l.b16 %v6953
    %v7474 = vunpack.c.l.b16 %v6954
    %v7475 = vunpack.c.l.b16 %v6955
    %v7476 = vunpack.c.l.b16 %v6956
    %v7477 = vunpack.c.l.b16 %v6957
    %v7478 = vunpack.c.l.b16 %v6958
    %v7479 = vunpack.c.l.b16 %v6959
    %v7480 = vunpack.c.l.b16 %v6960
    %v7481 = vunpack.c.l.b16 %v6961
    %v7482 = vunpack.c.l.b16 %v6962
    %v7483 = vunpack.c.l.b16 %v6963
    %v7484 = vunpack.c.l.b16 %v6964
    %v7485 = vunpack.c.l.b16 %v6965
    %v7486 = vunpack.c.l.b16 %v6966
    %v7487 = vunpack.c.l.b16 %v6967
    %v7488 = vunpack.c.l.b16 %v6968
    %v7489 = vunpack.c.l.b16 %v6969
    %v7490 = vunpack.c.l.b16 %v6970
    %v7491 = vunpack.c.l.b16 %v6971
    %v7492 = vunpack.c.l.b16 %v6972
    %v7493 = vunpack.c.l.b16 %v6973
    %v7494 = vunpack.c.l.b16 %v6974
    %v7495 = vunpack.c.l.b16 %v6975
    %v7496 = vunpack.c.l.b16 %v6976
    %v7497 = vunpack.c.l.b16 %v6977
    %v7498 = vunpack.c.l.b16 %v6978
    %v7499 = vunpack.c.l.b16 %v6979
    %v7500 = vunpack.c.l.b16 %v6980
    %v7501 = vunpack.c.l.b16 %v6981
    %v7502 = vunpack.c.l.b16 %v6982
    %v7503 = vunpack.c.l.b16 %v6983
    %v7504 = vunpack.c.l.b16 %v6984
    %v7505 = vunpack.c.l.b16 %v6985
    %v7506 = vunpack.c.l.b16 %v6986
    %v7507 = vunpack.c.l.b16 %v6987
    %v7508 = vunpack.c.l.b16 %v6988
    %v7509 = vunpack.c.l.b16 %v6989
    %v7510 = vunpack.c.l.b16 %v6990
    %v7511 = vunpack.c.l.b16 %v6991
    %v7512 = vunpack.c.l.b16 %v6992
    %v7513 = vunpack.c.l.b16 %v6993
    %v7514 = vunpack.c.l.b16 %v6994
    %v7515 = vunpack.c.l.b16 %v6995
    %v7516 = vunpack.c.l.b16 %v6996
    %v7517 = vunpack.c.l.b16 %v6997
    %v7518 = vunpack.c.l.b16 %v6998
    %v7519 = vunpack.c.l.b16 %v6999
    %v7520 = vunpack.c.l.b16 %v7000
    %v7521 = vunpack.c.l.b16 %v7001
    %v7522 = vunpack.c.l.b16 %v7002
    %v7523 = vunpack.c.l.b16 %v7003
    %v7524 = vunpack.c.l.b16 %v7004
    %v7525 = vunpack.c.l.b16 %v7005
    %v7526 = vunpack.c.l.b16 %v7006
    %v7527 = vunpack.c.l.b16 %v7007
    %v7528 = vunpack.c.l.b16 %v7008
    %v7529 = vunpack.c.l.b16 %v7009
    %v7530 = vunpack.c.l.b16 %v7010
    %v7531 = vunpack.c.l.b16 %v7011
    %v7532 = vunpack.c.l.b16 %v7012
    %v7533 = vunpack.c.l.b16 %v7013
    %v7534 = vunpack.c.l.b16 %v7014
    %v7535 = vunpack.c.l.b16 %v7015
    %v7536 = vunpack.c.l.b16 %v7016
    %v7537 = vunpack.c.l.b16 %v7017
    %v7538 = vunpack.c.l.b16 %v7018
    %v7539 = vunpack.c.l.b16 %v7019
    %v7540 = vunpack.c.l.b16 %v7020
    %v7541 = vunpack.c.l.b16 %v7021
    %v7542 = vunpack.c.l.b16 %v7022
    %v7543 = vunpack.c.l.b16 %v7023
    %v7544 = vunpack.c.l.b16 %v7024
    %v7545 = vunpack.c.l.b16 %v7025
    %v7546 = vunpack.c.l.b16 %v7026
    %v7547 = vunpack.c.l.b16 %v7027
    %v7548 = vunpack.c.l.b16 %v7028
    %v7549 = vunpack.c.l.b16 %v7029
    %v7550 = vunpack.c.l.b16 %v7030
    %v7551 = vunpack.c.l.b16 %v7031
    %v7552 = vpack.c.b16 %v7297, %v7296
    %v7553 = vpack.c.b16 %v7299, %v7298
    %v7554 = vpack.c.b16 %v7301, %v7300
    %v7555 = vpack.c.b16 %v7303, %v7302
    %v7556 = vpack.c.b16 %v7305, %v7304
    %v7557 = vpack.c.b16 %v7307, %v7306
    %v7558 = vpack.c.b16 %v7309, %v7308
    %v7559 = vpack.c.b16 %v7311, %v7310
    %v7560 = vpack.c.b16 %v7313, %v7312
    %v7561 = vpack.c.b16 %v7315, %v7314
    %v7562 = vpack.c.b16 %v7317, %v7316
    %v7563 = vpack.c.b16 %v7319, %v7318
    %v7564 = vpack.c.b16 %v7321, %v7320
    %v7565 = vpack.c.b16 %v7323, %v7322
    %v7566 = vpack.c.b16 %v7325, %v7324
    %v7567 = vpack.c.b16 %v7327, %v7326
    %v7568 = vpack.c.b16 %v7329, %v7328
    %v7569 = vpack.c.b16 %v7331, %v7330
    %v7570 = vpack.c.b16 %v7333, %v7332
    %v7571 = vpack.c.b16 %v7335, %v7334
    %v7572 = vpack.c.b16 %v7337, %v7336
    %v7573 = vpack.c.b16 %v7339, %v7338
    %v7574 = vpack.c.b16 %v7341, %v7340
    %v7575 = vpack.c.b16 %v7343, %v7342
    %v7576 = vpack.c.b16 %v7345, %v7344
    %v7577 = vpack.c.b16 %v7347, %v7346
    %v7578 = vpack.c.b16 %v7349, %v7348
    %v7579 = vpack.c.b16 %v7351, %v7350
    %v7580 = vpack.c.b16 %v7353, %v7352
    %v7581 = vpack.c.b16 %v7355, %v7354
    %v7582 = vpack.c.b16 %v7357, %v7356
    %v7583 = vpack.c.b16 %v7359, %v7358
    %v7584 = vpack.c.b16 %v7361, %v7360
    %v7585 = vpack.c.b16 %v7363, %v7362
    %v7586 = vpack.c.b16 %v7365, %v7364
    %v7587 = vpack.c.b16 %v7367, %v7366
    %v7588 = vpack.c.b16 %v7369, %v7368
    %v7589 = vpack.c.b16 %v7371, %v7370
    %v7590 = vpack.c.b16 %v7373, %v7372
    %v7591 = vpack.c.b16 %v7375, %v7374
    %v7592 = vpack.c.b16 %v7377, %v7376
    %v7593 = vpack.c.b16 %v7379, %v7378
    %v7594 = vpack.c.b16 %v7381, %v7380
    %v7595 = vpack.c.b16 %v7383, %v7382
    %v7596 = vpack.c.b16 %v7385, %v7384
    %v7597 = vpack.c.b16 %v7387, %v7386
    %v7598 = vpack.c.b16 %v7389, %v7388
    %v7599 = vpack.c.b16 %v7391, %v7390
    %v7600 = vpack.c.b16 %v7393, %v7392
    %v7601 = vpack.c.b16 %v7395, %v7394
    %v7602 = vpack.c.b16 %v7397, %v7396
    %v7603 = vpack.c.b16 %v7399, %v7398
    %v7604 = vpack.c.b16 %v7401, %v7400
    %v7605 = vpack.c.b16 %v7403, %v7402
    %v7606 = vpack.c.b16 %v7405, %v7404
    %v7607 = vpack.c.b16 %v7407, %v7406
    %v7608 = vpack.c.b16 %v7409, %v7408
    %v7609 = vpack.c.b16 %v7411, %v7410
    %v7610 = vpack.c.b16 %v7413, %v7412
    %v7611 = vpack.c.b16 %v7415, %v7414
    %v7612 = vpack.c.b16 %v7417, %v7416
    %v7613 = vpack.c.b16 %v7419, %v7418
    %v7614 = vpack.c.b16 %v7421, %v7420
    %v7615 = vpack.c.b16 %v7423, %v7422
    %v7616 = vpack.c.b16 %v7425, %v7424
    %v7617 = vpack.c.b16 %v7427, %v7426
    %v7618 = vpack.c.b16 %v7429, %v7428
    %v7619 = vpack.c.b16 %v7431, %v7430
    %v7620 = vpack.c.b16 %v7433, %v7432
    %v7621 = vpack.c.b16 %v7435, %v7434
    %v7622 = vpack.c.b16 %v7437, %v7436
    %v7623 = vpack.c.b16 %v7439, %v7438
    %v7624 = vpack.c.b16 %v7441, %v7440
    %v7625 = vpack.c.b16 %v7443, %v7442
    %v7626 = vpack.c.b16 %v7445, %v7444
    %v7627 = vpack.c.b16 %v7447, %v7446
    %v7628 = vpack.c.b16 %v7449, %v7448
    %v7629 = vpack.c.b16 %v7451, %v7450
    %v7630 = vpack.c.b16 %v7453, %v7452
    %v7631 = vpack.c.b16 %v7455, %v7454
    %v7632 = vpack.c.b16 %v7457, %v7456
    %v7633 = vpack.c.b16 %v7459, %v7458
    %v7634 = vpack.c.b16 %v7461, %v7460
    %v7635 = vpack.c.b16 %v7463, %v7462
    %v7636 = vpack.c.b16 %v7465, %v7464
    %v7637 = vpack.c.b16 %v7467, %v7466
    %v7638 = vpack.c.b16 %v7469, %v7468
    %v7639 = vpack.c.b16 %v7471, %v7470
    %v7640 = vpack.c.b16 %v7473, %v7472
    %v7641 = vpack.c.b16 %v7475, %v7474
    %v7642 = vpack.c.b16 %v7477, %v7476
    %v7643 = vpack.c.b16 %v7479, %v7478
    %v7644 = vpack.c.b16 %v7481, %v7480
    %v7645 = vpack.c.b16 %v7483, %v7482
    %v7646 = vpack.c.b16 %v7485, %v7484
    %v7647 = vpack.c.b16 %v7487, %v7486
    %v7648 = vpack.c.b16 %v7489, %v7488
    %v7649 = vpack.c.b16 %v7491, %v7490
    %v7650 = vpack.c.b16 %v7493, %v7492
    %v7651 = vpack.c.b16 %v7495, %v7494
    %v7652 = vpack.c.b16 %v7497, %v7496
    %v7653 = vpack.c.b16 %v7499, %v7498
    %v7654 = vpack.c.b16 %v7501, %v7500
    %v7655 = vpack.c.b16 %v7503, %v7502
    %v7656 = vpack.c.b16 %v7505, %v7504
    %v7657 = vpack.c.b16 %v7507, %v7506
    %v7658 = vpack.c.b16 %v7509, %v7508
    %v7659 = vpack.c.b16 %v7511, %v7510
    %v7660 = vpack.c.b16 %v7513, %v7512
    %v7661 = vpack.c.b16 %v7515, %v7514
    %v7662 = vpack.c.b16 %v7517, %v7516
    %v7663 = vpack.c.b16 %v7519, %v7518
    %v7664 = vpack.c.b16 %v7521, %v7520
    %v7665 = vpack.c.b16 %v7523, %v7522
    %v7666 = vpack.c.b16 %v7525, %v7524
    %v7667 = vpack.c.b16 %v7527, %v7526
    %v7668 = vpack.c.b16 %v7529, %v7528
    %v7669 = vpack.c.b16 %v7531, %v7530
    %v7670 = vpack.c.b16 %v7533, %v7532
    %v7671 = vpack.c.b16 %v7535, %v7534
    %v7672 = vpack.c.b16 %v7537, %v7536
    %v7673 = vpack.c.b16 %v7539, %v7538
    %v7674 = vpack.c.b16 %v7541, %v7540
    %v7675 = vpack.c.b16 %v7543, %v7542
    %v7676 = vpack.c.b16 %v7545, %v7544
    %v7677 = vpack.c.b16 %v7547, %v7546
    %v7678 = vpack.c.b16 %v7549, %v7548
    %v7679 = vpack.c.b16 %v7551, %v7550
    %7808 = vmatprep.subr.bf16.mxu0 0
    %7809 = vmatpush1.bf16.msra.mxu0 %v7559
    %7810 = vmatprep.subr.bf16.mxu0 0
    %7811 = vmatpush1.bf16.msra.mxu0 %v7558
    %7812 = vmatprep.subr.bf16.mxu0 0
    %7813 = vmatpush1.bf16.msra.mxu0 %v7557
    %7814 = vmatprep.subr.bf16.mxu0 0
    %7815 = vmatpush1.bf16.msra.mxu0 %v7556
    %7816 = vmatprep.subr.bf16.mxu0 0
    %7817 = vmatpush1.bf16.msra.mxu0 %v7555
    %7818 = vmatprep.subr.bf16.mxu0 0
    %7819 = vmatpush1.bf16.msra.mxu0 %v7554
    %7820 = vmatprep.subr.bf16.mxu0 0
    %7821 = vmatpush1.bf16.msra.mxu0 %v7553
    %7822 = vmatprep.subr.bf16.mxu0 0
    %7823 = vmatpush1.bf16.msra.mxu0 %v7552
    %7824 = vmatprep.subr.bf16.mxu0 0
    %7825 = vmatpush2.bf16.msra.mxu0 %v7567
    %7826 = vmatprep.subr.bf16.mxu0 0
    %7827 = vmatpush2.bf16.msra.mxu0 %v7566
    %7828 = vmatprep.subr.bf16.mxu0 0
    %7829 = vmatpush2.bf16.msra.mxu0 %v7565
    %7830 = vmatprep.subr.bf16.mxu0 0
    %7831 = vmatpush2.bf16.msra.mxu0 %v7564
    %7832 = vmatprep.subr.bf16.mxu0 0
    %7833 = vmatpush2.bf16.msra.mxu0 %v7563
    %7834 = vmatprep.subr.bf16.mxu0 0
    %7835 = vmatpush2.bf16.msra.mxu0 %v7562
    %7836 = vmatprep.subr.bf16.mxu0 0
    %7837 = vmatpush2.bf16.msra.mxu0 %v7561
    %7838 = vmatprep.subr.bf16.mxu0 0
    %7839 = vmatpush2.bf16.msra.mxu0 %v7560
    %7840 = vmatprep.mubr.bf16.mxu0 %v6760
    %7841 = vmatmul.mubr.bf16.gmra.mxu0 %v6759
    %v7842 = vpop.f32.mrf.mxu0
    %v7843 = vadd.f32 %v7038, %v7842
    %v7844 = vpop.f32.mrf.mxu0
    %v7845 = vpop.f32.mrf.mxu0
    %v7846 = vadd.f32 %v7038, %v7845
    %v7847 = vpop.f32.mrf.mxu0
    %7848 = vdwg.mxu0
    %7849 = vmatprep.subr.bf16.mxu0 0
    %7850 = vmatpush1.bf16.msra.mxu0 %v7575
    %7851 = vmatprep.subr.bf16.mxu0 0
    %7852 = vmatpush1.bf16.msra.mxu0 %v7574
    %7853 = vmatprep.subr.bf16.mxu0 0
    %7854 = vmatpush1.bf16.msra.mxu0 %v7573
    %7855 = vmatprep.subr.bf16.mxu0 0
    %7856 = vmatpush1.bf16.msra.mxu0 %v7572
    %7857 = vmatprep.subr.bf16.mxu0 0
    %7858 = vmatpush1.bf16.msra.mxu0 %v7571
    %7859 = vmatprep.subr.bf16.mxu0 0
    %7860 = vmatpush1.bf16.msra.mxu0 %v7570
    %7861 = vmatprep.subr.bf16.mxu0 0
    %7862 = vmatpush1.bf16.msra.mxu0 %v7569
    %7863 = vmatprep.subr.bf16.mxu0 0
    %7864 = vmatpush1.bf16.msra.mxu0 %v7568
    %7865 = vmatprep.subr.bf16.mxu0 0
    %7866 = vmatpush2.bf16.msra.mxu0 %v7583
    %7867 = vmatprep.subr.bf16.mxu0 0
    %7868 = vmatpush2.bf16.msra.mxu0 %v7582
    %7869 = vmatprep.subr.bf16.mxu0 0
    %7870 = vmatpush2.bf16.msra.mxu0 %v7581
    %7871 = vmatprep.subr.bf16.mxu0 0
    %7872 = vmatpush2.bf16.msra.mxu0 %v7580
    %7873 = vmatprep.subr.bf16.mxu0 0
    %7874 = vmatpush2.bf16.msra.mxu0 %v7579
    %7875 = vmatprep.subr.bf16.mxu0 0
    %7876 = vmatpush2.bf16.msra.mxu0 %v7578
    %7877 = vmatprep.subr.bf16.mxu0 0
    %7878 = vmatpush2.bf16.msra.mxu0 %v7577
    %7879 = vmatprep.subr.bf16.mxu0 0
    %7880 = vmatpush2.bf16.msra.mxu0 %v7576
    %7881 = vmatprep.mubr.bf16.mxu0 %v6762
    %7882 = vmatmul.mubr.bf16.gmra.mxu0 %v6761
    %v7883 = vpop.f32.mrf.mxu0
    %v7884 = vadd.f32 %v7843, %v7883
    %v7885 = vpop.f32.mrf.mxu0
    %v7886 = vpop.f32.mrf.mxu0
    %v7887 = vadd.f32 %v7846, %v7886
    %v7888 = vpop.f32.mrf.mxu0
    %7889 = vdwg.mxu0
    %7890 = vmatprep.subr.bf16.mxu0 0
    %7891 = vmatpush1.bf16.msra.mxu0 %v7591
    %7892 = vmatprep.subr.bf16.mxu0 0
    %7893 = vmatpush1.bf16.msra.mxu0 %v7590
    %7894 = vmatprep.subr.bf16.mxu0 0
    %7895 = vmatpush1.bf16.msra.mxu0 %v7589
    %7896 = vmatprep.subr.bf16.mxu0 0
    %7897 = vmatpush1.bf16.msra.mxu0 %v7588
    %7898 = vmatprep.subr.bf16.mxu0 0
    %7899 = vmatpush1.bf16.msra.mxu0 %v7587
    %7900 = vmatprep.subr.bf16.mxu0 0
    %7901 = vmatpush1.bf16.msra.mxu0 %v7586
    %7902 = vmatprep.subr.bf16.mxu0 0
    %7903 = vmatpush1.bf16.msra.mxu0 %v7585
    %7904 = vmatprep.subr.bf16.mxu0 0
    %7905 = vmatpush1.bf16.msra.mxu0 %v7584
    %7906 = vmatprep.subr.bf16.mxu0 0
    %7907 = vmatpush2.bf16.msra.mxu0 %v7599
    %7908 = vmatprep.subr.bf16.mxu0 0
    %7909 = vmatpush2.bf16.msra.mxu0 %v7598
    %7910 = vmatprep.subr.bf16.mxu0 0
    %7911 = vmatpush2.bf16.msra.mxu0 %v7597
    %7912 = vmatprep.subr.bf16.mxu0 0
    %7913 = vmatpush2.bf16.msra.mxu0 %v7596
    %7914 = vmatprep.subr.bf16.mxu0 0
    %7915 = vmatpush2.bf16.msra.mxu0 %v7595
    %7916 = vmatprep.subr.bf16.mxu0 0
    %7917 = vmatpush2.bf16.msra.mxu0 %v7594
    %7918 = vmatprep.subr.bf16.mxu0 0
    %7919 = vmatpush2.bf16.msra.mxu0 %v7593
    %7920 = vmatprep.subr.bf16.mxu0 0
    %7921 = vmatpush2.bf16.msra.mxu0 %v7592
    %7922 = vmatprep.mubr.bf16.mxu0 %v6764
    %7923 = vmatmul.mubr.bf16.gmra.mxu0 %v6763
    %v7924 = vpop.f32.mrf.mxu0
    %v7925 = vadd.f32 %v7884, %v7924
    %v7926 = vpop.f32.mrf.mxu0
    %v7927 = vpop.f32.mrf.mxu0
    %v7928 = vadd.f32 %v7887, %v7927
    %v7929 = vpop.f32.mrf.mxu0
    %7930 = vdwg.mxu0
    %7931 = vmatprep.subr.bf16.mxu0 0
    %7932 = vmatpush1.bf16.msra.mxu0 %v7607
    %7933 = vmatprep.subr.bf16.mxu0 0
    %7934 = vmatpush1.bf16.msra.mxu0 %v7606
    %7935 = vmatprep.subr.bf16.mxu0 0
    %7936 = vmatpush1.bf16.msra.mxu0 %v7605
    %7937 = vmatprep.subr.bf16.mxu0 0
    %7938 = vmatpush1.bf16.msra.mxu0 %v7604
    %7939 = vmatprep.subr.bf16.mxu0 0
    %7940 = vmatpush1.bf16.msra.mxu0 %v7603
    %7941 = vmatprep.subr.bf16.mxu0 0
    %7942 = vmatpush1.bf16.msra.mxu0 %v7602
    %7943 = vmatprep.subr.bf16.mxu0 0
    %7944 = vmatpush1.bf16.msra.mxu0 %v7601
    %7945 = vmatprep.subr.bf16.mxu0 0
    %7946 = vmatpush1.bf16.msra.mxu0 %v7600
    %7947 = vmatprep.subr.bf16.mxu0 0
    %7948 = vmatpush2.bf16.msra.mxu0 %v7615
    %7949 = vmatprep.subr.bf16.mxu0 0
    %7950 = vmatpush2.bf16.msra.mxu0 %v7614
    %7951 = vmatprep.subr.bf16.mxu0 0
    %7952 = vmatpush2.bf16.msra.mxu0 %v7613
    %7953 = vmatprep.subr.bf16.mxu0 0
    %7954 = vmatpush2.bf16.msra.mxu0 %v7612
    %7955 = vmatprep.subr.bf16.mxu0 0
    %7956 = vmatpush2.bf16.msra.mxu0 %v7611
    %7957 = vmatprep.subr.bf16.mxu0 0
    %7958 = vmatpush2.bf16.msra.mxu0 %v7610
    %7959 = vmatprep.subr.bf16.mxu0 0
    %7960 = vmatpush2.bf16.msra.mxu0 %v7609
    %7961 = vmatprep.subr.bf16.mxu0 0
    %7962 = vmatpush2.bf16.msra.mxu0 %v7608
    %7963 = vmatprep.mubr.bf16.mxu0 %v6766
    %7964 = vmatmul.mubr.bf16.gmra.mxu0 %v6765
    %v7965 = vpop.f32.mrf.mxu0
    %v7966 = vadd.f32 %v7925, %v7965
    %v7967 = vpop.f32.mrf.mxu0
    %v7968 = vpop.f32.mrf.mxu0
    %v7969 = vadd.f32 %v7928, %v7968
    %v7970 = vpop.f32.mrf.mxu0
    %7971 = vdwg.mxu0
    %7972 = vmatprep.subr.bf16.mxu0 0
    %7973 = vmatpush1.bf16.msra.mxu0 %v7623
    %7974 = vmatprep.subr.bf16.mxu0 0
    %7975 = vmatpush1.bf16.msra.mxu0 %v7622
    %7976 = vmatprep.subr.bf16.mxu0 0
    %7977 = vmatpush1.bf16.msra.mxu0 %v7621
    %7978 = vmatprep.subr.bf16.mxu0 0
    %7979 = vmatpush1.bf16.msra.mxu0 %v7620
    %7980 = vmatprep.subr.bf16.mxu0 0
    %7981 = vmatpush1.bf16.msra.mxu0 %v7619
    %7982 = vmatprep.subr.bf16.mxu0 0
    %7983 = vmatpush1.bf16.msra.mxu0 %v7618
    %7984 = vmatprep.subr.bf16.mxu0 0
    %7985 = vmatpush1.bf16.msra.mxu0 %v7617
    %7986 = vmatprep.subr.bf16.mxu0 0
    %7987 = vmatpush1.bf16.msra.mxu0 %v7616
    %7988 = vmatprep.subr.bf16.mxu0 0
    %7989 = vmatpush2.bf16.msra.mxu0 %v7631
    %7990 = vmatprep.subr.bf16.mxu0 0
    %7991 = vmatpush2.bf16.msra.mxu0 %v7630
    %7992 = vmatprep.subr.bf16.mxu0 0
    %7993 = vmatpush2.bf16.msra.mxu0 %v7629
    %7994 = vmatprep.subr.bf16.mxu0 0
    %7995 = vmatpush2.bf16.msra.mxu0 %v7628
    %7996 = vmatprep.subr.bf16.mxu0 0
    %7997 = vmatpush2.bf16.msra.mxu0 %v7627
    %7998 = vmatprep.subr.bf16.mxu0 0
    %7999 = vmatpush2.bf16.msra.mxu0 %v7626
    %8000 = vmatprep.subr.bf16.mxu0 0
    %8001 = vmatpush2.bf16.msra.mxu0 %v7625
    %8002 = vmatprep.subr.bf16.mxu0 0
    %8003 = vmatpush2.bf16.msra.mxu0 %v7624
    %8004 = vmatprep.mubr.bf16.mxu0 %v6768
    %8005 = vmatmul.mubr.bf16.gmra.mxu0 %v6767
    %v8006 = vpop.f32.mrf.mxu0
    %v8007 = vadd.f32 %v7966, %v8006
    %v8008 = vpop.f32.mrf.mxu0
    %v8009 = vpop.f32.mrf.mxu0
    %v8010 = vadd.f32 %v7969, %v8009
    %v8011 = vpop.f32.mrf.mxu0
    %8012 = vdwg.mxu0
    %8013 = vmatprep.subr.bf16.mxu0 0
    %8014 = vmatpush1.bf16.msra.mxu0 %v7639
    %8015 = vmatprep.subr.bf16.mxu0 0
    %8016 = vmatpush1.bf16.msra.mxu0 %v7638
    %8017 = vmatprep.subr.bf16.mxu0 0
    %8018 = vmatpush1.bf16.msra.mxu0 %v7637
    %8019 = vmatprep.subr.bf16.mxu0 0
    %8020 = vmatpush1.bf16.msra.mxu0 %v7636
    %8021 = vmatprep.subr.bf16.mxu0 0
    %8022 = vmatpush1.bf16.msra.mxu0 %v7635
    %8023 = vmatprep.subr.bf16.mxu0 0
    %8024 = vmatpush1.bf16.msra.mxu0 %v7634
    %8025 = vmatprep.subr.bf16.mxu0 0
    %8026 = vmatpush1.bf16.msra.mxu0 %v7633
    %8027 = vmatprep.subr.bf16.mxu0 0
    %8028 = vmatpush1.bf16.msra.mxu0 %v7632
    %8029 = vmatprep.subr.bf16.mxu0 0
    %8030 = vmatpush2.bf16.msra.mxu0 %v7647
    %8031 = vmatprep.subr.bf16.mxu0 0
    %8032 = vmatpush2.bf16.msra.mxu0 %v7646
    %8033 = vmatprep.subr.bf16.mxu0 0
    %8034 = vmatpush2.bf16.msra.mxu0 %v7645
    %8035 = vmatprep.subr.bf16.mxu0 0
    %8036 = vmatpush2.bf16.msra.mxu0 %v7644
    %8037 = vmatprep.subr.bf16.mxu0 0
    %8038 = vmatpush2.bf16.msra.mxu0 %v7643
    %8039 = vmatprep.subr.bf16.mxu0 0
    %8040 = vmatpush2.bf16.msra.mxu0 %v7642
    %8041 = vmatprep.subr.bf16.mxu0 0
    %8042 = vmatpush2.bf16.msra.mxu0 %v7641
    %8043 = vmatprep.subr.bf16.mxu0 0
    %8044 = vmatpush2.bf16.msra.mxu0 %v7640
    %8045 = vmatprep.mubr.bf16.mxu0 %v6770
    %8046 = vmatmul.mubr.bf16.gmra.mxu0 %v6769
    %v8047 = vpop.f32.mrf.mxu0
    %v8048 = vadd.f32 %v8007, %v8047
    %v8049 = vpop.f32.mrf.mxu0
    %v8050 = vpop.f32.mrf.mxu0
    %v8051 = vadd.f32 %v8010, %v8050
    %v8052 = vpop.f32.mrf.mxu0
    %8053 = vdwg.mxu0
    %8054 = vmatprep.subr.bf16.mxu0 0
    %8055 = vmatpush1.bf16.msra.mxu0 %v7655
    %8056 = vmatprep.subr.bf16.mxu0 0
    %8057 = vmatpush1.bf16.msra.mxu0 %v7654
    %8058 = vmatprep.subr.bf16.mxu0 0
    %8059 = vmatpush1.bf16.msra.mxu0 %v7653
    %8060 = vmatprep.subr.bf16.mxu0 0
    %8061 = vmatpush1.bf16.msra.mxu0 %v7652
    %8062 = vmatprep.subr.bf16.mxu0 0
    %8063 = vmatpush1.bf16.msra.mxu0 %v7651
    %8064 = vmatprep.subr.bf16.mxu0 0
    %8065 = vmatpush1.bf16.msra.mxu0 %v7650
    %8066 = vmatprep.subr.bf16.mxu0 0
    %8067 = vmatpush1.bf16.msra.mxu0 %v7649
    %8068 = vmatprep.subr.bf16.mxu0 0
    %8069 = vmatpush1.bf16.msra.mxu0 %v7648
    %8070 = vmatprep.subr.bf16.mxu0 0
    %8071 = vmatpush2.bf16.msra.mxu0 %v7663
    %8072 = vmatprep.subr.bf16.mxu0 0
    %8073 = vmatpush2.bf16.msra.mxu0 %v7662
    %8074 = vmatprep.subr.bf16.mxu0 0
    %8075 = vmatpush2.bf16.msra.mxu0 %v7661
    %8076 = vmatprep.subr.bf16.mxu0 0
    %8077 = vmatpush2.bf16.msra.mxu0 %v7660
    %8078 = vmatprep.subr.bf16.mxu0 0
    %8079 = vmatpush2.bf16.msra.mxu0 %v7659
    %8080 = vmatprep.subr.bf16.mxu0 0
    %8081 = vmatpush2.bf16.msra.mxu0 %v7658
    %8082 = vmatprep.subr.bf16.mxu0 0
    %8083 = vmatpush2.bf16.msra.mxu0 %v7657
    %8084 = vmatprep.subr.bf16.mxu0 0
    %8085 = vmatpush2.bf16.msra.mxu0 %v7656
    %8086 = vmatprep.mubr.bf16.mxu0 %v6772
    %8087 = vmatmul.mubr.bf16.gmra.mxu0 %v6771
    %v8088 = vpop.f32.mrf.mxu0
    %v8089 = vadd.f32 %v8048, %v8088
    %v8090 = vpop.f32.mrf.mxu0
    %v8091 = vpop.f32.mrf.mxu0
    %v8092 = vadd.f32 %v8051, %v8091
    %v8093 = vpop.f32.mrf.mxu0
    %8094 = vdwg.mxu0
    %8095 = vmatprep.subr.bf16.mxu0 0
    %8096 = vmatpush1.bf16.msra.mxu0 %v7671
    %8097 = vmatprep.subr.bf16.mxu0 0
    %8098 = vmatpush1.bf16.msra.mxu0 %v7670
    %8099 = vmatprep.subr.bf16.mxu0 0
    %8100 = vmatpush1.bf16.msra.mxu0 %v7669
    %8101 = vmatprep.subr.bf16.mxu0 0
    %8102 = vmatpush1.bf16.msra.mxu0 %v7668
    %8103 = vmatprep.subr.bf16.mxu0 0
    %8104 = vmatpush1.bf16.msra.mxu0 %v7667
    %8105 = vmatprep.subr.bf16.mxu0 0
    %8106 = vmatpush1.bf16.msra.mxu0 %v7666
    %8107 = vmatprep.subr.bf16.mxu0 0
    %8108 = vmatpush1.bf16.msra.mxu0 %v7665
    %8109 = vmatprep.subr.bf16.mxu0 0
    %8110 = vmatpush1.bf16.msra.mxu0 %v7664
    %8111 = vmatprep.subr.bf16.mxu0 0
    %8112 = vmatpush2.bf16.msra.mxu0 %v7679
    %8113 = vmatprep.subr.bf16.mxu0 0
    %8114 = vmatpush2.bf16.msra.mxu0 %v7678
    %8115 = vmatprep.subr.bf16.mxu0 0
    %8116 = vmatpush2.bf16.msra.mxu0 %v7677
    %8117 = vmatprep.subr.bf16.mxu0 0
    %8118 = vmatpush2.bf16.msra.mxu0 %v7676
    %8119 = vmatprep.subr.bf16.mxu0 0
    %8120 = vmatpush2.bf16.msra.mxu0 %v7675
    %8121 = vmatprep.subr.bf16.mxu0 0
    %8122 = vmatpush2.bf16.msra.mxu0 %v7674
    %8123 = vmatprep.subr.bf16.mxu0 0
    %8124 = vmatpush2.bf16.msra.mxu0 %v7673
    %8125 = vmatprep.subr.bf16.mxu0 0
    %8126 = vmatpush2.bf16.msra.mxu0 %v7672
    %8127 = vmatprep.mubr.bf16.mxu0 %v6774
    %8128 = vmatmul.mubr.bf16.gmra.mxu0 %v6773
    %v8129 = vpop.f32.mrf.mxu0
    %v8130 = vadd.f32 %v8089, %v8129
    %v8131 = vpop.f32.mrf.mxu0
    %v8132 = vpop.f32.mrf.mxu0
    %v8133 = vadd.f32 %v8092, %v8132
    %v8134 = vpop.f32.mrf.mxu0
    %8135 = vdwg.mxu0
    %v8138 = vcombine.high %v8130, %v8130
    %v8140 = vunpack.c.l.s4 1983009808
    %v8141 = vunpack.c.0.s8 %v8140
    %v8142 = vlaneseq
    %v8143 = vshrl.u32 %v8142, 7
    %v8144 = vsub.s32 %v8141, %v8143
    %v8145 = vrot.slane %v8130, %v8144
    %v8147 = vunpack.c.l.s4 1983009808
    %v8148 = vunpack.c.0.s8 %v8147
    %v8149 = vlaneseq
    %v8150 = vshrl.u32 %v8149, 7
    %v8151 = vsub.s32 %v8148, %v8150
    %v8152 = vrot.slane %v8138, %v8151
    %v8153 = vcombine.high %v8145, %v8145
    %v8154 = vcombine.high %v8152, %v8152
    %v8155 = vcombine.high %v8133, %v8133
    %v8157 = vunpack.c.l.s4 1983009808
    %v8158 = vunpack.c.0.s8 %v8157
    %v8159 = vlaneseq
    %v8160 = vshrl.u32 %v8159, 7
    %v8161 = vsub.s32 %v8158, %v8160
    %v8162 = vrot.slane %v8133, %v8161
    %v8164 = vunpack.c.l.s4 1983009808
    %v8165 = vunpack.c.0.s8 %v8164
    %v8166 = vlaneseq
    %v8167 = vshrl.u32 %v8166, 7
    %v8168 = vsub.s32 %v8165, %v8167
    %v8169 = vrot.slane %v8155, %v8168
    %v8170 = vcombine.high %v8162, %v8162
    %v8171 = vcombine.high %v8169, %v8169
    %v8180 = vadd.f32 %v6049, %v8145
    %v8181 = vadd.f32 %v6050, %v8153
    %v8182 = vadd.f32 %v6051, %v8152
    %v8183 = vadd.f32 %v6052, %v8154
    %v8184 = vadd.f32 %v6053, %v8162
    %v8185 = vadd.f32 %v6054, %v8170
    %v8186 = vadd.f32 %v6055, %v8169
    %v8187 = vadd.f32 %v6056, %v8171
    %v8196 = vcombine.low %v8180, %v8181
    %v8197 = vcombine.low %v8182, %v8183
    %v8199 = vunpack.c.l.s4 1983009808
    %v8200 = vunpack.c.0.s8 %v8199
    %v8201 = vlaneseq
    %v8202 = vshrl.u32 %v8201, 7
    %v8203 = vsub.s32 %v8200, %v8202
    %v8204 = vrot.slane %v8196, %v8203
    %v8206 = vunpack.c.l.s4 1983009808
    %v8207 = vunpack.c.0.s8 %v8206
    %v8208 = vlaneseq
    %v8209 = vshrl.u32 %v8208, 7
    %v8210 = vsub.s32 %v8207, %v8209
    %v8211 = vrot.slane %v8197, %v8210
    %v8212 = vcombine.low %v8204, %v8211
    %v8213 = vcombine.low %v8184, %v8185
    %v8214 = vcombine.low %v8186, %v8187
    %v8216 = vunpack.c.l.s4 1983009808
    %v8217 = vunpack.c.0.s8 %v8216
    %v8218 = vlaneseq
    %v8219 = vshrl.u32 %v8218, 7
    %v8220 = vsub.s32 %v8217, %v8219
    %v8221 = vrot.slane %v8213, %v8220
    %v8223 = vunpack.c.l.s4 1983009808
    %v8224 = vunpack.c.0.s8 %v8223
    %v8225 = vlaneseq
    %v8226 = vshrl.u32 %v8225, 7
    %v8227 = vsub.s32 %v8224, %v8226
    %v8228 = vrot.slane %v8214, %v8227
    %v8229 = vcombine.low %v8221, %v8228
    %v8232 = vsel %vm165, %v8212, 0.0
    %8233 = vadd.xlane.f32.xlu0 %v8232
    %v8234 = vpop.xlane.xlu0 %8233
    %v8235 = vsel %vm165, %v8229, 0.0
    %8236 = vadd.xlane.f32.xlu0 %v8235
    %v8237 = vpop.xlane.xlu0 %8236
    %v8238 = vmul.f32 %v8234, %v1561
    %v8239 = vmul.f32 %v8237, %v1561
    %v8243 = vunpack.c.l.s4 269488144
    %v8244 = vunpack.c.0.s8 %v8243
    %v8245 = vlaneseq
    %v8246 = vshrl.u32 %v8245, 7
    %v8247 = vsub.s32 %v8244, %v8246
    %v8248 = vrot.slane %v8238, %v8247
    %v8250 = vunpack.c.l.s4 842150450
    %v8251 = vunpack.c.0.s8 %v8250
    %v8252 = vlaneseq
    %v8253 = vshrl.u32 %v8252, 7
    %v8254 = vsub.s32 %v8251, %v8253
    %v8255 = vrot.slane %v8238, %v8254
    %v8257 = vunpack.c.l.s4 1414812756
    %v8258 = vunpack.c.0.s8 %v8257
    %v8259 = vlaneseq
    %v8260 = vshrl.u32 %v8259, 7
    %v8261 = vsub.s32 %v8258, %v8260
    %v8262 = vrot.slane %v8238, %v8261
    %v8264 = vunpack.c.l.s4 1987475062
    %v8265 = vunpack.c.0.s8 %v8264
    %v8266 = vlaneseq
    %v8267 = vshrl.u32 %v8266, 7
    %v8268 = vsub.s32 %v8265, %v8267
    %v8269 = vrot.slane %v8238, %v8268
    %v8271 = vunpack.c.l.s4 269488144
    %v8272 = vunpack.c.0.s8 %v8271
    %v8273 = vlaneseq
    %v8274 = vshrl.u32 %v8273, 7
    %v8275 = vsub.s32 %v8272, %v8274
    %v8276 = vrot.slane %v8239, %v8275
    %v8278 = vunpack.c.l.s4 842150450
    %v8279 = vunpack.c.0.s8 %v8278
    %v8280 = vlaneseq
    %v8281 = vshrl.u32 %v8280, 7
    %v8282 = vsub.s32 %v8279, %v8281
    %v8283 = vrot.slane %v8239, %v8282
    %v8285 = vunpack.c.l.s4 1414812756
    %v8286 = vunpack.c.0.s8 %v8285
    %v8287 = vlaneseq
    %v8288 = vshrl.u32 %v8287, 7
    %v8289 = vsub.s32 %v8286, %v8288
    %v8290 = vrot.slane %v8239, %v8289
    %v8292 = vunpack.c.l.s4 1987475062
    %v8293 = vunpack.c.0.s8 %v8292
    %v8294 = vlaneseq
    %v8295 = vshrl.u32 %v8294, 7
    %v8296 = vsub.s32 %v8293, %v8295
    %v8297 = vrot.slane %v8239, %v8296
    %v8306 = vsub.f32 %v8180, %v8248
    %v8307 = vsub.f32 %v8181, %v8255
    %v8308 = vsub.f32 %v8182, %v8262
    %v8309 = vsub.f32 %v8183, %v8269
    %v8310 = vsub.f32 %v8184, %v8276
    %v8311 = vsub.f32 %v8185, %v8283
    %v8312 = vsub.f32 %v8186, %v8290
    %v8313 = vsub.f32 %v8187, %v8297
    %v8314 = vmul.f32 %v8306, %v8306
    %v8315 = vmul.f32 %v8307, %v8307
    %v8316 = vmul.f32 %v8308, %v8308
    %v8317 = vmul.f32 %v8309, %v8309
    %v8318 = vmul.f32 %v8310, %v8310
    %v8319 = vmul.f32 %v8311, %v8311
    %v8320 = vmul.f32 %v8312, %v8312
    %v8321 = vmul.f32 %v8313, %v8313
    %v8330 = vcombine.low %v8314, %v8315
    %v8331 = vcombine.low %v8316, %v8317
    %v8333 = vunpack.c.l.s4 1983009808
    %v8334 = vunpack.c.0.s8 %v8333
    %v8335 = vlaneseq
    %v8336 = vshrl.u32 %v8335, 7
    %v8337 = vsub.s32 %v8334, %v8336
    %v8338 = vrot.slane %v8330, %v8337
    %v8340 = vunpack.c.l.s4 1983009808
    %v8341 = vunpack.c.0.s8 %v8340
    %v8342 = vlaneseq
    %v8343 = vshrl.u32 %v8342, 7
    %v8344 = vsub.s32 %v8341, %v8343
    %v8345 = vrot.slane %v8331, %v8344
    %v8346 = vcombine.low %v8338, %v8345
    %v8347 = vcombine.low %v8318, %v8319
    %v8348 = vcombine.low %v8320, %v8321
    %v8350 = vunpack.c.l.s4 1983009808
    %v8351 = vunpack.c.0.s8 %v8350
    %v8352 = vlaneseq
    %v8353 = vshrl.u32 %v8352, 7
    %v8354 = vsub.s32 %v8351, %v8353
    %v8355 = vrot.slane %v8347, %v8354
    %v8357 = vunpack.c.l.s4 1983009808
    %v8358 = vunpack.c.0.s8 %v8357
    %v8359 = vlaneseq
    %v8360 = vshrl.u32 %v8359, 7
    %v8361 = vsub.s32 %v8358, %v8360
    %v8362 = vrot.slane %v8348, %v8361
    %v8363 = vcombine.low %v8355, %v8362
    %v8366 = vsel %vm165, %v8346, 0.0
    %8367 = vadd.xlane.f32.xlu0 %v8366
    %v8368 = vpop.xlane.xlu0 %8367
    %v8369 = vsel %vm165, %v8363, 0.0
    %8370 = vadd.xlane.f32.xlu0 %v8369
    %v8371 = vpop.xlane.xlu0 %8370
    %v8372 = vmul.f32 %v8368, %v1561
    %v8373 = vmul.f32 %v8371, %v1561
    %v8374 = vadd.f32 %v8372, 1e-05
    %v8375 = vadd.f32 %v8373, 1e-05
    %v8376 = vrsqrt.pop %v8374
    %v8377 = vrsqrt.pop %v8375
    %v8381 = vunpack.c.l.s4 269488144
    %v8382 = vunpack.c.0.s8 %v8381
    %v8383 = vlaneseq
    %v8384 = vshrl.u32 %v8383, 7
    %v8385 = vsub.s32 %v8382, %v8384
    %v8386 = vrot.slane %v8376, %v8385
    %v8388 = vunpack.c.l.s4 842150450
    %v8389 = vunpack.c.0.s8 %v8388
    %v8390 = vlaneseq
    %v8391 = vshrl.u32 %v8390, 7
    %v8392 = vsub.s32 %v8389, %v8391
    %v8393 = vrot.slane %v8376, %v8392
    %v8395 = vunpack.c.l.s4 1414812756
    %v8396 = vunpack.c.0.s8 %v8395
    %v8397 = vlaneseq
    %v8398 = vshrl.u32 %v8397, 7
    %v8399 = vsub.s32 %v8396, %v8398
    %v8400 = vrot.slane %v8376, %v8399
    %v8402 = vunpack.c.l.s4 1987475062
    %v8403 = vunpack.c.0.s8 %v8402
    %v8404 = vlaneseq
    %v8405 = vshrl.u32 %v8404, 7
    %v8406 = vsub.s32 %v8403, %v8405
    %v8407 = vrot.slane %v8376, %v8406
    %v8409 = vunpack.c.l.s4 269488144
    %v8410 = vunpack.c.0.s8 %v8409
    %v8411 = vlaneseq
    %v8412 = vshrl.u32 %v8411, 7
    %v8413 = vsub.s32 %v8410, %v8412
    %v8414 = vrot.slane %v8377, %v8413
    %v8416 = vunpack.c.l.s4 842150450
    %v8417 = vunpack.c.0.s8 %v8416
    %v8418 = vlaneseq
    %v8419 = vshrl.u32 %v8418, 7
    %v8420 = vsub.s32 %v8417, %v8419
    %v8421 = vrot.slane %v8377, %v8420
    %v8423 = vunpack.c.l.s4 1414812756
    %v8424 = vunpack.c.0.s8 %v8423
    %v8425 = vlaneseq
    %v8426 = vshrl.u32 %v8425, 7
    %v8427 = vsub.s32 %v8424, %v8426
    %v8428 = vrot.slane %v8377, %v8427
    %v8430 = vunpack.c.l.s4 1987475062
    %v8431 = vunpack.c.0.s8 %v8430
    %v8432 = vlaneseq
    %v8433 = vshrl.u32 %v8432, 7
    %v8434 = vsub.s32 %v8431, %v8433
    %v8435 = vrot.slane %v8377, %v8434
    %v8444 = vmul.f32 %v8306, %v8386
    %v8445 = vmul.f32 %v8307, %v8393
    %v8446 = vmul.f32 %v8308, %v8400
    %v8447 = vmul.f32 %v8309, %v8407
    %v8448 = vmul.f32 %v8310, %v8414
    %v8449 = vmul.f32 %v8311, %v8421
    %v8450 = vmul.f32 %v8312, %v8428
    %v8451 = vmul.f32 %v8313, %v8435
    %s8452 = scalar_lea.vmem %s11, 1
    %v8453 = vld [vmem:[%s8452] sm:$0x1]
    %v8455 = vlaneseq
    %v8456 = vshrl.u32 %v8455, 7
    %v8457 = vsub.s32 0, %v8456
    %v8458 = vrot.slane %v8453, %v8457
    %v8459 = vcombine.high %v8458, %v8458
    %v8461 = vunpack.c.l.s4 1983009808
    %v8462 = vunpack.c.0.s8 %v8461
    %v8463 = vlaneseq
    %v8464 = vshrl.u32 %v8463, 7
    %v8465 = vsub.s32 %v8462, %v8464
    %v8466 = vrot.slane %v8458, %v8465
    %v8468 = vunpack.c.l.s4 1983009808
    %v8469 = vunpack.c.0.s8 %v8468
    %v8470 = vlaneseq
    %v8471 = vshrl.u32 %v8470, 7
    %v8472 = vsub.s32 %v8469, %v8471
    %v8473 = vrot.slane %v8459, %v8472
    %v8474 = vcombine.high %v8466, %v8466
    %v8475 = vcombine.high %v8473, %v8473
    %v8480 = vmul.f32 %v8444, %v8466
    %v8481 = vmul.f32 %v8445, %v8474
    %v8482 = vmul.f32 %v8446, %v8473
    %v8483 = vmul.f32 %v8447, %v8475
    %v8484 = vmul.f32 %v8448, %v8466
    %v8485 = vmul.f32 %v8449, %v8474
    %v8486 = vmul.f32 %v8450, %v8473
    %v8487 = vmul.f32 %v8451, %v8475
    %s8488 = scalar_lea.vmem %s12, 1
    %v8489 = vld [vmem:[%s8488] sm:$0x1]
    %v8491 = vlaneseq
    %v8492 = vshrl.u32 %v8491, 7
    %v8493 = vsub.s32 0, %v8492
    %v8494 = vrot.slane %v8489, %v8493
    %v8495 = vcombine.high %v8494, %v8494
    %v8497 = vunpack.c.l.s4 1983009808
    %v8498 = vunpack.c.0.s8 %v8497
    %v8499 = vlaneseq
    %v8500 = vshrl.u32 %v8499, 7
    %v8501 = vsub.s32 %v8498, %v8500
    %v8502 = vrot.slane %v8494, %v8501
    %v8504 = vunpack.c.l.s4 1983009808
    %v8505 = vunpack.c.0.s8 %v8504
    %v8506 = vlaneseq
    %v8507 = vshrl.u32 %v8506, 7
    %v8508 = vsub.s32 %v8505, %v8507
    %v8509 = vrot.slane %v8495, %v8508
    %v8510 = vcombine.high %v8502, %v8502
    %v8511 = vcombine.high %v8509, %v8509
    %v8516 = vadd.f32 %v8480, %v8502
    %v8517 = vadd.f32 %v8481, %v8510
    %v8518 = vadd.f32 %v8482, %v8509
    %v8519 = vadd.f32 %v8483, %v8511
    %v8520 = vadd.f32 %v8484, %v8502
    %v8521 = vadd.f32 %v8485, %v8510
    %v8522 = vadd.f32 %v8486, %v8509
    %v8523 = vadd.f32 %v8487, %v8511
    %vm8524 = vcmask 254976
    %8525 = vst.msk [vmem:[#allocation2] sm:$0x3] %vm8524, %v8516
    %8526 = vst.msk [vmem:[#allocation2 + $0x2] sm:$0x3] %vm8524, %v8517
    %8527 = vst.msk [vmem:[#allocation2 + $0x4] sm:$0x3] %vm8524, %v8518
    %8528 = vst.msk [vmem:[#allocation2 + $0x6] sm:$0x3] %vm8524, %v8519
    %8529 = vst.msk [vmem:[#allocation2 + $0x8] sm:$0x3] %vm8524, %v8520
    %8530 = vst.msk [vmem:[#allocation2 + $0xa] sm:$0x3] %vm8524, %v8521
    %8531 = vst.msk [vmem:[#allocation2 + $0xc] sm:$0x3] %vm8524, %v8522
    %8532 = vst.msk [vmem:[#allocation2 + $0xe] sm:$0x3] %vm8524, %v8523
    // Predicated region
    $region54: #{tpi_encoder_pallas.1} parent=1 // pred_check
      _
    $region55: #{tpi_encoder_pallas.1} parent=1 // pred_check_branch
      %8534 = sbr.rel (0) target = $region57
    $region56: #{tpi_encoder_pallas.1} parent=1 // pred_region
      %s8536 = ssub.s32 256, 256
      %8537 = vsyncadd [#allocation3], %s8536
      %s8538 = sshll.u32 [#allocation2], 4
      %s8539 = int_to_ptr.vmem [resolvable:$true] %s8538
      %8544 = dma.vmem_to_hbm [thread:$0]  %s8539, 256, %s13, [#allocation3], 32, 32, 2
    $region57: #{tpi_encoder_pallas.1} parent=1 // pred_fallthru
      _
    // Predicated region
    $region58: #{tpi_encoder_pallas.1} parent=1 // pred_check
      _
    $region59: #{tpi_encoder_pallas.1} parent=1 // pred_check_branch
      %8546 = sbr.rel (0) target = $region61
    $region60: #{tpi_encoder_pallas.1} parent=1 // pred_region
      %8547 = dma.done [#allocation3], 256
    $region61: #{tpi_encoder_pallas.1} parent=1 // pred_fallthru
      _
    %8548 = vsyncpa [#allocation3], 1

</llo_original>
